<compile_context>
chip_gen: v5e
topology: v5e:2x2
jax: 0.10.0
libtpu: 0.0.40
codegen_flags: <defaults>
</compile_context>

<pallas_src>
import functools
import math

import jax
import jax.numpy as jnp
from jax.experimental import pallas as pl
from jax.experimental.pallas import tpu as pltpu

# ------------------------- small-model hyper-parameters ---------------------
B = 2          # batch
IN_CH = 3      # image channels
H = W = 16     # image spatial size
OUT_CH = 8     # backbone.out_ch
D_MODEL = 32   # d_model
NHEAD = 4
FFN = 64
N_QUERY = 8    # (300 in the real model; small here)
N_CLS = 2
LANE = 128     # lane-padding width for the tiny head outputs
EPS = 1e-5
BIAS_VALUE = -math.log((1 - 0.01) / 0.01)   # cls_embed bias init


# ------------------------------ Pallas kernels -------------------------------
def _stem_kernel(x_ref, wb_ref, bb_ref, wp_ref, bp_ref, o_ref):
    """Fused backbone 1x1 conv + ReLU + input_proj 1x1 conv on (M, Cin) rows."""
    x = x_ref[...].astype(jnp.float32)
    f = jnp.dot(x, wb_ref[...], preferred_element_type=jnp.float32) + bb_ref[...]
    f = jnp.maximum(f, 0.0)
    y = jnp.dot(f, wp_ref[...], preferred_element_type=jnp.float32) + bp_ref[...]
    o_ref[...] = y.astype(o_ref.dtype)


def _mha_ln_kernel(x_ref, qpos_ref, kv_ref, kpos_ref, m_ref,
                   wq_ref, bq_ref, wk_ref, bk_ref, wv_ref, bv_ref,
                   wo_ref, bo_ref, g_ref, bln_ref, o_ref,
                   *, nhead, scale, eps):
    """Fused MHA (QKV proj + attention + out proj) + residual add + LayerNorm.

    One grid step == one batch element.  x is the query stream (also the
    residual); kv is the key/value stream; qpos/kpos are additive positional
    embeddings; m is the additive key-padding mask (1, Sk).
    """
    x = x_ref[0].astype(jnp.float32)          # (Sq, D)
    qp = qpos_ref[0].astype(jnp.float32)      # (Sq, D)
    kv = kv_ref[0].astype(jnp.float32)        # (Sk, D)
    kp = kpos_ref[0].astype(jnp.float32)      # (Sk, D)
    madd = m_ref[0]                           # (1, Sk)

    q = jnp.dot(x + qp, wq_ref[...], preferred_element_type=jnp.float32) + bq_ref[...]
    k = jnp.dot(kv + kp, wk_ref[...], preferred_element_type=jnp.float32) + bk_ref[...]
    v = jnp.dot(kv, wv_ref[...], preferred_element_type=jnp.float32) + bv_ref[...]

    d = q.shape[-1]
    dh = d // nhead
    wo = wo_ref[...]                          # (D, D)

    # Per-head attention; the head concat is folded into the output projection:
    #   concat_h(o_h) @ Wo == sum_h o_h @ Wo[h*dh:(h+1)*dh, :]
    acc = jnp.zeros_like(x)
    for h in range(nhead):
        sl = slice(h * dh, (h + 1) * dh)
        qh, kh, vh = q[:, sl], k[:, sl], v[:, sl]
        s = jax.lax.dot_general(qh, kh, (((1,), (1,)), ((), ())),
                                preferred_element_type=jnp.float32) * scale
        s = s + madd                          # (Sq, Sk) + (1, Sk)
        s = s - jnp.max(s, axis=-1, keepdims=True)
        p = jnp.exp(s)
        p = p * pl.reciprocal(jnp.sum(p, axis=-1, keepdims=True), approx=True)
        oh = jnp.dot(p, vh, preferred_element_type=jnp.float32)      # (Sq, dh)
        acc = acc + jnp.dot(oh, wo[sl, :], preferred_element_type=jnp.float32)

    y = x + acc + bo_ref[...]                 # residual + attn_out
    mu = jnp.mean(y, axis=-1, keepdims=True)
    var = jnp.mean(jnp.square(y - mu), axis=-1, keepdims=True)
    y = (y - mu) * jax.lax.rsqrt(var + eps)
    o_ref[0] = (y * g_ref[...] + bln_ref[...]).astype(o_ref.dtype)


def _ffn_ln_kernel(x_ref, w1_ref, b1_ref, w2_ref, b2_ref, g_ref, b_ref, o_ref, *, eps):
    """Fused FFN (w1 + ReLU + w2) + residual add + LayerNorm."""
    x = x_ref[...].astype(jnp.float32)
    h = jnp.dot(x, w1_ref[...], preferred_element_type=jnp.float32) + b1_ref[...]
    h = jnp.maximum(h, 0.0)
    y = x + jnp.dot(h, w2_ref[...], preferred_element_type=jnp.float32) + b2_ref[...]
    mu = jnp.mean(y, axis=-1, keepdims=True)
    var = jnp.mean(jnp.square(y - mu), axis=-1, keepdims=True)
    y = (y - mu) * jax.lax.rsqrt(var + eps)
    o_ref[...] = (y * g_ref[...] + b_ref[...]).astype(o_ref.dtype)


def _heads_kernel(h_ref, wc_ref, bc_ref, w1_ref, b1_ref, w2_ref, b2_ref,
                  w3_ref, b3_ref, logit_ref, box_ref):
    """Fused prediction heads: cls linear + 3-layer box MLP with sigmoid.

    The cls / final-box weights are zero-padded to 128 output columns so both
    stores are lane-dense; the real 2 / 4 columns are sliced out in JAX.
    """
    h = h_ref[...].astype(jnp.float32)
    logit_ref[...] = (jnp.dot(h, wc_ref[...], preferred_element_type=jnp.float32)
                      + bc_ref[...]).astype(logit_ref.dtype)
    x = jnp.maximum(jnp.dot(h, w1_ref[...], preferred_element_type=jnp.float32)
                    + b1_ref[...], 0.0)
    x = jnp.maximum(jnp.dot(x, w2_ref[...], preferred_element_type=jnp.float32)
                    + b2_ref[...], 0.0)
    box_ref[...] = jax.nn.sigmoid(
        jnp.dot(x, w3_ref[...], preferred_element_type=jnp.float32) + b3_ref[...]
    ).astype(box_ref.dtype)


# ------------------------------ kernel wrappers -------------------------------
def stem(params, rows):
    """rows: (M, IN_CH) channels-last rows -> (M, D_MODEL)."""
    M = rows.shape[0]
    return pl.pallas_call(
        _stem_kernel,
        out_shape=jax.ShapeDtypeStruct((M, D_MODEL), jnp.float32),
    )(rows,
      params["backbone"]["w"], params["backbone"]["b"].reshape(1, -1),
      params["input_proj"]["w"], params["input_proj"]["b"].reshape(1, -1))


def mha_ln(p_attn, ln_g, ln_b, x, qpos, kv, kpos, key_add):
    """x: (B, Sq, D) query stream / residual.  kv: (B, Sk, D) key/value stream.
    qpos: (B or 1, Sq, D), kpos: (B or 1, Sk, D), key_add: (B, 1, Sk) additive."""
    Bb, Sq, D = x.shape
    Sk = kv.shape[1]
    scale = 1.0 / math.sqrt(D // NHEAD)

    def pos_map(arr):
        # positional embeddings may be shared across batch (leading dim 1)
        return (lambda b: (0, 0, 0)) if arr.shape[0] == 1 else (lambda b: (b, 0, 0))

    w_spec = pl.BlockSpec((D, D), lambda b: (0, 0))
    v_spec = pl.BlockSpec((1, D), lambda b: (0, 0))
    in_specs = [
        pl.BlockSpec((1, Sq, D), lambda b: (b, 0, 0)),   # x
        pl.BlockSpec((1, Sq, D), pos_map(qpos)),         # qpos
        pl.BlockSpec((1, Sk, D), lambda b: (b, 0, 0)),   # kv
        pl.BlockSpec((1, Sk, D), pos_map(kpos)),         # kpos
        pl.BlockSpec((1, 1, Sk), lambda b: (b, 0, 0)),   # key-padding mask (additive)
        w_spec, v_spec,                                  # wq, bq
        w_spec, v_spec,                                  # wk, bk
        w_spec, v_spec,                                  # wv, bv
        w_spec, v_spec,                                  # wo, bo
        v_spec, v_spec,                                  # ln gamma, beta
    ]
    return pl.pallas_call(
        functools.partial(_mha_ln_kernel, nhead=NHEAD, scale=scale, eps=EPS),
        out_shape=jax.ShapeDtypeStruct((Bb, Sq, D), x.dtype),
        grid=(Bb,),
        in_specs=in_specs,
        out_specs=pl.BlockSpec((1, Sq, D), lambda b: (b, 0, 0)),
        compiler_params=pltpu.CompilerParams(dimension_semantics=("parallel",)),
    )(x, qpos, kv, kpos, key_add,
      p_attn["wq"], p_attn["bq"].reshape(1, D),
      p_attn["wk"], p_attn["bk"].reshape(1, D),
      p_attn["wv"], p_attn["bv"].reshape(1, D),
      p_attn["wo"], p_attn["bo"].reshape(1, D),
      ln_g.reshape(1, D), ln_b.reshape(1, D))


def ffn_ln(p, x3d, gkey, bkey):
    Bb, S, D = x3d.shape
    x2 = x3d.reshape(Bb * S, D)
    out = pl.pallas_call(
        functools.partial(_ffn_ln_kernel, eps=EPS),
        out_shape=jax.ShapeDtypeStruct(x2.shape, x3d.dtype),
    )(x2, p["w1"], p["b1"].reshape(1, -1), p["w2"], p["b2"].reshape(1, -1),
      p[gkey].reshape(1, -1), p[bkey].reshape(1, -1))
    return out.reshape(Bb, S, D)


def heads(params, h2d):
    """h2d: (B*Nq, D) -> (logits (B*Nq, N_CLS), boxes (B*Nq, 4))."""
    M = h2d.shape[0]
    cls_p, box_p = params["cls"], params["box"]
    # lane-pad the tiny output weights to 128 columns (lane-dense stores)
    cw = jnp.zeros((D_MODEL, LANE), jnp.float32).at[:, :N_CLS].set(cls_p["w"])
    cb = jnp.zeros((1, LANE), jnp.float32).at[:, :N_CLS].set(cls_p["b"])
    bw = jnp.zeros((D_MODEL, LANE), jnp.float32).at[:, :4].set(box_p["w3"])
    bb = jnp.zeros((1, LANE), jnp.float32).at[:, :4].set(box_p["b3"])
    logit_pad, box_pad = pl.pallas_call(
        _heads_kernel,
        out_shape=(jax.ShapeDtypeStruct((M, LANE), jnp.float32),
                   jax.ShapeDtypeStruct((M, LANE), jnp.float32)),
    )(h2d, cw, cb,
      box_p["w1"], box_p["b1"].reshape(1, -1),
      box_p["w2"], box_p["b2"].reshape(1, -1),
      bw, bb)
    return logit_pad[:, :N_CLS], box_pad[:, :4]


# ------------------------------ glue helpers ---------------------------------
def interpolate_nearest(m, out_hw):
    """PyTorch F.interpolate(mode='nearest') on (B, H, W)."""
    Bb, Hh, Ww = m.shape
    Hf, Wf = out_hw
    yi = jnp.arange(Hf) * Hh // Hf
    xi = jnp.arange(Wf) * Ww // Wf
    return m[:, yi][:, :, xi]


def sine_pos_embedding(mask_bool, num_pos_feats, temperature=10000.0):
    """DETR PositionEmbeddingSine. mask_bool: (B, Hf, Wf), True = padded."""
    not_mask = (~mask_bool).astype(jnp.float32)
    y_embed = jnp.cumsum(not_mask, axis=1)
    x_embed = jnp.cumsum(not_mask, axis=2)
    eps, scale = 1e-6, 2 * math.pi
    y_embed = y_embed / (y_embed[:, -1:, :] + eps) * scale
    x_embed = x_embed / (x_embed[:, :, -1:] + eps) * scale
    dim_t = jnp.arange(num_pos_feats, dtype=jnp.float32)
    dim_t = temperature ** (2.0 * (dim_t // 2) / num_pos_feats)
    pos_x = x_embed[..., None] / dim_t
    pos_y = y_embed[..., None] / dim_t
    shp = pos_x.shape[:3]
    pos_x = jnp.stack([jnp.sin(pos_x[..., 0::2]), jnp.cos(pos_x[..., 1::2])],
                      axis=4).reshape(*shp, -1)
    pos_y = jnp.stack([jnp.sin(pos_y[..., 0::2]), jnp.cos(pos_y[..., 1::2])],
                      axis=4).reshape(*shp, -1)
    return jnp.concatenate([pos_y, pos_x], axis=3)   # (B, Hf, Wf, d_model)


# ------------------------------ parameters -----------------------------------
def init_params(key):
    ks = iter(jax.random.split(key, 128))

    def w(shape, std=0.02):
        return std * jax.random.normal(next(ks), shape, jnp.float32)

    def zeros(shape):
        return jnp.zeros(shape, jnp.float32)

    def ones(shape):
        return jnp.ones(shape, jnp.float32)

    def mha_p():
        return dict(wq=w((D_MODEL, D_MODEL)), bq=zeros((D_MODEL,)),
                    wk=w((D_MODEL, D_MODEL)), bk=zeros((D_MODEL,)),
                    wv=w((D_MODEL, D_MODEL)), bv=zeros((D_MODEL,)),
                    wo=w((D_MODEL, D_MODEL)), bo=zeros((D_MODEL,)))

    def ffn_ln_p(extra_norm=False):
        d = dict(w1=w((D_MODEL, FFN)), b1=zeros((FFN,)),
                 w2=w((FFN, D_MODEL)), b2=zeros((D_MODEL,)),
                 n1g=ones((D_MODEL,)), n1b=zeros((D_MODEL,)),
                 n2g=ones((D_MODEL,)), n2b=zeros((D_MODEL,)))
        if extra_norm:
            d.update(n3g=ones((D_MODEL,)), n3b=zeros((D_MODEL,)))
        return d

    enc = dict(sa=mha_p(), **ffn_ln_p())
    dec = dict(sa=mha_p(), ca=mha_p(), **ffn_ln_p(extra_norm=True))

    return dict(
        backbone=dict(w=w((IN_CH, OUT_CH)), b=zeros((OUT_CH,))),
        input_proj=dict(w=w((OUT_CH, D_MODEL)), b=zeros((D_MODEL,))),
        query=w((N_QUERY, D_MODEL)),                       # nn.Embedding, std=0.02
        enc=enc,
        dec=dec,
        cls=dict(w=w((D_MODEL, N_CLS)),
                 b=jnp.full((N_CLS,), BIAS_VALUE, jnp.float32)),
        box=dict(w1=w((D_MODEL, D_MODEL)), b1=zeros((D_MODEL,)),
                 w2=w((D_MODEL, D_MODEL)), b2=zeros((D_MODEL,)),
                 w3=zeros((D_MODEL, 4)), b3=zeros((4,))),   # last layer zero-init
    )


# ------------------------------ full forward ----------------------------------
def detr_forward(params, img, mask):
    Bb = img.shape[0]
    Hf, Wf = H // 2, W // 2

    # NCHW -> channels-last exactly once, then 2x2 avg-pool (backbone stem glue)
    x = img.transpose(0, 2, 3, 1)                                     # (B, H, W, C)
    pooled = x.reshape(Bb, Hf, 2, Wf, 2, IN_CH).mean(axis=(2, 4))     # (B, Hf, Wf, C)
    rows = pooled.reshape(Bb * Hf * Wf, IN_CH)

    # fused backbone 1x1 conv + ReLU + input_proj 1x1 conv (Pallas)
    f = stem(params, rows).reshape(Bb, Hf * Wf, D_MODEL)

    # mask -> feature resolution (nearest), pos embedding, key-padding mask
    m = interpolate_nearest(mask, (Hf, Wf))
    mask_bool = m.astype(bool)
    pos_embed = sine_pos_embedding(mask_bool, D_MODEL // 2).reshape(Bb, Hf * Wf, D_MODEL)
    key_add = jnp.where(mask_bool.reshape(Bb, 1, Hf * Wf), -1e9, 0.0).astype(jnp.float32)

    # ---- encoder layer (fused MHA+LN, fused FFN+LN) ----
    enc = params["enc"]
    src = mha_ln(enc["sa"], enc["n1g"], enc["n1b"],
                 x=f, qpos=pos_embed, kv=f, kpos=pos_embed, key_add=key_add)
    memory = ffn_ln(enc, src, "n2g", "n2b")

    # ---- decoder layer ----
    dec = params["dec"]
    query_pos = params["query"][None]                                  # (1, Nq, D)
    tgt = jnp.zeros((Bb, N_QUERY, D_MODEL), jnp.float32)
    no_mask = jnp.zeros((Bb, 1, N_QUERY), jnp.float32)
    tgt = mha_ln(dec["sa"], dec["n1g"], dec["n1b"],
                 x=tgt, qpos=query_pos, kv=tgt, kpos=query_pos, key_add=no_mask)
    tgt = mha_ln(dec["ca"], dec["n2g"], dec["n2b"],
                 x=tgt, qpos=query_pos, kv=memory, kpos=pos_embed, key_add=key_add)
    tgt = ffn_ln(dec, tgt, "n3g", "n3b")
    hs = tgt[None]                                                     # (1, B, Nq, D)

    # ---- heads (eval path: hs[-1]); fused cls + 3-layer box MLP ----
    h = hs[-1].reshape(Bb * N_QUERY, D_MODEL)
    logits, boxes = heads(params, h)
    return {"pred_logits": logits.reshape(Bb, N_QUERY, N_CLS),
            "pred_boxes": boxes.reshape(Bb, N_QUERY, 4)}


if __name__ == "__main__":
    key = jax.random.PRNGKey(0)
    k_img, k_param = jax.random.split(key)
    img = jax.random.normal(k_img, (B, IN_CH, H, W), jnp.float32)
    # mask: True/1 = padded. Batch element 1 has its right-most columns padded.
    mask = jnp.zeros((B, H, W), jnp.float32).at[1, :, 12:].set(1.0)

    params = init_params(k_param)
    fwd = jax.jit(detr_forward)
    out = fwd(params, img, mask)
    out = jax.tree_util.tree_map(jax.block_until_ready, out)

    assert out["pred_logits"].shape == (B, N_QUERY, N_CLS)
    assert out["pred_boxes"].shape == (B, N_QUERY, 4)
    print("KERNEL_OK")
</pallas_src>

<mosaic_0001>
module attributes {stable_mosaic.version = 11 : i64} {
  func.func @_mha_ln_kernel(%arg0: i32, %arg1: memref<1x8x32xf32, #tpu.memory_space<vmem>>, %arg2: memref<1x8x32xf32, #tpu.memory_space<vmem>>, %arg3: memref<1x8x32xf32, #tpu.memory_space<vmem>>, %arg4: memref<1x8x32xf32, #tpu.memory_space<vmem>>, %arg5: memref<1x1x8xf32, #tpu.memory_space<vmem>>, %arg6: memref<32x32xf32, #tpu.memory_space<vmem>>, %arg7: memref<1x32xf32, #tpu.memory_space<vmem>>, %arg8: memref<32x32xf32, #tpu.memory_space<vmem>>, %arg9: memref<1x32xf32, #tpu.memory_space<vmem>>, %arg10: memref<32x32xf32, #tpu.memory_space<vmem>>, %arg11: memref<1x32xf32, #tpu.memory_space<vmem>>, %arg12: memref<32x32xf32, #tpu.memory_space<vmem>>, %arg13: memref<1x32xf32, #tpu.memory_space<vmem>>, %arg14: memref<1x32xf32, #tpu.memory_space<vmem>>, %arg15: memref<1x32xf32, #tpu.memory_space<vmem>>, %arg16: memref<1x8x32xf32, #tpu.memory_space<vmem>>) attributes {dimension_semantics = [#tpu.dimension_semantics<parallel>], iteration_bounds = array<i64: 2>, scalar_prefetch = 0 : i64, scratch_operands = 0 : i64, tpu.core_type = #tpu.core_type<tc>, window_params = [{transform_indices = @transform_0, window_bounds = array<i64: 1, 8, 32>}, {pipeline_mode = #tpu.pipeline_mode<synchronous>, transform_indices = @transform_1, window_bounds = array<i64: 1, 8, 32>}, {transform_indices = @transform_2, window_bounds = array<i64: 1, 8, 32>}, {pipeline_mode = #tpu.pipeline_mode<synchronous>, transform_indices = @transform_3, window_bounds = array<i64: 1, 8, 32>}, {transform_indices = @transform_4, window_bounds = array<i64: 1, 1, 8>}, {pipeline_mode = #tpu.pipeline_mode<synchronous>, transform_indices = @transform_5, window_bounds = array<i64: 32, 32>}, {pipeline_mode = #tpu.pipeline_mode<synchronous>, transform_indices = @transform_6, window_bounds = array<i64: 1, 32>}, {pipeline_mode = #tpu.pipeline_mode<synchronous>, transform_indices = @transform_7, window_bounds = array<i64: 32, 32>}, {pipeline_mode = #tpu.pipeline_mode<synchronous>, transform_indices = @transform_8, window_bounds = array<i64: 1, 32>}, {pipeline_mode = #tpu.pipeline_mode<synchronous>, transform_indices = @transform_9, window_bounds = array<i64: 32, 32>}, {pipeline_mode = #tpu.pipeline_mode<synchronous>, transform_indices = @transform_10, window_bounds = array<i64: 1, 32>}, {pipeline_mode = #tpu.pipeline_mode<synchronous>, transform_indices = @transform_11, window_bounds = array<i64: 32, 32>}, {pipeline_mode = #tpu.pipeline_mode<synchronous>, transform_indices = @transform_12, window_bounds = array<i64: 1, 32>}, {pipeline_mode = #tpu.pipeline_mode<synchronous>, transform_indices = @transform_13, window_bounds = array<i64: 1, 32>}, {pipeline_mode = #tpu.pipeline_mode<synchronous>, transform_indices = @transform_14, window_bounds = array<i64: 1, 32>}, {transform_indices = @transform_15, window_bounds = array<i64: 1, 8, 32>}]} {
    %c0 = arith.constant 0 : index
    %c0_0 = arith.constant 0 : index
    %c0_1 = arith.constant 0 : index
    %0 = vector.load %arg1[%c0, %c0_0, %c0_1] : memref<1x8x32xf32, #tpu.memory_space<vmem>>, vector<1x8x32xf32>
    %1 = vector.shape_cast %0 : vector<1x8x32xf32> to vector<8x32xf32>
    %c0_2 = arith.constant 0 : index
    %c0_3 = arith.constant 0 : index
    %c0_4 = arith.constant 0 : index
    %2 = vector.load %arg2[%c0_2, %c0_3, %c0_4] : memref<1x8x32xf32, #tpu.memory_space<vmem>>, vector<1x8x32xf32>
    %3 = vector.shape_cast %2 : vector<1x8x32xf32> to vector<8x32xf32>
    %c0_5 = arith.constant 0 : index
    %c0_6 = arith.constant 0 : index
    %c0_7 = arith.constant 0 : index
    %4 = vector.load %arg3[%c0_5, %c0_6, %c0_7] : memref<1x8x32xf32, #tpu.memory_space<vmem>>, vector<1x8x32xf32>
    %5 = vector.shape_cast %4 : vector<1x8x32xf32> to vector<8x32xf32>
    %c0_8 = arith.constant 0 : index
    %c0_9 = arith.constant 0 : index
    %c0_10 = arith.constant 0 : index
    %6 = vector.load %arg4[%c0_8, %c0_9, %c0_10] : memref<1x8x32xf32, #tpu.memory_space<vmem>>, vector<1x8x32xf32>
    %7 = vector.shape_cast %6 : vector<1x8x32xf32> to vector<8x32xf32>
    %c0_11 = arith.constant 0 : index
    %c0_12 = arith.constant 0 : index
    %c0_13 = arith.constant 0 : index
    %8 = vector.load %arg5[%c0_11, %c0_12, %c0_13] : memref<1x1x8xf32, #tpu.memory_space<vmem>>, vector<1x1x8xf32>
    %9 = vector.shape_cast %8 : vector<1x1x8xf32> to vector<1x8xf32>
    %10 = arith.addf %1, %3 : vector<8x32xf32>
    %c0_14 = arith.constant 0 : index
    %c0_15 = arith.constant 0 : index
    %11 = vector.load %arg6[%c0_14, %c0_15] : memref<32x32xf32, #tpu.memory_space<vmem>>, vector<32x32xf32>
    %cst = arith.constant dense<0.000000e+00> : vector<8x32xf32>
    %12 = tpu.matmul %10, %11, %cst {dimension_numbers = #tpu.dot_dimension_numbers<[1], [0], [0], [1], [0, 0, 1, 1], [], []>} : vector<8x32xf32>, vector<32x32xf32>, vector<8x32xf32> -> vector<8x32xf32>
    %c0_16 = arith.constant 0 : index
    %c0_17 = arith.constant 0 : index
    %13 = vector.load %arg7[%c0_16, %c0_17] : memref<1x32xf32, #tpu.memory_space<vmem>>, vector<1x32xf32>
    %14 = vector.broadcast %13 : vector<1x32xf32> to vector<8x32xf32>
    %15 = arith.addf %12, %14 : vector<8x32xf32>
    %16 = arith.addf %5, %7 : vector<8x32xf32>
    %c0_18 = arith.constant 0 : index
    %c0_19 = arith.constant 0 : index
    %17 = vector.load %arg8[%c0_18, %c0_19] : memref<32x32xf32, #tpu.memory_space<vmem>>, vector<32x32xf32>
    %cst_20 = arith.constant dense<0.000000e+00> : vector<8x32xf32>
    %18 = tpu.matmul %16, %17, %cst_20 {dimension_numbers = #tpu.dot_dimension_numbers<[1], [0], [0], [1], [0, 0, 1, 1], [], []>} : vector<8x32xf32>, vector<32x32xf32>, vector<8x32xf32> -> vector<8x32xf32>
    %c0_21 = arith.constant 0 : index
    %c0_22 = arith.constant 0 : index
    %19 = vector.load %arg9[%c0_21, %c0_22] : memref<1x32xf32, #tpu.memory_space<vmem>>, vector<1x32xf32>
    %20 = vector.broadcast %19 : vector<1x32xf32> to vector<8x32xf32>
    %21 = arith.addf %18, %20 : vector<8x32xf32>
    %c0_23 = arith.constant 0 : index
    %c0_24 = arith.constant 0 : index
    %22 = vector.load %arg10[%c0_23, %c0_24] : memref<32x32xf32, #tpu.memory_space<vmem>>, vector<32x32xf32>
    %cst_25 = arith.constant dense<0.000000e+00> : vector<8x32xf32>
    %23 = tpu.matmul %5, %22, %cst_25 {dimension_numbers = #tpu.dot_dimension_numbers<[1], [0], [0], [1], [0, 0, 1, 1], [], []>} : vector<8x32xf32>, vector<32x32xf32>, vector<8x32xf32> -> vector<8x32xf32>
    %c0_26 = arith.constant 0 : index
    %c0_27 = arith.constant 0 : index
    %24 = vector.load %arg11[%c0_26, %c0_27] : memref<1x32xf32, #tpu.memory_space<vmem>>, vector<1x32xf32>
    %25 = vector.broadcast %24 : vector<1x32xf32> to vector<8x32xf32>
    %26 = arith.addf %23, %25 : vector<8x32xf32>
    %c0_28 = arith.constant 0 : index
    %c0_29 = arith.constant 0 : index
    %27 = vector.load %arg12[%c0_28, %c0_29] : memref<32x32xf32, #tpu.memory_space<vmem>>, vector<32x32xf32>
    %cst_30 = arith.constant 0.000000e+00 : f32
    %28 = vector.broadcast %cst_30 : f32 to vector<8x32xf32>
    %29 = vector.extract_strided_slice %15 {offsets = [0, 0], sizes = [8, 8], strides = [1, 1]} : vector<8x32xf32> to vector<8x8xf32>
    %30 = vector.extract_strided_slice %21 {offsets = [0, 0], sizes = [8, 8], strides = [1, 1]} : vector<8x32xf32> to vector<8x8xf32>
    %31 = vector.extract_strided_slice %26 {offsets = [0, 0], sizes = [8, 8], strides = [1, 1]} : vector<8x32xf32> to vector<8x8xf32>
    %cst_31 = arith.constant dense<0.000000e+00> : vector<8x8xf32>
    %32 = tpu.matmul %29, %30, %cst_31 {dimension_numbers = #tpu.dot_dimension_numbers<[1], [1], [0], [0], [0, 0, 1, 0], [], []>} : vector<8x8xf32>, vector<8x8xf32>, vector<8x8xf32> -> vector<8x8xf32>
    %cst_32 = arith.constant 0.353553385 : f32
    %33 = vector.broadcast %cst_32 : f32 to vector<8x8xf32>
    %34 = arith.mulf %32, %33 : vector<8x8xf32>
    %35 = vector.broadcast %9 : vector<1x8xf32> to vector<8x8xf32>
    %36 = arith.addf %34, %35 : vector<8x8xf32>
    %cst_33 = arith.constant dense<0xFF800000> : vector<8xf32>
    %37 = vector.multi_reduction <maximumf>, %36, %cst_33 [1] : vector<8x8xf32> to vector<8xf32>
    %38 = vector.shape_cast %37 : vector<8xf32> to vector<8x1xf32>
    %39 = vector.broadcast %38 : vector<8x1xf32> to vector<8x8xf32>
    %40 = arith.subf %36, %39 : vector<8x8xf32>
    %41 = math.exp %40 : vector<8x8xf32>
    %cst_34 = arith.constant dense<0.000000e+00> : vector<8xf32>
    %42 = vector.multi_reduction <add>, %41, %cst_34 [1] : vector<8x8xf32> to vector<8xf32>
    %43 = vector.shape_cast %42 : vector<8xf32> to vector<8x1xf32>
    %44 = tpu.reciprocal %43 {approx = true} : vector<8x1xf32> -> vector<8x1xf32>
    %45 = vector.broadcast %44 : vector<8x1xf32> to vector<8x8xf32>
    %46 = arith.mulf %41, %45 : vector<8x8xf32>
    %cst_35 = arith.constant dense<0.000000e+00> : vector<8x8xf32>
    %47 = tpu.matmul %46, %31, %cst_35 {dimension_numbers = #tpu.dot_dimension_numbers<[1], [0], [0], [1], [0, 0, 1, 1], [], []>} : vector<8x8xf32>, vector<8x8xf32>, vector<8x8xf32> -> vector<8x8xf32>
    %48 = vector.extract_strided_slice %27 {offsets = [0, 0], sizes = [8, 32], strides = [1, 1]} : vector<32x32xf32> to vector<8x32xf32>
    %cst_36 = arith.constant dense<0.000000e+00> : vector<8x32xf32>
    %49 = tpu.matmul %47, %48, %cst_36 {dimension_numbers = #tpu.dot_dimension_numbers<[1], [0], [0], [1], [0, 0, 1, 1], [], []>} : vector<8x8xf32>, vector<8x32xf32>, vector<8x32xf32> -> vector<8x32xf32>
    %50 = arith.addf %28, %49 : vector<8x32xf32>
    %51 = vector.extract_strided_slice %15 {offsets = [0, 8], sizes = [8, 8], strides = [1, 1]} : vector<8x32xf32> to vector<8x8xf32>
    %52 = vector.extract_strided_slice %21 {offsets = [0, 8], sizes = [8, 8], strides = [1, 1]} : vector<8x32xf32> to vector<8x8xf32>
    %53 = vector.extract_strided_slice %26 {offsets = [0, 8], sizes = [8, 8], strides = [1, 1]} : vector<8x32xf32> to vector<8x8xf32>
    %cst_37 = arith.constant dense<0.000000e+00> : vector<8x8xf32>
    %54 = tpu.matmul %51, %52, %cst_37 {dimension_numbers = #tpu.dot_dimension_numbers<[1], [1], [0], [0], [0, 0, 1, 0], [], []>} : vector<8x8xf32>, vector<8x8xf32>, vector<8x8xf32> -> vector<8x8xf32>
    %cst_38 = arith.constant 0.353553385 : f32
    %55 = vector.broadcast %cst_38 : f32 to vector<8x8xf32>
    %56 = arith.mulf %54, %55 : vector<8x8xf32>
    %57 = vector.broadcast %9 : vector<1x8xf32> to vector<8x8xf32>
    %58 = arith.addf %56, %57 : vector<8x8xf32>
    %cst_39 = arith.constant dense<0xFF800000> : vector<8xf32>
    %59 = vector.multi_reduction <maximumf>, %58, %cst_39 [1] : vector<8x8xf32> to vector<8xf32>
    %60 = vector.shape_cast %59 : vector<8xf32> to vector<8x1xf32>
    %61 = vector.broadcast %60 : vector<8x1xf32> to vector<8x8xf32>
    %62 = arith.subf %58, %61 : vector<8x8xf32>
    %63 = math.exp %62 : vector<8x8xf32>
    %cst_40 = arith.constant dense<0.000000e+00> : vector<8xf32>
    %64 = vector.multi_reduction <add>, %63, %cst_40 [1] : vector<8x8xf32> to vector<8xf32>
    %65 = vector.shape_cast %64 : vector<8xf32> to vector<8x1xf32>
    %66 = tpu.reciprocal %65 {approx = true} : vector<8x1xf32> -> vector<8x1xf32>
    %67 = vector.broadcast %66 : vector<8x1xf32> to vector<8x8xf32>
    %68 = arith.mulf %63, %67 : vector<8x8xf32>
    %cst_41 = arith.constant dense<0.000000e+00> : vector<8x8xf32>
    %69 = tpu.matmul %68, %53, %cst_41 {dimension_numbers = #tpu.dot_dimension_numbers<[1], [0], [0], [1], [0, 0, 1, 1], [], []>} : vector<8x8xf32>, vector<8x8xf32>, vector<8x8xf32> -> vector<8x8xf32>
    %70 = vector.extract_strided_slice %27 {offsets = [8, 0], sizes = [8, 32], strides = [1, 1]} : vector<32x32xf32> to vector<8x32xf32>
    %cst_42 = arith.constant dense<0.000000e+00> : vector<8x32xf32>
    %71 = tpu.matmul %69, %70, %cst_42 {dimension_numbers = #tpu.dot_dimension_numbers<[1], [0], [0], [1], [0, 0, 1, 1], [], []>} : vector<8x8xf32>, vector<8x32xf32>, vector<8x32xf32> -> vector<8x32xf32>
    %72 = arith.addf %50, %71 : vector<8x32xf32>
    %73 = vector.extract_strided_slice %15 {offsets = [0, 16], sizes = [8, 8], strides = [1, 1]} : vector<8x32xf32> to vector<8x8xf32>
    %74 = vector.extract_strided_slice %21 {offsets = [0, 16], sizes = [8, 8], strides = [1, 1]} : vector<8x32xf32> to vector<8x8xf32>
    %75 = vector.extract_strided_slice %26 {offsets = [0, 16], sizes = [8, 8], strides = [1, 1]} : vector<8x32xf32> to vector<8x8xf32>
    %cst_43 = arith.constant dense<0.000000e+00> : vector<8x8xf32>
    %76 = tpu.matmul %73, %74, %cst_43 {dimension_numbers = #tpu.dot_dimension_numbers<[1], [1], [0], [0], [0, 0, 1, 0], [], []>} : vector<8x8xf32>, vector<8x8xf32>, vector<8x8xf32> -> vector<8x8xf32>
    %cst_44 = arith.constant 0.353553385 : f32
    %77 = vector.broadcast %cst_44 : f32 to vector<8x8xf32>
    %78 = arith.mulf %76, %77 : vector<8x8xf32>
    %79 = vector.broadcast %9 : vector<1x8xf32> to vector<8x8xf32>
    %80 = arith.addf %78, %79 : vector<8x8xf32>
    %cst_45 = arith.constant dense<0xFF800000> : vector<8xf32>
    %81 = vector.multi_reduction <maximumf>, %80, %cst_45 [1] : vector<8x8xf32> to vector<8xf32>
    %82 = vector.shape_cast %81 : vector<8xf32> to vector<8x1xf32>
    %83 = vector.broadcast %82 : vector<8x1xf32> to vector<8x8xf32>
    %84 = arith.subf %80, %83 : vector<8x8xf32>
    %85 = math.exp %84 : vector<8x8xf32>
    %cst_46 = arith.constant dense<0.000000e+00> : vector<8xf32>
    %86 = vector.multi_reduction <add>, %85, %cst_46 [1] : vector<8x8xf32> to vector<8xf32>
    %87 = vector.shape_cast %86 : vector<8xf32> to vector<8x1xf32>
    %88 = tpu.reciprocal %87 {approx = true} : vector<8x1xf32> -> vector<8x1xf32>
    %89 = vector.broadcast %88 : vector<8x1xf32> to vector<8x8xf32>
    %90 = arith.mulf %85, %89 : vector<8x8xf32>
    %cst_47 = arith.constant dense<0.000000e+00> : vector<8x8xf32>
    %91 = tpu.matmul %90, %75, %cst_47 {dimension_numbers = #tpu.dot_dimension_numbers<[1], [0], [0], [1], [0, 0, 1, 1], [], []>} : vector<8x8xf32>, vector<8x8xf32>, vector<8x8xf32> -> vector<8x8xf32>
    %92 = vector.extract_strided_slice %27 {offsets = [16, 0], sizes = [8, 32], strides = [1, 1]} : vector<32x32xf32> to vector<8x32xf32>
    %cst_48 = arith.constant dense<0.000000e+00> : vector<8x32xf32>
    %93 = tpu.matmul %91, %92, %cst_48 {dimension_numbers = #tpu.dot_dimension_numbers<[1], [0], [0], [1], [0, 0, 1, 1], [], []>} : vector<8x8xf32>, vector<8x32xf32>, vector<8x32xf32> -> vector<8x32xf32>
    %94 = arith.addf %72, %93 : vector<8x32xf32>
    %95 = vector.extract_strided_slice %15 {offsets = [0, 24], sizes = [8, 8], strides = [1, 1]} : vector<8x32xf32> to vector<8x8xf32>
    %96 = vector.extract_strided_slice %21 {offsets = [0, 24], sizes = [8, 8], strides = [1, 1]} : vector<8x32xf32> to vector<8x8xf32>
    %97 = vector.extract_strided_slice %26 {offsets = [0, 24], sizes = [8, 8], strides = [1, 1]} : vector<8x32xf32> to vector<8x8xf32>
    %cst_49 = arith.constant dense<0.000000e+00> : vector<8x8xf32>
    %98 = tpu.matmul %95, %96, %cst_49 {dimension_numbers = #tpu.dot_dimension_numbers<[1], [1], [0], [0], [0, 0, 1, 0], [], []>} : vector<8x8xf32>, vector<8x8xf32>, vector<8x8xf32> -> vector<8x8xf32>
    %cst_50 = arith.constant 0.353553385 : f32
    %99 = vector.broadcast %cst_50 : f32 to vector<8x8xf32>
    %100 = arith.mulf %98, %99 : vector<8x8xf32>
    %101 = vector.broadcast %9 : vector<1x8xf32> to vector<8x8xf32>
    %102 = arith.addf %100, %101 : vector<8x8xf32>
    %cst_51 = arith.constant dense<0xFF800000> : vector<8xf32>
    %103 = vector.multi_reduction <maximumf>, %102, %cst_51 [1] : vector<8x8xf32> to vector<8xf32>
    %104 = vector.shape_cast %103 : vector<8xf32> to vector<8x1xf32>
    %105 = vector.broadcast %104 : vector<8x1xf32> to vector<8x8xf32>
    %106 = arith.subf %102, %105 : vector<8x8xf32>
    %107 = math.exp %106 : vector<8x8xf32>
    %cst_52 = arith.constant dense<0.000000e+00> : vector<8xf32>
    %108 = vector.multi_reduction <add>, %107, %cst_52 [1] : vector<8x8xf32> to vector<8xf32>
    %109 = vector.shape_cast %108 : vector<8xf32> to vector<8x1xf32>
    %110 = tpu.reciprocal %109 {approx = true} : vector<8x1xf32> -> vector<8x1xf32>
    %111 = vector.broadcast %110 : vector<8x1xf32> to vector<8x8xf32>
    %112 = arith.mulf %107, %111 : vector<8x8xf32>
    %cst_53 = arith.constant dense<0.000000e+00> : vector<8x8xf32>
    %113 = tpu.matmul %112, %97, %cst_53 {dimension_numbers = #tpu.dot_dimension_numbers<[1], [0], [0], [1], [0, 0, 1, 1], [], []>} : vector<8x8xf32>, vector<8x8xf32>, vector<8x8xf32> -> vector<8x8xf32>
    %114 = vector.extract_strided_slice %27 {offsets = [24, 0], sizes = [8, 32], strides = [1, 1]} : vector<32x32xf32> to vector<8x32xf32>
    %cst_54 = arith.constant dense<0.000000e+00> : vector<8x32xf32>
    %115 = tpu.matmul %113, %114, %cst_54 {dimension_numbers = #tpu.dot_dimension_numbers<[1], [0], [0], [1], [0, 0, 1, 1], [], []>} : vector<8x8xf32>, vector<8x32xf32>, vector<8x32xf32> -> vector<8x32xf32>
    %116 = arith.addf %94, %115 : vector<8x32xf32>
    %117 = arith.addf %1, %116 : vector<8x32xf32>
    %c0_55 = arith.constant 0 : index
    %c0_56 = arith.constant 0 : index
    %118 = vector.load %arg13[%c0_55, %c0_56] : memref<1x32xf32, #tpu.memory_space<vmem>>, vector<1x32xf32>
    %119 = vector.broadcast %118 : vector<1x32xf32> to vector<8x32xf32>
    %120 = arith.addf %117, %119 : vector<8x32xf32>
    %cst_57 = arith.constant dense<0.000000e+00> : vector<8xf32>
    %121 = vector.multi_reduction <add>, %120, %cst_57 [1] : vector<8x32xf32> to vector<8xf32>
    %122 = vector.shape_cast %121 : vector<8xf32> to vector<8x1xf32>
    %cst_58 = arith.constant 3.200000e+01 : f32
    %123 = vector.broadcast %cst_58 : f32 to vector<8x1xf32>
    %124 = arith.divf %122, %123 : vector<8x1xf32>
    %125 = vector.broadcast %124 : vector<8x1xf32> to vector<8x32xf32>
    %126 = arith.subf %120, %125 : vector<8x32xf32>
    %127 = arith.mulf %126, %126 : vector<8x32xf32>
    %cst_59 = arith.constant dense<0.000000e+00> : vector<8xf32>
    %128 = vector.multi_reduction <add>, %127, %cst_59 [1] : vector<8x32xf32> to vector<8xf32>
    %129 = vector.shape_cast %128 : vector<8xf32> to vector<8x1xf32>
    %cst_60 = arith.constant 3.200000e+01 : f32
    %130 = vector.broadcast %cst_60 : f32 to vector<8x1xf32>
    %131 = arith.divf %129, %130 : vector<8x1xf32>
    %132 = vector.broadcast %124 : vector<8x1xf32> to vector<8x32xf32>
    %133 = arith.subf %120, %132 : vector<8x32xf32>
    %cst_61 = arith.constant 9.99999974E-6 : f32
    %134 = vector.broadcast %cst_61 : f32 to vector<8x1xf32>
    %135 = arith.addf %131, %134 : vector<8x1xf32>
    %136 = math.rsqrt %135 : vector<8x1xf32>
    %137 = vector.broadcast %136 : vector<8x1xf32> to vector<8x32xf32>
    %138 = arith.mulf %133, %137 : vector<8x32xf32>
    %c0_62 = arith.constant 0 : index
    %c0_63 = arith.constant 0 : index
    %139 = vector.load %arg14[%c0_62, %c0_63] : memref<1x32xf32, #tpu.memory_space<vmem>>, vector<1x32xf32>
    %140 = vector.broadcast %139 : vector<1x32xf32> to vector<8x32xf32>
    %141 = arith.mulf %138, %140 : vector<8x32xf32>
    %c0_64 = arith.constant 0 : index
    %c0_65 = arith.constant 0 : index
    %142 = vector.load %arg15[%c0_64, %c0_65] : memref<1x32xf32, #tpu.memory_space<vmem>>, vector<1x32xf32>
    %143 = vector.broadcast %142 : vector<1x32xf32> to vector<8x32xf32>
    %144 = arith.addf %141, %143 : vector<8x32xf32>
    %c0_66 = arith.constant 0 : index
    %c0_67 = arith.constant 0 : index
    %c0_68 = arith.constant 0 : index
    %145 = vector.load %arg16[%c0_66, %c0_67, %c0_68] : memref<1x8x32xf32, #tpu.memory_space<vmem>>, vector<1x8x32xf32>
    %146 = vector.shape_cast %145 : vector<1x8x32xf32> to vector<8x32xf32>
    %147 = vector.shape_cast %144 : vector<8x32xf32> to vector<1x8x32xf32>
    tpu.vector_store %arg16[%c0_66, %c0_67, %c0_68], %147 {strides = array<i32>} : memref<1x8x32xf32, #tpu.memory_space<vmem>>, vector<1x8x32xf32>,
    return
  }
  func.func @transform_0(%arg0: i32) -> (i32, i32, i32) {
    %c0_i32 = arith.constant 0 : i32
    %c0_i32_0 = arith.constant 0 : i32
    %c0_i32_1 = arith.constant 0 : i32
    return %arg0, %c0_i32, %c0_i32_0 : i32, i32, i32
  }
  func.func @transform_1(%arg0: i32) -> (i32, i32, i32) {
    %c0_i32 = arith.constant 0 : i32
    %c0_i32_0 = arith.constant 0 : i32
    %c0_i32_1 = arith.constant 0 : i32
    %c0_i32_2 = arith.constant 0 : i32
    return %c0_i32, %c0_i32_0, %c0_i32_1 : i32, i32, i32
  }
  func.func @transform_2(%arg0: i32) -> (i32, i32, i32) {
    %c0_i32 = arith.constant 0 : i32
    %c0_i32_0 = arith.constant 0 : i32
    %c0_i32_1 = arith.constant 0 : i32
    return %arg0, %c0_i32, %c0_i32_0 : i32, i32, i32
  }
  func.func @transform_3(%arg0: i32) -> (i32, i32, i32) {
    %c0_i32 = arith.constant 0 : i32
    %c0_i32_0 = arith.constant 0 : i32
    %c0_i32_1 = arith.constant 0 : i32
    %c0_i32_2 = arith.constant 0 : i32
    return %c0_i32, %c0_i32_0, %c0_i32_1 : i32, i32, i32
  }
  func.func @transform_4(%arg0: i32) -> (i32, i32, i32) {
    %c0_i32 = arith.constant 0 : i32
    %c0_i32_0 = arith.constant 0 : i32
    %c0_i32_1 = arith.constant 0 : i32
    return %arg0, %c0_i32, %c0_i32_0 : i32, i32, i32
  }
  func.func @transform_5(%arg0: i32) -> (i32, i32) {
    %c0_i32 = arith.constant 0 : i32
    %c0_i32_0 = arith.constant 0 : i32
    %c0_i32_1 = arith.constant 0 : i32
    return %c0_i32, %c0_i32_0 : i32, i32
  }
  func.func @transform_6(%arg0: i32) -> (i32, i32) {
    %c0_i32 = arith.constant 0 : i32
    %c0_i32_0 = arith.constant 0 : i32
    %c0_i32_1 = arith.constant 0 : i32
    return %c0_i32, %c0_i32_0 : i32, i32
  }
  func.func @transform_7(%arg0: i32) -> (i32, i32) {
    %c0_i32 = arith.constant 0 : i32
    %c0_i32_0 = arith.constant 0 : i32
    %c0_i32_1 = arith.constant 0 : i32
    return %c0_i32, %c0_i32_0 : i32, i32
  }
  func.func @transform_8(%arg0: i32) -> (i32, i32) {
    %c0_i32 = arith.constant 0 : i32
    %c0_i32_0 = arith.constant 0 : i32
    %c0_i32_1 = arith.constant 0 : i32
    return %c0_i32, %c0_i32_0 : i32, i32
  }
  func.func @transform_9(%arg0: i32) -> (i32, i32) {
    %c0_i32 = arith.constant 0 : i32
    %c0_i32_0 = arith.constant 0 : i32
    %c0_i32_1 = arith.constant 0 : i32
    return %c0_i32, %c0_i32_0 : i32, i32
  }
  func.func @transform_10(%arg0: i32) -> (i32, i32) {
    %c0_i32 = arith.constant 0 : i32
    %c0_i32_0 = arith.constant 0 : i32
    %c0_i32_1 = arith.constant 0 : i32
    return %c0_i32, %c0_i32_0 : i32, i32
  }
  func.func @transform_11(%arg0: i32) -> (i32, i32) {
    %c0_i32 = arith.constant 0 : i32
    %c0_i32_0 = arith.constant 0 : i32
    %c0_i32_1 = arith.constant 0 : i32
    return %c0_i32, %c0_i32_0 : i32, i32
  }
  func.func @transform_12(%arg0: i32) -> (i32, i32) {
    %c0_i32 = arith.constant 0 : i32
    %c0_i32_0 = arith.constant 0 : i32
    %c0_i32_1 = arith.constant 0 : i32
    return %c0_i32, %c0_i32_0 : i32, i32
  }
  func.func @transform_13(%arg0: i32) -> (i32, i32) {
    %c0_i32 = arith.constant 0 : i32
    %c0_i32_0 = arith.constant 0 : i32
    %c0_i32_1 = arith.constant 0 : i32
    return %c0_i32, %c0_i32_0 : i32, i32
  }
  func.func @transform_14(%arg0: i32) -> (i32, i32) {
    %c0_i32 = arith.constant 0 : i32
    %c0_i32_0 = arith.constant 0 : i32
    %c0_i32_1 = arith.constant 0 : i32
    return %c0_i32, %c0_i32_0 : i32, i32
  }
  func.func @transform_15(%arg0: i32) -> (i32, i32, i32) {
    %c0_i32 = arith.constant 0 : i32
    %c0_i32_0 = arith.constant 0 : i32
    %c0_i32_1 = arith.constant 0 : i32
    return %arg0, %c0_i32, %c0_i32_0 : i32, i32, i32
  }
}

module attributes {stable_mosaic.version = 11 : i64} {
  func.func @_stem_kernel(%arg0: memref<128x3xf32, #tpu.memory_space<vmem>>, %arg1: memref<3x8xf32, #tpu.memory_space<vmem>>, %arg2: memref<1x8xf32, #tpu.memory_space<vmem>>, %arg3: memref<8x32xf32, #tpu.memory_space<vmem>>, %arg4: memref<1x32xf32, #tpu.memory_space<vmem>>, %arg5: memref<128x32xf32, #tpu.memory_space<vmem>>) attributes {dimension_semantics = [], scalar_prefetch = 0 : i64, scratch_operands = 0 : i64, tpu.core_type = #tpu.core_type<tc>} {
    %c0 = arith.constant 0 : index
    %c0_0 = arith.constant 0 : index
    %0 = vector.load %arg0[%c0, %c0_0] : memref<128x3xf32, #tpu.memory_space<vmem>>, vector<128x3xf32>
    %c0_1 = arith.constant 0 : index
    %c0_2 = arith.constant 0 : index
    %1 = vector.load %arg1[%c0_1, %c0_2] : memref<3x8xf32, #tpu.memory_space<vmem>>, vector<3x8xf32>
    %cst = arith.constant dense<0.000000e+00> : vector<128x8xf32>
    %2 = tpu.matmul %0, %1, %cst {dimension_numbers = #tpu.dot_dimension_numbers<[1], [0], [0], [1], [0, 0, 1, 1], [], []>} : vector<128x3xf32>, vector<3x8xf32>, vector<128x8xf32> -> vector<128x8xf32>
    %c0_3 = arith.constant 0 : index
    %c0_4 = arith.constant 0 : index
    %3 = vector.load %arg2[%c0_3, %c0_4] : memref<1x8xf32, #tpu.memory_space<vmem>>, vector<1x8xf32>
    %4 = vector.broadcast %3 : vector<1x8xf32> to vector<128x8xf32>
    %5 = arith.addf %2, %4 : vector<128x8xf32>
    %cst_5 = arith.constant 0.000000e+00 : f32
    %6 = vector.broadcast %cst_5 : f32 to vector<128x8xf32>
    %7 = arith.maximumf %5, %6 : vector<128x8xf32>
    %c0_6 = arith.constant 0 : index
    %c0_7 = arith.constant 0 : index
    %8 = vector.load %arg3[%c0_6, %c0_7] : memref<8x32xf32, #tpu.memory_space<vmem>>, vector<8x32xf32>
    %cst_8 = arith.constant dense<0.000000e+00> : vector<128x32xf32>
    %9 = tpu.matmul %7, %8, %cst_8 {dimension_numbers = #tpu.dot_dimension_numbers<[1], [0], [0], [1], [0, 0, 1, 1], [], []>} : vector<128x8xf32>, vector<8x32xf32>, vector<128x32xf32> -> vector<128x32xf32>
    %c0_9 = arith.constant 0 : index
    %c0_10 = arith.constant 0 : index
    %10 = vector.load %arg4[%c0_9, %c0_10] : memref<1x32xf32, #tpu.memory_space<vmem>>, vector<1x32xf32>
    %11 = vector.broadcast %10 : vector<1x32xf32> to vector<128x32xf32>
    %12 = arith.addf %9, %11 : vector<128x32xf32>
    %c0_11 = arith.constant 0 : index
    %c0_12 = arith.constant 0 : index
    %13 = vector.load %arg5[%c0_11, %c0_12] : memref<128x32xf32, #tpu.memory_space<vmem>>, vector<128x32xf32>
    tpu.vector_store %arg5[%c0_11, %c0_12], %12 {strides = array<i32>} : memref<128x32xf32, #tpu.memory_space<vmem>>, vector<128x32xf32>,
    return
  }
}

module attributes {stable_mosaic.version = 11 : i64} {
  func.func @_mha_ln_kernel(%arg0: i32, %arg1: memref<1x64x32xf32, #tpu.memory_space<vmem>>, %arg2: memref<1x64x32xf32, #tpu.memory_space<vmem>>, %arg3: memref<1x64x32xf32, #tpu.memory_space<vmem>>, %arg4: memref<1x64x32xf32, #tpu.memory_space<vmem>>, %arg5: memref<1x1x64xf32, #tpu.memory_space<vmem>>, %arg6: memref<32x32xf32, #tpu.memory_space<vmem>>, %arg7: memref<1x32xf32, #tpu.memory_space<vmem>>, %arg8: memref<32x32xf32, #tpu.memory_space<vmem>>, %arg9: memref<1x32xf32, #tpu.memory_space<vmem>>, %arg10: memref<32x32xf32, #tpu.memory_space<vmem>>, %arg11: memref<1x32xf32, #tpu.memory_space<vmem>>, %arg12: memref<32x32xf32, #tpu.memory_space<vmem>>, %arg13: memref<1x32xf32, #tpu.memory_space<vmem>>, %arg14: memref<1x32xf32, #tpu.memory_space<vmem>>, %arg15: memref<1x32xf32, #tpu.memory_space<vmem>>, %arg16: memref<1x64x32xf32, #tpu.memory_space<vmem>>) attributes {dimension_semantics = [#tpu.dimension_semantics<parallel>], iteration_bounds = array<i64: 2>, scalar_prefetch = 0 : i64, scratch_operands = 0 : i64, tpu.core_type = #tpu.core_type<tc>, window_params = [{transform_indices = @transform_0, window_bounds = array<i64: 1, 64, 32>}, {transform_indices = @transform_1, window_bounds = array<i64: 1, 64, 32>}, {transform_indices = @transform_2, window_bounds = array<i64: 1, 64, 32>}, {transform_indices = @transform_3, window_bounds = array<i64: 1, 64, 32>}, {transform_indices = @transform_4, window_bounds = array<i64: 1, 1, 64>}, {pipeline_mode = #tpu.pipeline_mode<synchronous>, transform_indices = @transform_5, window_bounds = array<i64: 32, 32>}, {pipeline_mode = #tpu.pipeline_mode<synchronous>, transform_indices = @transform_6, window_bounds = array<i64: 1, 32>}, {pipeline_mode = #tpu.pipeline_mode<synchronous>, transform_indices = @transform_7, window_bounds = array<i64: 32, 32>}, {pipeline_mode = #tpu.pipeline_mode<synchronous>, transform_indices = @transform_8, window_bounds = array<i64: 1, 32>}, {pipeline_mode = #tpu.pipeline_mode<synchronous>, transform_indices = @transform_9, window_bounds = array<i64: 32, 32>}, {pipeline_mode = #tpu.pipeline_mode<synchronous>, transform_indices = @transform_10, window_bounds = array<i64: 1, 32>}, {pipeline_mode = #tpu.pipeline_mode<synchronous>, transform_indices = @transform_11, window_bounds = array<i64: 32, 32>}, {pipeline_mode = #tpu.pipeline_mode<synchronous>, transform_indices = @transform_12, window_bounds = array<i64: 1, 32>}, {pipeline_mode = #tpu.pipeline_mode<synchronous>, transform_indices = @transform_13, window_bounds = array<i64: 1, 32>}, {pipeline_mode = #tpu.pipeline_mode<synchronous>, transform_indices = @transform_14, window_bounds = array<i64: 1, 32>}, {transform_indices = @transform_15, window_bounds = array<i64: 1, 64, 32>}]} {
    %c0 = arith.constant 0 : index
    %c0_0 = arith.constant 0 : index
    %c0_1 = arith.constant 0 : index
    %0 = vector.load %arg1[%c0, %c0_0, %c0_1] : memref<1x64x32xf32, #tpu.memory_space<vmem>>, vector<1x64x32xf32>
    %1 = vector.shape_cast %0 : vector<1x64x32xf32> to vector<64x32xf32>
    %c0_2 = arith.constant 0 : index
    %c0_3 = arith.constant 0 : index
    %c0_4 = arith.constant 0 : index
    %2 = vector.load %arg2[%c0_2, %c0_3, %c0_4] : memref<1x64x32xf32, #tpu.memory_space<vmem>>, vector<1x64x32xf32>
    %3 = vector.shape_cast %2 : vector<1x64x32xf32> to vector<64x32xf32>
    %c0_5 = arith.constant 0 : index
    %c0_6 = arith.constant 0 : index
    %c0_7 = arith.constant 0 : index
    %4 = vector.load %arg3[%c0_5, %c0_6, %c0_7] : memref<1x64x32xf32, #tpu.memory_space<vmem>>, vector<1x64x32xf32>
    %5 = vector.shape_cast %4 : vector<1x64x32xf32> to vector<64x32xf32>
    %c0_8 = arith.constant 0 : index
    %c0_9 = arith.constant 0 : index
    %c0_10 = arith.constant 0 : index
    %6 = vector.load %arg4[%c0_8, %c0_9, %c0_10] : memref<1x64x32xf32, #tpu.memory_space<vmem>>, vector<1x64x32xf32>
    %7 = vector.shape_cast %6 : vector<1x64x32xf32> to vector<64x32xf32>
    %c0_11 = arith.constant 0 : index
    %c0_12 = arith.constant 0 : index
    %c0_13 = arith.constant 0 : index
    %8 = vector.load %arg5[%c0_11, %c0_12, %c0_13] : memref<1x1x64xf32, #tpu.memory_space<vmem>>, vector<1x1x64xf32>
    %9 = vector.shape_cast %8 : vector<1x1x64xf32> to vector<1x64xf32>
    %10 = arith.addf %1, %3 : vector<64x32xf32>
    %c0_14 = arith.constant 0 : index
    %c0_15 = arith.constant 0 : index
    %11 = vector.load %arg6[%c0_14, %c0_15] : memref<32x32xf32, #tpu.memory_space<vmem>>, vector<32x32xf32>
    %cst = arith.constant dense<0.000000e+00> : vector<64x32xf32>
    %12 = tpu.matmul %10, %11, %cst {dimension_numbers = #tpu.dot_dimension_numbers<[1], [0], [0], [1], [0, 0, 1, 1], [], []>} : vector<64x32xf32>, vector<32x32xf32>, vector<64x32xf32> -> vector<64x32xf32>
    %c0_16 = arith.constant 0 : index
    %c0_17 = arith.constant 0 : index
    %13 = vector.load %arg7[%c0_16, %c0_17] : memref<1x32xf32, #tpu.memory_space<vmem>>, vector<1x32xf32>
    %14 = vector.broadcast %13 : vector<1x32xf32> to vector<64x32xf32>
    %15 = arith.addf %12, %14 : vector<64x32xf32>
    %16 = arith.addf %5, %7 : vector<64x32xf32>
    %c0_18 = arith.constant 0 : index
    %c0_19 = arith.constant 0 : index
    %17 = vector.load %arg8[%c0_18, %c0_19] : memref<32x32xf32, #tpu.memory_space<vmem>>, vector<32x32xf32>
    %cst_20 = arith.constant dense<0.000000e+00> : vector<64x32xf32>
    %18 = tpu.matmul %16, %17, %cst_20 {dimension_numbers = #tpu.dot_dimension_numbers<[1], [0], [0], [1], [0, 0, 1, 1], [], []>} : vector<64x32xf32>, vector<32x32xf32>, vector<64x32xf32> -> vector<64x32xf32>
    %c0_21 = arith.constant 0 : index
    %c0_22 = arith.constant 0 : index
    %19 = vector.load %arg9[%c0_21, %c0_22] : memref<1x32xf32, #tpu.memory_space<vmem>>, vector<1x32xf32>
    %20 = vector.broadcast %19 : vector<1x32xf32> to vector<64x32xf32>
    %21 = arith.addf %18, %20 : vector<64x32xf32>
    %c0_23 = arith.constant 0 : index
    %c0_24 = arith.constant 0 : index
    %22 = vector.load %arg10[%c0_23, %c0_24] : memref<32x32xf32, #tpu.memory_space<vmem>>, vector<32x32xf32>
    %cst_25 = arith.constant dense<0.000000e+00> : vector<64x32xf32>
    %23 = tpu.matmul %5, %22, %cst_25 {dimension_numbers = #tpu.dot_dimension_numbers<[1], [0], [0], [1], [0, 0, 1, 1], [], []>} : vector<64x32xf32>, vector<32x32xf32>, vector<64x32xf32> -> vector<64x32xf32>
    %c0_26 = arith.constant 0 : index
    %c0_27 = arith.constant 0 : index
    %24 = vector.load %arg11[%c0_26, %c0_27] : memref<1x32xf32, #tpu.memory_space<vmem>>, vector<1x32xf32>
    %25 = vector.broadcast %24 : vector<1x32xf32> to vector<64x32xf32>
    %26 = arith.addf %23, %25 : vector<64x32xf32>
    %c0_28 = arith.constant 0 : index
    %c0_29 = arith.constant 0 : index
    %27 = vector.load %arg12[%c0_28, %c0_29] : memref<32x32xf32, #tpu.memory_space<vmem>>, vector<32x32xf32>
    %cst_30 = arith.constant 0.000000e+00 : f32
    %28 = vector.broadcast %cst_30 : f32 to vector<64x32xf32>
    %29 = vector.extract_strided_slice %15 {offsets = [0, 0], sizes = [64, 8], strides = [1, 1]} : vector<64x32xf32> to vector<64x8xf32>
    %30 = vector.extract_strided_slice %21 {offsets = [0, 0], sizes = [64, 8], strides = [1, 1]} : vector<64x32xf32> to vector<64x8xf32>
    %31 = vector.extract_strided_slice %26 {offsets = [0, 0], sizes = [64, 8], strides = [1, 1]} : vector<64x32xf32> to vector<64x8xf32>
    %cst_31 = arith.constant dense<0.000000e+00> : vector<64x64xf32>
    %32 = tpu.matmul %29, %30, %cst_31 {dimension_numbers = #tpu.dot_dimension_numbers<[1], [1], [0], [0], [0, 0, 1, 0], [], []>} : vector<64x8xf32>, vector<64x8xf32>, vector<64x64xf32> -> vector<64x64xf32>
    %cst_32 = arith.constant 0.353553385 : f32
    %33 = vector.broadcast %cst_32 : f32 to vector<64x64xf32>
    %34 = arith.mulf %32, %33 : vector<64x64xf32>
    %35 = vector.broadcast %9 : vector<1x64xf32> to vector<64x64xf32>
    %36 = arith.addf %34, %35 : vector<64x64xf32>
    %cst_33 = arith.constant dense<0xFF800000> : vector<64xf32>
    %37 = vector.multi_reduction <maximumf>, %36, %cst_33 [1] : vector<64x64xf32> to vector<64xf32>
    %38 = vector.shape_cast %37 : vector<64xf32> to vector<64x1xf32>
    %39 = vector.broadcast %38 : vector<64x1xf32> to vector<64x64xf32>
    %40 = arith.subf %36, %39 : vector<64x64xf32>
    %41 = math.exp %40 : vector<64x64xf32>
    %cst_34 = arith.constant dense<0.000000e+00> : vector<64xf32>
    %42 = vector.multi_reduction <add>, %41, %cst_34 [1] : vector<64x64xf32> to vector<64xf32>
    %43 = vector.shape_cast %42 : vector<64xf32> to vector<64x1xf32>
    %44 = tpu.reciprocal %43 {approx = true} : vector<64x1xf32> -> vector<64x1xf32>
    %45 = vector.broadcast %44 : vector<64x1xf32> to vector<64x64xf32>
    %46 = arith.mulf %41, %45 : vector<64x64xf32>
    %cst_35 = arith.constant dense<0.000000e+00> : vector<64x8xf32>
    %47 = tpu.matmul %46, %31, %cst_35 {dimension_numbers = #tpu.dot_dimension_numbers<[1], [0], [0], [1], [0, 0, 1, 1], [], []>} : vector<64x64xf32>, vector<64x8xf32>, vector<64x8xf32> -> vector<64x8xf32>
    %48 = vector.extract_strided_slice %27 {offsets = [0, 0], sizes = [8, 32], strides = [1, 1]} : vector<32x32xf32> to vector<8x32xf32>
    %cst_36 = arith.constant dense<0.000000e+00> : vector<64x32xf32>
    %49 = tpu.matmul %47, %48, %cst_36 {dimension_numbers = #tpu.dot_dimension_numbers<[1], [0], [0], [1], [0, 0, 1, 1], [], []>} : vector<64x8xf32>, vector<8x32xf32>, vector<64x32xf32> -> vector<64x32xf32>
    %50 = arith.addf %28, %49 : vector<64x32xf32>
    %51 = vector.extract_strided_slice %15 {offsets = [0, 8], sizes = [64, 8], strides = [1, 1]} : vector<64x32xf32> to vector<64x8xf32>
    %52 = vector.extract_strided_slice %21 {offsets = [0, 8], sizes = [64, 8], strides = [1, 1]} : vector<64x32xf32> to vector<64x8xf32>
    %53 = vector.extract_strided_slice %26 {offsets = [0, 8], sizes = [64, 8], strides = [1, 1]} : vector<64x32xf32> to vector<64x8xf32>
    %cst_37 = arith.constant dense<0.000000e+00> : vector<64x64xf32>
    %54 = tpu.matmul %51, %52, %cst_37 {dimension_numbers = #tpu.dot_dimension_numbers<[1], [1], [0], [0], [0, 0, 1, 0], [], []>} : vector<64x8xf32>, vector<64x8xf32>, vector<64x64xf32> -> vector<64x64xf32>
    %cst_38 = arith.constant 0.353553385 : f32
    %55 = vector.broadcast %cst_38 : f32 to vector<64x64xf32>
    %56 = arith.mulf %54, %55 : vector<64x64xf32>
    %57 = vector.broadcast %9 : vector<1x64xf32> to vector<64x64xf32>
    %58 = arith.addf %56, %57 : vector<64x64xf32>
    %cst_39 = arith.constant dense<0xFF800000> : vector<64xf32>
    %59 = vector.multi_reduction <maximumf>, %58, %cst_39 [1] : vector<64x64xf32> to vector<64xf32>
    %60 = vector.shape_cast %59 : vector<64xf32> to vector<64x1xf32>
    %61 = vector.broadcast %60 : vector<64x1xf32> to vector<64x64xf32>
    %62 = arith.subf %58, %61 : vector<64x64xf32>
    %63 = math.exp %62 : vector<64x64xf32>
    %cst_40 = arith.constant dense<0.000000e+00> : vector<64xf32>
    %64 = vector.multi_reduction <add>, %63, %cst_40 [1] : vector<64x64xf32> to vector<64xf32>
    %65 = vector.shape_cast %64 : vector<64xf32> to vector<64x1xf32>
    %66 = tpu.reciprocal %65 {approx = true} : vector<64x1xf32> -> vector<64x1xf32>
    %67 = vector.broadcast %66 : vector<64x1xf32> to vector<64x64xf32>
    %68 = arith.mulf %63, %67 : vector<64x64xf32>
    %cst_41 = arith.constant dense<0.000000e+00> : vector<64x8xf32>
    %69 = tpu.matmul %68, %53, %cst_41 {dimension_numbers = #tpu.dot_dimension_numbers<[1], [0], [0], [1], [0, 0, 1, 1], [], []>} : vector<64x64xf32>, vector<64x8xf32>, vector<64x8xf32> -> vector<64x8xf32>
    %70 = vector.extract_strided_slice %27 {offsets = [8, 0], sizes = [8, 32], strides = [1, 1]} : vector<32x32xf32> to vector<8x32xf32>
    %cst_42 = arith.constant dense<0.000000e+00> : vector<64x32xf32>
    %71 = tpu.matmul %69, %70, %cst_42 {dimension_numbers = #tpu.dot_dimension_numbers<[1], [0], [0], [1], [0, 0, 1, 1], [], []>} : vector<64x8xf32>, vector<8x32xf32>, vector<64x32xf32> -> vector<64x32xf32>
    %72 = arith.addf %50, %71 : vector<64x32xf32>
    %73 = vector.extract_strided_slice %15 {offsets = [0, 16], sizes = [64, 8], strides = [1, 1]} : vector<64x32xf32> to vector<64x8xf32>
    %74 = vector.extract_strided_slice %21 {offsets = [0, 16], sizes = [64, 8], strides = [1, 1]} : vector<64x32xf32> to vector<64x8xf32>
    %75 = vector.extract_strided_slice %26 {offsets = [0, 16], sizes = [64, 8], strides = [1, 1]} : vector<64x32xf32> to vector<64x8xf32>
    %cst_43 = arith.constant dense<0.000000e+00> : vector<64x64xf32>
    %76 = tpu.matmul %73, %74, %cst_43 {dimension_numbers = #tpu.dot_dimension_numbers<[1], [1], [0], [0], [0, 0, 1, 0], [], []>} : vector<64x8xf32>, vector<64x8xf32>, vector<64x64xf32> -> vector<64x64xf32>
    %cst_44 = arith.constant 0.353553385 : f32
    %77 = vector.broadcast %cst_44 : f32 to vector<64x64xf32>
    %78 = arith.mulf %76, %77 : vector<64x64xf32>
    %79 = vector.broadcast %9 : vector<1x64xf32> to vector<64x64xf32>
    %80 = arith.addf %78, %79 : vector<64x64xf32>
    %cst_45 = arith.constant dense<0xFF800000> : vector<64xf32>
    %81 = vector.multi_reduction <maximumf>, %80, %cst_45 [1] : vector<64x64xf32> to vector<64xf32>
    %82 = vector.shape_cast %81 : vector<64xf32> to vector<64x1xf32>
    %83 = vector.broadcast %82 : vector<64x1xf32> to vector<64x64xf32>
    %84 = arith.subf %80, %83 : vector<64x64xf32>
    %85 = math.exp %84 : vector<64x64xf32>
    %cst_46 = arith.constant dense<0.000000e+00> : vector<64xf32>
    %86 = vector.multi_reduction <add>, %85, %cst_46 [1] : vector<64x64xf32> to vector<64xf32>
    %87 = vector.shape_cast %86 : vector<64xf32> to vector<64x1xf32>
    %88 = tpu.reciprocal %87 {approx = true} : vector<64x1xf32> -> vector<64x1xf32>
    %89 = vector.broadcast %88 : vector<64x1xf32> to vector<64x64xf32>
    %90 = arith.mulf %85, %89 : vector<64x64xf32>
    %cst_47 = arith.constant dense<0.000000e+00> : vector<64x8xf32>
    %91 = tpu.matmul %90, %75, %cst_47 {dimension_numbers = #tpu.dot_dimension_numbers<[1], [0], [0], [1], [0, 0, 1, 1], [], []>} : vector<64x64xf32>, vector<64x8xf32>, vector<64x8xf32> -> vector<64x8xf32>
    %92 = vector.extract_strided_slice %27 {offsets = [16, 0], sizes = [8, 32], strides = [1, 1]} : vector<32x32xf32> to vector<8x32xf32>
    %cst_48 = arith.constant dense<0.000000e+00> : vector<64x32xf32>
    %93 = tpu.matmul %91, %92, %cst_48 {dimension_numbers = #tpu.dot_dimension_numbers<[1], [0], [0], [1], [0, 0, 1, 1], [], []>} : vector<64x8xf32>, vector<8x32xf32>, vector<64x32xf32> -> vector<64x32xf32>
    %94 = arith.addf %72, %93 : vector<64x32xf32>
    %95 = vector.extract_strided_slice %15 {offsets = [0, 24], sizes = [64, 8], strides = [1, 1]} : vector<64x32xf32> to vector<64x8xf32>
    %96 = vector.extract_strided_slice %21 {offsets = [0, 24], sizes = [64, 8], strides = [1, 1]} : vector<64x32xf32> to vector<64x8xf32>
    %97 = vector.extract_strided_slice %26 {offsets = [0, 24], sizes = [64, 8], strides = [1, 1]} : vector<64x32xf32> to vector<64x8xf32>
    %cst_49 = arith.constant dense<0.000000e+00> : vector<64x64xf32>
    %98 = tpu.matmul %95, %96, %cst_49 {dimension_numbers = #tpu.dot_dimension_numbers<[1], [1], [0], [0], [0, 0, 1, 0], [], []>} : vector<64x8xf32>, vector<64x8xf32>, vector<64x64xf32> -> vector<64x64xf32>
    %cst_50 = arith.constant 0.353553385 : f32
    %99 = vector.broadcast %cst_50 : f32 to vector<64x64xf32>
    %100 = arith.mulf %98, %99 : vector<64x64xf32>
    %101 = vector.broadcast %9 : vector<1x64xf32> to vector<64x64xf32>
    %102 = arith.addf %100, %101 : vector<64x64xf32>
    %cst_51 = arith.constant dense<0xFF800000> : vector<64xf32>
    %103 = vector.multi_reduction <maximumf>, %102, %cst_51 [1] : vector<64x64xf32> to vector<64xf32>
    %104 = vector.shape_cast %103 : vector<64xf32> to vector<64x1xf32>
    %105 = vector.broadcast %104 : vector<64x1xf32> to vector<64x64xf32>
    %106 = arith.subf %102, %105 : vector<64x64xf32>
    %107 = math.exp %106 : vector<64x64xf32>
    %cst_52 = arith.constant dense<0.000000e+00> : vector<64xf32>
    %108 = vector.multi_reduction <add>, %107, %cst_52 [1] : vector<64x64xf32> to vector<64xf32>
    %109 = vector.shape_cast %108 : vector<64xf32> to vector<64x1xf32>
    %110 = tpu.reciprocal %109 {approx = true} : vector<64x1xf32> -> vector<64x1xf32>
    %111 = vector.broadcast %110 : vector<64x1xf32> to vector<64x64xf32>
    %112 = arith.mulf %107, %111 : vector<64x64xf32>
    %cst_53 = arith.constant dense<0.000000e+00> : vector<64x8xf32>
    %113 = tpu.matmul %112, %97, %cst_53 {dimension_numbers = #tpu.dot_dimension_numbers<[1], [0], [0], [1], [0, 0, 1, 1], [], []>} : vector<64x64xf32>, vector<64x8xf32>, vector<64x8xf32> -> vector<64x8xf32>
    %114 = vector.extract_strided_slice %27 {offsets = [24, 0], sizes = [8, 32], strides = [1, 1]} : vector<32x32xf32> to vector<8x32xf32>
    %cst_54 = arith.constant dense<0.000000e+00> : vector<64x32xf32>
    %115 = tpu.matmul %113, %114, %cst_54 {dimension_numbers = #tpu.dot_dimension_numbers<[1], [0], [0], [1], [0, 0, 1, 1], [], []>} : vector<64x8xf32>, vector<8x32xf32>, vector<64x32xf32> -> vector<64x32xf32>
    %116 = arith.addf %94, %115 : vector<64x32xf32>
    %117 = arith.addf %1, %116 : vector<64x32xf32>
    %c0_55 = arith.constant 0 : index
    %c0_56 = arith.constant 0 : index
    %118 = vector.load %arg13[%c0_55, %c0_56] : memref<1x32xf32, #tpu.memory_space<vmem>>, vector<1x32xf32>
    %119 = vector.broadcast %118 : vector<1x32xf32> to vector<64x32xf32>
    %120 = arith.addf %117, %119 : vector<64x32xf32>
    %cst_57 = arith.constant dense<0.000000e+00> : vector<64xf32>
    %121 = vector.multi_reduction <add>, %120, %cst_57 [1] : vector<64x32xf32> to vector<64xf32>
    %122 = vector.shape_cast %121 : vector<64xf32> to vector<64x1xf32>
    %cst_58 = arith.constant 3.200000e+01 : f32
    %123 = vector.broadcast %cst_58 : f32 to vector<64x1xf32>
    %124 = arith.divf %122, %123 : vector<64x1xf32>
    %125 = vector.broadcast %124 : vector<64x1xf32> to vector<64x32xf32>
    %126 = arith.subf %120, %125 : vector<64x32xf32>
    %127 = arith.mulf %126, %126 : vector<64x32xf32>
    %cst_59 = arith.constant dense<0.000000e+00> : vector<64xf32>
    %128 = vector.multi_reduction <add>, %127, %cst_59 [1] : vector<64x32xf32> to vector<64xf32>
    %129 = vector.shape_cast %128 : vector<64xf32> to vector<64x1xf32>
    %cst_60 = arith.constant 3.200000e+01 : f32
    %130 = vector.broadcast %cst_60 : f32 to vector<64x1xf32>
    %131 = arith.divf %129, %130 : vector<64x1xf32>
    %132 = vector.broadcast %124 : vector<64x1xf32> to vector<64x32xf32>
    %133 = arith.subf %120, %132 : vector<64x32xf32>
    %cst_61 = arith.constant 9.99999974E-6 : f32
    %134 = vector.broadcast %cst_61 : f32 to vector<64x1xf32>
    %135 = arith.addf %131, %134 : vector<64x1xf32>
    %136 = math.rsqrt %135 : vector<64x1xf32>
    %137 = vector.broadcast %136 : vector<64x1xf32> to vector<64x32xf32>
    %138 = arith.mulf %133, %137 : vector<64x32xf32>
    %c0_62 = arith.constant 0 : index
    %c0_63 = arith.constant 0 : index
    %139 = vector.load %arg14[%c0_62, %c0_63] : memref<1x32xf32, #tpu.memory_space<vmem>>, vector<1x32xf32>
    %140 = vector.broadcast %139 : vector<1x32xf32> to vector<64x32xf32>
    %141 = arith.mulf %138, %140 : vector<64x32xf32>
    %c0_64 = arith.constant 0 : index
    %c0_65 = arith.constant 0 : index
    %142 = vector.load %arg15[%c0_64, %c0_65] : memref<1x32xf32, #tpu.memory_space<vmem>>, vector<1x32xf32>
    %143 = vector.broadcast %142 : vector<1x32xf32> to vector<64x32xf32>
    %144 = arith.addf %141, %143 : vector<64x32xf32>
    %c0_66 = arith.constant 0 : index
    %c0_67 = arith.constant 0 : index
    %c0_68 = arith.constant 0 : index
    %145 = vector.load %arg16[%c0_66, %c0_67, %c0_68] : memref<1x64x32xf32, #tpu.memory_space<vmem>>, vector<1x64x32xf32>
    %146 = vector.shape_cast %145 : vector<1x64x32xf32> to vector<64x32xf32>
    %147 = vector.shape_cast %144 : vector<64x32xf32> to vector<1x64x32xf32>
    tpu.vector_store %arg16[%c0_66, %c0_67, %c0_68], %147 {strides = array<i32>} : memref<1x64x32xf32, #tpu.memory_space<vmem>>, vector<1x64x32xf32>,
    return
  }
  func.func @transform_0(%arg0: i32) -> (i32, i32, i32) {
    %c0_i32 = arith.constant 0 : i32
    %c0_i32_0 = arith.constant 0 : i32
    %c0_i32_1 = arith.constant 0 : i32
    return %arg0, %c0_i32, %c0_i32_0 : i32, i32, i32
  }
  func.func @transform_1(%arg0: i32) -> (i32, i32, i32) {
    %c0_i32 = arith.constant 0 : i32
    %c0_i32_0 = arith.constant 0 : i32
    %c0_i32_1 = arith.constant 0 : i32
    return %arg0, %c0_i32, %c0_i32_0 : i32, i32, i32
  }
  func.func @transform_2(%arg0: i32) -> (i32, i32, i32) {
    %c0_i32 = arith.constant 0 : i32
    %c0_i32_0 = arith.constant 0 : i32
    %c0_i32_1 = arith.constant 0 : i32
    return %arg0, %c0_i32, %c0_i32_0 : i32, i32, i32
  }
  func.func @transform_3(%arg0: i32) -> (i32, i32, i32) {
    %c0_i32 = arith.constant 0 : i32
    %c0_i32_0 = arith.constant 0 : i32
    %c0_i32_1 = arith.constant 0 : i32
    return %arg0, %c0_i32, %c0_i32_0 : i32, i32, i32
  }
  func.func @transform_4(%arg0: i32) -> (i32, i32, i32) {
    %c0_i32 = arith.constant 0 : i32
    %c0_i32_0 = arith.constant 0 : i32
    %c0_i32_1 = arith.constant 0 : i32
    return %arg0, %c0_i32, %c0_i32_0 : i32, i32, i32
  }
  func.func @transform_5(%arg0: i32) -> (i32, i32) {
    %c0_i32 = arith.constant 0 : i32
    %c0_i32_0 = arith.constant 0 : i32
    %c0_i32_1 = arith.constant 0 : i32
    return %c0_i32, %c0_i32_0 : i32, i32
  }
  func.func @transform_6(%arg0: i32) -> (i32, i32) {
    %c0_i32 = arith.constant 0 : i32
    %c0_i32_0 = arith.constant 0 : i32
    %c0_i32_1 = arith.constant 0 : i32
    return %c0_i32, %c0_i32_0 : i32, i32
  }
  func.func @transform_7(%arg0: i32) -> (i32, i32) {
    %c0_i32 = arith.constant 0 : i32
    %c0_i32_0 = arith.constant 0 : i32
    %c0_i32_1 = arith.constant 0 : i32
    return %c0_i32, %c0_i32_0 : i32, i32
  }
  func.func @transform_8(%arg0: i32) -> (i32, i32) {
    %c0_i32 = arith.constant 0 : i32
    %c0_i32_0 = arith.constant 0 : i32
    %c0_i32_1 = arith.constant 0 : i32
    return %c0_i32, %c0_i32_0 : i32, i32
  }
  func.func @transform_9(%arg0: i32) -> (i32, i32) {
    %c0_i32 = arith.constant 0 : i32
    %c0_i32_0 = arith.constant 0 : i32
    %c0_i32_1 = arith.constant 0 : i32
    return %c0_i32, %c0_i32_0 : i32, i32
  }
  func.func @transform_10(%arg0: i32) -> (i32, i32) {
    %c0_i32 = arith.constant 0 : i32
    %c0_i32_0 = arith.constant 0 : i32
    %c0_i32_1 = arith.constant 0 : i32
    return %c0_i32, %c0_i32_0 : i32, i32
  }
  func.func @transform_11(%arg0: i32) -> (i32, i32) {
    %c0_i32 = arith.constant 0 : i32
    %c0_i32_0 = arith.constant 0 : i32
    %c0_i32_1 = arith.constant 0 : i32
    return %c0_i32, %c0_i32_0 : i32, i32
  }
  func.func @transform_12(%arg0: i32) -> (i32, i32) {
    %c0_i32 = arith.constant 0 : i32
    %c0_i32_0 = arith.constant 0 : i32
    %c0_i32_1 = arith.constant 0 : i32
    return %c0_i32, %c0_i32_0 : i32, i32
  }
  func.func @transform_13(%arg0: i32) -> (i32, i32) {
    %c0_i32 = arith.constant 0 : i32
    %c0_i32_0 = arith.constant 0 : i32
    %c0_i32_1 = arith.constant 0 : i32
    return %c0_i32, %c0_i32_0 : i32, i32
  }
  func.func @transform_14(%arg0: i32) -> (i32, i32) {
    %c0_i32 = arith.constant 0 : i32
    %c0_i32_0 = arith.constant 0 : i32
    %c0_i32_1 = arith.constant 0 : i32
    return %c0_i32, %c0_i32_0 : i32, i32
  }
  func.func @transform_15(%arg0: i32) -> (i32, i32, i32) {
    %c0_i32 = arith.constant 0 : i32
    %c0_i32_0 = arith.constant 0 : i32
    %c0_i32_1 = arith.constant 0 : i32
    return %arg0, %c0_i32, %c0_i32_0 : i32, i32, i32
  }
}

module attributes {stable_mosaic.version = 11 : i64} {
  func.func @_ffn_ln_kernel(%arg0: memref<128x32xf32, #tpu.memory_space<vmem>>, %arg1: memref<32x64xf32, #tpu.memory_space<vmem>>, %arg2: memref<1x64xf32, #tpu.memory_space<vmem>>, %arg3: memref<64x32xf32, #tpu.memory_space<vmem>>, %arg4: memref<1x32xf32, #tpu.memory_space<vmem>>, %arg5: memref<1x32xf32, #tpu.memory_space<vmem>>, %arg6: memref<1x32xf32, #tpu.memory_space<vmem>>, %arg7: memref<128x32xf32, #tpu.memory_space<vmem>>) attributes {dimension_semantics = [], scalar_prefetch = 0 : i64, scratch_operands = 0 : i64, tpu.core_type = #tpu.core_type<tc>} {
    %c0 = arith.constant 0 : index
    %c0_0 = arith.constant 0 : index
    %0 = vector.load %arg0[%c0, %c0_0] : memref<128x32xf32, #tpu.memory_space<vmem>>, vector<128x32xf32>
    %c0_1 = arith.constant 0 : index
    %c0_2 = arith.constant 0 : index
    %1 = vector.load %arg1[%c0_1, %c0_2] : memref<32x64xf32, #tpu.memory_space<vmem>>, vector<32x64xf32>
    %cst = arith.constant dense<0.000000e+00> : vector<128x64xf32>
    %2 = tpu.matmul %0, %1, %cst {dimension_numbers = #tpu.dot_dimension_numbers<[1], [0], [0], [1], [0, 0, 1, 1], [], []>} : vector<128x32xf32>, vector<32x64xf32>, vector<128x64xf32> -> vector<128x64xf32>
    %c0_3 = arith.constant 0 : index
    %c0_4 = arith.constant 0 : index
    %3 = vector.load %arg2[%c0_3, %c0_4] : memref<1x64xf32, #tpu.memory_space<vmem>>, vector<1x64xf32>
    %4 = vector.broadcast %3 : vector<1x64xf32> to vector<128x64xf32>
    %5 = arith.addf %2, %4 : vector<128x64xf32>
    %cst_5 = arith.constant 0.000000e+00 : f32
    %6 = vector.broadcast %cst_5 : f32 to vector<128x64xf32>
    %7 = arith.maximumf %5, %6 : vector<128x64xf32>
    %c0_6 = arith.constant 0 : index
    %c0_7 = arith.constant 0 : index
    %8 = vector.load %arg3[%c0_6, %c0_7] : memref<64x32xf32, #tpu.memory_space<vmem>>, vector<64x32xf32>
    %cst_8 = arith.constant dense<0.000000e+00> : vector<128x32xf32>
    %9 = tpu.matmul %7, %8, %cst_8 {dimension_numbers = #tpu.dot_dimension_numbers<[1], [0], [0], [1], [0, 0, 1, 1], [], []>} : vector<128x64xf32>, vector<64x32xf32>, vector<128x32xf32> -> vector<128x32xf32>
    %10 = arith.addf %0, %9 : vector<128x32xf32>
    %c0_9 = arith.constant 0 : index
    %c0_10 = arith.constant 0 : index
    %11 = vector.load %arg4[%c0_9, %c0_10] : memref<1x32xf32, #tpu.memory_space<vmem>>, vector<1x32xf32>
    %12 = vector.broadcast %11 : vector<1x32xf32> to vector<128x32xf32>
    %13 = arith.addf %10, %12 : vector<128x32xf32>
    %cst_11 = arith.constant dense<0.000000e+00> : vector<128xf32>
    %14 = vector.multi_reduction <add>, %13, %cst_11 [1] : vector<128x32xf32> to vector<128xf32>
    %15 = vector.shape_cast %14 : vector<128xf32> to vector<128x1xf32>
    %cst_12 = arith.constant 3.200000e+01 : f32
    %16 = vector.broadcast %cst_12 : f32 to vector<128x1xf32>
    %17 = arith.divf %15, %16 : vector<128x1xf32>
    %18 = vector.broadcast %17 : vector<128x1xf32> to vector<128x32xf32>
    %19 = arith.subf %13, %18 : vector<128x32xf32>
    %20 = arith.mulf %19, %19 : vector<128x32xf32>
    %cst_13 = arith.constant dense<0.000000e+00> : vector<128xf32>
    %21 = vector.multi_reduction <add>, %20, %cst_13 [1] : vector<128x32xf32> to vector<128xf32>
    %22 = vector.shape_cast %21 : vector<128xf32> to vector<128x1xf32>
    %cst_14 = arith.constant 3.200000e+01 : f32
    %23 = vector.broadcast %cst_14 : f32 to vector<128x1xf32>
    %24 = arith.divf %22, %23 : vector<128x1xf32>
    %25 = vector.broadcast %17 : vector<128x1xf32> to vector<128x32xf32>
    %26 = arith.subf %13, %25 : vector<128x32xf32>
    %cst_15 = arith.constant 9.99999974E-6 : f32
    %27 = vector.broadcast %cst_15 : f32 to vector<128x1xf32>
    %28 = arith.addf %24, %27 : vector<128x1xf32>
    %29 = math.rsqrt %28 : vector<128x1xf32>
    %30 = vector.broadcast %29 : vector<128x1xf32> to vector<128x32xf32>
    %31 = arith.mulf %26, %30 : vector<128x32xf32>
    %c0_16 = arith.constant 0 : index
    %c0_17 = arith.constant 0 : index
    %32 = vector.load %arg5[%c0_16, %c0_17] : memref<1x32xf32, #tpu.memory_space<vmem>>, vector<1x32xf32>
    %33 = vector.broadcast %32 : vector<1x32xf32> to vector<128x32xf32>
    %34 = arith.mulf %31, %33 : vector<128x32xf32>
    %c0_18 = arith.constant 0 : index
    %c0_19 = arith.constant 0 : index
    %35 = vector.load %arg6[%c0_18, %c0_19] : memref<1x32xf32, #tpu.memory_space<vmem>>, vector<1x32xf32>
    %36 = vector.broadcast %35 : vector<1x32xf32> to vector<128x32xf32>
    %37 = arith.addf %34, %36 : vector<128x32xf32>
    %c0_20 = arith.constant 0 : index
    %c0_21 = arith.constant 0 : index
    %38 = vector.load %arg7[%c0_20, %c0_21] : memref<128x32xf32, #tpu.memory_space<vmem>>, vector<128x32xf32>
    tpu.vector_store %arg7[%c0_20, %c0_21], %37 {strides = array<i32>} : memref<128x32xf32, #tpu.memory_space<vmem>>, vector<128x32xf32>,
    return
  }
}

module attributes {stable_mosaic.version = 11 : i64} {
  func.func @_mha_ln_kernel(%arg0: i32, %arg1: memref<1x8x32xf32, #tpu.memory_space<vmem>>, %arg2: memref<1x8x32xf32, #tpu.memory_space<vmem>>, %arg3: memref<1x64x32xf32, #tpu.memory_space<vmem>>, %arg4: memref<1x64x32xf32, #tpu.memory_space<vmem>>, %arg5: memref<1x1x64xf32, #tpu.memory_space<vmem>>, %arg6: memref<32x32xf32, #tpu.memory_space<vmem>>, %arg7: memref<1x32xf32, #tpu.memory_space<vmem>>, %arg8: memref<32x32xf32, #tpu.memory_space<vmem>>, %arg9: memref<1x32xf32, #tpu.memory_space<vmem>>, %arg10: memref<32x32xf32, #tpu.memory_space<vmem>>, %arg11: memref<1x32xf32, #tpu.memory_space<vmem>>, %arg12: memref<32x32xf32, #tpu.memory_space<vmem>>, %arg13: memref<1x32xf32, #tpu.memory_space<vmem>>, %arg14: memref<1x32xf32, #tpu.memory_space<vmem>>, %arg15: memref<1x32xf32, #tpu.memory_space<vmem>>, %arg16: memref<1x8x32xf32, #tpu.memory_space<vmem>>) attributes {dimension_semantics = [#tpu.dimension_semantics<parallel>], iteration_bounds = array<i64: 2>, scalar_prefetch = 0 : i64, scratch_operands = 0 : i64, tpu.core_type = #tpu.core_type<tc>, window_params = [{transform_indices = @transform_0, window_bounds = array<i64: 1, 8, 32>}, {pipeline_mode = #tpu.pipeline_mode<synchronous>, transform_indices = @transform_1, window_bounds = array<i64: 1, 8, 32>}, {transform_indices = @transform_2, window_bounds = array<i64: 1, 64, 32>}, {transform_indices = @transform_3, window_bounds = array<i64: 1, 64, 32>}, {transform_indices = @transform_4, window_bounds = array<i64: 1, 1, 64>}, {pipeline_mode = #tpu.pipeline_mode<synchronous>, transform_indices = @transform_5, window_bounds = array<i64: 32, 32>}, {pipeline_mode = #tpu.pipeline_mode<synchronous>, transform_indices = @transform_6, window_bounds = array<i64: 1, 32>}, {pipeline_mode = #tpu.pipeline_mode<synchronous>, transform_indices = @transform_7, window_bounds = array<i64: 32, 32>}, {pipeline_mode = #tpu.pipeline_mode<synchronous>, transform_indices = @transform_8, window_bounds = array<i64: 1, 32>}, {pipeline_mode = #tpu.pipeline_mode<synchronous>, transform_indices = @transform_9, window_bounds = array<i64: 32, 32>}, {pipeline_mode = #tpu.pipeline_mode<synchronous>, transform_indices = @transform_10, window_bounds = array<i64: 1, 32>}, {pipeline_mode = #tpu.pipeline_mode<synchronous>, transform_indices = @transform_11, window_bounds = array<i64: 32, 32>}, {pipeline_mode = #tpu.pipeline_mode<synchronous>, transform_indices = @transform_12, window_bounds = array<i64: 1, 32>}, {pipeline_mode = #tpu.pipeline_mode<synchronous>, transform_indices = @transform_13, window_bounds = array<i64: 1, 32>}, {pipeline_mode = #tpu.pipeline_mode<synchronous>, transform_indices = @transform_14, window_bounds = array<i64: 1, 32>}, {transform_indices = @transform_15, window_bounds = array<i64: 1, 8, 32>}]} {
    %c0 = arith.constant 0 : index
    %c0_0 = arith.constant 0 : index
    %c0_1 = arith.constant 0 : index
    %0 = vector.load %arg1[%c0, %c0_0, %c0_1] : memref<1x8x32xf32, #tpu.memory_space<vmem>>, vector<1x8x32xf32>
    %1 = vector.shape_cast %0 : vector<1x8x32xf32> to vector<8x32xf32>
    %c0_2 = arith.constant 0 : index
    %c0_3 = arith.constant 0 : index
    %c0_4 = arith.constant 0 : index
    %2 = vector.load %arg2[%c0_2, %c0_3, %c0_4] : memref<1x8x32xf32, #tpu.memory_space<vmem>>, vector<1x8x32xf32>
    %3 = vector.shape_cast %2 : vector<1x8x32xf32> to vector<8x32xf32>
    %c0_5 = arith.constant 0 : index
    %c0_6 = arith.constant 0 : index
    %c0_7 = arith.constant 0 : index
    %4 = vector.load %arg3[%c0_5, %c0_6, %c0_7] : memref<1x64x32xf32, #tpu.memory_space<vmem>>, vector<1x64x32xf32>
    %5 = vector.shape_cast %4 : vector<1x64x32xf32> to vector<64x32xf32>
    %c0_8 = arith.constant 0 : index
    %c0_9 = arith.constant 0 : index
    %c0_10 = arith.constant 0 : index
    %6 = vector.load %arg4[%c0_8, %c0_9, %c0_10] : memref<1x64x32xf32, #tpu.memory_space<vmem>>, vector<1x64x32xf32>
    %7 = vector.shape_cast %6 : vector<1x64x32xf32> to vector<64x32xf32>
    %c0_11 = arith.constant 0 : index
    %c0_12 = arith.constant 0 : index
    %c0_13 = arith.constant 0 : index
    %8 = vector.load %arg5[%c0_11, %c0_12, %c0_13] : memref<1x1x64xf32, #tpu.memory_space<vmem>>, vector<1x1x64xf32>
    %9 = vector.shape_cast %8 : vector<1x1x64xf32> to vector<1x64xf32>
    %10 = arith.addf %1, %3 : vector<8x32xf32>
    %c0_14 = arith.constant 0 : index
    %c0_15 = arith.constant 0 : index
    %11 = vector.load %arg6[%c0_14, %c0_15] : memref<32x32xf32, #tpu.memory_space<vmem>>, vector<32x32xf32>
    %cst = arith.constant dense<0.000000e+00> : vector<8x32xf32>
    %12 = tpu.matmul %10, %11, %cst {dimension_numbers = #tpu.dot_dimension_numbers<[1], [0], [0], [1], [0, 0, 1, 1], [], []>} : vector<8x32xf32>, vector<32x32xf32>, vector<8x32xf32> -> vector<8x32xf32>
    %c0_16 = arith.constant 0 : index
    %c0_17 = arith.constant 0 : index
    %13 = vector.load %arg7[%c0_16, %c0_17] : memref<1x32xf32, #tpu.memory_space<vmem>>, vector<1x32xf32>
    %14 = vector.broadcast %13 : vector<1x32xf32> to vector<8x32xf32>
    %15 = arith.addf %12, %14 : vector<8x32xf32>
    %16 = arith.addf %5, %7 : vector<64x32xf32>
    %c0_18 = arith.constant 0 : index
    %c0_19 = arith.constant 0 : index
    %17 = vector.load %arg8[%c0_18, %c0_19] : memref<32x32xf32, #tpu.memory_space<vmem>>, vector<32x32xf32>
    %cst_20 = arith.constant dense<0.000000e+00> : vector<64x32xf32>
    %18 = tpu.matmul %16, %17, %cst_20 {dimension_numbers = #tpu.dot_dimension_numbers<[1], [0], [0], [1], [0, 0, 1, 1], [], []>} : vector<64x32xf32>, vector<32x32xf32>, vector<64x32xf32> -> vector<64x32xf32>
    %c0_21 = arith.constant 0 : index
    %c0_22 = arith.constant 0 : index
    %19 = vector.load %arg9[%c0_21, %c0_22] : memref<1x32xf32, #tpu.memory_space<vmem>>, vector<1x32xf32>
    %20 = vector.broadcast %19 : vector<1x32xf32> to vector<64x32xf32>
    %21 = arith.addf %18, %20 : vector<64x32xf32>
    %c0_23 = arith.constant 0 : index
    %c0_24 = arith.constant 0 : index
    %22 = vector.load %arg10[%c0_23, %c0_24] : memref<32x32xf32, #tpu.memory_space<vmem>>, vector<32x32xf32>
    %cst_25 = arith.constant dense<0.000000e+00> : vector<64x32xf32>
    %23 = tpu.matmul %5, %22, %cst_25 {dimension_numbers = #tpu.dot_dimension_numbers<[1], [0], [0], [1], [0, 0, 1, 1], [], []>} : vector<64x32xf32>, vector<32x32xf32>, vector<64x32xf32> -> vector<64x32xf32>
    %c0_26 = arith.constant 0 : index
    %c0_27 = arith.constant 0 : index
    %24 = vector.load %arg11[%c0_26, %c0_27] : memref<1x32xf32, #tpu.memory_space<vmem>>, vector<1x32xf32>
    %25 = vector.broadcast %24 : vector<1x32xf32> to vector<64x32xf32>
    %26 = arith.addf %23, %25 : vector<64x32xf32>
    %c0_28 = arith.constant 0 : index
    %c0_29 = arith.constant 0 : index
    %27 = vector.load %arg12[%c0_28, %c0_29] : memref<32x32xf32, #tpu.memory_space<vmem>>, vector<32x32xf32>
    %cst_30 = arith.constant 0.000000e+00 : f32
    %28 = vector.broadcast %cst_30 : f32 to vector<8x32xf32>
    %29 = vector.extract_strided_slice %15 {offsets = [0, 0], sizes = [8, 8], strides = [1, 1]} : vector<8x32xf32> to vector<8x8xf32>
    %30 = vector.extract_strided_slice %21 {offsets = [0, 0], sizes = [64, 8], strides = [1, 1]} : vector<64x32xf32> to vector<64x8xf32>
    %31 = vector.extract_strided_slice %26 {offsets = [0, 0], sizes = [64, 8], strides = [1, 1]} : vector<64x32xf32> to vector<64x8xf32>
    %cst_31 = arith.constant dense<0.000000e+00> : vector<8x64xf32>
    %32 = tpu.matmul %29, %30, %cst_31 {dimension_numbers = #tpu.dot_dimension_numbers<[1], [1], [0], [0], [0, 0, 1, 0], [], []>} : vector<8x8xf32>, vector<64x8xf32>, vector<8x64xf32> -> vector<8x64xf32>
    %cst_32 = arith.constant 0.353553385 : f32
    %33 = vector.broadcast %cst_32 : f32 to vector<8x64xf32>
    %34 = arith.mulf %32, %33 : vector<8x64xf32>
    %35 = vector.broadcast %9 : vector<1x64xf32> to vector<8x64xf32>
    %36 = arith.addf %34, %35 : vector<8x64xf32>
    %cst_33 = arith.constant dense<0xFF800000> : vector<8xf32>
    %37 = vector.multi_reduction <maximumf>, %36, %cst_33 [1] : vector<8x64xf32> to vector<8xf32>
    %38 = vector.shape_cast %37 : vector<8xf32> to vector<8x1xf32>
    %39 = vector.broadcast %38 : vector<8x1xf32> to vector<8x64xf32>
    %40 = arith.subf %36, %39 : vector<8x64xf32>
    %41 = math.exp %40 : vector<8x64xf32>
    %cst_34 = arith.constant dense<0.000000e+00> : vector<8xf32>
    %42 = vector.multi_reduction <add>, %41, %cst_34 [1] : vector<8x64xf32> to vector<8xf32>
    %43 = vector.shape_cast %42 : vector<8xf32> to vector<8x1xf32>
    %44 = tpu.reciprocal %43 {approx = true} : vector<8x1xf32> -> vector<8x1xf32>
    %45 = vector.broadcast %44 : vector<8x1xf32> to vector<8x64xf32>
    %46 = arith.mulf %41, %45 : vector<8x64xf32>
    %cst_35 = arith.constant dense<0.000000e+00> : vector<8x8xf32>
    %47 = tpu.matmul %46, %31, %cst_35 {dimension_numbers = #tpu.dot_dimension_numbers<[1], [0], [0], [1], [0, 0, 1, 1], [], []>} : vector<8x64xf32>, vector<64x8xf32>, vector<8x8xf32> -> vector<8x8xf32>
    %48 = vector.extract_strided_slice %27 {offsets = [0, 0], sizes = [8, 32], strides = [1, 1]} : vector<32x32xf32> to vector<8x32xf32>
    %cst_36 = arith.constant dense<0.000000e+00> : vector<8x32xf32>
    %49 = tpu.matmul %47, %48, %cst_36 {dimension_numbers = #tpu.dot_dimension_numbers<[1], [0], [0], [1], [0, 0, 1, 1], [], []>} : vector<8x8xf32>, vector<8x32xf32>, vector<8x32xf32> -> vector<8x32xf32>
    %50 = arith.addf %28, %49 : vector<8x32xf32>
    %51 = vector.extract_strided_slice %15 {offsets = [0, 8], sizes = [8, 8], strides = [1, 1]} : vector<8x32xf32> to vector<8x8xf32>
    %52 = vector.extract_strided_slice %21 {offsets = [0, 8], sizes = [64, 8], strides = [1, 1]} : vector<64x32xf32> to vector<64x8xf32>
    %53 = vector.extract_strided_slice %26 {offsets = [0, 8], sizes = [64, 8], strides = [1, 1]} : vector<64x32xf32> to vector<64x8xf32>
    %cst_37 = arith.constant dense<0.000000e+00> : vector<8x64xf32>
    %54 = tpu.matmul %51, %52, %cst_37 {dimension_numbers = #tpu.dot_dimension_numbers<[1], [1], [0], [0], [0, 0, 1, 0], [], []>} : vector<8x8xf32>, vector<64x8xf32>, vector<8x64xf32> -> vector<8x64xf32>
    %cst_38 = arith.constant 0.353553385 : f32
    %55 = vector.broadcast %cst_38 : f32 to vector<8x64xf32>
    %56 = arith.mulf %54, %55 : vector<8x64xf32>
    %57 = vector.broadcast %9 : vector<1x64xf32> to vector<8x64xf32>
    %58 = arith.addf %56, %57 : vector<8x64xf32>
    %cst_39 = arith.constant dense<0xFF800000> : vector<8xf32>
    %59 = vector.multi_reduction <maximumf>, %58, %cst_39 [1] : vector<8x64xf32> to vector<8xf32>
    %60 = vector.shape_cast %59 : vector<8xf32> to vector<8x1xf32>
    %61 = vector.broadcast %60 : vector<8x1xf32> to vector<8x64xf32>
    %62 = arith.subf %58, %61 : vector<8x64xf32>
    %63 = math.exp %62 : vector<8x64xf32>
    %cst_40 = arith.constant dense<0.000000e+00> : vector<8xf32>
    %64 = vector.multi_reduction <add>, %63, %cst_40 [1] : vector<8x64xf32> to vector<8xf32>
    %65 = vector.shape_cast %64 : vector<8xf32> to vector<8x1xf32>
    %66 = tpu.reciprocal %65 {approx = true} : vector<8x1xf32> -> vector<8x1xf32>
    %67 = vector.broadcast %66 : vector<8x1xf32> to vector<8x64xf32>
    %68 = arith.mulf %63, %67 : vector<8x64xf32>
    %cst_41 = arith.constant dense<0.000000e+00> : vector<8x8xf32>
    %69 = tpu.matmul %68, %53, %cst_41 {dimension_numbers = #tpu.dot_dimension_numbers<[1], [0], [0], [1], [0, 0, 1, 1], [], []>} : vector<8x64xf32>, vector<64x8xf32>, vector<8x8xf32> -> vector<8x8xf32>
    %70 = vector.extract_strided_slice %27 {offsets = [8, 0], sizes = [8, 32], strides = [1, 1]} : vector<32x32xf32> to vector<8x32xf32>
    %cst_42 = arith.constant dense<0.000000e+00> : vector<8x32xf32>
    %71 = tpu.matmul %69, %70, %cst_42 {dimension_numbers = #tpu.dot_dimension_numbers<[1], [0], [0], [1], [0, 0, 1, 1], [], []>} : vector<8x8xf32>, vector<8x32xf32>, vector<8x32xf32> -> vector<8x32xf32>
    %72 = arith.addf %50, %71 : vector<8x32xf32>
    %73 = vector.extract_strided_slice %15 {offsets = [0, 16], sizes = [8, 8], strides = [1, 1]} : vector<8x32xf32> to vector<8x8xf32>
    %74 = vector.extract_strided_slice %21 {offsets = [0, 16], sizes = [64, 8], strides = [1, 1]} : vector<64x32xf32> to vector<64x8xf32>
    %75 = vector.extract_strided_slice %26 {offsets = [0, 16], sizes = [64, 8], strides = [1, 1]} : vector<64x32xf32> to vector<64x8xf32>
    %cst_43 = arith.constant dense<0.000000e+00> : vector<8x64xf32>
    %76 = tpu.matmul %73, %74, %cst_43 {dimension_numbers = #tpu.dot_dimension_numbers<[1], [1], [0], [0], [0, 0, 1, 0], [], []>} : vector<8x8xf32>, vector<64x8xf32>, vector<8x64xf32> -> vector<8x64xf32>
    %cst_44 = arith.constant 0.353553385 : f32
    %77 = vector.broadcast %cst_44 : f32 to vector<8x64xf32>
    %78 = arith.mulf %76, %77 : vector<8x64xf32>
    %79 = vector.broadcast %9 : vector<1x64xf32> to vector<8x64xf32>
    %80 = arith.addf %78, %79 : vector<8x64xf32>
    %cst_45 = arith.constant dense<0xFF800000> : vector<8xf32>
    %81 = vector.multi_reduction <maximumf>, %80, %cst_45 [1] : vector<8x64xf32> to vector<8xf32>
    %82 = vector.shape_cast %81 : vector<8xf32> to vector<8x1xf32>
    %83 = vector.broadcast %82 : vector<8x1xf32> to vector<8x64xf32>
    %84 = arith.subf %80, %83 : vector<8x64xf32>
    %85 = math.exp %84 : vector<8x64xf32>
    %cst_46 = arith.constant dense<0.000000e+00> : vector<8xf32>
    %86 = vector.multi_reduction <add>, %85, %cst_46 [1] : vector<8x64xf32> to vector<8xf32>
    %87 = vector.shape_cast %86 : vector<8xf32> to vector<8x1xf32>
    %88 = tpu.reciprocal %87 {approx = true} : vector<8x1xf32> -> vector<8x1xf32>
    %89 = vector.broadcast %88 : vector<8x1xf32> to vector<8x64xf32>
    %90 = arith.mulf %85, %89 : vector<8x64xf32>
    %cst_47 = arith.constant dense<0.000000e+00> : vector<8x8xf32>
    %91 = tpu.matmul %90, %75, %cst_47 {dimension_numbers = #tpu.dot_dimension_numbers<[1], [0], [0], [1], [0, 0, 1, 1], [], []>} : vector<8x64xf32>, vector<64x8xf32>, vector<8x8xf32> -> vector<8x8xf32>
    %92 = vector.extract_strided_slice %27 {offsets = [16, 0], sizes = [8, 32], strides = [1, 1]} : vector<32x32xf32> to vector<8x32xf32>
    %cst_48 = arith.constant dense<0.000000e+00> : vector<8x32xf32>
    %93 = tpu.matmul %91, %92, %cst_48 {dimension_numbers = #tpu.dot_dimension_numbers<[1], [0], [0], [1], [0, 0, 1, 1], [], []>} : vector<8x8xf32>, vector<8x32xf32>, vector<8x32xf32> -> vector<8x32xf32>
    %94 = arith.addf %72, %93 : vector<8x32xf32>
    %95 = vector.extract_strided_slice %15 {offsets = [0, 24], sizes = [8, 8], strides = [1, 1]} : vector<8x32xf32> to vector<8x8xf32>
    %96 = vector.extract_strided_slice %21 {offsets = [0, 24], sizes = [64, 8], strides = [1, 1]} : vector<64x32xf32> to vector<64x8xf32>
    %97 = vector.extract_strided_slice %26 {offsets = [0, 24], sizes = [64, 8], strides = [1, 1]} : vector<64x32xf32> to vector<64x8xf32>
    %cst_49 = arith.constant dense<0.000000e+00> : vector<8x64xf32>
    %98 = tpu.matmul %95, %96, %cst_49 {dimension_numbers = #tpu.dot_dimension_numbers<[1], [1], [0], [0], [0, 0, 1, 0], [], []>} : vector<8x8xf32>, vector<64x8xf32>, vector<8x64xf32> -> vector<8x64xf32>
    %cst_50 = arith.constant 0.353553385 : f32
    %99 = vector.broadcast %cst_50 : f32 to vector<8x64xf32>
    %100 = arith.mulf %98, %99 : vector<8x64xf32>
    %101 = vector.broadcast %9 : vector<1x64xf32> to vector<8x64xf32>
    %102 = arith.addf %100, %101 : vector<8x64xf32>
    %cst_51 = arith.constant dense<0xFF800000> : vector<8xf32>
    %103 = vector.multi_reduction <maximumf>, %102, %cst_51 [1] : vector<8x64xf32> to vector<8xf32>
    %104 = vector.shape_cast %103 : vector<8xf32> to vector<8x1xf32>
    %105 = vector.broadcast %104 : vector<8x1xf32> to vector<8x64xf32>
    %106 = arith.subf %102, %105 : vector<8x64xf32>
    %107 = math.exp %106 : vector<8x64xf32>
    %cst_52 = arith.constant dense<0.000000e+00> : vector<8xf32>
    %108 = vector.multi_reduction <add>, %107, %cst_52 [1] : vector<8x64xf32> to vector<8xf32>
    %109 = vector.shape_cast %108 : vector<8xf32> to vector<8x1xf32>
    %110 = tpu.reciprocal %109 {approx = true} : vector<8x1xf32> -> vector<8x1xf32>
    %111 = vector.broadcast %110 : vector<8x1xf32> to vector<8x64xf32>
    %112 = arith.mulf %107, %111 : vector<8x64xf32>
    %cst_53 = arith.constant dense<0.000000e+00> : vector<8x8xf32>
    %113 = tpu.matmul %112, %97, %cst_53 {dimension_numbers = #tpu.dot_dimension_numbers<[1], [0], [0], [1], [0, 0, 1, 1], [], []>} : vector<8x64xf32>, vector<64x8xf32>, vector<8x8xf32> -> vector<8x8xf32>
    %114 = vector.extract_strided_slice %27 {offsets = [24, 0], sizes = [8, 32], strides = [1, 1]} : vector<32x32xf32> to vector<8x32xf32>
    %cst_54 = arith.constant dense<0.000000e+00> : vector<8x32xf32>
    %115 = tpu.matmul %113, %114, %cst_54 {dimension_numbers = #tpu.dot_dimension_numbers<[1], [0], [0], [1], [0, 0, 1, 1], [], []>} : vector<8x8xf32>, vector<8x32xf32>, vector<8x32xf32> -> vector<8x32xf32>
    %116 = arith.addf %94, %115 : vector<8x32xf32>
    %117 = arith.addf %1, %116 : vector<8x32xf32>
    %c0_55 = arith.constant 0 : index
    %c0_56 = arith.constant 0 : index
    %118 = vector.load %arg13[%c0_55, %c0_56] : memref<1x32xf32, #tpu.memory_space<vmem>>, vector<1x32xf32>
    %119 = vector.broadcast %118 : vector<1x32xf32> to vector<8x32xf32>
    %120 = arith.addf %117, %119 : vector<8x32xf32>
    %cst_57 = arith.constant dense<0.000000e+00> : vector<8xf32>
    %121 = vector.multi_reduction <add>, %120, %cst_57 [1] : vector<8x32xf32> to vector<8xf32>
    %122 = vector.shape_cast %121 : vector<8xf32> to vector<8x1xf32>
    %cst_58 = arith.constant 3.200000e+01 : f32
    %123 = vector.broadcast %cst_58 : f32 to vector<8x1xf32>
    %124 = arith.divf %122, %123 : vector<8x1xf32>
    %125 = vector.broadcast %124 : vector<8x1xf32> to vector<8x32xf32>
    %126 = arith.subf %120, %125 : vector<8x32xf32>
    %127 = arith.mulf %126, %126 : vector<8x32xf32>
    %cst_59 = arith.constant dense<0.000000e+00> : vector<8xf32>
    %128 = vector.multi_reduction <add>, %127, %cst_59 [1] : vector<8x32xf32> to vector<8xf32>
    %129 = vector.shape_cast %128 : vector<8xf32> to vector<8x1xf32>
    %cst_60 = arith.constant 3.200000e+01 : f32
    %130 = vector.broadcast %cst_60 : f32 to vector<8x1xf32>
    %131 = arith.divf %129, %130 : vector<8x1xf32>
    %132 = vector.broadcast %124 : vector<8x1xf32> to vector<8x32xf32>
    %133 = arith.subf %120, %132 : vector<8x32xf32>
    %cst_61 = arith.constant 9.99999974E-6 : f32
    %134 = vector.broadcast %cst_61 : f32 to vector<8x1xf32>
    %135 = arith.addf %131, %134 : vector<8x1xf32>
    %136 = math.rsqrt %135 : vector<8x1xf32>
    %137 = vector.broadcast %136 : vector<8x1xf32> to vector<8x32xf32>
    %138 = arith.mulf %133, %137 : vector<8x32xf32>
    %c0_62 = arith.constant 0 : index
    %c0_63 = arith.constant 0 : index
    %139 = vector.load %arg14[%c0_62, %c0_63] : memref<1x32xf32, #tpu.memory_space<vmem>>, vector<1x32xf32>
    %140 = vector.broadcast %139 : vector<1x32xf32> to vector<8x32xf32>
    %141 = arith.mulf %138, %140 : vector<8x32xf32>
    %c0_64 = arith.constant 0 : index
    %c0_65 = arith.constant 0 : index
    %142 = vector.load %arg15[%c0_64, %c0_65] : memref<1x32xf32, #tpu.memory_space<vmem>>, vector<1x32xf32>
    %143 = vector.broadcast %142 : vector<1x32xf32> to vector<8x32xf32>
    %144 = arith.addf %141, %143 : vector<8x32xf32>
    %c0_66 = arith.constant 0 : index
    %c0_67 = arith.constant 0 : index
    %c0_68 = arith.constant 0 : index
    %145 = vector.load %arg16[%c0_66, %c0_67, %c0_68] : memref<1x8x32xf32, #tpu.memory_space<vmem>>, vector<1x8x32xf32>
    %146 = vector.shape_cast %145 : vector<1x8x32xf32> to vector<8x32xf32>
    %147 = vector.shape_cast %144 : vector<8x32xf32> to vector<1x8x32xf32>
    tpu.vector_store %arg16[%c0_66, %c0_67, %c0_68], %147 {strides = array<i32>} : memref<1x8x32xf32, #tpu.memory_space<vmem>>, vector<1x8x32xf32>,
    return
  }
  func.func @transform_0(%arg0: i32) -> (i32, i32, i32) {
    %c0_i32 = arith.constant 0 : i32
    %c0_i32_0 = arith.constant 0 : i32
    %c0_i32_1 = arith.constant 0 : i32
    return %arg0, %c0_i32, %c0_i32_0 : i32, i32, i32
  }
  func.func @transform_1(%arg0: i32) -> (i32, i32, i32) {
    %c0_i32 = arith.constant 0 : i32
    %c0_i32_0 = arith.constant 0 : i32
    %c0_i32_1 = arith.constant 0 : i32
    %c0_i32_2 = arith.constant 0 : i32
    return %c0_i32, %c0_i32_0, %c0_i32_1 : i32, i32, i32
  }
  func.func @transform_2(%arg0: i32) -> (i32, i32, i32) {
    %c0_i32 = arith.constant 0 : i32
    %c0_i32_0 = arith.constant 0 : i32
    %c0_i32_1 = arith.constant 0 : i32
    return %arg0, %c0_i32, %c0_i32_0 : i32, i32, i32
  }
  func.func @transform_3(%arg0: i32) -> (i32, i32, i32) {
    %c0_i32 = arith.constant 0 : i32
    %c0_i32_0 = arith.constant 0 : i32
    %c0_i32_1 = arith.constant 0 : i32
    return %arg0, %c0_i32, %c0_i32_0 : i32, i32, i32
  }
  func.func @transform_4(%arg0: i32) -> (i32, i32, i32) {
    %c0_i32 = arith.constant 0 : i32
    %c0_i32_0 = arith.constant 0 : i32
    %c0_i32_1 = arith.constant 0 : i32
    return %arg0, %c0_i32, %c0_i32_0 : i32, i32, i32
  }
  func.func @transform_5(%arg0: i32) -> (i32, i32) {
    %c0_i32 = arith.constant 0 : i32
    %c0_i32_0 = arith.constant 0 : i32
    %c0_i32_1 = arith.constant 0 : i32
    return %c0_i32, %c0_i32_0 : i32, i32
  }
  func.func @transform_6(%arg0: i32) -> (i32, i32) {
    %c0_i32 = arith.constant 0 : i32
    %c0_i32_0 = arith.constant 0 : i32
    %c0_i32_1 = arith.constant 0 : i32
    return %c0_i32, %c0_i32_0 : i32, i32
  }
  func.func @transform_7(%arg0: i32) -> (i32, i32) {
    %c0_i32 = arith.constant 0 : i32
    %c0_i32_0 = arith.constant 0 : i32
    %c0_i32_1 = arith.constant 0 : i32
    return %c0_i32, %c0_i32_0 : i32, i32
  }
  func.func @transform_8(%arg0: i32) -> (i32, i32) {
    %c0_i32 = arith.constant 0 : i32
    %c0_i32_0 = arith.constant 0 : i32
    %c0_i32_1 = arith.constant 0 : i32
    return %c0_i32, %c0_i32_0 : i32, i32
  }
  func.func @transform_9(%arg0: i32) -> (i32, i32) {
    %c0_i32 = arith.constant 0 : i32
    %c0_i32_0 = arith.constant 0 : i32
    %c0_i32_1 = arith.constant 0 : i32
    return %c0_i32, %c0_i32_0 : i32, i32
  }
  func.func @transform_10(%arg0: i32) -> (i32, i32) {
    %c0_i32 = arith.constant 0 : i32
    %c0_i32_0 = arith.constant 0 : i32
    %c0_i32_1 = arith.constant 0 : i32
    return %c0_i32, %c0_i32_0 : i32, i32
  }
  func.func @transform_11(%arg0: i32) -> (i32, i32) {
    %c0_i32 = arith.constant 0 : i32
    %c0_i32_0 = arith.constant 0 : i32
    %c0_i32_1 = arith.constant 0 : i32
    return %c0_i32, %c0_i32_0 : i32, i32
  }
  func.func @transform_12(%arg0: i32) -> (i32, i32) {
    %c0_i32 = arith.constant 0 : i32
    %c0_i32_0 = arith.constant 0 : i32
    %c0_i32_1 = arith.constant 0 : i32
    return %c0_i32, %c0_i32_0 : i32, i32
  }
  func.func @transform_13(%arg0: i32) -> (i32, i32) {
    %c0_i32 = arith.constant 0 : i32
    %c0_i32_0 = arith.constant 0 : i32
    %c0_i32_1 = arith.constant 0 : i32
    return %c0_i32, %c0_i32_0 : i32, i32
  }
  func.func @transform_14(%arg0: i32) -> (i32, i32) {
    %c0_i32 = arith.constant 0 : i32
    %c0_i32_0 = arith.constant 0 : i32
    %c0_i32_1 = arith.constant 0 : i32
    return %c0_i32, %c0_i32_0 : i32, i32
  }
  func.func @transform_15(%arg0: i32) -> (i32, i32, i32) {
    %c0_i32 = arith.constant 0 : i32
    %c0_i32_0 = arith.constant 0 : i32
    %c0_i32_1 = arith.constant 0 : i32
    return %arg0, %c0_i32, %c0_i32_0 : i32, i32, i32
  }
}

module attributes {stable_mosaic.version = 11 : i64} {
  func.func @_ffn_ln_kernel(%arg0: memref<16x32xf32, #tpu.memory_space<vmem>>, %arg1: memref<32x64xf32, #tpu.memory_space<vmem>>, %arg2: memref<1x64xf32, #tpu.memory_space<vmem>>, %arg3: memref<64x32xf32, #tpu.memory_space<vmem>>, %arg4: memref<1x32xf32, #tpu.memory_space<vmem>>, %arg5: memref<1x32xf32, #tpu.memory_space<vmem>>, %arg6: memref<1x32xf32, #tpu.memory_space<vmem>>, %arg7: memref<16x32xf32, #tpu.memory_space<vmem>>) attributes {dimension_semantics = [], scalar_prefetch = 0 : i64, scratch_operands = 0 : i64, tpu.core_type = #tpu.core_type<tc>} {
    %c0 = arith.constant 0 : index
    %c0_0 = arith.constant 0 : index
    %0 = vector.load %arg0[%c0, %c0_0] : memref<16x32xf32, #tpu.memory_space<vmem>>, vector<16x32xf32>
    %c0_1 = arith.constant 0 : index
    %c0_2 = arith.constant 0 : index
    %1 = vector.load %arg1[%c0_1, %c0_2] : memref<32x64xf32, #tpu.memory_space<vmem>>, vector<32x64xf32>
    %cst = arith.constant dense<0.000000e+00> : vector<16x64xf32>
    %2 = tpu.matmul %0, %1, %cst {dimension_numbers = #tpu.dot_dimension_numbers<[1], [0], [0], [1], [0, 0, 1, 1], [], []>} : vector<16x32xf32>, vector<32x64xf32>, vector<16x64xf32> -> vector<16x64xf32>
    %c0_3 = arith.constant 0 : index
    %c0_4 = arith.constant 0 : index
    %3 = vector.load %arg2[%c0_3, %c0_4] : memref<1x64xf32, #tpu.memory_space<vmem>>, vector<1x64xf32>
    %4 = vector.broadcast %3 : vector<1x64xf32> to vector<16x64xf32>
    %5 = arith.addf %2, %4 : vector<16x64xf32>
    %cst_5 = arith.constant 0.000000e+00 : f32
    %6 = vector.broadcast %cst_5 : f32 to vector<16x64xf32>
    %7 = arith.maximumf %5, %6 : vector<16x64xf32>
    %c0_6 = arith.constant 0 : index
    %c0_7 = arith.constant 0 : index
    %8 = vector.load %arg3[%c0_6, %c0_7] : memref<64x32xf32, #tpu.memory_space<vmem>>, vector<64x32xf32>
    %cst_8 = arith.constant dense<0.000000e+00> : vector<16x32xf32>
    %9 = tpu.matmul %7, %8, %cst_8 {dimension_numbers = #tpu.dot_dimension_numbers<[1], [0], [0], [1], [0, 0, 1, 1], [], []>} : vector<16x64xf32>, vector<64x32xf32>, vector<16x32xf32> -> vector<16x32xf32>
    %10 = arith.addf %0, %9 : vector<16x32xf32>
    %c0_9 = arith.constant 0 : index
    %c0_10 = arith.constant 0 : index
    %11 = vector.load %arg4[%c0_9, %c0_10] : memref<1x32xf32, #tpu.memory_space<vmem>>, vector<1x32xf32>
    %12 = vector.broadcast %11 : vector<1x32xf32> to vector<16x32xf32>
    %13 = arith.addf %10, %12 : vector<16x32xf32>
    %cst_11 = arith.constant dense<0.000000e+00> : vector<16xf32>
    %14 = vector.multi_reduction <add>, %13, %cst_11 [1] : vector<16x32xf32> to vector<16xf32>
    %15 = vector.shape_cast %14 : vector<16xf32> to vector<16x1xf32>
    %cst_12 = arith.constant 3.200000e+01 : f32
    %16 = vector.broadcast %cst_12 : f32 to vector<16x1xf32>
    %17 = arith.divf %15, %16 : vector<16x1xf32>
    %18 = vector.broadcast %17 : vector<16x1xf32> to vector<16x32xf32>
    %19 = arith.subf %13, %18 : vector<16x32xf32>
    %20 = arith.mulf %19, %19 : vector<16x32xf32>
    %cst_13 = arith.constant dense<0.000000e+00> : vector<16xf32>
    %21 = vector.multi_reduction <add>, %20, %cst_13 [1] : vector<16x32xf32> to vector<16xf32>
    %22 = vector.shape_cast %21 : vector<16xf32> to vector<16x1xf32>
    %cst_14 = arith.constant 3.200000e+01 : f32
    %23 = vector.broadcast %cst_14 : f32 to vector<16x1xf32>
    %24 = arith.divf %22, %23 : vector<16x1xf32>
    %25 = vector.broadcast %17 : vector<16x1xf32> to vector<16x32xf32>
    %26 = arith.subf %13, %25 : vector<16x32xf32>
    %cst_15 = arith.constant 9.99999974E-6 : f32
    %27 = vector.broadcast %cst_15 : f32 to vector<16x1xf32>
    %28 = arith.addf %24, %27 : vector<16x1xf32>
    %29 = math.rsqrt %28 : vector<16x1xf32>
    %30 = vector.broadcast %29 : vector<16x1xf32> to vector<16x32xf32>
    %31 = arith.mulf %26, %30 : vector<16x32xf32>
    %c0_16 = arith.constant 0 : index
    %c0_17 = arith.constant 0 : index
    %32 = vector.load %arg5[%c0_16, %c0_17] : memref<1x32xf32, #tpu.memory_space<vmem>>, vector<1x32xf32>
    %33 = vector.broadcast %32 : vector<1x32xf32> to vector<16x32xf32>
    %34 = arith.mulf %31, %33 : vector<16x32xf32>
    %c0_18 = arith.constant 0 : index
    %c0_19 = arith.constant 0 : index
    %35 = vector.load %arg6[%c0_18, %c0_19] : memref<1x32xf32, #tpu.memory_space<vmem>>, vector<1x32xf32>
    %36 = vector.broadcast %35 : vector<1x32xf32> to vector<16x32xf32>
    %37 = arith.addf %34, %36 : vector<16x32xf32>
    %c0_20 = arith.constant 0 : index
    %c0_21 = arith.constant 0 : index
    %38 = vector.load %arg7[%c0_20, %c0_21] : memref<16x32xf32, #tpu.memory_space<vmem>>, vector<16x32xf32>
    tpu.vector_store %arg7[%c0_20, %c0_21], %37 {strides = array<i32>} : memref<16x32xf32, #tpu.memory_space<vmem>>, vector<16x32xf32>,
    return
  }
}

module attributes {stable_mosaic.version = 11 : i64} {
  func.func @_heads_kernel(%arg0: memref<16x32xf32, #tpu.memory_space<vmem>>, %arg1: memref<32x128xf32, #tpu.memory_space<vmem>>, %arg2: memref<1x128xf32, #tpu.memory_space<vmem>>, %arg3: memref<32x32xf32, #tpu.memory_space<vmem>>, %arg4: memref<1x32xf32, #tpu.memory_space<vmem>>, %arg5: memref<32x32xf32, #tpu.memory_space<vmem>>, %arg6: memref<1x32xf32, #tpu.memory_space<vmem>>, %arg7: memref<32x128xf32, #tpu.memory_space<vmem>>, %arg8: memref<1x128xf32, #tpu.memory_space<vmem>>, %arg9: memref<16x128xf32, #tpu.memory_space<vmem>>, %arg10: memref<16x128xf32, #tpu.memory_space<vmem>>) attributes {dimension_semantics = [], scalar_prefetch = 0 : i64, scratch_operands = 0 : i64, tpu.core_type = #tpu.core_type<tc>} {
    %c0 = arith.constant 0 : index
    %c0_0 = arith.constant 0 : index
    %0 = vector.load %arg0[%c0, %c0_0] : memref<16x32xf32, #tpu.memory_space<vmem>>, vector<16x32xf32>
    %c0_1 = arith.constant 0 : index
    %c0_2 = arith.constant 0 : index
    %1 = vector.load %arg1[%c0_1, %c0_2] : memref<32x128xf32, #tpu.memory_space<vmem>>, vector<32x128xf32>
    %cst = arith.constant dense<0.000000e+00> : vector<16x128xf32>
    %2 = tpu.matmul %0, %1, %cst {dimension_numbers = #tpu.dot_dimension_numbers<[1], [0], [0], [1], [0, 0, 1, 1], [], []>} : vector<16x32xf32>, vector<32x128xf32>, vector<16x128xf32> -> vector<16x128xf32>
    %c0_3 = arith.constant 0 : index
    %c0_4 = arith.constant 0 : index
    %3 = vector.load %arg2[%c0_3, %c0_4] : memref<1x128xf32, #tpu.memory_space<vmem>>, vector<1x128xf32>
    %4 = vector.broadcast %3 : vector<1x128xf32> to vector<16x128xf32>
    %5 = arith.addf %2, %4 : vector<16x128xf32>
    %c0_5 = arith.constant 0 : index
    %c0_6 = arith.constant 0 : index
    %6 = vector.load %arg9[%c0_5, %c0_6] : memref<16x128xf32, #tpu.memory_space<vmem>>, vector<16x128xf32>
    tpu.vector_store %arg9[%c0_5, %c0_6], %5 {strides = array<i32>} : memref<16x128xf32, #tpu.memory_space<vmem>>, vector<16x128xf32>,
    %c0_7 = arith.constant 0 : index
    %c0_8 = arith.constant 0 : index
    %7 = vector.load %arg3[%c0_7, %c0_8] : memref<32x32xf32, #tpu.memory_space<vmem>>, vector<32x32xf32>
    %cst_9 = arith.constant dense<0.000000e+00> : vector<16x32xf32>
    %8 = tpu.matmul %0, %7, %cst_9 {dimension_numbers = #tpu.dot_dimension_numbers<[1], [0], [0], [1], [0, 0, 1, 1], [], []>} : vector<16x32xf32>, vector<32x32xf32>, vector<16x32xf32> -> vector<16x32xf32>
    %c0_10 = arith.constant 0 : index
    %c0_11 = arith.constant 0 : index
    %9 = vector.load %arg4[%c0_10, %c0_11] : memref<1x32xf32, #tpu.memory_space<vmem>>, vector<1x32xf32>
    %10 = vector.broadcast %9 : vector<1x32xf32> to vector<16x32xf32>
    %11 = arith.addf %8, %10 : vector<16x32xf32>
    %cst_12 = arith.constant 0.000000e+00 : f32
    %12 = vector.broadcast %cst_12 : f32 to vector<16x32xf32>
    %13 = arith.maximumf %11, %12 : vector<16x32xf32>
    %c0_13 = arith.constant 0 : index
    %c0_14 = arith.constant 0 : index
    %14 = vector.load %arg5[%c0_13, %c0_14] : memref<32x32xf32, #tpu.memory_space<vmem>>, vector<32x32xf32>
    %cst_15 = arith.constant dense<0.000000e+00> : vector<16x32xf32>
    %15 = tpu.matmul %13, %14, %cst_15 {dimension_numbers = #tpu.dot_dimension_numbers<[1], [0], [0], [1], [0, 0, 1, 1], [], []>} : vector<16x32xf32>, vector<32x32xf32>, vector<16x32xf32> -> vector<16x32xf32>
    %c0_16 = arith.constant 0 : index
    %c0_17 = arith.constant 0 : index
    %16 = vector.load %arg6[%c0_16, %c0_17] : memref<1x32xf32, #tpu.memory_space<vmem>>, vector<1x32xf32>
    %17 = vector.broadcast %16 : vector<1x32xf32> to vector<16x32xf32>
    %18 = arith.addf %15, %17 : vector<16x32xf32>
    %cst_18 = arith.constant 0.000000e+00 : f32
    %19 = vector.broadcast %cst_18 : f32 to vector<16x32xf32>
    %20 = arith.maximumf %18, %19 : vector<16x32xf32>
    %c0_19 = arith.constant 0 : index
    %c0_20 = arith.constant 0 : index
    %21 = vector.load %arg7[%c0_19, %c0_20] : memref<32x128xf32, #tpu.memory_space<vmem>>, vector<32x128xf32>
    %cst_21 = arith.constant dense<0.000000e+00> : vector<16x128xf32>
    %22 = tpu.matmul %20, %21, %cst_21 {dimension_numbers = #tpu.dot_dimension_numbers<[1], [0], [0], [1], [0, 0, 1, 1], [], []>} : vector<16x32xf32>, vector<32x128xf32>, vector<16x128xf32> -> vector<16x128xf32>
    %c0_22 = arith.constant 0 : index
    %c0_23 = arith.constant 0 : index
    %23 = vector.load %arg8[%c0_22, %c0_23] : memref<1x128xf32, #tpu.memory_space<vmem>>, vector<1x128xf32>
    %24 = vector.broadcast %23 : vector<1x128xf32> to vector<16x128xf32>
    %25 = arith.addf %22, %24 : vector<16x128xf32>
    %26 = arith.negf %25 : vector<16x128xf32>
    %27 = math.exp %26 : vector<16x128xf32>
    %cst_24 = arith.constant 1.000000e+00 : f32
    %28 = vector.broadcast %cst_24 : f32 to vector<16x128xf32>
    %29 = arith.addf %28, %27 : vector<16x128xf32>
    %30 = arith.divf %28, %29 : vector<16x128xf32>
    %c0_25 = arith.constant 0 : index
    %c0_26 = arith.constant 0 : index
    %31 = vector.load %arg10[%c0_25, %c0_26] : memref<16x128xf32, #tpu.memory_space<vmem>>, vector<16x128xf32>
    tpu.vector_store %arg10[%c0_25, %c0_26], %30 {strides = array<i32>} : memref<16x128xf32, #tpu.memory_space<vmem>>, vector<16x128xf32>,
    return
  }
}

</mosaic_0001>

<llo_original>
// kernel: detr_forward.7
$region0: #{detr_forward.7}
  #allocation0 [shape = 'u32[]', space=smem, size = 0x4, offset = 0x4, fixed_abs, tag = 'smem constant byte address 0x4 - core index']
  #allocation1 [shape = 'u32[72,128]{1,0:T(1,128)}', space=vmem, size = 0x9000, scoped, tag = 'internal scratch']
  %s0 = inlined_call_operand.vmem [shape: f32[128,3], index: 0, kind: input, shape index: {}]
  %s1 = inlined_call_operand.vmem [shape: f32[3,8], index: 1, kind: input, shape index: {}]
  %s2 = inlined_call_operand.vmem [shape: f32[1,8], index: 2, kind: input, shape index: {}]
  %s3 = inlined_call_operand.vmem [shape: f32[8,32], index: 3, kind: input, shape index: {}]
  %s4 = inlined_call_operand.vmem [shape: f32[1,32], index: 4, kind: input, shape index: {}]
  %s5 = inlined_call_operand.vmem [shape: f32[128,32], index: 5, kind: output, shape index: {}]
  %s6 = sld [smem:[#allocation0]]
  $region30: #{detr_forward.7} parent=0
    _
  %s8 = ssub.s32 1, %s6
  %s9 = scalar_select 0, %s8, %s6
  // Predicated region
  $region2: #{detr_forward.7} parent=0 // pred_check
    _
  $region3: #{detr_forward.7} parent=0 // pred_check_branch
    %11 = sbr.rel (0) target = $region5
  $region4: #{detr_forward.7} parent=0 // pred_region
    _
  $region5: #{detr_forward.7} parent=0 // pred_fallthru
    _
  // Predicated region
  $region6: #{detr_forward.7} parent=0 // pred_check
    _
  $region7: #{detr_forward.7} parent=0 // pred_check_branch
    %13 = sbr.rel (0) target = $region9
  $region8: #{detr_forward.7} parent=0 // pred_region
    _
  $region9: #{detr_forward.7} parent=0 // pred_fallthru
    _
  // Predicated region
  $region10: #{detr_forward.7} parent=0 // pred_check
    _
  $region11: #{detr_forward.7} parent=0 // pred_check_branch
    %15 = sbr.rel (0) target = $region13
  $region12: #{detr_forward.7} parent=0 // pred_region
    _
  $region13: #{detr_forward.7} parent=0 // pred_fallthru
    _
  // Predicated region
  $region14: #{detr_forward.7} parent=0 // pred_check
    _
  $region15: #{detr_forward.7} parent=0 // pred_check_branch
    %17 = sbr.rel (0) target = $region17
  $region16: #{detr_forward.7} parent=0 // pred_region
    _
  $region17: #{detr_forward.7} parent=0 // pred_fallthru
    _
  // Predicated region
  $region18: #{detr_forward.7} parent=0 // pred_check
    _
  $region19: #{detr_forward.7} parent=0 // pred_check_branch
    %19 = sbr.rel (0) target = $region21
  $region20: #{detr_forward.7} parent=0 // pred_region
    _
  $region21: #{detr_forward.7} parent=0 // pred_fallthru
    _
  %v20 = vld [vmem:[%s0] sm:$0xff]
  %v21 = vld [vmem:[%s0 + $0x8] sm:$0xff]
  %v22 = vld [vmem:[%s0 + $0x10] sm:$0xff]
  %v23 = vld [vmem:[%s0 + $0x18] sm:$0xff]
  %v24 = vld [vmem:[%s0 + $0x20] sm:$0xff]
  %v25 = vld [vmem:[%s0 + $0x28] sm:$0xff]
  %v26 = vld [vmem:[%s0 + $0x30] sm:$0xff]
  %v27 = vld [vmem:[%s0 + $0x38] sm:$0xff]
  %v28 = vld [vmem:[%s0 + $0x40] sm:$0xff]
  %v29 = vld [vmem:[%s0 + $0x48] sm:$0xff]
  %v30 = vld [vmem:[%s0 + $0x50] sm:$0xff]
  %v31 = vld [vmem:[%s0 + $0x58] sm:$0xff]
  %v32 = vld [vmem:[%s0 + $0x60] sm:$0xff]
  %v33 = vld [vmem:[%s0 + $0x68] sm:$0xff]
  %v34 = vld [vmem:[%s0 + $0x70] sm:$0xff]
  %v35 = vld [vmem:[%s0 + $0x78] sm:$0xff]
  %v36 = vld [vmem:[%s1] sm:$0x7]
  %v37 = vld [vmem:[%s2] sm:$0x1]
  %v39 = vperm.slane %v37, 0
  %vm41 = vcmask 23552
  %v43 = vsel %vm41, %v20, 0
  %v46 = vsel %vm41, %v21, 0
  %v49 = vsel %vm41, %v22, 0
  %v52 = vsel %vm41, %v23, 0
  %v55 = vsel %vm41, %v24, 0
  %v58 = vsel %vm41, %v25, 0
  %v61 = vsel %vm41, %v26, 0
  %v64 = vsel %vm41, %v27, 0
  %v67 = vsel %vm41, %v28, 0
  %v70 = vsel %vm41, %v29, 0
  %v73 = vsel %vm41, %v30, 0
  %v76 = vsel %vm41, %v31, 0
  %v79 = vsel %vm41, %v32, 0
  %v82 = vsel %vm41, %v33, 0
  %v85 = vsel %vm41, %v34, 0
  %v88 = vsel %vm41, %v35, 0
  %vm90 = vcmask 1042432
  %v92 = vsel %vm90, %v36, 0
  %94 = vmatpush.msra.mxu0 0.0
  %95 = vmatpush.msra.mxu0 0.0
  %96 = vmatpush.msra.mxu0 0.0
  %97 = vmatpush.msra.mxu0 0.0
  %98 = vmatpush.msra.mxu0 0.0
  %99 = vmatpush.msra.mxu0 0.0
  %100 = vmatpush.msra.mxu0 0.0
  %101 = vmatpush.msra.mxu0 0.0
  %102 = vmatpush.msra.mxu0 0.0
  %103 = vmatpush.msra.mxu0 0.0
  %104 = vmatpush.msra.mxu0 0.0
  %105 = vmatpush.msra.mxu0 0.0
  %106 = vmatpush.msra.mxu0 0.0
  %107 = vmatpush.msra.mxu0 0.0
  %108 = vmatpush.msra.mxu0 0.0
  %109 = vmatpush.msra.mxu0 %v92
  %110 = vmatmul.f32.gmra.mxu0 %v43
  %v111 = vpop.f32.mrf.mxu0
  %v112 = vadd.f32 %v39, %v111
  %113 = vmatmul.f32.gmra.mxu0 %v46
  %v114 = vpop.f32.mrf.mxu0
  %v115 = vadd.f32 %v39, %v114
  %116 = vmatmul.f32.gmra.mxu0 %v49
  %v117 = vpop.f32.mrf.mxu0
  %v118 = vadd.f32 %v39, %v117
  %119 = vmatmul.f32.gmra.mxu0 %v52
  %v120 = vpop.f32.mrf.mxu0
  %v121 = vadd.f32 %v39, %v120
  %122 = vmatmul.f32.gmra.mxu0 %v55
  %v123 = vpop.f32.mrf.mxu0
  %v124 = vadd.f32 %v39, %v123
  %125 = vmatmul.f32.gmra.mxu0 %v58
  %v126 = vpop.f32.mrf.mxu0
  %v127 = vadd.f32 %v39, %v126
  %128 = vmatmul.f32.gmra.mxu0 %v61
  %v129 = vpop.f32.mrf.mxu0
  %v130 = vadd.f32 %v39, %v129
  %131 = vmatmul.f32.gmra.mxu0 %v64
  %v132 = vpop.f32.mrf.mxu0
  %v133 = vadd.f32 %v39, %v132
  %134 = vmatmul.f32.gmra.mxu0 %v67
  %v135 = vpop.f32.mrf.mxu0
  %v136 = vadd.f32 %v39, %v135
  %137 = vmatmul.f32.gmra.mxu0 %v70
  %v138 = vpop.f32.mrf.mxu0
  %v139 = vadd.f32 %v39, %v138
  %140 = vmatmul.f32.gmra.mxu0 %v73
  %v141 = vpop.f32.mrf.mxu0
  %v142 = vadd.f32 %v39, %v141
  %143 = vmatmul.f32.gmra.mxu0 %v76
  %v144 = vpop.f32.mrf.mxu0
  %v145 = vadd.f32 %v39, %v144
  %146 = vmatmul.f32.gmra.mxu0 %v79
  %v147 = vpop.f32.mrf.mxu0
  %v148 = vadd.f32 %v39, %v147
  %149 = vmatmul.f32.gmra.mxu0 %v82
  %v150 = vpop.f32.mrf.mxu0
  %v151 = vadd.f32 %v39, %v150
  %152 = vmatmul.f32.gmra.mxu0 %v85
  %v153 = vpop.f32.mrf.mxu0
  %v154 = vadd.f32 %v39, %v153
  %155 = vmatmul.f32.gmra.mxu0 %v88
  %v156 = vpop.f32.mrf.mxu0
  %v157 = vadd.f32 %v39, %v156
  %158 = vdwg.mxu0
  %v159 = vmax.f32 %v112, 0.0
  %v160 = vmax.f32 %v115, 0.0
  %v161 = vmax.f32 %v118, 0.0
  %v162 = vmax.f32 %v121, 0.0
  %v163 = vmax.f32 %v124, 0.0
  %v164 = vmax.f32 %v127, 0.0
  %v165 = vmax.f32 %v130, 0.0
  %v166 = vmax.f32 %v133, 0.0
  %v167 = vmax.f32 %v136, 0.0
  %v168 = vmax.f32 %v139, 0.0
  %v169 = vmax.f32 %v142, 0.0
  %v170 = vmax.f32 %v145, 0.0
  %v171 = vmax.f32 %v148, 0.0
  %v172 = vmax.f32 %v151, 0.0
  %v173 = vmax.f32 %v154, 0.0
  %v174 = vmax.f32 %v157, 0.0
  %v175 = vld [vmem:[%s3] sm:$0xff]
  %v176 = vld [vmem:[%s4] sm:$0x1]
  %v178 = vperm.slane %v176, 0
  %vm180 = vcmask 64512
  %v182 = vsel %vm180, %v159, 0
  %v185 = vsel %vm180, %v160, 0
  %v188 = vsel %vm180, %v161, 0
  %v191 = vsel %vm180, %v162, 0
  %v194 = vsel %vm180, %v163, 0
  %v197 = vsel %vm180, %v164, 0
  %v200 = vsel %vm180, %v165, 0
  %v203 = vsel %vm180, %v166, 0
  %v206 = vsel %vm180, %v167, 0
  %v209 = vsel %vm180, %v168, 0
  %v212 = vsel %vm180, %v169, 0
  %v215 = vsel %vm180, %v170, 0
  %v218 = vsel %vm180, %v171, 0
  %v221 = vsel %vm180, %v172, 0
  %v224 = vsel %vm180, %v173, 0
  %v227 = vsel %vm180, %v174, 0
  %229 = vmatpush.msra.mxu0 0.0
  %230 = vmatpush.msra.mxu0 0.0
  %231 = vmatpush.msra.mxu0 0.0
  %232 = vmatpush.msra.mxu0 0.0
  %233 = vmatpush.msra.mxu0 0.0
  %234 = vmatpush.msra.mxu0 0.0
  %235 = vmatpush.msra.mxu0 0.0
  %236 = vmatpush.msra.mxu0 0.0
  %237 = vmatpush.msra.mxu0 0.0
  %238 = vmatpush.msra.mxu0 0.0
  %239 = vmatpush.msra.mxu0 0.0
  %240 = vmatpush.msra.mxu0 0.0
  %241 = vmatpush.msra.mxu0 0.0
  %242 = vmatpush.msra.mxu0 0.0
  %243 = vmatpush.msra.mxu0 0.0
  %244 = vmatpush.msra.mxu0 %v175
  %245 = vmatmul.f32.gmra.mxu0 %v182
  %v246 = vpop.f32.mrf.mxu0
  %v247 = vadd.f32 %v178, %v246
  %248 = vmatmul.f32.gmra.mxu0 %v185
  %v249 = vpop.f32.mrf.mxu0
  %v250 = vadd.f32 %v178, %v249
  %251 = vmatmul.f32.gmra.mxu0 %v188
  %v252 = vpop.f32.mrf.mxu0
  %v253 = vadd.f32 %v178, %v252
  %254 = vmatmul.f32.gmra.mxu0 %v191
  %v255 = vpop.f32.mrf.mxu0
  %v256 = vadd.f32 %v178, %v255
  %257 = vmatmul.f32.gmra.mxu0 %v194
  %v258 = vpop.f32.mrf.mxu0
  %v259 = vadd.f32 %v178, %v258
  %260 = vmatmul.f32.gmra.mxu0 %v197
  %v261 = vpop.f32.mrf.mxu0
  %v262 = vadd.f32 %v178, %v261
  %263 = vmatmul.f32.gmra.mxu0 %v200
  %v264 = vpop.f32.mrf.mxu0
  %v265 = vadd.f32 %v178, %v264
  %266 = vmatmul.f32.gmra.mxu0 %v203
  %v267 = vpop.f32.mrf.mxu0
  %v268 = vadd.f32 %v178, %v267
  %269 = vmatmul.f32.gmra.mxu0 %v206
  %v270 = vpop.f32.mrf.mxu0
  %v271 = vadd.f32 %v178, %v270
  %272 = vmatmul.f32.gmra.mxu0 %v209
  %v273 = vpop.f32.mrf.mxu0
  %v274 = vadd.f32 %v178, %v273
  %275 = vmatmul.f32.gmra.mxu0 %v212
  %v276 = vpop.f32.mrf.mxu0
  %v277 = vadd.f32 %v178, %v276
  %278 = vmatmul.f32.gmra.mxu0 %v215
  %v279 = vpop.f32.mrf.mxu0
  %v280 = vadd.f32 %v178, %v279
  %281 = vmatmul.f32.gmra.mxu0 %v218
  %v282 = vpop.f32.mrf.mxu0
  %v283 = vadd.f32 %v178, %v282
  %284 = vmatmul.f32.gmra.mxu0 %v221
  %v285 = vpop.f32.mrf.mxu0
  %v286 = vadd.f32 %v178, %v285
  %287 = vmatmul.f32.gmra.mxu0 %v224
  %v288 = vpop.f32.mrf.mxu0
  %v289 = vadd.f32 %v178, %v288
  %290 = vmatmul.f32.gmra.mxu0 %v227
  %v291 = vpop.f32.mrf.mxu0
  %v292 = vadd.f32 %v178, %v291
  %293 = vdwg.mxu0
  %vm294 = vcmask 261120
  %295 = vst.msk [vmem:[%s5] sm:$0xff] %vm294, %v247
  %296 = vst.msk [vmem:[%s5 + $0x8] sm:$0xff] %vm294, %v250
  %297 = vst.msk [vmem:[%s5 + $0x10] sm:$0xff] %vm294, %v253
  %298 = vst.msk [vmem:[%s5 + $0x18] sm:$0xff] %vm294, %v256
  %299 = vst.msk [vmem:[%s5 + $0x20] sm:$0xff] %vm294, %v259
  %300 = vst.msk [vmem:[%s5 + $0x28] sm:$0xff] %vm294, %v262
  %301 = vst.msk [vmem:[%s5 + $0x30] sm:$0xff] %vm294, %v265
  %302 = vst.msk [vmem:[%s5 + $0x38] sm:$0xff] %vm294, %v268
  %303 = vst.msk [vmem:[%s5 + $0x40] sm:$0xff] %vm294, %v271
  %304 = vst.msk [vmem:[%s5 + $0x48] sm:$0xff] %vm294, %v274
  %305 = vst.msk [vmem:[%s5 + $0x50] sm:$0xff] %vm294, %v277
  %306 = vst.msk [vmem:[%s5 + $0x58] sm:$0xff] %vm294, %v280
  %307 = vst.msk [vmem:[%s5 + $0x60] sm:$0xff] %vm294, %v283
  %308 = vst.msk [vmem:[%s5 + $0x68] sm:$0xff] %vm294, %v286
  %309 = vst.msk [vmem:[%s5 + $0x70] sm:$0xff] %vm294, %v289
  %310 = vst.msk [vmem:[%s5 + $0x78] sm:$0xff] %vm294, %v292
  // Predicated region
  $region22: #{detr_forward.7} parent=0 // pred_check
    _
  $region23: #{detr_forward.7} parent=0 // pred_check_branch
    %312 = sbr.rel (0) target = $region25
  $region24: #{detr_forward.7} parent=0 // pred_region
    _
  $region25: #{detr_forward.7} parent=0 // pred_fallthru
    _
  // Predicated region
  $region26: #{detr_forward.7} parent=0 // pred_check
    _
  $region27: #{detr_forward.7} parent=0 // pred_check_branch
    %314 = sbr.rel (0) target = $region29
  $region28: #{detr_forward.7} parent=0 // pred_region
    _
  $region29: #{detr_forward.7} parent=0 // pred_fallthru
    _

// kernel: detr_forward.10
$region0: #{detr_forward.10}
  #allocation0 [shape = 'u32[]', space=smem, size = 0x4, offset = 0x4, fixed_abs, tag = 'smem constant byte address 0x4 - core index']
  #allocation1 [shape = 'u32[72,128]{1,0:T(1,128)}', space=vmem, size = 0x9000, scoped, tag = 'internal scratch']
  %s0 = inlined_call_operand.vmem [shape: f32[2,8,32], index: 0, kind: input, shape index: {}, may-alias: {0,2}]
  %s1 = inlined_call_operand.vmem [shape: f32[1,8,32], index: 1, kind: input, shape index: {}, may-alias: {1,3}]
  %s2 = inlined_call_operand.vmem [shape: f32[2,8,32], index: 2, kind: input, shape index: {}, may-alias: {0,2}]
  %s3 = inlined_call_operand.vmem [shape: f32[1,8,32], index: 3, kind: input, shape index: {}, may-alias: {1,3}]
  %s4 = inlined_call_operand.vmem [shape: f32[2,1,8], index: 4, kind: input, shape index: {}]
  %s5 = inlined_call_operand.vmem [shape: f32[32,32], index: 5, kind: input, shape index: {}]
  %s6 = inlined_call_operand.vmem [shape: f32[1,32], index: 6, kind: input, shape index: {}]
  %s7 = inlined_call_operand.vmem [shape: f32[32,32], index: 7, kind: input, shape index: {}]
  %s8 = inlined_call_operand.vmem [shape: f32[1,32], index: 8, kind: input, shape index: {}]
  %s9 = inlined_call_operand.hbm [shape: f32[32,32], index: 9, kind: input, shape index: {}]
  %s10 = inlined_call_operand.hbm [shape: f32[1,32], index: 10, kind: input, shape index: {}]
  %s11 = inlined_call_operand.hbm [shape: f32[32,32], index: 11, kind: input, shape index: {}]
  %s12 = inlined_call_operand.hbm [shape: f32[1,32], index: 12, kind: input, shape index: {}]
  %s13 = inlined_call_operand.hbm [shape: f32[1,32], index: 13, kind: input, shape index: {}]
  %s14 = inlined_call_operand.hbm [shape: f32[1,32], index: 14, kind: input, shape index: {}]
  %s15 = inlined_call_operand.vmem [shape: f32[2,8,32], index: 15, kind: output, shape index: {}]
  %s16 = sld [smem:[#allocation0]]
  $region117: #{detr_forward.10} parent=0
    _
  %s18 = ssub.s32 1, %s16
  %s19 = scalar_select 0, %s18, %s16
  $region1: #{detr_forward.10} parent=0
    #allocation2 [shape = 'u8[16384]{0}', space=vmem, size = 0x4000, scoped, tag = 'input window, operand 9, single buffered']
    #allocation3 [shape = 's32[2]{0}', space=sflag, size = 0x8, scoped, tag = 'scoped memory for detr_forward.10']
    #allocation4 [shape = 'u8[512]{0}', space=vmem, size = 0x400, scoped, tag = 'input window, operand 10, single buffered']
    #allocation5 [shape = 's32[1]{0}', space=sflag, size = 0x4, scoped, tag = 'scoped memory for detr_forward.10']
    #allocation6 [shape = 'u8[16384]{0}', space=vmem, size = 0x4000, scoped, tag = 'input window, operand 11, single buffered']
    #allocation7 [shape = 'u8[512]{0}', space=vmem, size = 0x400, scoped, tag = 'input window, operand 12, single buffered']
    #allocation8 [shape = 's32[1]{0}', space=sflag, size = 0x4, scoped, tag = 'scoped memory for detr_forward.10']
    #allocation9 [shape = 'u8[512]{0}', space=vmem, size = 0x400, scoped, tag = 'input window, operand 13, single buffered']
    #allocation10 [shape = 'u8[512]{0}', space=vmem, size = 0x400, scoped, tag = 'input window, operand 14, single buffered']
    #allocation11 [shape = 's32[1]{0}', space=sflag, size = 0x4, scoped, tag = 'scoped memory for detr_forward.10']
    %20 = vsyncpa [#allocation3], 0
    %21 = vsyncpa [#allocation5], 0
    %22 = vsyncpa [#allocation8], 0
    %23 = vsyncpa [#allocation11], 0
    loop: start=0, step=1, limit=4
    $region2: #{detr_forward.10} parent=1 // loop_pre_header
      _
    $region3: #{detr_forward.10} parent=1 // loop_header
      %s25 = sphi 0, %s29
      %p26 = scmp.ge.s32.totalorder %s25, 4
      %s35 = sphi 0, %s37
      %s38 = sphi 0, %s35
      %s39 = sphi 0, %s38
      %s55 = sphi 0, %s39
      %s59 = sphi 0, %s59
      %s61 = sphi 0, %s59
      %s62 = sphi 0, %s61
      %s76 = sphi 0, %s62
      %s82 = sphi 0, %s84
      %s85 = sphi 0, %s82
      %s86 = sphi 0, %s85
      %s102 = sphi 0, %s86
      %s106 = sphi 0, %s106
      %s108 = sphi 0, %s106
      %s109 = sphi 0, %s108
      %s123 = sphi 0, %s109
      %s129 = sphi 0, %s131
      %s132 = sphi 0, %s129
      %s133 = sphi 0, %s132
      %s149 = sphi 0, %s133
      %s153 = sphi 0, %s153
      %s155 = sphi 0, %s153
      %s156 = sphi 0, %s155
      %s170 = sphi 0, %s156
      %s174 = sphi 0, %s174
      %s176 = sphi 0, %s174
      %s177 = sphi 0, %s176
      %s191 = sphi 0, %s177
      %s195 = sphi 0, %s195
      %s197 = sphi 0, %s195
      %s198 = sphi 0, %s197
      %s212 = sphi 0, %s198
      %s216 = sphi 0, %s216
      %s218 = sphi 0, %s216
      %s219 = sphi 0, %s218
      %s233 = sphi 0, %s219
      %s237 = sphi 0, %s237
      %s239 = sphi 0, %s237
      %s240 = sphi 0, %s239
      %s254 = sphi 0, %s240
      %s258 = sphi 0, %s258
      %s260 = sphi 0, %s258
      %s261 = sphi 0, %s260
      %s275 = sphi 0, %s261
      %s279 = sphi 0, %s279
      %s281 = sphi 0, %s279
      %s282 = sphi 0, %s281
      %s296 = sphi 0, %s282
      %s300 = sphi 0, %s300
      %s302 = sphi 0, %s300
      %s303 = sphi 0, %s302
      %s317 = sphi 0, %s303
      %s321 = sphi 0, %s321
      %s323 = sphi 0, %s321
      %s324 = sphi 0, %s323
      %s338 = sphi 0, %s324
      %s342 = sphi 0, %s342
      %s344 = sphi 0, %s342
      %s345 = sphi 0, %s344
      %s359 = sphi 0, %s345
      %s365 = sphi 0, %s367
      %s368 = sphi 0, %s365
      %s369 = sphi 0, %s368
      %s385 = sphi 0, %s369
    $region4: #{detr_forward.10} parent=1 // loop_header_branch
      %28 = sbr.rel (%p26) target = $region8
    $region5: #{detr_forward.10} parent=1 // loop_body
      %s30 = ssub.s32 %s25, 1
      %s31 = ssub.s32 %s25, 2
      %s32 = sadd.s32 %s25, 1
      %s33 = ssub.s32 %s25, %s32
      %p34 = scmp.eq.s32.totalorder %s33, 0
      %s36 = sadd.s32 %s35, 1
      %s37 = scalar_select %p34, %s35, %s36
      %p40 = pneg %p34
      %p41 = scmp.eq.s32.totalorder %s25, 1
      %p42 = por %p40, %p41
      %p43 = scmp.ne.s32.totalorder %s35, %s38
      %p44 = scmp.eq.s32.totalorder %s25, 0
      %p45 = por %p43, %p44
      %p46 = scmp.ne.s32.totalorder %s35, %s38
      %p47 = scmp.eq.s32.totalorder %s30, 1
      %p48 = por %p46, %p47
      %p49 = scmp.ne.s32.totalorder %s38, %s39
      %p50 = scmp.eq.s32.totalorder %s30, 0
      %p51 = por %p49, %p50
      %p52 = scmp.ne.s32.totalorder %s38, %s39
      %p53 = scmp.eq.s32.totalorder %s31, 1
      %p54 = por %p52, %p53
      %p56 = scmp.ne.s32.totalorder %s39, %s55
      %p57 = scmp.eq.s32.totalorder %s31, 0
      %p58 = por %p56, %p57
      %s60 = sadd.s32 %s59, 1
      %p63 = scmp.eq.s32.totalorder %s25, 1
      %p64 = scmp.ne.s32.totalorder %s59, %s61
      %p65 = scmp.eq.s32.totalorder %s25, 0
      %p66 = por %p64, %p65
      %p67 = scmp.ne.s32.totalorder %s59, %s61
      %p68 = scmp.eq.s32.totalorder %s30, 1
      %p69 = por %p67, %p68
      %p70 = scmp.ne.s32.totalorder %s61, %s62
      %p71 = scmp.eq.s32.totalorder %s30, 0
      %p72 = por %p70, %p71
      %p73 = scmp.ne.s32.totalorder %s61, %s62
      %p74 = scmp.eq.s32.totalorder %s31, 1
      %p75 = por %p73, %p74
      %p77 = scmp.ne.s32.totalorder %s62, %s76
      %p78 = scmp.eq.s32.totalorder %s31, 0
      %p79 = por %p77, %p78
      %s80 = ssub.s32 %s25, %s32
      %p81 = scmp.eq.s32.totalorder %s80, 0
      %s83 = sadd.s32 %s82, 1
      %s84 = scalar_select %p81, %s82, %s83
      %p87 = pneg %p81
      %p88 = scmp.eq.s32.totalorder %s25, 1
      %p89 = por %p87, %p88
      %p90 = scmp.ne.s32.totalorder %s82, %s85
      %p91 = scmp.eq.s32.totalorder %s25, 0
      %p92 = por %p90, %p91
      %p93 = scmp.ne.s32.totalorder %s82, %s85
      %p94 = scmp.eq.s32.totalorder %s30, 1
      %p95 = por %p93, %p94
      %p96 = scmp.ne.s32.totalorder %s85, %s86
      %p97 = scmp.eq.s32.totalorder %s30, 0
      %p98 = por %p96, %p97
      %p99 = scmp.ne.s32.totalorder %s85, %s86
      %p100 = scmp.eq.s32.totalorder %s31, 1
      %p101 = por %p99, %p100
      %p103 = scmp.ne.s32.totalorder %s86, %s102
      %p104 = scmp.eq.s32.totalorder %s31, 0
      %p105 = por %p103, %p104
      %s107 = sadd.s32 %s106, 1
      %p110 = scmp.eq.s32.totalorder %s25, 1
      %p111 = scmp.ne.s32.totalorder %s106, %s108
      %p112 = scmp.eq.s32.totalorder %s25, 0
      %p113 = por %p111, %p112
      %p114 = scmp.ne.s32.totalorder %s106, %s108
      %p115 = scmp.eq.s32.totalorder %s30, 1
      %p116 = por %p114, %p115
      %p117 = scmp.ne.s32.totalorder %s108, %s109
      %p118 = scmp.eq.s32.totalorder %s30, 0
      %p119 = por %p117, %p118
      %p120 = scmp.ne.s32.totalorder %s108, %s109
      %p121 = scmp.eq.s32.totalorder %s31, 1
      %p122 = por %p120, %p121
      %p124 = scmp.ne.s32.totalorder %s109, %s123
      %p125 = scmp.eq.s32.totalorder %s31, 0
      %p126 = por %p124, %p125
      %s127 = ssub.s32 %s25, %s32
      %p128 = scmp.eq.s32.totalorder %s127, 0
      %s130 = sadd.s32 %s129, 1
      %s131 = scalar_select %p128, %s129, %s130
      %p134 = pneg %p128
      %p135 = scmp.eq.s32.totalorder %s25, 1
      %p136 = por %p134, %p135
      %p137 = scmp.ne.s32.totalorder %s129, %s132
      %p138 = scmp.eq.s32.totalorder %s25, 0
      %p139 = por %p137, %p138
      %p140 = scmp.ne.s32.totalorder %s129, %s132
      %p141 = scmp.eq.s32.totalorder %s30, 1
      %p142 = por %p140, %p141
      %p143 = scmp.ne.s32.totalorder %s132, %s133
      %p144 = scmp.eq.s32.totalorder %s30, 0
      %p145 = por %p143, %p144
      %p146 = scmp.ne.s32.totalorder %s132, %s133
      %p147 = scmp.eq.s32.totalorder %s31, 1
      %p148 = por %p146, %p147
      %p150 = scmp.ne.s32.totalorder %s133, %s149
      %p151 = scmp.eq.s32.totalorder %s31, 0
      %p152 = por %p150, %p151
      %s154 = sadd.s32 %s153, 1
      %p157 = scmp.eq.s32.totalorder %s25, 1
      %p158 = scmp.ne.s32.totalorder %s153, %s155
      %p159 = scmp.eq.s32.totalorder %s25, 0
      %p160 = por %p158, %p159
      %p161 = scmp.ne.s32.totalorder %s153, %s155
      %p162 = scmp.eq.s32.totalorder %s30, 1
      %p163 = por %p161, %p162
      %p164 = scmp.ne.s32.totalorder %s155, %s156
      %p165 = scmp.eq.s32.totalorder %s30, 0
      %p166 = por %p164, %p165
      %p167 = scmp.ne.s32.totalorder %s155, %s156
      %p168 = scmp.eq.s32.totalorder %s31, 1
      %p169 = por %p167, %p168
      %p171 = scmp.ne.s32.totalorder %s156, %s170
      %p172 = scmp.eq.s32.totalorder %s31, 0
      %p173 = por %p171, %p172
      %s175 = sadd.s32 %s174, 1
      %p178 = scmp.eq.s32.totalorder %s25, 1
      %p179 = scmp.ne.s32.totalorder %s174, %s176
      %p180 = scmp.eq.s32.totalorder %s25, 0
      %p181 = por %p179, %p180
      %p182 = scmp.ne.s32.totalorder %s174, %s176
      %p183 = scmp.eq.s32.totalorder %s30, 1
      %p184 = por %p182, %p183
      %p185 = scmp.ne.s32.totalorder %s176, %s177
      %p186 = scmp.eq.s32.totalorder %s30, 0
      %p187 = por %p185, %p186
      %p188 = scmp.ne.s32.totalorder %s176, %s177
      %p189 = scmp.eq.s32.totalorder %s31, 1
      %p190 = por %p188, %p189
      %p192 = scmp.ne.s32.totalorder %s177, %s191
      %p193 = scmp.eq.s32.totalorder %s31, 0
      %p194 = por %p192, %p193
      %s196 = sadd.s32 %s195, 1
      %p199 = scmp.eq.s32.totalorder %s25, 1
      %p200 = scmp.ne.s32.totalorder %s195, %s197
      %p201 = scmp.eq.s32.totalorder %s25, 0
      %p202 = por %p200, %p201
      %p203 = scmp.ne.s32.totalorder %s195, %s197
      %p204 = scmp.eq.s32.totalorder %s30, 1
      %p205 = por %p203, %p204
      %p206 = scmp.ne.s32.totalorder %s197, %s198
      %p207 = scmp.eq.s32.totalorder %s30, 0
      %p208 = por %p206, %p207
      %p209 = scmp.ne.s32.totalorder %s197, %s198
      %p210 = scmp.eq.s32.totalorder %s31, 1
      %p211 = por %p209, %p210
      %p213 = scmp.ne.s32.totalorder %s198, %s212
      %p214 = scmp.eq.s32.totalorder %s31, 0
      %p215 = por %p213, %p214
      %s217 = sadd.s32 %s216, 1
      %p220 = scmp.eq.s32.totalorder %s25, 1
      %p221 = scmp.ne.s32.totalorder %s216, %s218
      %p222 = scmp.eq.s32.totalorder %s25, 0
      %p223 = por %p221, %p222
      %p224 = scmp.ne.s32.totalorder %s216, %s218
      %p225 = scmp.eq.s32.totalorder %s30, 1
      %p226 = por %p224, %p225
      %p227 = scmp.ne.s32.totalorder %s218, %s219
      %p228 = scmp.eq.s32.totalorder %s30, 0
      %p229 = por %p227, %p228
      %p230 = scmp.ne.s32.totalorder %s218, %s219
      %p231 = scmp.eq.s32.totalorder %s31, 1
      %p232 = por %p230, %p231
      %p234 = scmp.ne.s32.totalorder %s219, %s233
      %p235 = scmp.eq.s32.totalorder %s31, 0
      %p236 = por %p234, %p235
      %s238 = sadd.s32 %s237, 1
      %p241 = scmp.eq.s32.totalorder %s25, 1
      %p242 = scmp.ne.s32.totalorder %s237, %s239
      %p243 = scmp.eq.s32.totalorder %s25, 0
      %p244 = por %p242, %p243
      %p245 = scmp.ne.s32.totalorder %s237, %s239
      %p246 = scmp.eq.s32.totalorder %s30, 1
      %p247 = por %p245, %p246
      %p248 = scmp.ne.s32.totalorder %s239, %s240
      %p249 = scmp.eq.s32.totalorder %s30, 0
      %p250 = por %p248, %p249
      %p251 = scmp.ne.s32.totalorder %s239, %s240
      %p252 = scmp.eq.s32.totalorder %s31, 1
      %p253 = por %p251, %p252
      %p255 = scmp.ne.s32.totalorder %s240, %s254
      %p256 = scmp.eq.s32.totalorder %s31, 0
      %p257 = por %p255, %p256
      %s259 = sadd.s32 %s258, 1
      %p262 = scmp.eq.s32.totalorder %s25, 1
      %p263 = scmp.ne.s32.totalorder %s258, %s260
      %p264 = scmp.eq.s32.totalorder %s25, 0
      %p265 = por %p263, %p264
      %p266 = scmp.ne.s32.totalorder %s258, %s260
      %p267 = scmp.eq.s32.totalorder %s30, 1
      %p268 = por %p266, %p267
      %p269 = scmp.ne.s32.totalorder %s260, %s261
      %p270 = scmp.eq.s32.totalorder %s30, 0
      %p271 = por %p269, %p270
      %p272 = scmp.ne.s32.totalorder %s260, %s261
      %p273 = scmp.eq.s32.totalorder %s31, 1
      %p274 = por %p272, %p273
      %p276 = scmp.ne.s32.totalorder %s261, %s275
      %p277 = scmp.eq.s32.totalorder %s31, 0
      %p278 = por %p276, %p277
      %s280 = sadd.s32 %s279, 1
      %p283 = scmp.eq.s32.totalorder %s25, 1
      %p284 = scmp.ne.s32.totalorder %s279, %s281
      %p285 = scmp.eq.s32.totalorder %s25, 0
      %p286 = por %p284, %p285
      %p287 = scmp.ne.s32.totalorder %s279, %s281
      %p288 = scmp.eq.s32.totalorder %s30, 1
      %p289 = por %p287, %p288
      %p290 = scmp.ne.s32.totalorder %s281, %s282
      %p291 = scmp.eq.s32.totalorder %s30, 0
      %p292 = por %p290, %p291
      %p293 = scmp.ne.s32.totalorder %s281, %s282
      %p294 = scmp.eq.s32.totalorder %s31, 1
      %p295 = por %p293, %p294
      %p297 = scmp.ne.s32.totalorder %s282, %s296
      %p298 = scmp.eq.s32.totalorder %s31, 0
      %p299 = por %p297, %p298
      %s301 = sadd.s32 %s300, 1
      %p304 = scmp.eq.s32.totalorder %s25, 1
      %p305 = scmp.ne.s32.totalorder %s300, %s302
      %p306 = scmp.eq.s32.totalorder %s25, 0
      %p307 = por %p305, %p306
      %p308 = scmp.ne.s32.totalorder %s300, %s302
      %p309 = scmp.eq.s32.totalorder %s30, 1
      %p310 = por %p308, %p309
      %p311 = scmp.ne.s32.totalorder %s302, %s303
      %p312 = scmp.eq.s32.totalorder %s30, 0
      %p313 = por %p311, %p312
      %p314 = scmp.ne.s32.totalorder %s302, %s303
      %p315 = scmp.eq.s32.totalorder %s31, 1
      %p316 = por %p314, %p315
      %p318 = scmp.ne.s32.totalorder %s303, %s317
      %p319 = scmp.eq.s32.totalorder %s31, 0
      %p320 = por %p318, %p319
      %s322 = sadd.s32 %s321, 1
      %p325 = scmp.eq.s32.totalorder %s25, 1
      %p326 = scmp.ne.s32.totalorder %s321, %s323
      %p327 = scmp.eq.s32.totalorder %s25, 0
      %p328 = por %p326, %p327
      %p329 = scmp.ne.s32.totalorder %s321, %s323
      %p330 = scmp.eq.s32.totalorder %s30, 1
      %p331 = por %p329, %p330
      %p332 = scmp.ne.s32.totalorder %s323, %s324
      %p333 = scmp.eq.s32.totalorder %s30, 0
      %p334 = por %p332, %p333
      %p335 = scmp.ne.s32.totalorder %s323, %s324
      %p336 = scmp.eq.s32.totalorder %s31, 1
      %p337 = por %p335, %p336
      %p339 = scmp.ne.s32.totalorder %s324, %s338
      %p340 = scmp.eq.s32.totalorder %s31, 0
      %p341 = por %p339, %p340
      %s343 = sadd.s32 %s342, 1
      %p346 = scmp.eq.s32.totalorder %s25, 1
      %p347 = scmp.ne.s32.totalorder %s342, %s344
      %p348 = scmp.eq.s32.totalorder %s25, 0
      %p349 = por %p347, %p348
      %p350 = scmp.ne.s32.totalorder %s342, %s344
      %p351 = scmp.eq.s32.totalorder %s30, 1
      %p352 = por %p350, %p351
      %p353 = scmp.ne.s32.totalorder %s344, %s345
      %p354 = scmp.eq.s32.totalorder %s30, 0
      %p355 = por %p353, %p354
      %p356 = scmp.ne.s32.totalorder %s344, %s345
      %p357 = scmp.eq.s32.totalorder %s31, 1
      %p358 = por %p356, %p357
      %p360 = scmp.ne.s32.totalorder %s345, %s359
      %p361 = scmp.eq.s32.totalorder %s31, 0
      %p362 = por %p360, %p361
      %s363 = ssub.s32 %s25, %s32
      %p364 = scmp.eq.s32.totalorder %s363, 0
      %s366 = sadd.s32 %s365, 1
      %s367 = scalar_select %p364, %s365, %s366
      %p370 = pneg %p364
      %p371 = scmp.eq.s32.totalorder %s25, 1
      %p372 = por %p370, %p371
      %p373 = scmp.ne.s32.totalorder %s365, %s368
      %p374 = scmp.eq.s32.totalorder %s25, 0
      %p375 = por %p373, %p374
      %p376 = scmp.ne.s32.totalorder %s365, %s368
      %p377 = scmp.eq.s32.totalorder %s30, 1
      %p378 = por %p376, %p377
      %p379 = scmp.ne.s32.totalorder %s368, %s369
      %p380 = scmp.eq.s32.totalorder %s30, 0
      %p381 = por %p379, %p380
      %p382 = scmp.ne.s32.totalorder %s368, %s369
      %p383 = scmp.eq.s32.totalorder %s31, 1
      %p384 = por %p382, %p383
      %p386 = scmp.ne.s32.totalorder %s369, %s385
      %p387 = scmp.eq.s32.totalorder %s31, 0
      %p388 = por %p386, %p387
      %p389 = scmp.le.s32.totalorder 1, %s25
      %p390 = scmp.lt.s32.totalorder %s25, 3
      %p391 = pnand %p389, %p390
      %p392 = pneg %p391
      // Predicated region
      $region9: #{detr_forward.10} parent=5 // pred_check
        _
      $region10: #{detr_forward.10} parent=5 // pred_check_branch
        %394 = sbr.rel (%p391) target = $region12
      $region11: #{detr_forward.10} parent=5 // pred_region
        %s395 = ssub.s32 %s25, 1
        // Predicated region
        $region13: #{detr_forward.10} parent=11 // pred_check
          %p396 = pneg %p72
        $region14: #{detr_forward.10} parent=11 // pred_check_branch
          %398 = sbr.rel (%p396) target = $region16
        $region15: #{detr_forward.10} parent=11 // pred_region
          _
        $region16: #{detr_forward.10} parent=11 // pred_fallthru
          _
        // Predicated region
        $region17: #{detr_forward.10} parent=11 // pred_check
          %p399 = pneg %p119
        $region18: #{detr_forward.10} parent=11 // pred_check_branch
          %401 = sbr.rel (%p399) target = $region20
        $region19: #{detr_forward.10} parent=11 // pred_region
          _
        $region20: #{detr_forward.10} parent=11 // pred_fallthru
          _
        // Predicated region
        $region21: #{detr_forward.10} parent=11 // pred_check
          %p402 = pneg %p166
        $region22: #{detr_forward.10} parent=11 // pred_check_branch
          %404 = sbr.rel (%p402) target = $region24
        $region23: #{detr_forward.10} parent=11 // pred_region
          _
        $region24: #{detr_forward.10} parent=11 // pred_fallthru
          _
        // Predicated region
        $region25: #{detr_forward.10} parent=11 // pred_check
          %p405 = pneg %p187
        $region26: #{detr_forward.10} parent=11 // pred_check_branch
          %407 = sbr.rel (%p405) target = $region28
        $region27: #{detr_forward.10} parent=11 // pred_region
          _
        $region28: #{detr_forward.10} parent=11 // pred_fallthru
          _
        // Predicated region
        $region29: #{detr_forward.10} parent=11 // pred_check
          %p408 = pneg %p208
        $region30: #{detr_forward.10} parent=11 // pred_check_branch
          %410 = sbr.rel (%p408) target = $region32
        $region31: #{detr_forward.10} parent=11 // pred_region
          _
        $region32: #{detr_forward.10} parent=11 // pred_fallthru
          _
        // Predicated region
        $region33: #{detr_forward.10} parent=11 // pred_check
          %p411 = pneg %p229
        $region34: #{detr_forward.10} parent=11 // pred_check_branch
          %413 = sbr.rel (%p411) target = $region36
        $region35: #{detr_forward.10} parent=11 // pred_region
          _
        $region36: #{detr_forward.10} parent=11 // pred_fallthru
          _
        // Predicated region
        $region37: #{detr_forward.10} parent=11 // pred_check
          %p414 = pneg %p250
        $region38: #{detr_forward.10} parent=11 // pred_check_branch
          %416 = sbr.rel (%p414) target = $region40
        $region39: #{detr_forward.10} parent=11 // pred_region
          %418 = vsyncadd [#allocation3], 0
          %s419 = sshll.u32 %s9, 4
          %s420 = int_to_ptr.hbm [resolvable:$true] %s419
          %s421 = sshll.u32 [#allocation2], 4
          %s422 = int_to_ptr.vmem [resolvable:$true] %s421
          %427 = dma.hbm_to_vmem [thread:$0]  %s420, 512, %s422, [#allocation3], 128, 128, 8
        $region40: #{detr_forward.10} parent=11 // pred_fallthru
          _
        // Predicated region
        $region41: #{detr_forward.10} parent=11 // pred_check
          %p428 = pneg %p271
        $region42: #{detr_forward.10} parent=11 // pred_check_branch
          %430 = sbr.rel (%p428) target = $region44
        $region43: #{detr_forward.10} parent=11 // pred_region
          %432 = vsyncadd [#allocation5], 0
          %s434 = sshll.u32 %s10, 4
          %s435 = int_to_ptr.hbm [resolvable:$true] %s434
          %s436 = sshll.u32 [#allocation4], 4
          %s437 = int_to_ptr.vmem [resolvable:$true] %s436
          %439 = dma.hbm_to_vmem [thread:$0]  %s435, 16, %s437, [#allocation5]
        $region44: #{detr_forward.10} parent=11 // pred_fallthru
          _
        // Predicated region
        $region45: #{detr_forward.10} parent=11 // pred_check
          %p440 = pneg %p292
        $region46: #{detr_forward.10} parent=11 // pred_check_branch
          %442 = sbr.rel (%p440) target = $region48
        $region47: #{detr_forward.10} parent=11 // pred_region
          %444 = vsyncadd [#allocation5], 0
          %s445 = sshll.u32 %s11, 4
          %s446 = int_to_ptr.hbm [resolvable:$true] %s445
          %s447 = sshll.u32 [#allocation6], 4
          %s448 = int_to_ptr.vmem [resolvable:$true] %s447
          %453 = dma.hbm_to_vmem [thread:$0]  %s446, 512, %s448, [#allocation5], 128, 128, 8
        $region48: #{detr_forward.10} parent=11 // pred_fallthru
          _
        // Predicated region
        $region49: #{detr_forward.10} parent=11 // pred_check
          %p454 = pneg %p313
        $region50: #{detr_forward.10} parent=11 // pred_check_branch
          %456 = sbr.rel (%p454) target = $region52
        $region51: #{detr_forward.10} parent=11 // pred_region
          %458 = vsyncadd [#allocation8], 0
          %s460 = sshll.u32 %s12, 4
          %s461 = int_to_ptr.hbm [resolvable:$true] %s460
          %s462 = sshll.u32 [#allocation7], 4
          %s463 = int_to_ptr.vmem [resolvable:$true] %s462
          %465 = dma.hbm_to_vmem [thread:$0]  %s461, 16, %s463, [#allocation8]
        $region52: #{detr_forward.10} parent=11 // pred_fallthru
          _
        // Predicated region
        $region53: #{detr_forward.10} parent=11 // pred_check
          %p466 = pneg %p334
        $region54: #{detr_forward.10} parent=11 // pred_check_branch
          %468 = sbr.rel (%p466) target = $region56
        $region55: #{detr_forward.10} parent=11 // pred_region
          %470 = vsyncadd [#allocation8], 0
          %s472 = sshll.u32 %s13, 4
          %s473 = int_to_ptr.hbm [resolvable:$true] %s472
          %s474 = sshll.u32 [#allocation9], 4
          %s475 = int_to_ptr.vmem [resolvable:$true] %s474
          %477 = dma.hbm_to_vmem [thread:$0]  %s473, 16, %s475, [#allocation8]
        $region56: #{detr_forward.10} parent=11 // pred_fallthru
          _
        // Predicated region
        $region57: #{detr_forward.10} parent=11 // pred_check
          %p478 = pneg %p355
        $region58: #{detr_forward.10} parent=11 // pred_check_branch
          %480 = sbr.rel (%p478) target = $region60
        $region59: #{detr_forward.10} parent=11 // pred_region
          %482 = vsyncadd [#allocation11], 0
          %s484 = sshll.u32 %s14, 4
          %s485 = int_to_ptr.hbm [resolvable:$true] %s484
          %s486 = sshll.u32 [#allocation10], 4
          %s487 = int_to_ptr.vmem [resolvable:$true] %s486
          %489 = dma.hbm_to_vmem [thread:$0]  %s485, 16, %s487, [#allocation11]
        $region60: #{detr_forward.10} parent=11 // pred_fallthru
          _
      $region12: #{detr_forward.10} parent=5 // pred_fallthru
        _
      %p490 = scmp.lt.s32.totalorder %s25, 2
      // Predicated region
      $region61: #{detr_forward.10} parent=5 // pred_check
        %p491 = pneg %p490
      $region62: #{detr_forward.10} parent=5 // pred_check_branch
        %493 = sbr.rel (%p491) target = $region64
      $region63: #{detr_forward.10} parent=5 // pred_region
        // Predicated region
        $region65: #{detr_forward.10} parent=63 // pred_check
          %p494 = pneg %p45
        $region66: #{detr_forward.10} parent=63 // pred_check_branch
          %496 = sbr.rel (%p494) target = $region68
        $region67: #{detr_forward.10} parent=63 // pred_region
          %p497 = scmp.lt.s32.totalorder %s25, 1
          %s498 = scalar_select %p497, %s25, 1
          %s499 = smul.addr %s498, 8
          %s500 = scalar_lea.vmem %s0, %s499
        $region68: #{detr_forward.10} parent=63 // pred_fallthru
          _
        // Predicated region
        $region69: #{detr_forward.10} parent=63 // pred_check
          %p501 = pneg %p92
        $region70: #{detr_forward.10} parent=63 // pred_check_branch
          %503 = sbr.rel (%p501) target = $region72
        $region71: #{detr_forward.10} parent=63 // pred_region
          %p504 = scmp.lt.s32.totalorder %s25, 1
          %s505 = scalar_select %p504, %s25, 1
          %s506 = smul.addr %s505, 8
          %s507 = scalar_lea.vmem %s2, %s506
        $region72: #{detr_forward.10} parent=63 // pred_fallthru
          _
        // Predicated region
        $region73: #{detr_forward.10} parent=63 // pred_check
          %p508 = pneg %p139
        $region74: #{detr_forward.10} parent=63 // pred_check_branch
          %510 = sbr.rel (%p508) target = $region76
        $region75: #{detr_forward.10} parent=63 // pred_region
          %p511 = scmp.lt.s32.totalorder %s25, 1
          %s512 = scalar_select %p511, %s25, 1
          %s513 = scalar_lea.vmem %s4, %s512
        $region76: #{detr_forward.10} parent=63 // pred_fallthru
          _
      $region64: #{detr_forward.10} parent=5 // pred_fallthru
        _
      %p514 = scmp.le.s32.totalorder 1, %s25
      %p515 = scmp.lt.s32.totalorder %s25, 3
      %p516 = pnand %p514, %p515
      %p517 = pneg %p516
      // Predicated region
      $region77: #{detr_forward.10} parent=5 // pred_check
        _
      $region78: #{detr_forward.10} parent=5 // pred_check_branch
        %519 = sbr.rel (%p516) target = $region80
      $region79: #{detr_forward.10} parent=5 // pred_region
        %s520 = ssub.s32 %s25, 1
        // Predicated region
        $region81: #{detr_forward.10} parent=79 // pred_check
          %p521 = pneg %p250
        $region82: #{detr_forward.10} parent=79 // pred_check_branch
          %523 = sbr.rel (%p521) target = $region84
        $region83: #{detr_forward.10} parent=79 // pred_region
          %525 = dma.done [#allocation3], 512
        $region84: #{detr_forward.10} parent=79 // pred_fallthru
          _
        // Predicated region
        $region85: #{detr_forward.10} parent=79 // pred_check
          %p526 = pneg %p271
        $region86: #{detr_forward.10} parent=79 // pred_check_branch
          %528 = sbr.rel (%p526) target = $region88
        $region87: #{detr_forward.10} parent=79 // pred_region
          %530 = dma.done [#allocation5], 16
        $region88: #{detr_forward.10} parent=79 // pred_fallthru
          _
        // Predicated region
        $region89: #{detr_forward.10} parent=79 // pred_check
          %p531 = pneg %p292
        $region90: #{detr_forward.10} parent=79 // pred_check_branch
          %533 = sbr.rel (%p531) target = $region92
        $region91: #{detr_forward.10} parent=79 // pred_region
          %535 = dma.done [#allocation5], 512
        $region92: #{detr_forward.10} parent=79 // pred_fallthru
          _
        // Predicated region
        $region93: #{detr_forward.10} parent=79 // pred_check
          %p536 = pneg %p313
        $region94: #{detr_forward.10} parent=79 // pred_check_branch
          %538 = sbr.rel (%p536) target = $region96
        $region95: #{detr_forward.10} parent=79 // pred_region
          %540 = dma.done [#allocation8], 16
        $region96: #{detr_forward.10} parent=79 // pred_fallthru
          _
        // Predicated region
        $region97: #{detr_forward.10} parent=79 // pred_check
          %p541 = pneg %p334
        $region98: #{detr_forward.10} parent=79 // pred_check_branch
          %543 = sbr.rel (%p541) target = $region100
        $region99: #{detr_forward.10} parent=79 // pred_region
          %545 = dma.done [#allocation8], 16
        $region100: #{detr_forward.10} parent=79 // pred_fallthru
          _
        // Predicated region
        $region101: #{detr_forward.10} parent=79 // pred_check
          %p546 = pneg %p355
        $region102: #{detr_forward.10} parent=79 // pred_check_branch
          %548 = sbr.rel (%p546) target = $region104
        $region103: #{detr_forward.10} parent=79 // pred_region
          %550 = dma.done [#allocation11], 16
        $region104: #{detr_forward.10} parent=79 // pred_fallthru
          _
        %p551 = scmp.lt.s32.totalorder %s30, 1
        %s552 = scalar_select %p551, %s30, 1
        %s553 = smul.addr %s552, 8
        %s554 = scalar_lea.vmem %s0, %s553
        %p555 = pneg %p51
        %p556 = pneg %p48
        %p557 = pneg %p72
        %p558 = pneg %p69
        %p559 = scmp.lt.s32.totalorder %s30, 1
        %s560 = scalar_select %p559, %s30, 1
        %s561 = smul.addr %s560, 8
        %s562 = scalar_lea.vmem %s2, %s561
        %p563 = pneg %p98
        %p564 = pneg %p95
        %p565 = pneg %p119
        %p566 = pneg %p116
        %p567 = scmp.lt.s32.totalorder %s30, 1
        %s568 = scalar_select %p567, %s30, 1
        %s569 = scalar_lea.vmem %s4, %s568
        %p570 = pneg %p145
        %p571 = pneg %p142
        %p572 = pneg %p166
        %p573 = pneg %p163
        %p574 = pneg %p187
        %p575 = pneg %p184
        %p576 = pneg %p208
        %p577 = pneg %p205
        %p578 = pneg %p229
        %p579 = pneg %p226
        %p580 = pneg %p250
        %p581 = pneg %p247
        %p582 = pneg %p271
        %p583 = pneg %p268
        %p584 = pneg %p292
        %p585 = pneg %p289
        %p586 = pneg %p313
        %p587 = pneg %p310
        %p588 = pneg %p334
        %p589 = pneg %p331
        %p590 = pneg %p355
        %p591 = pneg %p352
        %p592 = pneg %p381
        %p593 = pneg %p378
        %p594 = scmp.lt.s32.totalorder %s30, 1
        %s595 = scalar_select %p594, %s30, 1
        %s596 = smul.addr %s595, 8
        %s597 = scalar_lea.vmem %s15, %s596
        %p598 = scmp.lt.s32.totalorder %s30, 1
        %s599 = scalar_select %p598, %s30, 1
        %s600 = smul.addr %s599, 8
        %s601 = scalar_lea.vmem %s0, %s600
        %p602 = scmp.lt.s32.totalorder %s30, 1
        %s603 = scalar_select %p602, %s30, 1
        %s604 = smul.addr %s603, 8
        %s605 = scalar_lea.vmem %s2, %s604
        %p606 = scmp.lt.s32.totalorder %s30, 1
        %s607 = scalar_select %p606, %s30, 1
        %s608 = scalar_lea.vmem %s4, %s607
        %p609 = scmp.lt.s32.totalorder %s30, 1
        %s610 = scalar_select %p609, %s30, 1
        %s611 = smul.addr %s610, 8
        %s612 = scalar_lea.vmem %s15, %s611
        %v613 = vld [vmem:[%s601] sm:$0xff]
        %v614 = vld [vmem:[%s1] sm:$0xff]
        %v615 = vld [vmem:[%s605] sm:$0xff]
        %v616 = vld [vmem:[%s3] sm:$0xff]
        %v617 = vld [vmem:[%s608] sm:$0x1]
        %v618 = vadd.f32 %v613, %v614
        %v619 = vld [vmem:[%s5] sm:$0xff]
        %v620 = vld [vmem:[%s5 + $0x8] sm:$0xff]
        %v621 = vld [vmem:[%s5 + $0x10] sm:$0xff]
        %v622 = vld [vmem:[%s5 + $0x18] sm:$0xff]
        %v623 = vld [vmem:[%s6] sm:$0x1]
        %v625 = vperm.slane %v623, 0
        %vm627 = vcmask 261120
        %v629 = vsel %vm627, %v618, 0
        %631 = vmatpush.msra.mxu0 0.0
        %632 = vmatpush.msra.mxu0 0.0
        %633 = vmatpush.msra.mxu0 0.0
        %634 = vmatpush.msra.mxu0 0.0
        %635 = vmatpush.msra.mxu0 0.0
        %636 = vmatpush.msra.mxu0 0.0
        %637 = vmatpush.msra.mxu0 0.0
        %638 = vmatpush.msra.mxu0 0.0
        %639 = vmatpush.msra.mxu0 0.0
        %640 = vmatpush.msra.mxu0 0.0
        %641 = vmatpush.msra.mxu0 0.0
        %642 = vmatpush.msra.mxu0 0.0
        %643 = vmatpush.msra.mxu0 %v622
        %644 = vmatpush.msra.mxu0 %v621
        %645 = vmatpush.msra.mxu0 %v620
        %646 = vmatpush.msra.mxu0 %v619
        %647 = vmatmul.f32.gmra.mxu0 %v629
        %v648 = vpop.f32.mrf.mxu0
        %v649 = vadd.f32 %v625, %v648
        %650 = vdwg.mxu0
        %v651 = vadd.f32 %v615, %v616
        %v652 = vld [vmem:[%s7] sm:$0xff]
        %v653 = vld [vmem:[%s7 + $0x8] sm:$0xff]
        %v654 = vld [vmem:[%s7 + $0x10] sm:$0xff]
        %v655 = vld [vmem:[%s7 + $0x18] sm:$0xff]
        %v656 = vld [vmem:[%s8] sm:$0x1]
        %v658 = vperm.slane %v656, 0
        %v661 = vsel %vm627, %v651, 0
        %663 = vmatpush.msra.mxu0 0.0
        %664 = vmatpush.msra.mxu0 0.0
        %665 = vmatpush.msra.mxu0 0.0
        %666 = vmatpush.msra.mxu0 0.0
        %667 = vmatpush.msra.mxu0 0.0
        %668 = vmatpush.msra.mxu0 0.0
        %669 = vmatpush.msra.mxu0 0.0
        %670 = vmatpush.msra.mxu0 0.0
        %671 = vmatpush.msra.mxu0 0.0
        %672 = vmatpush.msra.mxu0 0.0
        %673 = vmatpush.msra.mxu0 0.0
        %674 = vmatpush.msra.mxu0 0.0
        %675 = vmatpush.msra.mxu0 %v655
        %676 = vmatpush.msra.mxu0 %v654
        %677 = vmatpush.msra.mxu0 %v653
        %678 = vmatpush.msra.mxu0 %v652
        %679 = vmatmul.f32.gmra.mxu0 %v661
        %v680 = vpop.f32.mrf.mxu0
        %v681 = vadd.f32 %v658, %v680
        %682 = vdwg.mxu0
        %v683 = vld [vmem:[#allocation2] sm:$0xff]
        %v684 = vld [vmem:[#allocation2 + $0x8] sm:$0xff]
        %v685 = vld [vmem:[#allocation2 + $0x10] sm:$0xff]
        %v686 = vld [vmem:[#allocation2 + $0x18] sm:$0xff]
        %v687 = vld [vmem:[#allocation4] sm:$0x1]
        %v689 = vperm.slane %v687, 0
        %v692 = vsel %vm627, %v615, 0
        %694 = vmatpush.msra.mxu0 0.0
        %695 = vmatpush.msra.mxu0 0.0
        %696 = vmatpush.msra.mxu0 0.0
        %697 = vmatpush.msra.mxu0 0.0
        %698 = vmatpush.msra.mxu0 0.0
        %699 = vmatpush.msra.mxu0 0.0
        %700 = vmatpush.msra.mxu0 0.0
        %701 = vmatpush.msra.mxu0 0.0
        %702 = vmatpush.msra.mxu0 0.0
        %703 = vmatpush.msra.mxu0 0.0
        %704 = vmatpush.msra.mxu0 0.0
        %705 = vmatpush.msra.mxu0 0.0
        %706 = vmatpush.msra.mxu0 %v686
        %707 = vmatpush.msra.mxu0 %v685
        %708 = vmatpush.msra.mxu0 %v684
        %709 = vmatpush.msra.mxu0 %v683
        %710 = vmatmul.f32.gmra.mxu0 %v692
        %v711 = vpop.f32.mrf.mxu0
        %v712 = vadd.f32 %v689, %v711
        %713 = vdwg.mxu0
        %v714 = vld [vmem:[#allocation6] sm:$0xff]
        %v715 = vld [vmem:[#allocation6 + $0x8] sm:$0xff]
        %v716 = vld [vmem:[#allocation6 + $0x10] sm:$0xff]
        %v717 = vld [vmem:[#allocation6 + $0x18] sm:$0xff]
        %vm718 = vcmask 64512
        %v720 = vsel %vm718, %v649, 0
        %v723 = vsel %vm718, %v681, 0
        %725 = vmatpush.xpose.msra.mxu0 0.0
        %726 = vmatpush.xpose.msra.mxu0 0.0
        %727 = vmatpush.xpose.msra.mxu0 0.0
        %728 = vmatpush.xpose.msra.mxu0 0.0
        %729 = vmatpush.xpose.msra.mxu0 0.0
        %730 = vmatpush.xpose.msra.mxu0 0.0
        %731 = vmatpush.xpose.msra.mxu0 0.0
        %732 = vmatpush.xpose.msra.mxu0 0.0
        %733 = vmatpush.xpose.msra.mxu0 0.0
        %734 = vmatpush.xpose.msra.mxu0 0.0
        %735 = vmatpush.xpose.msra.mxu0 0.0
        %736 = vmatpush.xpose.msra.mxu0 0.0
        %737 = vmatpush.xpose.msra.mxu0 0.0
        %738 = vmatpush.xpose.msra.mxu0 0.0
        %739 = vmatpush.xpose.msra.mxu0 0.0
        %740 = vmatpush.xpose.msra.mxu0 %v723
        %741 = vmatmul.f32.gmra.mxu0 %v720
        %v742 = vpop.f32.mrf.mxu0
        %v743 = vadd.f32 0.0, %v742
        %744 = vdwg.mxu0
        %v745 = vmul.f32 %v743, 0.35355338
        %v747 = vperm.slane %v617, 0
        %v749 = vadd.f32 %v745, %v747
        %v750 = vsel %vm718, %v749, -inf
        %751 = vmax.xlane.f32.xlu0 %v750
        %v752 = vpop.xlane.xlu0 %751
        %v753 = vsub.f32 %v749, %v752
        %v754 = vmul.f32 %v753, 1.442695
        %v755 = vpow.pop %v754
        %v756 = vsel %vm718, %v755, 0.0
        %757 = vadd.xlane.f32.xlu0 %v756
        %v758 = vpop.xlane.xlu0 %757
        %v759 = vrcp.pop %v758
        %v760 = vmul.f32 %v755, %v759
        %v762 = vsel %vm718, %v760, 0
        %764 = vmatpush.msra.mxu0 0.0
        %765 = vmatpush.msra.mxu0 0.0
        %766 = vmatpush.msra.mxu0 0.0
        %767 = vmatpush.msra.mxu0 0.0
        %768 = vmatpush.msra.mxu0 0.0
        %769 = vmatpush.msra.mxu0 0.0
        %770 = vmatpush.msra.mxu0 0.0
        %771 = vmatpush.msra.mxu0 0.0
        %772 = vmatpush.msra.mxu0 0.0
        %773 = vmatpush.msra.mxu0 0.0
        %774 = vmatpush.msra.mxu0 0.0
        %775 = vmatpush.msra.mxu0 0.0
        %776 = vmatpush.msra.mxu0 0.0
        %777 = vmatpush.msra.mxu0 0.0
        %778 = vmatpush.msra.mxu0 0.0
        %779 = vmatpush.msra.mxu0 %v712
        %780 = vmatmul.f32.gmra.mxu0 %v762
        %v781 = vpop.f32.mrf.mxu0
        %v782 = vadd.f32 0.0, %v781
        %783 = vdwg.mxu0
        %784 = vrot.lane.b32.xlu0 %v649, 120
        %v785 = vpop.permute.xlu0 %784
        %786 = vrot.lane.b32.xlu0 %v681, 120
        %v787 = vpop.permute.xlu0 %786
        %v788 = vsel %vm718, %v785, 0
        %v790 = vsel %vm718, %v787, 0
        %792 = vmatpush.xpose.msra.mxu0 0.0
        %793 = vmatpush.xpose.msra.mxu0 0.0
        %794 = vmatpush.xpose.msra.mxu0 0.0
        %795 = vmatpush.xpose.msra.mxu0 0.0
        %796 = vmatpush.xpose.msra.mxu0 0.0
        %797 = vmatpush.xpose.msra.mxu0 0.0
        %798 = vmatpush.xpose.msra.mxu0 0.0
        %799 = vmatpush.xpose.msra.mxu0 0.0
        %800 = vmatpush.xpose.msra.mxu0 0.0
        %801 = vmatpush.xpose.msra.mxu0 0.0
        %802 = vmatpush.xpose.msra.mxu0 0.0
        %803 = vmatpush.xpose.msra.mxu0 0.0
        %804 = vmatpush.xpose.msra.mxu0 0.0
        %805 = vmatpush.xpose.msra.mxu0 0.0
        %806 = vmatpush.xpose.msra.mxu0 0.0
        %807 = vmatpush.xpose.msra.mxu0 %v790
        %808 = vmatmul.f32.gmra.mxu0 %v788
        %v809 = vpop.f32.mrf.mxu0
        %v810 = vadd.f32 0.0, %v809
        %811 = vdwg.mxu0
        %v812 = vmul.f32 %v810, 0.35355338
        %v813 = vadd.f32 %v812, %v747
        %v814 = vsel %vm718, %v813, -inf
        %815 = vmax.xlane.f32.xlu0 %v814
        %v816 = vpop.xlane.xlu0 %815
        %v817 = vsub.f32 %v813, %v816
        %v818 = vmul.f32 %v817, 1.442695
        %v819 = vpow.pop %v818
        %v820 = vsel %vm718, %v819, 0.0
        %821 = vadd.xlane.f32.xlu0 %v820
        %v822 = vpop.xlane.xlu0 %821
        %v823 = vrcp.pop %v822
        %v824 = vmul.f32 %v819, %v823
        %826 = vrot.lane.b32.xlu0 %v712, 120
        %v827 = vpop.permute.xlu0 %826
        %v830 = vsel %vm718, %v824, 0
        %832 = vmatpush.msra.mxu0 0.0
        %833 = vmatpush.msra.mxu0 0.0
        %834 = vmatpush.msra.mxu0 0.0
        %835 = vmatpush.msra.mxu0 0.0
        %836 = vmatpush.msra.mxu0 0.0
        %837 = vmatpush.msra.mxu0 0.0
        %838 = vmatpush.msra.mxu0 0.0
        %839 = vmatpush.msra.mxu0 0.0
        %840 = vmatpush.msra.mxu0 0.0
        %841 = vmatpush.msra.mxu0 0.0
        %842 = vmatpush.msra.mxu0 0.0
        %843 = vmatpush.msra.mxu0 0.0
        %844 = vmatpush.msra.mxu0 0.0
        %845 = vmatpush.msra.mxu0 0.0
        %846 = vmatpush.msra.mxu0 0.0
        %847 = vmatpush.msra.mxu0 %v827
        %848 = vmatmul.f32.gmra.mxu0 %v830
        %v849 = vpop.f32.mrf.mxu0
        %v850 = vadd.f32 0.0, %v849
        %851 = vdwg.mxu0
        %v853 = vsel %vm718, %v850, 0
        %855 = vmatpush.msra.mxu0 0.0
        %856 = vmatpush.msra.mxu0 0.0
        %857 = vmatpush.msra.mxu0 0.0
        %858 = vmatpush.msra.mxu0 0.0
        %859 = vmatpush.msra.mxu0 0.0
        %860 = vmatpush.msra.mxu0 0.0
        %861 = vmatpush.msra.mxu0 0.0
        %862 = vmatpush.msra.mxu0 0.0
        %863 = vmatpush.msra.mxu0 0.0
        %864 = vmatpush.msra.mxu0 0.0
        %865 = vmatpush.msra.mxu0 0.0
        %866 = vmatpush.msra.mxu0 0.0
        %867 = vmatpush.msra.mxu0 0.0
        %868 = vmatpush.msra.mxu0 0.0
        %869 = vmatpush.msra.mxu0 0.0
        %870 = vmatpush.msra.mxu0 %v715
        %871 = vmatmul.f32.gmra.mxu0 %v853
        %v872 = vpop.f32.mrf.mxu0
        %v873 = vadd.f32 0.0, %v872
        %874 = vdwg.mxu0
        %v876 = vsel %vm718, %v782, 0
        %878 = vmatpush.msra.mxu0 0.0
        %879 = vmatpush.msra.mxu0 0.0
        %880 = vmatpush.msra.mxu0 0.0
        %881 = vmatpush.msra.mxu0 0.0
        %882 = vmatpush.msra.mxu0 0.0
        %883 = vmatpush.msra.mxu0 0.0
        %884 = vmatpush.msra.mxu0 0.0
        %885 = vmatpush.msra.mxu0 0.0
        %886 = vmatpush.msra.mxu0 0.0
        %887 = vmatpush.msra.mxu0 0.0
        %888 = vmatpush.msra.mxu0 0.0
        %889 = vmatpush.msra.mxu0 0.0
        %890 = vmatpush.msra.mxu0 0.0
        %891 = vmatpush.msra.mxu0 0.0
        %892 = vmatpush.msra.mxu0 0.0
        %893 = vmatpush.msra.mxu0 %v714
        %894 = vmatmul.f32.gmra.mxu0 %v876
        %v895 = vpop.f32.mrf.mxu0
        %v896 = vadd.f32 %v873, %v895
        %897 = vdwg.mxu0
        %898 = vrot.lane.b32.xlu0 %v649, 112
        %v899 = vpop.permute.xlu0 %898
        %900 = vrot.lane.b32.xlu0 %v681, 112
        %v901 = vpop.permute.xlu0 %900
        %v902 = vsel %vm718, %v899, 0
        %v904 = vsel %vm718, %v901, 0
        %906 = vmatpush.xpose.msra.mxu0 0.0
        %907 = vmatpush.xpose.msra.mxu0 0.0
        %908 = vmatpush.xpose.msra.mxu0 0.0
        %909 = vmatpush.xpose.msra.mxu0 0.0
        %910 = vmatpush.xpose.msra.mxu0 0.0
        %911 = vmatpush.xpose.msra.mxu0 0.0
        %912 = vmatpush.xpose.msra.mxu0 0.0
        %913 = vmatpush.xpose.msra.mxu0 0.0
        %914 = vmatpush.xpose.msra.mxu0 0.0
        %915 = vmatpush.xpose.msra.mxu0 0.0
        %916 = vmatpush.xpose.msra.mxu0 0.0
        %917 = vmatpush.xpose.msra.mxu0 0.0
        %918 = vmatpush.xpose.msra.mxu0 0.0
        %919 = vmatpush.xpose.msra.mxu0 0.0
        %920 = vmatpush.xpose.msra.mxu0 0.0
        %921 = vmatpush.xpose.msra.mxu0 %v904
        %922 = vmatmul.f32.gmra.mxu0 %v902
        %v923 = vpop.f32.mrf.mxu0
        %v924 = vadd.f32 0.0, %v923
        %925 = vdwg.mxu0
        %v926 = vmul.f32 %v924, 0.35355338
        %v927 = vadd.f32 %v926, %v747
        %v928 = vsel %vm718, %v927, -inf
        %929 = vmax.xlane.f32.xlu0 %v928
        %v930 = vpop.xlane.xlu0 %929
        %v931 = vsub.f32 %v927, %v930
        %v932 = vmul.f32 %v931, 1.442695
        %v933 = vpow.pop %v932
        %v934 = vsel %vm718, %v933, 0.0
        %935 = vadd.xlane.f32.xlu0 %v934
        %v936 = vpop.xlane.xlu0 %935
        %v937 = vrcp.pop %v936
        %v938 = vmul.f32 %v933, %v937
        %939 = vrot.lane.b32.xlu0 %v712, 112
        %v940 = vpop.permute.xlu0 %939
        %v943 = vsel %vm718, %v938, 0
        %945 = vmatpush.msra.mxu0 0.0
        %946 = vmatpush.msra.mxu0 0.0
        %947 = vmatpush.msra.mxu0 0.0
        %948 = vmatpush.msra.mxu0 0.0
        %949 = vmatpush.msra.mxu0 0.0
        %950 = vmatpush.msra.mxu0 0.0
        %951 = vmatpush.msra.mxu0 0.0
        %952 = vmatpush.msra.mxu0 0.0
        %953 = vmatpush.msra.mxu0 0.0
        %954 = vmatpush.msra.mxu0 0.0
        %955 = vmatpush.msra.mxu0 0.0
        %956 = vmatpush.msra.mxu0 0.0
        %957 = vmatpush.msra.mxu0 0.0
        %958 = vmatpush.msra.mxu0 0.0
        %959 = vmatpush.msra.mxu0 0.0
        %960 = vmatpush.msra.mxu0 %v940
        %961 = vmatmul.f32.gmra.mxu0 %v943
        %v962 = vpop.f32.mrf.mxu0
        %v963 = vadd.f32 0.0, %v962
        %964 = vdwg.mxu0
        %v966 = vsel %vm718, %v963, 0
        %968 = vmatpush.msra.mxu0 0.0
        %969 = vmatpush.msra.mxu0 0.0
        %970 = vmatpush.msra.mxu0 0.0
        %971 = vmatpush.msra.mxu0 0.0
        %972 = vmatpush.msra.mxu0 0.0
        %973 = vmatpush.msra.mxu0 0.0
        %974 = vmatpush.msra.mxu0 0.0
        %975 = vmatpush.msra.mxu0 0.0
        %976 = vmatpush.msra.mxu0 0.0
        %977 = vmatpush.msra.mxu0 0.0
        %978 = vmatpush.msra.mxu0 0.0
        %979 = vmatpush.msra.mxu0 0.0
        %980 = vmatpush.msra.mxu0 0.0
        %981 = vmatpush.msra.mxu0 0.0
        %982 = vmatpush.msra.mxu0 0.0
        %983 = vmatpush.msra.mxu0 %v716
        %984 = vmatmul.f32.gmra.mxu0 %v966
        %v985 = vpop.f32.mrf.mxu0
        %v986 = vadd.f32 0.0, %v985
        %987 = vdwg.mxu0
        %v988 = vadd.f32 %v896, %v986
        %989 = vrot.lane.b32.xlu0 %v649, 104
        %v990 = vpop.permute.xlu0 %989
        %991 = vrot.lane.b32.xlu0 %v681, 104
        %v992 = vpop.permute.xlu0 %991
        %v993 = vsel %vm718, %v990, 0
        %v995 = vsel %vm718, %v992, 0
        %997 = vmatpush.xpose.msra.mxu0 0.0
        %998 = vmatpush.xpose.msra.mxu0 0.0
        %999 = vmatpush.xpose.msra.mxu0 0.0
        %1000 = vmatpush.xpose.msra.mxu0 0.0
        %1001 = vmatpush.xpose.msra.mxu0 0.0
        %1002 = vmatpush.xpose.msra.mxu0 0.0
        %1003 = vmatpush.xpose.msra.mxu0 0.0
        %1004 = vmatpush.xpose.msra.mxu0 0.0
        %1005 = vmatpush.xpose.msra.mxu0 0.0
        %1006 = vmatpush.xpose.msra.mxu0 0.0
        %1007 = vmatpush.xpose.msra.mxu0 0.0
        %1008 = vmatpush.xpose.msra.mxu0 0.0
        %1009 = vmatpush.xpose.msra.mxu0 0.0
        %1010 = vmatpush.xpose.msra.mxu0 0.0
        %1011 = vmatpush.xpose.msra.mxu0 0.0
        %1012 = vmatpush.xpose.msra.mxu0 %v995
        %1013 = vmatmul.f32.gmra.mxu0 %v993
        %v1014 = vpop.f32.mrf.mxu0
        %v1015 = vadd.f32 0.0, %v1014
        %1016 = vdwg.mxu0
        %v1017 = vmul.f32 %v1015, 0.35355338
        %v1018 = vadd.f32 %v1017, %v747
        %v1019 = vsel %vm718, %v1018, -inf
        %1020 = vmax.xlane.f32.xlu0 %v1019
        %v1021 = vpop.xlane.xlu0 %1020
        %v1022 = vsub.f32 %v1018, %v1021
        %v1023 = vmul.f32 %v1022, 1.442695
        %v1024 = vpow.pop %v1023
        %v1025 = vsel %vm718, %v1024, 0.0
        %1026 = vadd.xlane.f32.xlu0 %v1025
        %v1027 = vpop.xlane.xlu0 %1026
        %v1028 = vrcp.pop %v1027
        %v1029 = vmul.f32 %v1024, %v1028
        %1030 = vrot.lane.b32.xlu0 %v712, 104
        %v1031 = vpop.permute.xlu0 %1030
        %v1034 = vsel %vm718, %v1029, 0
        %1036 = vmatpush.msra.mxu0 0.0
        %1037 = vmatpush.msra.mxu0 0.0
        %1038 = vmatpush.msra.mxu0 0.0
        %1039 = vmatpush.msra.mxu0 0.0
        %1040 = vmatpush.msra.mxu0 0.0
        %1041 = vmatpush.msra.mxu0 0.0
        %1042 = vmatpush.msra.mxu0 0.0
        %1043 = vmatpush.msra.mxu0 0.0
        %1044 = vmatpush.msra.mxu0 0.0
        %1045 = vmatpush.msra.mxu0 0.0
        %1046 = vmatpush.msra.mxu0 0.0
        %1047 = vmatpush.msra.mxu0 0.0
        %1048 = vmatpush.msra.mxu0 0.0
        %1049 = vmatpush.msra.mxu0 0.0
        %1050 = vmatpush.msra.mxu0 0.0
        %1051 = vmatpush.msra.mxu0 %v1031
        %1052 = vmatmul.f32.gmra.mxu0 %v1034
        %v1053 = vpop.f32.mrf.mxu0
        %v1054 = vadd.f32 0.0, %v1053
        %1055 = vdwg.mxu0
        %v1057 = vsel %vm718, %v1054, 0
        %1059 = vmatpush.msra.mxu0 0.0
        %1060 = vmatpush.msra.mxu0 0.0
        %1061 = vmatpush.msra.mxu0 0.0
        %1062 = vmatpush.msra.mxu0 0.0
        %1063 = vmatpush.msra.mxu0 0.0
        %1064 = vmatpush.msra.mxu0 0.0
        %1065 = vmatpush.msra.mxu0 0.0
        %1066 = vmatpush.msra.mxu0 0.0
        %1067 = vmatpush.msra.mxu0 0.0
        %1068 = vmatpush.msra.mxu0 0.0
        %1069 = vmatpush.msra.mxu0 0.0
        %1070 = vmatpush.msra.mxu0 0.0
        %1071 = vmatpush.msra.mxu0 0.0
        %1072 = vmatpush.msra.mxu0 0.0
        %1073 = vmatpush.msra.mxu0 0.0
        %1074 = vmatpush.msra.mxu0 %v717
        %1075 = vmatmul.f32.gmra.mxu0 %v1057
        %v1076 = vpop.f32.mrf.mxu0
        %v1077 = vadd.f32 0.0, %v1076
        %1078 = vdwg.mxu0
        %v1079 = vadd.f32 %v988, %v1077
        %v1080 = vadd.f32 %v613, %v1079
        %v1081 = vld [vmem:[#allocation7] sm:$0x1]
        %v1083 = vperm.slane %v1081, 0
        %v1085 = vadd.f32 %v1080, %v1083
        %v1086 = vsel %vm627, %v1085, 0.0
        %1087 = vadd.xlane.f32.xlu0 %v1086
        %v1088 = vpop.xlane.xlu0 %1087
        %v1089 = vrcp.pop 32.0
        %v1090 = vmul.f32 32.0, %v1089
        %v1091 = vsub.f32 1.0, %v1090
        %v1092 = vmul.f32 %v1089, %v1091
        %v1093 = vadd.f32 %v1089, %v1092
        %vm1094 = vweird.f32 %v1089
        %v1095 = vsel %vm1094, %v1089, %v1093
        %v1096 = vmul.f32 %v1088, %v1095
        %v1097 = vsub.f32 %v1085, %v1096
        %v1098 = vmul.f32 %v1097, %v1097
        %v1099 = vsel %vm627, %v1098, 0.0
        %1100 = vadd.xlane.f32.xlu0 %v1099
        %v1101 = vpop.xlane.xlu0 %1100
        %v1102 = vmul.f32 %v1101, %v1095
        %v1103 = vadd.f32 %v1102, 1e-05
        %v1104 = vrsqrt.pop %v1103
        %v1105 = vmul.f32 %v1104, %v1103
        %v1106 = vmul.f32 %v1105, %v1104
        %v1107 = vmul.f32 0.5, %v1106
        %v1108 = vsub.f32 1.5, %v1107
        %v1109 = vmul.f32 %v1104, %v1108
        %vm1110 = vweird.f32 %v1103
        %vm1111 = vweird.f32 %v1104
        %vm1112 = vmor %vm1110, %vm1111
        %v1113 = vsel %vm1112, %v1104, %v1109
        %v1114 = vmul.f32 %v1097, %v1113
        %v1115 = vld [vmem:[#allocation9] sm:$0x1]
        %v1117 = vperm.slane %v1115, 0
        %v1119 = vmul.f32 %v1114, %v1117
        %v1120 = vld [vmem:[#allocation10] sm:$0x1]
        %v1122 = vperm.slane %v1120, 0
        %v1124 = vadd.f32 %v1119, %v1122
        %1125 = vst.msk [vmem:[%s612] sm:$0xff] %vm627, %v1124
        %p1126 = scmp.lt.s32.totalorder %s30, 1
        %s1127 = scalar_select %p1126, %s30, 1
        %s1128 = smul.addr %s1127, 8
        %s1129 = scalar_lea.vmem %s15, %s1128
        // Predicated region
        $region105: #{detr_forward.10} parent=79 // pred_check
          %p1130 = pneg %p378
        $region106: #{detr_forward.10} parent=79 // pred_check_branch
          %1132 = sbr.rel (%p1130) target = $region108
        $region107: #{detr_forward.10} parent=79 // pred_region
          _
        $region108: #{detr_forward.10} parent=79 // pred_fallthru
          _
      $region80: #{detr_forward.10} parent=5 // pred_fallthru
        _
      %p1133 = scmp.le.s32.totalorder 2, %s25
      // Predicated region
      $region109: #{detr_forward.10} parent=5 // pred_check
        %p1134 = pneg %p1133
      $region110: #{detr_forward.10} parent=5 // pred_check_branch
        %1136 = sbr.rel (%p1134) target = $region112
      $region111: #{detr_forward.10} parent=5 // pred_region
        %s1137 = ssub.s32 %s25, 2
        // Predicated region
        $region113: #{detr_forward.10} parent=111 // pred_check
          %p1138 = pneg %p384
        $region114: #{detr_forward.10} parent=111 // pred_check_branch
          %1140 = sbr.rel (%p1138) target = $region116
        $region115: #{detr_forward.10} parent=111 // pred_region
          %p1141 = scmp.lt.s32.totalorder %s31, 1
          %s1142 = scalar_select %p1141, %s31, 1
          %s1143 = smul.addr %s1142, 8
          %s1144 = scalar_lea.vmem %s15, %s1143
        $region116: #{detr_forward.10} parent=111 // pred_fallthru
          _
      $region112: #{detr_forward.10} parent=5 // pred_fallthru
        _
    $region6: #{detr_forward.10} parent=1 // loop_footer
      %s29 = sadd.s32 1, %s25
    $region7: #{detr_forward.10} parent=1 // loop_footer_branch
      %24 = sbr.rel target = $region3
    $region8: #{detr_forward.10} parent=1 // loop_exit
      _
    %1145 = vsyncpa [#allocation3], 1
    %s1146 = scalar_lea.sflag [#allocation3], 1
    %1147 = vsyncpa %s1146, 1
    %1148 = vsyncpa [#allocation5], 1
    %1149 = vsyncpa [#allocation8], 1
    %1150 = vsyncpa [#allocation11], 1

// kernel: detr_forward.9
$region0: #{detr_forward.9}
  #allocation0 [shape = 'u32[]', space=smem, size = 0x4, offset = 0x4, fixed_abs, tag = 'smem constant byte address 0x4 - core index']
  #allocation1 [shape = 'u32[72,128]{1,0:T(1,128)}', space=vmem, size = 0x9000, scoped, tag = 'internal scratch']
  %s0 = inlined_call_operand.vmem [shape: f32[128,32], index: 0, kind: input, shape index: {}]
  %s1 = inlined_call_operand.vmem [shape: f32[32,64], index: 1, kind: input, shape index: {}]
  %s2 = inlined_call_operand.vmem [shape: f32[1,64], index: 2, kind: input, shape index: {}]
  %s3 = inlined_call_operand.vmem [shape: f32[64,32], index: 3, kind: input, shape index: {}]
  %s4 = inlined_call_operand.vmem [shape: f32[1,32], index: 4, kind: input, shape index: {}]
  %s5 = inlined_call_operand.vmem [shape: f32[1,32], index: 5, kind: input, shape index: {}]
  %s6 = inlined_call_operand.vmem [shape: f32[1,32], index: 6, kind: input, shape index: {}]
  %s7 = inlined_call_operand.vmem [shape: f32[128,32], index: 7, kind: output, shape index: {}]
  %s8 = sld [smem:[#allocation0]]
  $region38: #{detr_forward.9} parent=0
    _
  %s10 = ssub.s32 1, %s8
  %s11 = scalar_select 0, %s10, %s8
  // Predicated region
  $region2: #{detr_forward.9} parent=0 // pred_check
    _
  $region3: #{detr_forward.9} parent=0 // pred_check_branch
    %13 = sbr.rel (0) target = $region5
  $region4: #{detr_forward.9} parent=0 // pred_region
    _
  $region5: #{detr_forward.9} parent=0 // pred_fallthru
    _
  // Predicated region
  $region6: #{detr_forward.9} parent=0 // pred_check
    _
  $region7: #{detr_forward.9} parent=0 // pred_check_branch
    %15 = sbr.rel (0) target = $region9
  $region8: #{detr_forward.9} parent=0 // pred_region
    _
  $region9: #{detr_forward.9} parent=0 // pred_fallthru
    _
  // Predicated region
  $region10: #{detr_forward.9} parent=0 // pred_check
    _
  $region11: #{detr_forward.9} parent=0 // pred_check_branch
    %17 = sbr.rel (0) target = $region13
  $region12: #{detr_forward.9} parent=0 // pred_region
    _
  $region13: #{detr_forward.9} parent=0 // pred_fallthru
    _
  // Predicated region
  $region14: #{detr_forward.9} parent=0 // pred_check
    _
  $region15: #{detr_forward.9} parent=0 // pred_check_branch
    %19 = sbr.rel (0) target = $region17
  $region16: #{detr_forward.9} parent=0 // pred_region
    _
  $region17: #{detr_forward.9} parent=0 // pred_fallthru
    _
  // Predicated region
  $region18: #{detr_forward.9} parent=0 // pred_check
    _
  $region19: #{detr_forward.9} parent=0 // pred_check_branch
    %21 = sbr.rel (0) target = $region21
  $region20: #{detr_forward.9} parent=0 // pred_region
    _
  $region21: #{detr_forward.9} parent=0 // pred_fallthru
    _
  // Predicated region
  $region22: #{detr_forward.9} parent=0 // pred_check
    _
  $region23: #{detr_forward.9} parent=0 // pred_check_branch
    %23 = sbr.rel (0) target = $region25
  $region24: #{detr_forward.9} parent=0 // pred_region
    _
  $region25: #{detr_forward.9} parent=0 // pred_fallthru
    _
  // Predicated region
  $region26: #{detr_forward.9} parent=0 // pred_check
    _
  $region27: #{detr_forward.9} parent=0 // pred_check_branch
    %25 = sbr.rel (0) target = $region29
  $region28: #{detr_forward.9} parent=0 // pred_region
    _
  $region29: #{detr_forward.9} parent=0 // pred_fallthru
    _
  %v26 = vld [vmem:[%s0] sm:$0xff]
  %v27 = vld [vmem:[%s0 + $0x8] sm:$0xff]
  %v28 = vld [vmem:[%s0 + $0x10] sm:$0xff]
  %v29 = vld [vmem:[%s0 + $0x18] sm:$0xff]
  %v30 = vld [vmem:[%s0 + $0x20] sm:$0xff]
  %v31 = vld [vmem:[%s0 + $0x28] sm:$0xff]
  %v32 = vld [vmem:[%s0 + $0x30] sm:$0xff]
  %v33 = vld [vmem:[%s0 + $0x38] sm:$0xff]
  %v34 = vld [vmem:[%s0 + $0x40] sm:$0xff]
  %v35 = vld [vmem:[%s0 + $0x48] sm:$0xff]
  %v36 = vld [vmem:[%s0 + $0x50] sm:$0xff]
  %v37 = vld [vmem:[%s0 + $0x58] sm:$0xff]
  %v38 = vld [vmem:[%s0 + $0x60] sm:$0xff]
  %v39 = vld [vmem:[%s0 + $0x68] sm:$0xff]
  %v40 = vld [vmem:[%s0 + $0x70] sm:$0xff]
  %v41 = vld [vmem:[%s0 + $0x78] sm:$0xff]
  %v42 = vld [vmem:[%s1] sm:$0xff]
  %v43 = vld [vmem:[%s1 + $0x8] sm:$0xff]
  %v44 = vld [vmem:[%s1 + $0x10] sm:$0xff]
  %v45 = vld [vmem:[%s1 + $0x18] sm:$0xff]
  %v46 = vld [vmem:[%s2] sm:$0x1]
  %v48 = vperm.slane %v46, 0
  %vm50 = vcmask 261120
  %v52 = vsel %vm50, %v26, 0
  %v55 = vsel %vm50, %v27, 0
  %v58 = vsel %vm50, %v28, 0
  %v61 = vsel %vm50, %v29, 0
  %v64 = vsel %vm50, %v30, 0
  %v67 = vsel %vm50, %v31, 0
  %v70 = vsel %vm50, %v32, 0
  %v73 = vsel %vm50, %v33, 0
  %v76 = vsel %vm50, %v34, 0
  %v79 = vsel %vm50, %v35, 0
  %v82 = vsel %vm50, %v36, 0
  %v85 = vsel %vm50, %v37, 0
  %v88 = vsel %vm50, %v38, 0
  %v91 = vsel %vm50, %v39, 0
  %v94 = vsel %vm50, %v40, 0
  %v97 = vsel %vm50, %v41, 0
  %99 = vmatpush.msra.mxu0 0.0
  %100 = vmatpush.msra.mxu0 0.0
  %101 = vmatpush.msra.mxu0 0.0
  %102 = vmatpush.msra.mxu0 0.0
  %103 = vmatpush.msra.mxu0 0.0
  %104 = vmatpush.msra.mxu0 0.0
  %105 = vmatpush.msra.mxu0 0.0
  %106 = vmatpush.msra.mxu0 0.0
  %107 = vmatpush.msra.mxu0 0.0
  %108 = vmatpush.msra.mxu0 0.0
  %109 = vmatpush.msra.mxu0 0.0
  %110 = vmatpush.msra.mxu0 0.0
  %111 = vmatpush.msra.mxu0 %v45
  %112 = vmatpush.msra.mxu0 %v44
  %113 = vmatpush.msra.mxu0 %v43
  %114 = vmatpush.msra.mxu0 %v42
  %115 = vmatmul.f32.gmra.mxu0 %v52
  %v116 = vpop.f32.mrf.mxu0
  %v117 = vadd.f32 %v48, %v116
  %118 = vmatmul.f32.gmra.mxu0 %v55
  %v119 = vpop.f32.mrf.mxu0
  %v120 = vadd.f32 %v48, %v119
  %121 = vmatmul.f32.gmra.mxu0 %v58
  %v122 = vpop.f32.mrf.mxu0
  %v123 = vadd.f32 %v48, %v122
  %124 = vmatmul.f32.gmra.mxu0 %v61
  %v125 = vpop.f32.mrf.mxu0
  %v126 = vadd.f32 %v48, %v125
  %127 = vmatmul.f32.gmra.mxu0 %v64
  %v128 = vpop.f32.mrf.mxu0
  %v129 = vadd.f32 %v48, %v128
  %130 = vmatmul.f32.gmra.mxu0 %v67
  %v131 = vpop.f32.mrf.mxu0
  %v132 = vadd.f32 %v48, %v131
  %133 = vmatmul.f32.gmra.mxu0 %v70
  %v134 = vpop.f32.mrf.mxu0
  %v135 = vadd.f32 %v48, %v134
  %136 = vmatmul.f32.gmra.mxu0 %v73
  %v137 = vpop.f32.mrf.mxu0
  %v138 = vadd.f32 %v48, %v137
  %139 = vmatmul.f32.gmra.mxu0 %v76
  %v140 = vpop.f32.mrf.mxu0
  %v141 = vadd.f32 %v48, %v140
  %142 = vmatmul.f32.gmra.mxu0 %v79
  %v143 = vpop.f32.mrf.mxu0
  %v144 = vadd.f32 %v48, %v143
  %145 = vmatmul.f32.gmra.mxu0 %v82
  %v146 = vpop.f32.mrf.mxu0
  %v147 = vadd.f32 %v48, %v146
  %148 = vmatmul.f32.gmra.mxu0 %v85
  %v149 = vpop.f32.mrf.mxu0
  %v150 = vadd.f32 %v48, %v149
  %151 = vmatmul.f32.gmra.mxu0 %v88
  %v152 = vpop.f32.mrf.mxu0
  %v153 = vadd.f32 %v48, %v152
  %154 = vmatmul.f32.gmra.mxu0 %v91
  %v155 = vpop.f32.mrf.mxu0
  %v156 = vadd.f32 %v48, %v155
  %157 = vmatmul.f32.gmra.mxu0 %v94
  %v158 = vpop.f32.mrf.mxu0
  %v159 = vadd.f32 %v48, %v158
  %160 = vmatmul.f32.gmra.mxu0 %v97
  %v161 = vpop.f32.mrf.mxu0
  %v162 = vadd.f32 %v48, %v161
  %163 = vdwg.mxu0
  %v164 = vmax.f32 %v117, 0.0
  %v165 = vmax.f32 %v120, 0.0
  %v166 = vmax.f32 %v123, 0.0
  %v167 = vmax.f32 %v126, 0.0
  %v168 = vmax.f32 %v129, 0.0
  %v169 = vmax.f32 %v132, 0.0
  %v170 = vmax.f32 %v135, 0.0
  %v171 = vmax.f32 %v138, 0.0
  %v172 = vmax.f32 %v141, 0.0
  %v173 = vmax.f32 %v144, 0.0
  %v174 = vmax.f32 %v147, 0.0
  %v175 = vmax.f32 %v150, 0.0
  %v176 = vmax.f32 %v153, 0.0
  %v177 = vmax.f32 %v156, 0.0
  %v178 = vmax.f32 %v159, 0.0
  %v179 = vmax.f32 %v162, 0.0
  %v180 = vld [vmem:[%s3] sm:$0xff]
  %v181 = vld [vmem:[%s3 + $0x8] sm:$0xff]
  %v182 = vld [vmem:[%s3 + $0x10] sm:$0xff]
  %v183 = vld [vmem:[%s3 + $0x18] sm:$0xff]
  %v184 = vld [vmem:[%s3 + $0x20] sm:$0xff]
  %v185 = vld [vmem:[%s3 + $0x28] sm:$0xff]
  %v186 = vld [vmem:[%s3 + $0x30] sm:$0xff]
  %v187 = vld [vmem:[%s3 + $0x38] sm:$0xff]
  %vm188 = vcmask 523264
  %v190 = vsel %vm188, %v164, 0
  %v193 = vsel %vm188, %v165, 0
  %v196 = vsel %vm188, %v166, 0
  %v199 = vsel %vm188, %v167, 0
  %v202 = vsel %vm188, %v168, 0
  %v205 = vsel %vm188, %v169, 0
  %v208 = vsel %vm188, %v170, 0
  %v211 = vsel %vm188, %v171, 0
  %v214 = vsel %vm188, %v172, 0
  %v217 = vsel %vm188, %v173, 0
  %v220 = vsel %vm188, %v174, 0
  %v223 = vsel %vm188, %v175, 0
  %v226 = vsel %vm188, %v176, 0
  %v229 = vsel %vm188, %v177, 0
  %v232 = vsel %vm188, %v178, 0
  %v235 = vsel %vm188, %v179, 0
  %237 = vmatpush.msra.mxu0 0.0
  %238 = vmatpush.msra.mxu0 0.0
  %239 = vmatpush.msra.mxu0 0.0
  %240 = vmatpush.msra.mxu0 0.0
  %241 = vmatpush.msra.mxu0 0.0
  %242 = vmatpush.msra.mxu0 0.0
  %243 = vmatpush.msra.mxu0 0.0
  %244 = vmatpush.msra.mxu0 0.0
  %245 = vmatpush.msra.mxu0 %v187
  %246 = vmatpush.msra.mxu0 %v186
  %247 = vmatpush.msra.mxu0 %v185
  %248 = vmatpush.msra.mxu0 %v184
  %249 = vmatpush.msra.mxu0 %v183
  %250 = vmatpush.msra.mxu0 %v182
  %251 = vmatpush.msra.mxu0 %v181
  %252 = vmatpush.msra.mxu0 %v180
  %253 = vmatmul.f32.gmra.mxu0 %v190
  %v254 = vpop.f32.mrf.mxu0
  %v255 = vadd.f32 0.0, %v254
  %256 = vmatmul.f32.gmra.mxu0 %v193
  %v257 = vpop.f32.mrf.mxu0
  %v258 = vadd.f32 0.0, %v257
  %259 = vmatmul.f32.gmra.mxu0 %v196
  %v260 = vpop.f32.mrf.mxu0
  %v261 = vadd.f32 0.0, %v260
  %262 = vmatmul.f32.gmra.mxu0 %v199
  %v263 = vpop.f32.mrf.mxu0
  %v264 = vadd.f32 0.0, %v263
  %265 = vmatmul.f32.gmra.mxu0 %v202
  %v266 = vpop.f32.mrf.mxu0
  %v267 = vadd.f32 0.0, %v266
  %268 = vmatmul.f32.gmra.mxu0 %v205
  %v269 = vpop.f32.mrf.mxu0
  %v270 = vadd.f32 0.0, %v269
  %271 = vmatmul.f32.gmra.mxu0 %v208
  %v272 = vpop.f32.mrf.mxu0
  %v273 = vadd.f32 0.0, %v272
  %274 = vmatmul.f32.gmra.mxu0 %v211
  %v275 = vpop.f32.mrf.mxu0
  %v276 = vadd.f32 0.0, %v275
  %277 = vmatmul.f32.gmra.mxu0 %v214
  %v278 = vpop.f32.mrf.mxu0
  %v279 = vadd.f32 0.0, %v278
  %280 = vmatmul.f32.gmra.mxu0 %v217
  %v281 = vpop.f32.mrf.mxu0
  %v282 = vadd.f32 0.0, %v281
  %283 = vmatmul.f32.gmra.mxu0 %v220
  %v284 = vpop.f32.mrf.mxu0
  %v285 = vadd.f32 0.0, %v284
  %286 = vmatmul.f32.gmra.mxu0 %v223
  %v287 = vpop.f32.mrf.mxu0
  %v288 = vadd.f32 0.0, %v287
  %289 = vmatmul.f32.gmra.mxu0 %v226
  %v290 = vpop.f32.mrf.mxu0
  %v291 = vadd.f32 0.0, %v290
  %292 = vmatmul.f32.gmra.mxu0 %v229
  %v293 = vpop.f32.mrf.mxu0
  %v294 = vadd.f32 0.0, %v293
  %295 = vmatmul.f32.gmra.mxu0 %v232
  %v296 = vpop.f32.mrf.mxu0
  %v297 = vadd.f32 0.0, %v296
  %298 = vmatmul.f32.gmra.mxu0 %v235
  %v299 = vpop.f32.mrf.mxu0
  %v300 = vadd.f32 0.0, %v299
  %301 = vdwg.mxu0
  %v302 = vadd.f32 %v26, %v255
  %v303 = vadd.f32 %v27, %v258
  %v304 = vadd.f32 %v28, %v261
  %v305 = vadd.f32 %v29, %v264
  %v306 = vadd.f32 %v30, %v267
  %v307 = vadd.f32 %v31, %v270
  %v308 = vadd.f32 %v32, %v273
  %v309 = vadd.f32 %v33, %v276
  %v310 = vadd.f32 %v34, %v279
  %v311 = vadd.f32 %v35, %v282
  %v312 = vadd.f32 %v36, %v285
  %v313 = vadd.f32 %v37, %v288
  %v314 = vadd.f32 %v38, %v291
  %v315 = vadd.f32 %v39, %v294
  %v316 = vadd.f32 %v40, %v297
  %v317 = vadd.f32 %v41, %v300
  %v318 = vld [vmem:[%s4] sm:$0x1]
  %v320 = vperm.slane %v318, 0
  %v322 = vadd.f32 %v302, %v320
  %v323 = vadd.f32 %v303, %v320
  %v324 = vadd.f32 %v304, %v320
  %v325 = vadd.f32 %v305, %v320
  %v326 = vadd.f32 %v306, %v320
  %v327 = vadd.f32 %v307, %v320
  %v328 = vadd.f32 %v308, %v320
  %v329 = vadd.f32 %v309, %v320
  %v330 = vadd.f32 %v310, %v320
  %v331 = vadd.f32 %v311, %v320
  %v332 = vadd.f32 %v312, %v320
  %v333 = vadd.f32 %v313, %v320
  %v334 = vadd.f32 %v314, %v320
  %v335 = vadd.f32 %v315, %v320
  %v336 = vadd.f32 %v316, %v320
  %v337 = vadd.f32 %v317, %v320
  %v338 = vsel %vm50, %v322, 0.0
  %339 = vadd.xlane.f32.xlu0 %v338
  %v340 = vpop.xlane.xlu0 %339
  %v341 = vsel %vm50, %v323, 0.0
  %342 = vadd.xlane.f32.xlu0 %v341
  %v343 = vpop.xlane.xlu0 %342
  %v344 = vsel %vm50, %v324, 0.0
  %345 = vadd.xlane.f32.xlu0 %v344
  %v346 = vpop.xlane.xlu0 %345
  %v347 = vsel %vm50, %v325, 0.0
  %348 = vadd.xlane.f32.xlu0 %v347
  %v349 = vpop.xlane.xlu0 %348
  %v350 = vsel %vm50, %v326, 0.0
  %351 = vadd.xlane.f32.xlu0 %v350
  %v352 = vpop.xlane.xlu0 %351
  %v353 = vsel %vm50, %v327, 0.0
  %354 = vadd.xlane.f32.xlu0 %v353
  %v355 = vpop.xlane.xlu0 %354
  %v356 = vsel %vm50, %v328, 0.0
  %357 = vadd.xlane.f32.xlu0 %v356
  %v358 = vpop.xlane.xlu0 %357
  %v359 = vsel %vm50, %v329, 0.0
  %360 = vadd.xlane.f32.xlu0 %v359
  %v361 = vpop.xlane.xlu0 %360
  %v362 = vsel %vm50, %v330, 0.0
  %363 = vadd.xlane.f32.xlu0 %v362
  %v364 = vpop.xlane.xlu0 %363
  %v365 = vsel %vm50, %v331, 0.0
  %366 = vadd.xlane.f32.xlu0 %v365
  %v367 = vpop.xlane.xlu0 %366
  %v368 = vsel %vm50, %v332, 0.0
  %369 = vadd.xlane.f32.xlu0 %v368
  %v370 = vpop.xlane.xlu0 %369
  %v371 = vsel %vm50, %v333, 0.0
  %372 = vadd.xlane.f32.xlu0 %v371
  %v373 = vpop.xlane.xlu0 %372
  %v374 = vsel %vm50, %v334, 0.0
  %375 = vadd.xlane.f32.xlu0 %v374
  %v376 = vpop.xlane.xlu0 %375
  %v377 = vsel %vm50, %v335, 0.0
  %378 = vadd.xlane.f32.xlu0 %v377
  %v379 = vpop.xlane.xlu0 %378
  %v380 = vsel %vm50, %v336, 0.0
  %381 = vadd.xlane.f32.xlu0 %v380
  %v382 = vpop.xlane.xlu0 %381
  %v383 = vsel %vm50, %v337, 0.0
  %384 = vadd.xlane.f32.xlu0 %v383
  %v385 = vpop.xlane.xlu0 %384
  %v386 = vrcp.pop 32.0
  %v387 = vmul.f32 32.0, %v386
  %v388 = vsub.f32 1.0, %v387
  %v389 = vmul.f32 %v386, %v388
  %v390 = vadd.f32 %v386, %v389
  %vm391 = vweird.f32 %v386
  %v392 = vsel %vm391, %v386, %v390
  %v393 = vmul.f32 %v340, %v392
  %v394 = vmul.f32 %v343, %v392
  %v395 = vmul.f32 %v346, %v392
  %v396 = vmul.f32 %v349, %v392
  %v397 = vmul.f32 %v352, %v392
  %v398 = vmul.f32 %v355, %v392
  %v399 = vmul.f32 %v358, %v392
  %v400 = vmul.f32 %v361, %v392
  %v401 = vmul.f32 %v364, %v392
  %v402 = vmul.f32 %v367, %v392
  %v403 = vmul.f32 %v370, %v392
  %v404 = vmul.f32 %v373, %v392
  %v405 = vmul.f32 %v376, %v392
  %v406 = vmul.f32 %v379, %v392
  %v407 = vmul.f32 %v382, %v392
  %v408 = vmul.f32 %v385, %v392
  %v409 = vsub.f32 %v322, %v393
  %v410 = vsub.f32 %v323, %v394
  %v411 = vsub.f32 %v324, %v395
  %v412 = vsub.f32 %v325, %v396
  %v413 = vsub.f32 %v326, %v397
  %v414 = vsub.f32 %v327, %v398
  %v415 = vsub.f32 %v328, %v399
  %v416 = vsub.f32 %v329, %v400
  %v417 = vsub.f32 %v330, %v401
  %v418 = vsub.f32 %v331, %v402
  %v419 = vsub.f32 %v332, %v403
  %v420 = vsub.f32 %v333, %v404
  %v421 = vsub.f32 %v334, %v405
  %v422 = vsub.f32 %v335, %v406
  %v423 = vsub.f32 %v336, %v407
  %v424 = vsub.f32 %v337, %v408
  %v425 = vmul.f32 %v409, %v409
  %v426 = vmul.f32 %v410, %v410
  %v427 = vmul.f32 %v411, %v411
  %v428 = vmul.f32 %v412, %v412
  %v429 = vmul.f32 %v413, %v413
  %v430 = vmul.f32 %v414, %v414
  %v431 = vmul.f32 %v415, %v415
  %v432 = vmul.f32 %v416, %v416
  %v433 = vmul.f32 %v417, %v417
  %v434 = vmul.f32 %v418, %v418
  %v435 = vmul.f32 %v419, %v419
  %v436 = vmul.f32 %v420, %v420
  %v437 = vmul.f32 %v421, %v421
  %v438 = vmul.f32 %v422, %v422
  %v439 = vmul.f32 %v423, %v423
  %v440 = vmul.f32 %v424, %v424
  %v441 = vsel %vm50, %v425, 0.0
  %442 = vadd.xlane.f32.xlu0 %v441
  %v443 = vpop.xlane.xlu0 %442
  %v444 = vsel %vm50, %v426, 0.0
  %445 = vadd.xlane.f32.xlu0 %v444
  %v446 = vpop.xlane.xlu0 %445
  %v447 = vsel %vm50, %v427, 0.0
  %448 = vadd.xlane.f32.xlu0 %v447
  %v449 = vpop.xlane.xlu0 %448
  %v450 = vsel %vm50, %v428, 0.0
  %451 = vadd.xlane.f32.xlu0 %v450
  %v452 = vpop.xlane.xlu0 %451
  %v453 = vsel %vm50, %v429, 0.0
  %454 = vadd.xlane.f32.xlu0 %v453
  %v455 = vpop.xlane.xlu0 %454
  %v456 = vsel %vm50, %v430, 0.0
  %457 = vadd.xlane.f32.xlu0 %v456
  %v458 = vpop.xlane.xlu0 %457
  %v459 = vsel %vm50, %v431, 0.0
  %460 = vadd.xlane.f32.xlu0 %v459
  %v461 = vpop.xlane.xlu0 %460
  %v462 = vsel %vm50, %v432, 0.0
  %463 = vadd.xlane.f32.xlu0 %v462
  %v464 = vpop.xlane.xlu0 %463
  %v465 = vsel %vm50, %v433, 0.0
  %466 = vadd.xlane.f32.xlu0 %v465
  %v467 = vpop.xlane.xlu0 %466
  %v468 = vsel %vm50, %v434, 0.0
  %469 = vadd.xlane.f32.xlu0 %v468
  %v470 = vpop.xlane.xlu0 %469
  %v471 = vsel %vm50, %v435, 0.0
  %472 = vadd.xlane.f32.xlu0 %v471
  %v473 = vpop.xlane.xlu0 %472
  %v474 = vsel %vm50, %v436, 0.0
  %475 = vadd.xlane.f32.xlu0 %v474
  %v476 = vpop.xlane.xlu0 %475
  %v477 = vsel %vm50, %v437, 0.0
  %478 = vadd.xlane.f32.xlu0 %v477
  %v479 = vpop.xlane.xlu0 %478
  %v480 = vsel %vm50, %v438, 0.0
  %481 = vadd.xlane.f32.xlu0 %v480
  %v482 = vpop.xlane.xlu0 %481
  %v483 = vsel %vm50, %v439, 0.0
  %484 = vadd.xlane.f32.xlu0 %v483
  %v485 = vpop.xlane.xlu0 %484
  %v486 = vsel %vm50, %v440, 0.0
  %487 = vadd.xlane.f32.xlu0 %v486
  %v488 = vpop.xlane.xlu0 %487
  %v489 = vmul.f32 %v443, %v392
  %v490 = vmul.f32 %v446, %v392
  %v491 = vmul.f32 %v449, %v392
  %v492 = vmul.f32 %v452, %v392
  %v493 = vmul.f32 %v455, %v392
  %v494 = vmul.f32 %v458, %v392
  %v495 = vmul.f32 %v461, %v392
  %v496 = vmul.f32 %v464, %v392
  %v497 = vmul.f32 %v467, %v392
  %v498 = vmul.f32 %v470, %v392
  %v499 = vmul.f32 %v473, %v392
  %v500 = vmul.f32 %v476, %v392
  %v501 = vmul.f32 %v479, %v392
  %v502 = vmul.f32 %v482, %v392
  %v503 = vmul.f32 %v485, %v392
  %v504 = vmul.f32 %v488, %v392
  %v505 = vadd.f32 %v489, 1e-05
  %v506 = vadd.f32 %v490, 1e-05
  %v507 = vadd.f32 %v491, 1e-05
  %v508 = vadd.f32 %v492, 1e-05
  %v509 = vadd.f32 %v493, 1e-05
  %v510 = vadd.f32 %v494, 1e-05
  %v511 = vadd.f32 %v495, 1e-05
  %v512 = vadd.f32 %v496, 1e-05
  %v513 = vadd.f32 %v497, 1e-05
  %v514 = vadd.f32 %v498, 1e-05
  %v515 = vadd.f32 %v499, 1e-05
  %v516 = vadd.f32 %v500, 1e-05
  %v517 = vadd.f32 %v501, 1e-05
  %v518 = vadd.f32 %v502, 1e-05
  %v519 = vadd.f32 %v503, 1e-05
  %v520 = vadd.f32 %v504, 1e-05
  %v521 = vrsqrt.pop %v505
  %v522 = vmul.f32 %v521, %v505
  %v523 = vmul.f32 %v522, %v521
  %v524 = vmul.f32 0.5, %v523
  %v525 = vsub.f32 1.5, %v524
  %v526 = vmul.f32 %v521, %v525
  %vm527 = vweird.f32 %v505
  %vm528 = vweird.f32 %v521
  %vm529 = vmor %vm527, %vm528
  %v530 = vsel %vm529, %v521, %v526
  %v531 = vrsqrt.pop %v506
  %v532 = vmul.f32 %v531, %v506
  %v533 = vmul.f32 %v532, %v531
  %v534 = vmul.f32 0.5, %v533
  %v535 = vsub.f32 1.5, %v534
  %v536 = vmul.f32 %v531, %v535
  %vm537 = vweird.f32 %v506
  %vm538 = vweird.f32 %v531
  %vm539 = vmor %vm537, %vm538
  %v540 = vsel %vm539, %v531, %v536
  %v541 = vrsqrt.pop %v507
  %v542 = vmul.f32 %v541, %v507
  %v543 = vmul.f32 %v542, %v541
  %v544 = vmul.f32 0.5, %v543
  %v545 = vsub.f32 1.5, %v544
  %v546 = vmul.f32 %v541, %v545
  %vm547 = vweird.f32 %v507
  %vm548 = vweird.f32 %v541
  %vm549 = vmor %vm547, %vm548
  %v550 = vsel %vm549, %v541, %v546
  %v551 = vrsqrt.pop %v508
  %v552 = vmul.f32 %v551, %v508
  %v553 = vmul.f32 %v552, %v551
  %v554 = vmul.f32 0.5, %v553
  %v555 = vsub.f32 1.5, %v554
  %v556 = vmul.f32 %v551, %v555
  %vm557 = vweird.f32 %v508
  %vm558 = vweird.f32 %v551
  %vm559 = vmor %vm557, %vm558
  %v560 = vsel %vm559, %v551, %v556
  %v561 = vrsqrt.pop %v509
  %v562 = vmul.f32 %v561, %v509
  %v563 = vmul.f32 %v562, %v561
  %v564 = vmul.f32 0.5, %v563
  %v565 = vsub.f32 1.5, %v564
  %v566 = vmul.f32 %v561, %v565
  %vm567 = vweird.f32 %v509
  %vm568 = vweird.f32 %v561
  %vm569 = vmor %vm567, %vm568
  %v570 = vsel %vm569, %v561, %v566
  %v571 = vrsqrt.pop %v510
  %v572 = vmul.f32 %v571, %v510
  %v573 = vmul.f32 %v572, %v571
  %v574 = vmul.f32 0.5, %v573
  %v575 = vsub.f32 1.5, %v574
  %v576 = vmul.f32 %v571, %v575
  %vm577 = vweird.f32 %v510
  %vm578 = vweird.f32 %v571
  %vm579 = vmor %vm577, %vm578
  %v580 = vsel %vm579, %v571, %v576
  %v581 = vrsqrt.pop %v511
  %v582 = vmul.f32 %v581, %v511
  %v583 = vmul.f32 %v582, %v581
  %v584 = vmul.f32 0.5, %v583
  %v585 = vsub.f32 1.5, %v584
  %v586 = vmul.f32 %v581, %v585
  %vm587 = vweird.f32 %v511
  %vm588 = vweird.f32 %v581
  %vm589 = vmor %vm587, %vm588
  %v590 = vsel %vm589, %v581, %v586
  %v591 = vrsqrt.pop %v512
  %v592 = vmul.f32 %v591, %v512
  %v593 = vmul.f32 %v592, %v591
  %v594 = vmul.f32 0.5, %v593
  %v595 = vsub.f32 1.5, %v594
  %v596 = vmul.f32 %v591, %v595
  %vm597 = vweird.f32 %v512
  %vm598 = vweird.f32 %v591
  %vm599 = vmor %vm597, %vm598
  %v600 = vsel %vm599, %v591, %v596
  %v601 = vrsqrt.pop %v513
  %v602 = vmul.f32 %v601, %v513
  %v603 = vmul.f32 %v602, %v601
  %v604 = vmul.f32 0.5, %v603
  %v605 = vsub.f32 1.5, %v604
  %v606 = vmul.f32 %v601, %v605
  %vm607 = vweird.f32 %v513
  %vm608 = vweird.f32 %v601
  %vm609 = vmor %vm607, %vm608
  %v610 = vsel %vm609, %v601, %v606
  %v611 = vrsqrt.pop %v514
  %v612 = vmul.f32 %v611, %v514
  %v613 = vmul.f32 %v612, %v611
  %v614 = vmul.f32 0.5, %v613
  %v615 = vsub.f32 1.5, %v614
  %v616 = vmul.f32 %v611, %v615
  %vm617 = vweird.f32 %v514
  %vm618 = vweird.f32 %v611
  %vm619 = vmor %vm617, %vm618
  %v620 = vsel %vm619, %v611, %v616
  %v621 = vrsqrt.pop %v515
  %v622 = vmul.f32 %v621, %v515
  %v623 = vmul.f32 %v622, %v621
  %v624 = vmul.f32 0.5, %v623
  %v625 = vsub.f32 1.5, %v624
  %v626 = vmul.f32 %v621, %v625
  %vm627 = vweird.f32 %v515
  %vm628 = vweird.f32 %v621
  %vm629 = vmor %vm627, %vm628
  %v630 = vsel %vm629, %v621, %v626
  %v631 = vrsqrt.pop %v516
  %v632 = vmul.f32 %v631, %v516
  %v633 = vmul.f32 %v632, %v631
  %v634 = vmul.f32 0.5, %v633
  %v635 = vsub.f32 1.5, %v634
  %v636 = vmul.f32 %v631, %v635
  %vm637 = vweird.f32 %v516
  %vm638 = vweird.f32 %v631
  %vm639 = vmor %vm637, %vm638
  %v640 = vsel %vm639, %v631, %v636
  %v641 = vrsqrt.pop %v517
  %v642 = vmul.f32 %v641, %v517
  %v643 = vmul.f32 %v642, %v641
  %v644 = vmul.f32 0.5, %v643
  %v645 = vsub.f32 1.5, %v644
  %v646 = vmul.f32 %v641, %v645
  %vm647 = vweird.f32 %v517
  %vm648 = vweird.f32 %v641
  %vm649 = vmor %vm647, %vm648
  %v650 = vsel %vm649, %v641, %v646
  %v651 = vrsqrt.pop %v518
  %v652 = vmul.f32 %v651, %v518
  %v653 = vmul.f32 %v652, %v651
  %v654 = vmul.f32 0.5, %v653
  %v655 = vsub.f32 1.5, %v654
  %v656 = vmul.f32 %v651, %v655
  %vm657 = vweird.f32 %v518
  %vm658 = vweird.f32 %v651
  %vm659 = vmor %vm657, %vm658
  %v660 = vsel %vm659, %v651, %v656
  %v661 = vrsqrt.pop %v519
  %v662 = vmul.f32 %v661, %v519
  %v663 = vmul.f32 %v662, %v661
  %v664 = vmul.f32 0.5, %v663
  %v665 = vsub.f32 1.5, %v664
  %v666 = vmul.f32 %v661, %v665
  %vm667 = vweird.f32 %v519
  %vm668 = vweird.f32 %v661
  %vm669 = vmor %vm667, %vm668
  %v670 = vsel %vm669, %v661, %v666
  %v671 = vrsqrt.pop %v520
  %v672 = vmul.f32 %v671, %v520
  %v673 = vmul.f32 %v672, %v671
  %v674 = vmul.f32 0.5, %v673
  %v675 = vsub.f32 1.5, %v674
  %v676 = vmul.f32 %v671, %v675
  %vm677 = vweird.f32 %v520
  %vm678 = vweird.f32 %v671
  %vm679 = vmor %vm677, %vm678
  %v680 = vsel %vm679, %v671, %v676
  %v681 = vmul.f32 %v409, %v530
  %v682 = vmul.f32 %v410, %v540
  %v683 = vmul.f32 %v411, %v550
  %v684 = vmul.f32 %v412, %v560
  %v685 = vmul.f32 %v413, %v570
  %v686 = vmul.f32 %v414, %v580
  %v687 = vmul.f32 %v415, %v590
  %v688 = vmul.f32 %v416, %v600
  %v689 = vmul.f32 %v417, %v610
  %v690 = vmul.f32 %v418, %v620
  %v691 = vmul.f32 %v419, %v630
  %v692 = vmul.f32 %v420, %v640
  %v693 = vmul.f32 %v421, %v650
  %v694 = vmul.f32 %v422, %v660
  %v695 = vmul.f32 %v423, %v670
  %v696 = vmul.f32 %v424, %v680
  %v697 = vld [vmem:[%s5] sm:$0x1]
  %v699 = vperm.slane %v697, 0
  %v701 = vmul.f32 %v681, %v699
  %v702 = vmul.f32 %v682, %v699
  %v703 = vmul.f32 %v683, %v699
  %v704 = vmul.f32 %v684, %v699
  %v705 = vmul.f32 %v685, %v699
  %v706 = vmul.f32 %v686, %v699
  %v707 = vmul.f32 %v687, %v699
  %v708 = vmul.f32 %v688, %v699
  %v709 = vmul.f32 %v689, %v699
  %v710 = vmul.f32 %v690, %v699
  %v711 = vmul.f32 %v691, %v699
  %v712 = vmul.f32 %v692, %v699
  %v713 = vmul.f32 %v693, %v699
  %v714 = vmul.f32 %v694, %v699
  %v715 = vmul.f32 %v695, %v699
  %v716 = vmul.f32 %v696, %v699
  %v717 = vld [vmem:[%s6] sm:$0x1]
  %v719 = vperm.slane %v717, 0
  %v721 = vadd.f32 %v701, %v719
  %v722 = vadd.f32 %v702, %v719
  %v723 = vadd.f32 %v703, %v719
  %v724 = vadd.f32 %v704, %v719
  %v725 = vadd.f32 %v705, %v719
  %v726 = vadd.f32 %v706, %v719
  %v727 = vadd.f32 %v707, %v719
  %v728 = vadd.f32 %v708, %v719
  %v729 = vadd.f32 %v709, %v719
  %v730 = vadd.f32 %v710, %v719
  %v731 = vadd.f32 %v711, %v719
  %v732 = vadd.f32 %v712, %v719
  %v733 = vadd.f32 %v713, %v719
  %v734 = vadd.f32 %v714, %v719
  %v735 = vadd.f32 %v715, %v719
  %v736 = vadd.f32 %v716, %v719
  %737 = vst.msk [vmem:[%s7] sm:$0xff] %vm50, %v721
  %738 = vst.msk [vmem:[%s7 + $0x8] sm:$0xff] %vm50, %v722
  %739 = vst.msk [vmem:[%s7 + $0x10] sm:$0xff] %vm50, %v723
  %740 = vst.msk [vmem:[%s7 + $0x18] sm:$0xff] %vm50, %v724
  %741 = vst.msk [vmem:[%s7 + $0x20] sm:$0xff] %vm50, %v725
  %742 = vst.msk [vmem:[%s7 + $0x28] sm:$0xff] %vm50, %v726
  %743 = vst.msk [vmem:[%s7 + $0x30] sm:$0xff] %vm50, %v727
  %744 = vst.msk [vmem:[%s7 + $0x38] sm:$0xff] %vm50, %v728
  %745 = vst.msk [vmem:[%s7 + $0x40] sm:$0xff] %vm50, %v729
  %746 = vst.msk [vmem:[%s7 + $0x48] sm:$0xff] %vm50, %v730
  %747 = vst.msk [vmem:[%s7 + $0x50] sm:$0xff] %vm50, %v731
  %748 = vst.msk [vmem:[%s7 + $0x58] sm:$0xff] %vm50, %v732
  %749 = vst.msk [vmem:[%s7 + $0x60] sm:$0xff] %vm50, %v733
  %750 = vst.msk [vmem:[%s7 + $0x68] sm:$0xff] %vm50, %v734
  %751 = vst.msk [vmem:[%s7 + $0x70] sm:$0xff] %vm50, %v735
  %752 = vst.msk [vmem:[%s7 + $0x78] sm:$0xff] %vm50, %v736
  // Predicated region
  $region30: #{detr_forward.9} parent=0 // pred_check
    _
  $region31: #{detr_forward.9} parent=0 // pred_check_branch
    %754 = sbr.rel (0) target = $region33
  $region32: #{detr_forward.9} parent=0 // pred_region
    _
  $region33: #{detr_forward.9} parent=0 // pred_fallthru
    _
  // Predicated region
  $region34: #{detr_forward.9} parent=0 // pred_check
    _
  $region35: #{detr_forward.9} parent=0 // pred_check_branch
    %756 = sbr.rel (0) target = $region37
  $region36: #{detr_forward.9} parent=0 // pred_region
    _
  $region37: #{detr_forward.9} parent=0 // pred_fallthru
    _

// kernel: detr_forward.11
$region0: #{detr_forward.11}
  #allocation0 [shape = 'u32[]', space=smem, size = 0x4, offset = 0x4, fixed_abs, tag = 'smem constant byte address 0x4 - core index']
  #allocation1 [shape = 'u32[72,128]{1,0:T(1,128)}', space=vmem, size = 0x9000, scoped, tag = 'internal scratch']
  %s0 = inlined_call_operand.vmem [shape: f32[2,8,32], index: 0, kind: input, shape index: {}]
  %s1 = inlined_call_operand.vmem [shape: f32[1,8,32], index: 1, kind: input, shape index: {}]
  %s2 = inlined_call_operand.vmem [shape: f32[2,64,32], index: 2, kind: input, shape index: {}]
  %s3 = inlined_call_operand.vmem [shape: f32[2,64,32], index: 3, kind: input, shape index: {}]
  %s4 = inlined_call_operand.vmem [shape: f32[2,1,64], index: 4, kind: input, shape index: {}]
  %s5 = inlined_call_operand.vmem [shape: f32[32,32], index: 5, kind: input, shape index: {}]
  %s6 = inlined_call_operand.vmem [shape: f32[1,32], index: 6, kind: input, shape index: {}]
  %s7 = inlined_call_operand.vmem [shape: f32[32,32], index: 7, kind: input, shape index: {}]
  %s8 = inlined_call_operand.vmem [shape: f32[1,32], index: 8, kind: input, shape index: {}]
  %s9 = inlined_call_operand.vmem [shape: f32[32,32], index: 9, kind: input, shape index: {}]
  %s10 = inlined_call_operand.vmem [shape: f32[1,32], index: 10, kind: input, shape index: {}]
  %s11 = inlined_call_operand.vmem [shape: f32[32,32], index: 11, kind: input, shape index: {}]
  %s12 = inlined_call_operand.vmem [shape: f32[1,32], index: 12, kind: input, shape index: {}]
  %s13 = inlined_call_operand.vmem [shape: f32[1,32], index: 13, kind: input, shape index: {}]
  %s14 = inlined_call_operand.vmem [shape: f32[1,32], index: 14, kind: input, shape index: {}]
  %s15 = inlined_call_operand.vmem [shape: f32[2,8,32], index: 15, kind: output, shape index: {}]
  %s16 = sld [smem:[#allocation0]]
  $region93: #{detr_forward.11} parent=0
    _
  %s18 = ssub.s32 1, %s16
  %s19 = scalar_select 0, %s18, %s16
  loop: start=0, step=1, limit=4
  $region2: #{detr_forward.11} parent=0 // loop_pre_header
    _
  $region3: #{detr_forward.11} parent=0 // loop_header
    %s21 = sphi 0, %s25
    %p22 = scmp.ge.s32.totalorder %s21, 4
    %s31 = sphi 0, %s33
    %s34 = sphi 0, %s31
    %s35 = sphi 0, %s34
    %s51 = sphi 0, %s35
    %s55 = sphi 0, %s55
    %s57 = sphi 0, %s55
    %s58 = sphi 0, %s57
    %s72 = sphi 0, %s58
    %s78 = sphi 0, %s80
    %s81 = sphi 0, %s78
    %s82 = sphi 0, %s81
    %s98 = sphi 0, %s82
    %s104 = sphi 0, %s106
    %s107 = sphi 0, %s104
    %s108 = sphi 0, %s107
    %s124 = sphi 0, %s108
    %s130 = sphi 0, %s132
    %s133 = sphi 0, %s130
    %s134 = sphi 0, %s133
    %s150 = sphi 0, %s134
    %s154 = sphi 0, %s154
    %s156 = sphi 0, %s154
    %s157 = sphi 0, %s156
    %s171 = sphi 0, %s157
    %s175 = sphi 0, %s175
    %s177 = sphi 0, %s175
    %s178 = sphi 0, %s177
    %s192 = sphi 0, %s178
    %s196 = sphi 0, %s196
    %s198 = sphi 0, %s196
    %s199 = sphi 0, %s198
    %s213 = sphi 0, %s199
    %s217 = sphi 0, %s217
    %s219 = sphi 0, %s217
    %s220 = sphi 0, %s219
    %s234 = sphi 0, %s220
    %s238 = sphi 0, %s238
    %s240 = sphi 0, %s238
    %s241 = sphi 0, %s240
    %s255 = sphi 0, %s241
    %s259 = sphi 0, %s259
    %s261 = sphi 0, %s259
    %s262 = sphi 0, %s261
    %s276 = sphi 0, %s262
    %s280 = sphi 0, %s280
    %s282 = sphi 0, %s280
    %s283 = sphi 0, %s282
    %s297 = sphi 0, %s283
    %s301 = sphi 0, %s301
    %s303 = sphi 0, %s301
    %s304 = sphi 0, %s303
    %s318 = sphi 0, %s304
    %s322 = sphi 0, %s322
    %s324 = sphi 0, %s322
    %s325 = sphi 0, %s324
    %s339 = sphi 0, %s325
    %s343 = sphi 0, %s343
    %s345 = sphi 0, %s343
    %s346 = sphi 0, %s345
    %s360 = sphi 0, %s346
    %s366 = sphi 0, %s368
    %s369 = sphi 0, %s366
    %s370 = sphi 0, %s369
    %s386 = sphi 0, %s370
  $region4: #{detr_forward.11} parent=0 // loop_header_branch
    %24 = sbr.rel (%p22) target = $region8
  $region5: #{detr_forward.11} parent=0 // loop_body
    %s26 = ssub.s32 %s21, 1
    %s27 = ssub.s32 %s21, 2
    %s28 = sadd.s32 %s21, 1
    %s29 = ssub.s32 %s21, %s28
    %p30 = scmp.eq.s32.totalorder %s29, 0
    %s32 = sadd.s32 %s31, 1
    %s33 = scalar_select %p30, %s31, %s32
    %p36 = pneg %p30
    %p37 = scmp.eq.s32.totalorder %s21, 1
    %p38 = por %p36, %p37
    %p39 = scmp.ne.s32.totalorder %s31, %s34
    %p40 = scmp.eq.s32.totalorder %s21, 0
    %p41 = por %p39, %p40
    %p42 = scmp.ne.s32.totalorder %s31, %s34
    %p43 = scmp.eq.s32.totalorder %s26, 1
    %p44 = por %p42, %p43
    %p45 = scmp.ne.s32.totalorder %s34, %s35
    %p46 = scmp.eq.s32.totalorder %s26, 0
    %p47 = por %p45, %p46
    %p48 = scmp.ne.s32.totalorder %s34, %s35
    %p49 = scmp.eq.s32.totalorder %s27, 1
    %p50 = por %p48, %p49
    %p52 = scmp.ne.s32.totalorder %s35, %s51
    %p53 = scmp.eq.s32.totalorder %s27, 0
    %p54 = por %p52, %p53
    %s56 = sadd.s32 %s55, 1
    %p59 = scmp.eq.s32.totalorder %s21, 1
    %p60 = scmp.ne.s32.totalorder %s55, %s57
    %p61 = scmp.eq.s32.totalorder %s21, 0
    %p62 = por %p60, %p61
    %p63 = scmp.ne.s32.totalorder %s55, %s57
    %p64 = scmp.eq.s32.totalorder %s26, 1
    %p65 = por %p63, %p64
    %p66 = scmp.ne.s32.totalorder %s57, %s58
    %p67 = scmp.eq.s32.totalorder %s26, 0
    %p68 = por %p66, %p67
    %p69 = scmp.ne.s32.totalorder %s57, %s58
    %p70 = scmp.eq.s32.totalorder %s27, 1
    %p71 = por %p69, %p70
    %p73 = scmp.ne.s32.totalorder %s58, %s72
    %p74 = scmp.eq.s32.totalorder %s27, 0
    %p75 = por %p73, %p74
    %s76 = ssub.s32 %s21, %s28
    %p77 = scmp.eq.s32.totalorder %s76, 0
    %s79 = sadd.s32 %s78, 1
    %s80 = scalar_select %p77, %s78, %s79
    %p83 = pneg %p77
    %p84 = scmp.eq.s32.totalorder %s21, 1
    %p85 = por %p83, %p84
    %p86 = scmp.ne.s32.totalorder %s78, %s81
    %p87 = scmp.eq.s32.totalorder %s21, 0
    %p88 = por %p86, %p87
    %p89 = scmp.ne.s32.totalorder %s78, %s81
    %p90 = scmp.eq.s32.totalorder %s26, 1
    %p91 = por %p89, %p90
    %p92 = scmp.ne.s32.totalorder %s81, %s82
    %p93 = scmp.eq.s32.totalorder %s26, 0
    %p94 = por %p92, %p93
    %p95 = scmp.ne.s32.totalorder %s81, %s82
    %p96 = scmp.eq.s32.totalorder %s27, 1
    %p97 = por %p95, %p96
    %p99 = scmp.ne.s32.totalorder %s82, %s98
    %p100 = scmp.eq.s32.totalorder %s27, 0
    %p101 = por %p99, %p100
    %s102 = ssub.s32 %s21, %s28
    %p103 = scmp.eq.s32.totalorder %s102, 0
    %s105 = sadd.s32 %s104, 1
    %s106 = scalar_select %p103, %s104, %s105
    %p109 = pneg %p103
    %p110 = scmp.eq.s32.totalorder %s21, 1
    %p111 = por %p109, %p110
    %p112 = scmp.ne.s32.totalorder %s104, %s107
    %p113 = scmp.eq.s32.totalorder %s21, 0
    %p114 = por %p112, %p113
    %p115 = scmp.ne.s32.totalorder %s104, %s107
    %p116 = scmp.eq.s32.totalorder %s26, 1
    %p117 = por %p115, %p116
    %p118 = scmp.ne.s32.totalorder %s107, %s108
    %p119 = scmp.eq.s32.totalorder %s26, 0
    %p120 = por %p118, %p119
    %p121 = scmp.ne.s32.totalorder %s107, %s108
    %p122 = scmp.eq.s32.totalorder %s27, 1
    %p123 = por %p121, %p122
    %p125 = scmp.ne.s32.totalorder %s108, %s124
    %p126 = scmp.eq.s32.totalorder %s27, 0
    %p127 = por %p125, %p126
    %s128 = ssub.s32 %s21, %s28
    %p129 = scmp.eq.s32.totalorder %s128, 0
    %s131 = sadd.s32 %s130, 1
    %s132 = scalar_select %p129, %s130, %s131
    %p135 = pneg %p129
    %p136 = scmp.eq.s32.totalorder %s21, 1
    %p137 = por %p135, %p136
    %p138 = scmp.ne.s32.totalorder %s130, %s133
    %p139 = scmp.eq.s32.totalorder %s21, 0
    %p140 = por %p138, %p139
    %p141 = scmp.ne.s32.totalorder %s130, %s133
    %p142 = scmp.eq.s32.totalorder %s26, 1
    %p143 = por %p141, %p142
    %p144 = scmp.ne.s32.totalorder %s133, %s134
    %p145 = scmp.eq.s32.totalorder %s26, 0
    %p146 = por %p144, %p145
    %p147 = scmp.ne.s32.totalorder %s133, %s134
    %p148 = scmp.eq.s32.totalorder %s27, 1
    %p149 = por %p147, %p148
    %p151 = scmp.ne.s32.totalorder %s134, %s150
    %p152 = scmp.eq.s32.totalorder %s27, 0
    %p153 = por %p151, %p152
    %s155 = sadd.s32 %s154, 1
    %p158 = scmp.eq.s32.totalorder %s21, 1
    %p159 = scmp.ne.s32.totalorder %s154, %s156
    %p160 = scmp.eq.s32.totalorder %s21, 0
    %p161 = por %p159, %p160
    %p162 = scmp.ne.s32.totalorder %s154, %s156
    %p163 = scmp.eq.s32.totalorder %s26, 1
    %p164 = por %p162, %p163
    %p165 = scmp.ne.s32.totalorder %s156, %s157
    %p166 = scmp.eq.s32.totalorder %s26, 0
    %p167 = por %p165, %p166
    %p168 = scmp.ne.s32.totalorder %s156, %s157
    %p169 = scmp.eq.s32.totalorder %s27, 1
    %p170 = por %p168, %p169
    %p172 = scmp.ne.s32.totalorder %s157, %s171
    %p173 = scmp.eq.s32.totalorder %s27, 0
    %p174 = por %p172, %p173
    %s176 = sadd.s32 %s175, 1
    %p179 = scmp.eq.s32.totalorder %s21, 1
    %p180 = scmp.ne.s32.totalorder %s175, %s177
    %p181 = scmp.eq.s32.totalorder %s21, 0
    %p182 = por %p180, %p181
    %p183 = scmp.ne.s32.totalorder %s175, %s177
    %p184 = scmp.eq.s32.totalorder %s26, 1
    %p185 = por %p183, %p184
    %p186 = scmp.ne.s32.totalorder %s177, %s178
    %p187 = scmp.eq.s32.totalorder %s26, 0
    %p188 = por %p186, %p187
    %p189 = scmp.ne.s32.totalorder %s177, %s178
    %p190 = scmp.eq.s32.totalorder %s27, 1
    %p191 = por %p189, %p190
    %p193 = scmp.ne.s32.totalorder %s178, %s192
    %p194 = scmp.eq.s32.totalorder %s27, 0
    %p195 = por %p193, %p194
    %s197 = sadd.s32 %s196, 1
    %p200 = scmp.eq.s32.totalorder %s21, 1
    %p201 = scmp.ne.s32.totalorder %s196, %s198
    %p202 = scmp.eq.s32.totalorder %s21, 0
    %p203 = por %p201, %p202
    %p204 = scmp.ne.s32.totalorder %s196, %s198
    %p205 = scmp.eq.s32.totalorder %s26, 1
    %p206 = por %p204, %p205
    %p207 = scmp.ne.s32.totalorder %s198, %s199
    %p208 = scmp.eq.s32.totalorder %s26, 0
    %p209 = por %p207, %p208
    %p210 = scmp.ne.s32.totalorder %s198, %s199
    %p211 = scmp.eq.s32.totalorder %s27, 1
    %p212 = por %p210, %p211
    %p214 = scmp.ne.s32.totalorder %s199, %s213
    %p215 = scmp.eq.s32.totalorder %s27, 0
    %p216 = por %p214, %p215
    %s218 = sadd.s32 %s217, 1
    %p221 = scmp.eq.s32.totalorder %s21, 1
    %p222 = scmp.ne.s32.totalorder %s217, %s219
    %p223 = scmp.eq.s32.totalorder %s21, 0
    %p224 = por %p222, %p223
    %p225 = scmp.ne.s32.totalorder %s217, %s219
    %p226 = scmp.eq.s32.totalorder %s26, 1
    %p227 = por %p225, %p226
    %p228 = scmp.ne.s32.totalorder %s219, %s220
    %p229 = scmp.eq.s32.totalorder %s26, 0
    %p230 = por %p228, %p229
    %p231 = scmp.ne.s32.totalorder %s219, %s220
    %p232 = scmp.eq.s32.totalorder %s27, 1
    %p233 = por %p231, %p232
    %p235 = scmp.ne.s32.totalorder %s220, %s234
    %p236 = scmp.eq.s32.totalorder %s27, 0
    %p237 = por %p235, %p236
    %s239 = sadd.s32 %s238, 1
    %p242 = scmp.eq.s32.totalorder %s21, 1
    %p243 = scmp.ne.s32.totalorder %s238, %s240
    %p244 = scmp.eq.s32.totalorder %s21, 0
    %p245 = por %p243, %p244
    %p246 = scmp.ne.s32.totalorder %s238, %s240
    %p247 = scmp.eq.s32.totalorder %s26, 1
    %p248 = por %p246, %p247
    %p249 = scmp.ne.s32.totalorder %s240, %s241
    %p250 = scmp.eq.s32.totalorder %s26, 0
    %p251 = por %p249, %p250
    %p252 = scmp.ne.s32.totalorder %s240, %s241
    %p253 = scmp.eq.s32.totalorder %s27, 1
    %p254 = por %p252, %p253
    %p256 = scmp.ne.s32.totalorder %s241, %s255
    %p257 = scmp.eq.s32.totalorder %s27, 0
    %p258 = por %p256, %p257
    %s260 = sadd.s32 %s259, 1
    %p263 = scmp.eq.s32.totalorder %s21, 1
    %p264 = scmp.ne.s32.totalorder %s259, %s261
    %p265 = scmp.eq.s32.totalorder %s21, 0
    %p266 = por %p264, %p265
    %p267 = scmp.ne.s32.totalorder %s259, %s261
    %p268 = scmp.eq.s32.totalorder %s26, 1
    %p269 = por %p267, %p268
    %p270 = scmp.ne.s32.totalorder %s261, %s262
    %p271 = scmp.eq.s32.totalorder %s26, 0
    %p272 = por %p270, %p271
    %p273 = scmp.ne.s32.totalorder %s261, %s262
    %p274 = scmp.eq.s32.totalorder %s27, 1
    %p275 = por %p273, %p274
    %p277 = scmp.ne.s32.totalorder %s262, %s276
    %p278 = scmp.eq.s32.totalorder %s27, 0
    %p279 = por %p277, %p278
    %s281 = sadd.s32 %s280, 1
    %p284 = scmp.eq.s32.totalorder %s21, 1
    %p285 = scmp.ne.s32.totalorder %s280, %s282
    %p286 = scmp.eq.s32.totalorder %s21, 0
    %p287 = por %p285, %p286
    %p288 = scmp.ne.s32.totalorder %s280, %s282
    %p289 = scmp.eq.s32.totalorder %s26, 1
    %p290 = por %p288, %p289
    %p291 = scmp.ne.s32.totalorder %s282, %s283
    %p292 = scmp.eq.s32.totalorder %s26, 0
    %p293 = por %p291, %p292
    %p294 = scmp.ne.s32.totalorder %s282, %s283
    %p295 = scmp.eq.s32.totalorder %s27, 1
    %p296 = por %p294, %p295
    %p298 = scmp.ne.s32.totalorder %s283, %s297
    %p299 = scmp.eq.s32.totalorder %s27, 0
    %p300 = por %p298, %p299
    %s302 = sadd.s32 %s301, 1
    %p305 = scmp.eq.s32.totalorder %s21, 1
    %p306 = scmp.ne.s32.totalorder %s301, %s303
    %p307 = scmp.eq.s32.totalorder %s21, 0
    %p308 = por %p306, %p307
    %p309 = scmp.ne.s32.totalorder %s301, %s303
    %p310 = scmp.eq.s32.totalorder %s26, 1
    %p311 = por %p309, %p310
    %p312 = scmp.ne.s32.totalorder %s303, %s304
    %p313 = scmp.eq.s32.totalorder %s26, 0
    %p314 = por %p312, %p313
    %p315 = scmp.ne.s32.totalorder %s303, %s304
    %p316 = scmp.eq.s32.totalorder %s27, 1
    %p317 = por %p315, %p316
    %p319 = scmp.ne.s32.totalorder %s304, %s318
    %p320 = scmp.eq.s32.totalorder %s27, 0
    %p321 = por %p319, %p320
    %s323 = sadd.s32 %s322, 1
    %p326 = scmp.eq.s32.totalorder %s21, 1
    %p327 = scmp.ne.s32.totalorder %s322, %s324
    %p328 = scmp.eq.s32.totalorder %s21, 0
    %p329 = por %p327, %p328
    %p330 = scmp.ne.s32.totalorder %s322, %s324
    %p331 = scmp.eq.s32.totalorder %s26, 1
    %p332 = por %p330, %p331
    %p333 = scmp.ne.s32.totalorder %s324, %s325
    %p334 = scmp.eq.s32.totalorder %s26, 0
    %p335 = por %p333, %p334
    %p336 = scmp.ne.s32.totalorder %s324, %s325
    %p337 = scmp.eq.s32.totalorder %s27, 1
    %p338 = por %p336, %p337
    %p340 = scmp.ne.s32.totalorder %s325, %s339
    %p341 = scmp.eq.s32.totalorder %s27, 0
    %p342 = por %p340, %p341
    %s344 = sadd.s32 %s343, 1
    %p347 = scmp.eq.s32.totalorder %s21, 1
    %p348 = scmp.ne.s32.totalorder %s343, %s345
    %p349 = scmp.eq.s32.totalorder %s21, 0
    %p350 = por %p348, %p349
    %p351 = scmp.ne.s32.totalorder %s343, %s345
    %p352 = scmp.eq.s32.totalorder %s26, 1
    %p353 = por %p351, %p352
    %p354 = scmp.ne.s32.totalorder %s345, %s346
    %p355 = scmp.eq.s32.totalorder %s26, 0
    %p356 = por %p354, %p355
    %p357 = scmp.ne.s32.totalorder %s345, %s346
    %p358 = scmp.eq.s32.totalorder %s27, 1
    %p359 = por %p357, %p358
    %p361 = scmp.ne.s32.totalorder %s346, %s360
    %p362 = scmp.eq.s32.totalorder %s27, 0
    %p363 = por %p361, %p362
    %s364 = ssub.s32 %s21, %s28
    %p365 = scmp.eq.s32.totalorder %s364, 0
    %s367 = sadd.s32 %s366, 1
    %s368 = scalar_select %p365, %s366, %s367
    %p371 = pneg %p365
    %p372 = scmp.eq.s32.totalorder %s21, 1
    %p373 = por %p371, %p372
    %p374 = scmp.ne.s32.totalorder %s366, %s369
    %p375 = scmp.eq.s32.totalorder %s21, 0
    %p376 = por %p374, %p375
    %p377 = scmp.ne.s32.totalorder %s366, %s369
    %p378 = scmp.eq.s32.totalorder %s26, 1
    %p379 = por %p377, %p378
    %p380 = scmp.ne.s32.totalorder %s369, %s370
    %p381 = scmp.eq.s32.totalorder %s26, 0
    %p382 = por %p380, %p381
    %p383 = scmp.ne.s32.totalorder %s369, %s370
    %p384 = scmp.eq.s32.totalorder %s27, 1
    %p385 = por %p383, %p384
    %p387 = scmp.ne.s32.totalorder %s370, %s386
    %p388 = scmp.eq.s32.totalorder %s27, 0
    %p389 = por %p387, %p388
    %p390 = scmp.le.s32.totalorder 1, %s21
    %p391 = scmp.lt.s32.totalorder %s21, 3
    %p392 = pnand %p390, %p391
    %p393 = pneg %p392
    // Predicated region
    $region9: #{detr_forward.11} parent=5 // pred_check
      _
    $region10: #{detr_forward.11} parent=5 // pred_check_branch
      %395 = sbr.rel (%p392) target = $region12
    $region11: #{detr_forward.11} parent=5 // pred_region
      %s396 = ssub.s32 %s21, 1
      // Predicated region
      $region13: #{detr_forward.11} parent=11 // pred_check
        %p397 = pneg %p68
      $region14: #{detr_forward.11} parent=11 // pred_check_branch
        %399 = sbr.rel (%p397) target = $region16
      $region15: #{detr_forward.11} parent=11 // pred_region
        _
      $region16: #{detr_forward.11} parent=11 // pred_fallthru
        _
      // Predicated region
      $region17: #{detr_forward.11} parent=11 // pred_check
        %p400 = pneg %p167
      $region18: #{detr_forward.11} parent=11 // pred_check_branch
        %402 = sbr.rel (%p400) target = $region20
      $region19: #{detr_forward.11} parent=11 // pred_region
        _
      $region20: #{detr_forward.11} parent=11 // pred_fallthru
        _
      // Predicated region
      $region21: #{detr_forward.11} parent=11 // pred_check
        %p403 = pneg %p188
      $region22: #{detr_forward.11} parent=11 // pred_check_branch
        %405 = sbr.rel (%p403) target = $region24
      $region23: #{detr_forward.11} parent=11 // pred_region
        _
      $region24: #{detr_forward.11} parent=11 // pred_fallthru
        _
      // Predicated region
      $region25: #{detr_forward.11} parent=11 // pred_check
        %p406 = pneg %p209
      $region26: #{detr_forward.11} parent=11 // pred_check_branch
        %408 = sbr.rel (%p406) target = $region28
      $region27: #{detr_forward.11} parent=11 // pred_region
        _
      $region28: #{detr_forward.11} parent=11 // pred_fallthru
        _
      // Predicated region
      $region29: #{detr_forward.11} parent=11 // pred_check
        %p409 = pneg %p230
      $region30: #{detr_forward.11} parent=11 // pred_check_branch
        %411 = sbr.rel (%p409) target = $region32
      $region31: #{detr_forward.11} parent=11 // pred_region
        _
      $region32: #{detr_forward.11} parent=11 // pred_fallthru
        _
      // Predicated region
      $region33: #{detr_forward.11} parent=11 // pred_check
        %p412 = pneg %p251
      $region34: #{detr_forward.11} parent=11 // pred_check_branch
        %414 = sbr.rel (%p412) target = $region36
      $region35: #{detr_forward.11} parent=11 // pred_region
        _
      $region36: #{detr_forward.11} parent=11 // pred_fallthru
        _
      // Predicated region
      $region37: #{detr_forward.11} parent=11 // pred_check
        %p415 = pneg %p272
      $region38: #{detr_forward.11} parent=11 // pred_check_branch
        %417 = sbr.rel (%p415) target = $region40
      $region39: #{detr_forward.11} parent=11 // pred_region
        _
      $region40: #{detr_forward.11} parent=11 // pred_fallthru
        _
      // Predicated region
      $region41: #{detr_forward.11} parent=11 // pred_check
        %p418 = pneg %p293
      $region42: #{detr_forward.11} parent=11 // pred_check_branch
        %420 = sbr.rel (%p418) target = $region44
      $region43: #{detr_forward.11} parent=11 // pred_region
        _
      $region44: #{detr_forward.11} parent=11 // pred_fallthru
        _
      // Predicated region
      $region45: #{detr_forward.11} parent=11 // pred_check
        %p421 = pneg %p314
      $region46: #{detr_forward.11} parent=11 // pred_check_branch
        %423 = sbr.rel (%p421) target = $region48
      $region47: #{detr_forward.11} parent=11 // pred_region
        _
      $region48: #{detr_forward.11} parent=11 // pred_fallthru
        _
      // Predicated region
      $region49: #{detr_forward.11} parent=11 // pred_check
        %p424 = pneg %p335
      $region50: #{detr_forward.11} parent=11 // pred_check_branch
        %426 = sbr.rel (%p424) target = $region52
      $region51: #{detr_forward.11} parent=11 // pred_region
        _
      $region52: #{detr_forward.11} parent=11 // pred_fallthru
        _
      // Predicated region
      $region53: #{detr_forward.11} parent=11 // pred_check
        %p427 = pneg %p356
      $region54: #{detr_forward.11} parent=11 // pred_check_branch
        %429 = sbr.rel (%p427) target = $region56
      $region55: #{detr_forward.11} parent=11 // pred_region
        _
      $region56: #{detr_forward.11} parent=11 // pred_fallthru
        _
    $region12: #{detr_forward.11} parent=5 // pred_fallthru
      _
    %p430 = scmp.lt.s32.totalorder %s21, 2
    // Predicated region
    $region57: #{detr_forward.11} parent=5 // pred_check
      %p431 = pneg %p430
    $region58: #{detr_forward.11} parent=5 // pred_check_branch
      %433 = sbr.rel (%p431) target = $region60
    $region59: #{detr_forward.11} parent=5 // pred_region
      // Predicated region
      $region61: #{detr_forward.11} parent=59 // pred_check
        %p434 = pneg %p41
      $region62: #{detr_forward.11} parent=59 // pred_check_branch
        %436 = sbr.rel (%p434) target = $region64
      $region63: #{detr_forward.11} parent=59 // pred_region
        %p437 = scmp.lt.s32.totalorder %s21, 1
        %s438 = scalar_select %p437, %s21, 1
        %s439 = smul.addr %s438, 8
        %s440 = scalar_lea.vmem %s0, %s439
      $region64: #{detr_forward.11} parent=59 // pred_fallthru
        _
      // Predicated region
      $region65: #{detr_forward.11} parent=59 // pred_check
        %p441 = pneg %p88
      $region66: #{detr_forward.11} parent=59 // pred_check_branch
        %443 = sbr.rel (%p441) target = $region68
      $region67: #{detr_forward.11} parent=59 // pred_region
        %p444 = scmp.lt.s32.totalorder %s21, 1
        %s445 = scalar_select %p444, %s21, 1
        %s446 = smul.addr %s445, 8
        %s447 = smul.addr %s446, 8
        %s448 = scalar_lea.vmem %s2, %s447
      $region68: #{detr_forward.11} parent=59 // pred_fallthru
        _
      // Predicated region
      $region69: #{detr_forward.11} parent=59 // pred_check
        %p449 = pneg %p114
      $region70: #{detr_forward.11} parent=59 // pred_check_branch
        %451 = sbr.rel (%p449) target = $region72
      $region71: #{detr_forward.11} parent=59 // pred_region
        %p452 = scmp.lt.s32.totalorder %s21, 1
        %s453 = scalar_select %p452, %s21, 1
        %s454 = smul.addr %s453, 8
        %s455 = smul.addr %s454, 8
        %s456 = scalar_lea.vmem %s3, %s455
      $region72: #{detr_forward.11} parent=59 // pred_fallthru
        _
      // Predicated region
      $region73: #{detr_forward.11} parent=59 // pred_check
        %p457 = pneg %p140
      $region74: #{detr_forward.11} parent=59 // pred_check_branch
        %459 = sbr.rel (%p457) target = $region76
      $region75: #{detr_forward.11} parent=59 // pred_region
        %p460 = scmp.lt.s32.totalorder %s21, 1
        %s461 = scalar_select %p460, %s21, 1
        %s462 = scalar_lea.vmem %s4, %s461
      $region76: #{detr_forward.11} parent=59 // pred_fallthru
        _
    $region60: #{detr_forward.11} parent=5 // pred_fallthru
      _
    %p463 = scmp.le.s32.totalorder 1, %s21
    %p464 = scmp.lt.s32.totalorder %s21, 3
    %p465 = pnand %p463, %p464
    %p466 = pneg %p465
    // Predicated region
    $region77: #{detr_forward.11} parent=5 // pred_check
      _
    $region78: #{detr_forward.11} parent=5 // pred_check_branch
      %468 = sbr.rel (%p465) target = $region80
    $region79: #{detr_forward.11} parent=5 // pred_region
      %s469 = ssub.s32 %s21, 1
      %p470 = scmp.lt.s32.totalorder %s26, 1
      %s471 = scalar_select %p470, %s26, 1
      %s472 = smul.addr %s471, 8
      %s473 = scalar_lea.vmem %s0, %s472
      %p474 = pneg %p47
      %p475 = pneg %p44
      %p476 = pneg %p68
      %p477 = pneg %p65
      %p478 = scmp.lt.s32.totalorder %s26, 1
      %s479 = scalar_select %p478, %s26, 1
      %s480 = smul.addr %s479, 8
      %s481 = smul.addr %s480, 8
      %s482 = scalar_lea.vmem %s2, %s481
      %p483 = pneg %p94
      %p484 = pneg %p91
      %p485 = scmp.lt.s32.totalorder %s26, 1
      %s486 = scalar_select %p485, %s26, 1
      %s487 = smul.addr %s486, 8
      %s488 = smul.addr %s487, 8
      %s489 = scalar_lea.vmem %s3, %s488
      %p490 = pneg %p120
      %p491 = pneg %p117
      %p492 = scmp.lt.s32.totalorder %s26, 1
      %s493 = scalar_select %p492, %s26, 1
      %s494 = scalar_lea.vmem %s4, %s493
      %p495 = pneg %p146
      %p496 = pneg %p143
      %p497 = pneg %p167
      %p498 = pneg %p164
      %p499 = pneg %p188
      %p500 = pneg %p185
      %p501 = pneg %p209
      %p502 = pneg %p206
      %p503 = pneg %p230
      %p504 = pneg %p227
      %p505 = pneg %p251
      %p506 = pneg %p248
      %p507 = pneg %p272
      %p508 = pneg %p269
      %p509 = pneg %p293
      %p510 = pneg %p290
      %p511 = pneg %p314
      %p512 = pneg %p311
      %p513 = pneg %p335
      %p514 = pneg %p332
      %p515 = pneg %p356
      %p516 = pneg %p353
      %p517 = pneg %p382
      %p518 = pneg %p379
      %p519 = scmp.lt.s32.totalorder %s26, 1
      %s520 = scalar_select %p519, %s26, 1
      %s521 = smul.addr %s520, 8
      %s522 = scalar_lea.vmem %s15, %s521
      %p523 = scmp.lt.s32.totalorder %s26, 1
      %s524 = scalar_select %p523, %s26, 1
      %s525 = smul.addr %s524, 8
      %s526 = scalar_lea.vmem %s0, %s525
      %p527 = scmp.lt.s32.totalorder %s26, 1
      %s528 = scalar_select %p527, %s26, 1
      %s529 = smul.addr %s528, 8
      %s530 = smul.addr %s529, 8
      %s531 = scalar_lea.vmem %s2, %s530
      %p532 = scmp.lt.s32.totalorder %s26, 1
      %s533 = scalar_select %p532, %s26, 1
      %s534 = smul.addr %s533, 8
      %s535 = smul.addr %s534, 8
      %s536 = scalar_lea.vmem %s3, %s535
      %p537 = scmp.lt.s32.totalorder %s26, 1
      %s538 = scalar_select %p537, %s26, 1
      %s539 = scalar_lea.vmem %s4, %s538
      %p540 = scmp.lt.s32.totalorder %s26, 1
      %s541 = scalar_select %p540, %s26, 1
      %s542 = smul.addr %s541, 8
      %s543 = scalar_lea.vmem %s15, %s542
      %v544 = vld [vmem:[%s526] sm:$0xff]
      %v545 = vld [vmem:[%s1] sm:$0xff]
      %v546 = vld [vmem:[%s531] sm:$0xff]
      %v547 = vld [vmem:[%s531 + $0x8] sm:$0xff]
      %v548 = vld [vmem:[%s531 + $0x10] sm:$0xff]
      %v549 = vld [vmem:[%s531 + $0x18] sm:$0xff]
      %v550 = vld [vmem:[%s531 + $0x20] sm:$0xff]
      %v551 = vld [vmem:[%s531 + $0x28] sm:$0xff]
      %v552 = vld [vmem:[%s531 + $0x30] sm:$0xff]
      %v553 = vld [vmem:[%s531 + $0x38] sm:$0xff]
      %v554 = vld [vmem:[%s536] sm:$0xff]
      %v555 = vld [vmem:[%s536 + $0x8] sm:$0xff]
      %v556 = vld [vmem:[%s536 + $0x10] sm:$0xff]
      %v557 = vld [vmem:[%s536 + $0x18] sm:$0xff]
      %v558 = vld [vmem:[%s536 + $0x20] sm:$0xff]
      %v559 = vld [vmem:[%s536 + $0x28] sm:$0xff]
      %v560 = vld [vmem:[%s536 + $0x30] sm:$0xff]
      %v561 = vld [vmem:[%s536 + $0x38] sm:$0xff]
      %v562 = vld [vmem:[%s539] sm:$0x1]
      %v563 = vadd.f32 %v544, %v545
      %v564 = vld [vmem:[%s5] sm:$0xff]
      %v565 = vld [vmem:[%s5 + $0x8] sm:$0xff]
      %v566 = vld [vmem:[%s5 + $0x10] sm:$0xff]
      %v567 = vld [vmem:[%s5 + $0x18] sm:$0xff]
      %v568 = vld [vmem:[%s6] sm:$0x1]
      %v570 = vperm.slane %v568, 0
      %vm572 = vcmask 261120
      %v574 = vsel %vm572, %v563, 0
      %576 = vmatpush.msra.mxu0 0.0
      %577 = vmatpush.msra.mxu0 0.0
      %578 = vmatpush.msra.mxu0 0.0
      %579 = vmatpush.msra.mxu0 0.0
      %580 = vmatpush.msra.mxu0 0.0
      %581 = vmatpush.msra.mxu0 0.0
      %582 = vmatpush.msra.mxu0 0.0
      %583 = vmatpush.msra.mxu0 0.0
      %584 = vmatpush.msra.mxu0 0.0
      %585 = vmatpush.msra.mxu0 0.0
      %586 = vmatpush.msra.mxu0 0.0
      %587 = vmatpush.msra.mxu0 0.0
      %588 = vmatpush.msra.mxu0 %v567
      %589 = vmatpush.msra.mxu0 %v566
      %590 = vmatpush.msra.mxu0 %v565
      %591 = vmatpush.msra.mxu0 %v564
      %592 = vmatmul.f32.gmra.mxu0 %v574
      %v593 = vpop.f32.mrf.mxu0
      %v594 = vadd.f32 %v570, %v593
      %595 = vdwg.mxu0
      %v596 = vadd.f32 %v546, %v554
      %v597 = vadd.f32 %v547, %v555
      %v598 = vadd.f32 %v548, %v556
      %v599 = vadd.f32 %v549, %v557
      %v600 = vadd.f32 %v550, %v558
      %v601 = vadd.f32 %v551, %v559
      %v602 = vadd.f32 %v552, %v560
      %v603 = vadd.f32 %v553, %v561
      %v604 = vld [vmem:[%s7] sm:$0xff]
      %v605 = vld [vmem:[%s7 + $0x8] sm:$0xff]
      %v606 = vld [vmem:[%s7 + $0x10] sm:$0xff]
      %v607 = vld [vmem:[%s7 + $0x18] sm:$0xff]
      %v608 = vld [vmem:[%s8] sm:$0x1]
      %v610 = vperm.slane %v608, 0
      %v613 = vsel %vm572, %v596, 0
      %v616 = vsel %vm572, %v597, 0
      %v619 = vsel %vm572, %v598, 0
      %v622 = vsel %vm572, %v599, 0
      %v625 = vsel %vm572, %v600, 0
      %v628 = vsel %vm572, %v601, 0
      %v631 = vsel %vm572, %v602, 0
      %v634 = vsel %vm572, %v603, 0
      %636 = vmatpush.msra.mxu0 0.0
      %637 = vmatpush.msra.mxu0 0.0
      %638 = vmatpush.msra.mxu0 0.0
      %639 = vmatpush.msra.mxu0 0.0
      %640 = vmatpush.msra.mxu0 0.0
      %641 = vmatpush.msra.mxu0 0.0
      %642 = vmatpush.msra.mxu0 0.0
      %643 = vmatpush.msra.mxu0 0.0
      %644 = vmatpush.msra.mxu0 0.0
      %645 = vmatpush.msra.mxu0 0.0
      %646 = vmatpush.msra.mxu0 0.0
      %647 = vmatpush.msra.mxu0 0.0
      %648 = vmatpush.msra.mxu0 %v607
      %649 = vmatpush.msra.mxu0 %v606
      %650 = vmatpush.msra.mxu0 %v605
      %651 = vmatpush.msra.mxu0 %v604
      %652 = vmatmul.f32.gmra.mxu0 %v613
      %v653 = vpop.f32.mrf.mxu0
      %v654 = vadd.f32 %v610, %v653
      %655 = vmatmul.f32.gmra.mxu0 %v616
      %v656 = vpop.f32.mrf.mxu0
      %v657 = vadd.f32 %v610, %v656
      %658 = vmatmul.f32.gmra.mxu0 %v619
      %v659 = vpop.f32.mrf.mxu0
      %v660 = vadd.f32 %v610, %v659
      %661 = vmatmul.f32.gmra.mxu0 %v622
      %v662 = vpop.f32.mrf.mxu0
      %v663 = vadd.f32 %v610, %v662
      %664 = vmatmul.f32.gmra.mxu0 %v625
      %v665 = vpop.f32.mrf.mxu0
      %v666 = vadd.f32 %v610, %v665
      %667 = vmatmul.f32.gmra.mxu0 %v628
      %v668 = vpop.f32.mrf.mxu0
      %v669 = vadd.f32 %v610, %v668
      %670 = vmatmul.f32.gmra.mxu0 %v631
      %v671 = vpop.f32.mrf.mxu0
      %v672 = vadd.f32 %v610, %v671
      %673 = vmatmul.f32.gmra.mxu0 %v634
      %v674 = vpop.f32.mrf.mxu0
      %v675 = vadd.f32 %v610, %v674
      %676 = vdwg.mxu0
      %v677 = vld [vmem:[%s9] sm:$0xff]
      %v678 = vld [vmem:[%s9 + $0x8] sm:$0xff]
      %v679 = vld [vmem:[%s9 + $0x10] sm:$0xff]
      %v680 = vld [vmem:[%s9 + $0x18] sm:$0xff]
      %v681 = vld [vmem:[%s10] sm:$0x1]
      %v683 = vperm.slane %v681, 0
      %v686 = vsel %vm572, %v546, 0
      %v689 = vsel %vm572, %v547, 0
      %v692 = vsel %vm572, %v548, 0
      %v695 = vsel %vm572, %v549, 0
      %v698 = vsel %vm572, %v550, 0
      %v701 = vsel %vm572, %v551, 0
      %v704 = vsel %vm572, %v552, 0
      %v707 = vsel %vm572, %v553, 0
      %709 = vmatpush.msra.mxu0 0.0
      %710 = vmatpush.msra.mxu0 0.0
      %711 = vmatpush.msra.mxu0 0.0
      %712 = vmatpush.msra.mxu0 0.0
      %713 = vmatpush.msra.mxu0 0.0
      %714 = vmatpush.msra.mxu0 0.0
      %715 = vmatpush.msra.mxu0 0.0
      %716 = vmatpush.msra.mxu0 0.0
      %717 = vmatpush.msra.mxu0 0.0
      %718 = vmatpush.msra.mxu0 0.0
      %719 = vmatpush.msra.mxu0 0.0
      %720 = vmatpush.msra.mxu0 0.0
      %721 = vmatpush.msra.mxu0 %v680
      %722 = vmatpush.msra.mxu0 %v679
      %723 = vmatpush.msra.mxu0 %v678
      %724 = vmatpush.msra.mxu0 %v677
      %725 = vmatmul.f32.gmra.mxu0 %v686
      %v726 = vpop.f32.mrf.mxu0
      %v727 = vadd.f32 %v683, %v726
      %728 = vmatmul.f32.gmra.mxu0 %v689
      %v729 = vpop.f32.mrf.mxu0
      %v730 = vadd.f32 %v683, %v729
      %731 = vmatmul.f32.gmra.mxu0 %v692
      %v732 = vpop.f32.mrf.mxu0
      %v733 = vadd.f32 %v683, %v732
      %734 = vmatmul.f32.gmra.mxu0 %v695
      %v735 = vpop.f32.mrf.mxu0
      %v736 = vadd.f32 %v683, %v735
      %737 = vmatmul.f32.gmra.mxu0 %v698
      %v738 = vpop.f32.mrf.mxu0
      %v739 = vadd.f32 %v683, %v738
      %740 = vmatmul.f32.gmra.mxu0 %v701
      %v741 = vpop.f32.mrf.mxu0
      %v742 = vadd.f32 %v683, %v741
      %743 = vmatmul.f32.gmra.mxu0 %v704
      %v744 = vpop.f32.mrf.mxu0
      %v745 = vadd.f32 %v683, %v744
      %746 = vmatmul.f32.gmra.mxu0 %v707
      %v747 = vpop.f32.mrf.mxu0
      %v748 = vadd.f32 %v683, %v747
      %749 = vdwg.mxu0
      %v750 = vld [vmem:[%s11] sm:$0xff]
      %v751 = vld [vmem:[%s11 + $0x8] sm:$0xff]
      %v752 = vld [vmem:[%s11 + $0x10] sm:$0xff]
      %v753 = vld [vmem:[%s11 + $0x18] sm:$0xff]
      %vm754 = vcmask 64512
      %v756 = vsel %vm754, %v594, 0
      %v759 = vsel %vm754, %v654, 0
      %v762 = vsel %vm754, %v657, 0
      %v765 = vsel %vm754, %v660, 0
      %v768 = vsel %vm754, %v663, 0
      %v771 = vsel %vm754, %v666, 0
      %v774 = vsel %vm754, %v669, 0
      %v777 = vsel %vm754, %v672, 0
      %v780 = vsel %vm754, %v675, 0
      %782 = vmatpush.xpose.msra.mxu0 0.0
      %783 = vmatpush.xpose.msra.mxu0 0.0
      %784 = vmatpush.xpose.msra.mxu0 0.0
      %785 = vmatpush.xpose.msra.mxu0 0.0
      %786 = vmatpush.xpose.msra.mxu0 0.0
      %787 = vmatpush.xpose.msra.mxu0 0.0
      %788 = vmatpush.xpose.msra.mxu0 0.0
      %789 = vmatpush.xpose.msra.mxu0 0.0
      %790 = vmatpush.xpose.msra.mxu0 %v780
      %791 = vmatpush.xpose.msra.mxu0 %v777
      %792 = vmatpush.xpose.msra.mxu0 %v774
      %793 = vmatpush.xpose.msra.mxu0 %v771
      %794 = vmatpush.xpose.msra.mxu0 %v768
      %795 = vmatpush.xpose.msra.mxu0 %v765
      %796 = vmatpush.xpose.msra.mxu0 %v762
      %797 = vmatpush.xpose.msra.mxu0 %v759
      %798 = vmatmul.f32.gmra.mxu0 %v756
      %v799 = vpop.f32.mrf.mxu0
      %v800 = vadd.f32 0.0, %v799
      %801 = vdwg.mxu0
      %v802 = vmul.f32 %v800, 0.35355338
      %v804 = vperm.slane %v562, 0
      %v806 = vadd.f32 %v802, %v804
      %vm807 = vcmask 523264
      %v808 = vsel %vm807, %v806, -inf
      %809 = vmax.xlane.f32.xlu0 %v808
      %v810 = vpop.xlane.xlu0 %809
      %v811 = vsub.f32 %v806, %v810
      %v812 = vmul.f32 %v811, 1.442695
      %v813 = vpow.pop %v812
      %v814 = vsel %vm807, %v813, 0.0
      %815 = vadd.xlane.f32.xlu0 %v814
      %v816 = vpop.xlane.xlu0 %815
      %v817 = vrcp.pop %v816
      %v818 = vmul.f32 %v813, %v817
      %v820 = vsel %vm807, %v818, 0
      %822 = vmatpush.msra.mxu0 0.0
      %823 = vmatpush.msra.mxu0 0.0
      %824 = vmatpush.msra.mxu0 0.0
      %825 = vmatpush.msra.mxu0 0.0
      %826 = vmatpush.msra.mxu0 0.0
      %827 = vmatpush.msra.mxu0 0.0
      %828 = vmatpush.msra.mxu0 0.0
      %829 = vmatpush.msra.mxu0 0.0
      %830 = vmatpush.msra.mxu0 %v748
      %831 = vmatpush.msra.mxu0 %v745
      %832 = vmatpush.msra.mxu0 %v742
      %833 = vmatpush.msra.mxu0 %v739
      %834 = vmatpush.msra.mxu0 %v736
      %835 = vmatpush.msra.mxu0 %v733
      %836 = vmatpush.msra.mxu0 %v730
      %837 = vmatpush.msra.mxu0 %v727
      %838 = vmatmul.f32.gmra.mxu0 %v820
      %v839 = vpop.f32.mrf.mxu0
      %v840 = vadd.f32 0.0, %v839
      %841 = vdwg.mxu0
      %842 = vrot.lane.b32.xlu0 %v594, 120
      %v843 = vpop.permute.xlu0 %842
      %844 = vrot.lane.b32.xlu0 %v654, 120
      %v845 = vpop.permute.xlu0 %844
      %846 = vrot.lane.b32.xlu0 %v657, 120
      %v847 = vpop.permute.xlu0 %846
      %848 = vrot.lane.b32.xlu0 %v660, 120
      %v849 = vpop.permute.xlu0 %848
      %850 = vrot.lane.b32.xlu0 %v663, 120
      %v851 = vpop.permute.xlu0 %850
      %852 = vrot.lane.b32.xlu0 %v666, 120
      %v853 = vpop.permute.xlu0 %852
      %854 = vrot.lane.b32.xlu0 %v669, 120
      %v855 = vpop.permute.xlu0 %854
      %856 = vrot.lane.b32.xlu0 %v672, 120
      %v857 = vpop.permute.xlu0 %856
      %858 = vrot.lane.b32.xlu0 %v675, 120
      %v859 = vpop.permute.xlu0 %858
      %v860 = vsel %vm754, %v843, 0
      %v862 = vsel %vm754, %v845, 0
      %v864 = vsel %vm754, %v847, 0
      %v866 = vsel %vm754, %v849, 0
      %v868 = vsel %vm754, %v851, 0
      %v870 = vsel %vm754, %v853, 0
      %v872 = vsel %vm754, %v855, 0
      %v874 = vsel %vm754, %v857, 0
      %v876 = vsel %vm754, %v859, 0
      %878 = vmatpush.xpose.msra.mxu0 0.0
      %879 = vmatpush.xpose.msra.mxu0 0.0
      %880 = vmatpush.xpose.msra.mxu0 0.0
      %881 = vmatpush.xpose.msra.mxu0 0.0
      %882 = vmatpush.xpose.msra.mxu0 0.0
      %883 = vmatpush.xpose.msra.mxu0 0.0
      %884 = vmatpush.xpose.msra.mxu0 0.0
      %885 = vmatpush.xpose.msra.mxu0 0.0
      %886 = vmatpush.xpose.msra.mxu0 %v876
      %887 = vmatpush.xpose.msra.mxu0 %v874
      %888 = vmatpush.xpose.msra.mxu0 %v872
      %889 = vmatpush.xpose.msra.mxu0 %v870
      %890 = vmatpush.xpose.msra.mxu0 %v868
      %891 = vmatpush.xpose.msra.mxu0 %v866
      %892 = vmatpush.xpose.msra.mxu0 %v864
      %893 = vmatpush.xpose.msra.mxu0 %v862
      %894 = vmatmul.f32.gmra.mxu0 %v860
      %v895 = vpop.f32.mrf.mxu0
      %v896 = vadd.f32 0.0, %v895
      %897 = vdwg.mxu0
      %v898 = vmul.f32 %v896, 0.35355338
      %v899 = vadd.f32 %v898, %v804
      %v900 = vsel %vm807, %v899, -inf
      %901 = vmax.xlane.f32.xlu0 %v900
      %v902 = vpop.xlane.xlu0 %901
      %v903 = vsub.f32 %v899, %v902
      %v904 = vmul.f32 %v903, 1.442695
      %v905 = vpow.pop %v904
      %v906 = vsel %vm807, %v905, 0.0
      %907 = vadd.xlane.f32.xlu0 %v906
      %v908 = vpop.xlane.xlu0 %907
      %v909 = vrcp.pop %v908
      %v910 = vmul.f32 %v905, %v909
      %919 = vrot.lane.b32.xlu0 %v727, 120
      %v920 = vpop.permute.xlu0 %919
      %921 = vrot.lane.b32.xlu0 %v730, 120
      %v922 = vpop.permute.xlu0 %921
      %923 = vrot.lane.b32.xlu0 %v733, 120
      %v924 = vpop.permute.xlu0 %923
      %925 = vrot.lane.b32.xlu0 %v736, 120
      %v926 = vpop.permute.xlu0 %925
      %927 = vrot.lane.b32.xlu0 %v739, 120
      %v928 = vpop.permute.xlu0 %927
      %929 = vrot.lane.b32.xlu0 %v742, 120
      %v930 = vpop.permute.xlu0 %929
      %931 = vrot.lane.b32.xlu0 %v745, 120
      %v932 = vpop.permute.xlu0 %931
      %933 = vrot.lane.b32.xlu0 %v748, 120
      %v934 = vpop.permute.xlu0 %933
      %v944 = vsel %vm807, %v910, 0
      %946 = vmatpush.msra.mxu0 0.0
      %947 = vmatpush.msra.mxu0 0.0
      %948 = vmatpush.msra.mxu0 0.0
      %949 = vmatpush.msra.mxu0 0.0
      %950 = vmatpush.msra.mxu0 0.0
      %951 = vmatpush.msra.mxu0 0.0
      %952 = vmatpush.msra.mxu0 0.0
      %953 = vmatpush.msra.mxu0 0.0
      %954 = vmatpush.msra.mxu0 %v934
      %955 = vmatpush.msra.mxu0 %v932
      %956 = vmatpush.msra.mxu0 %v930
      %957 = vmatpush.msra.mxu0 %v928
      %958 = vmatpush.msra.mxu0 %v926
      %959 = vmatpush.msra.mxu0 %v924
      %960 = vmatpush.msra.mxu0 %v922
      %961 = vmatpush.msra.mxu0 %v920
      %962 = vmatmul.f32.gmra.mxu0 %v944
      %v963 = vpop.f32.mrf.mxu0
      %v964 = vadd.f32 0.0, %v963
      %965 = vdwg.mxu0
      %v967 = vsel %vm754, %v964, 0
      %969 = vmatpush.msra.mxu0 0.0
      %970 = vmatpush.msra.mxu0 0.0
      %971 = vmatpush.msra.mxu0 0.0
      %972 = vmatpush.msra.mxu0 0.0
      %973 = vmatpush.msra.mxu0 0.0
      %974 = vmatpush.msra.mxu0 0.0
      %975 = vmatpush.msra.mxu0 0.0
      %976 = vmatpush.msra.mxu0 0.0
      %977 = vmatpush.msra.mxu0 0.0
      %978 = vmatpush.msra.mxu0 0.0
      %979 = vmatpush.msra.mxu0 0.0
      %980 = vmatpush.msra.mxu0 0.0
      %981 = vmatpush.msra.mxu0 0.0
      %982 = vmatpush.msra.mxu0 0.0
      %983 = vmatpush.msra.mxu0 0.0
      %984 = vmatpush.msra.mxu0 %v751
      %985 = vmatmul.f32.gmra.mxu0 %v967
      %v986 = vpop.f32.mrf.mxu0
      %v987 = vadd.f32 0.0, %v986
      %988 = vdwg.mxu0
      %v990 = vsel %vm754, %v840, 0
      %992 = vmatpush.msra.mxu0 0.0
      %993 = vmatpush.msra.mxu0 0.0
      %994 = vmatpush.msra.mxu0 0.0
      %995 = vmatpush.msra.mxu0 0.0
      %996 = vmatpush.msra.mxu0 0.0
      %997 = vmatpush.msra.mxu0 0.0
      %998 = vmatpush.msra.mxu0 0.0
      %999 = vmatpush.msra.mxu0 0.0
      %1000 = vmatpush.msra.mxu0 0.0
      %1001 = vmatpush.msra.mxu0 0.0
      %1002 = vmatpush.msra.mxu0 0.0
      %1003 = vmatpush.msra.mxu0 0.0
      %1004 = vmatpush.msra.mxu0 0.0
      %1005 = vmatpush.msra.mxu0 0.0
      %1006 = vmatpush.msra.mxu0 0.0
      %1007 = vmatpush.msra.mxu0 %v750
      %1008 = vmatmul.f32.gmra.mxu0 %v990
      %v1009 = vpop.f32.mrf.mxu0
      %v1010 = vadd.f32 %v987, %v1009
      %1011 = vdwg.mxu0
      %1012 = vrot.lane.b32.xlu0 %v594, 112
      %v1013 = vpop.permute.xlu0 %1012
      %1014 = vrot.lane.b32.xlu0 %v654, 112
      %v1015 = vpop.permute.xlu0 %1014
      %1016 = vrot.lane.b32.xlu0 %v657, 112
      %v1017 = vpop.permute.xlu0 %1016
      %1018 = vrot.lane.b32.xlu0 %v660, 112
      %v1019 = vpop.permute.xlu0 %1018
      %1020 = vrot.lane.b32.xlu0 %v663, 112
      %v1021 = vpop.permute.xlu0 %1020
      %1022 = vrot.lane.b32.xlu0 %v666, 112
      %v1023 = vpop.permute.xlu0 %1022
      %1024 = vrot.lane.b32.xlu0 %v669, 112
      %v1025 = vpop.permute.xlu0 %1024
      %1026 = vrot.lane.b32.xlu0 %v672, 112
      %v1027 = vpop.permute.xlu0 %1026
      %1028 = vrot.lane.b32.xlu0 %v675, 112
      %v1029 = vpop.permute.xlu0 %1028
      %v1030 = vsel %vm754, %v1013, 0
      %v1032 = vsel %vm754, %v1015, 0
      %v1034 = vsel %vm754, %v1017, 0
      %v1036 = vsel %vm754, %v1019, 0
      %v1038 = vsel %vm754, %v1021, 0
      %v1040 = vsel %vm754, %v1023, 0
      %v1042 = vsel %vm754, %v1025, 0
      %v1044 = vsel %vm754, %v1027, 0
      %v1046 = vsel %vm754, %v1029, 0
      %1048 = vmatpush.xpose.msra.mxu0 0.0
      %1049 = vmatpush.xpose.msra.mxu0 0.0
      %1050 = vmatpush.xpose.msra.mxu0 0.0
      %1051 = vmatpush.xpose.msra.mxu0 0.0
      %1052 = vmatpush.xpose.msra.mxu0 0.0
      %1053 = vmatpush.xpose.msra.mxu0 0.0
      %1054 = vmatpush.xpose.msra.mxu0 0.0
      %1055 = vmatpush.xpose.msra.mxu0 0.0
      %1056 = vmatpush.xpose.msra.mxu0 %v1046
      %1057 = vmatpush.xpose.msra.mxu0 %v1044
      %1058 = vmatpush.xpose.msra.mxu0 %v1042
      %1059 = vmatpush.xpose.msra.mxu0 %v1040
      %1060 = vmatpush.xpose.msra.mxu0 %v1038
      %1061 = vmatpush.xpose.msra.mxu0 %v1036
      %1062 = vmatpush.xpose.msra.mxu0 %v1034
      %1063 = vmatpush.xpose.msra.mxu0 %v1032
      %1064 = vmatmul.f32.gmra.mxu0 %v1030
      %v1065 = vpop.f32.mrf.mxu0
      %v1066 = vadd.f32 0.0, %v1065
      %1067 = vdwg.mxu0
      %v1068 = vmul.f32 %v1066, 0.35355338
      %v1069 = vadd.f32 %v1068, %v804
      %v1070 = vsel %vm807, %v1069, -inf
      %1071 = vmax.xlane.f32.xlu0 %v1070
      %v1072 = vpop.xlane.xlu0 %1071
      %v1073 = vsub.f32 %v1069, %v1072
      %v1074 = vmul.f32 %v1073, 1.442695
      %v1075 = vpow.pop %v1074
      %v1076 = vsel %vm807, %v1075, 0.0
      %1077 = vadd.xlane.f32.xlu0 %v1076
      %v1078 = vpop.xlane.xlu0 %1077
      %v1079 = vrcp.pop %v1078
      %v1080 = vmul.f32 %v1075, %v1079
      %1081 = vrot.lane.b32.xlu0 %v727, 112
      %v1082 = vpop.permute.xlu0 %1081
      %1083 = vrot.lane.b32.xlu0 %v730, 112
      %v1084 = vpop.permute.xlu0 %1083
      %1085 = vrot.lane.b32.xlu0 %v733, 112
      %v1086 = vpop.permute.xlu0 %1085
      %1087 = vrot.lane.b32.xlu0 %v736, 112
      %v1088 = vpop.permute.xlu0 %1087
      %1089 = vrot.lane.b32.xlu0 %v739, 112
      %v1090 = vpop.permute.xlu0 %1089
      %1091 = vrot.lane.b32.xlu0 %v742, 112
      %v1092 = vpop.permute.xlu0 %1091
      %1093 = vrot.lane.b32.xlu0 %v745, 112
      %v1094 = vpop.permute.xlu0 %1093
      %1095 = vrot.lane.b32.xlu0 %v748, 112
      %v1096 = vpop.permute.xlu0 %1095
      %v1106 = vsel %vm807, %v1080, 0
      %1108 = vmatpush.msra.mxu0 0.0
      %1109 = vmatpush.msra.mxu0 0.0
      %1110 = vmatpush.msra.mxu0 0.0
      %1111 = vmatpush.msra.mxu0 0.0
      %1112 = vmatpush.msra.mxu0 0.0
      %1113 = vmatpush.msra.mxu0 0.0
      %1114 = vmatpush.msra.mxu0 0.0
      %1115 = vmatpush.msra.mxu0 0.0
      %1116 = vmatpush.msra.mxu0 %v1096
      %1117 = vmatpush.msra.mxu0 %v1094
      %1118 = vmatpush.msra.mxu0 %v1092
      %1119 = vmatpush.msra.mxu0 %v1090
      %1120 = vmatpush.msra.mxu0 %v1088
      %1121 = vmatpush.msra.mxu0 %v1086
      %1122 = vmatpush.msra.mxu0 %v1084
      %1123 = vmatpush.msra.mxu0 %v1082
      %1124 = vmatmul.f32.gmra.mxu0 %v1106
      %v1125 = vpop.f32.mrf.mxu0
      %v1126 = vadd.f32 0.0, %v1125
      %1127 = vdwg.mxu0
      %v1129 = vsel %vm754, %v1126, 0
      %1131 = vmatpush.msra.mxu0 0.0
      %1132 = vmatpush.msra.mxu0 0.0
      %1133 = vmatpush.msra.mxu0 0.0
      %1134 = vmatpush.msra.mxu0 0.0
      %1135 = vmatpush.msra.mxu0 0.0
      %1136 = vmatpush.msra.mxu0 0.0
      %1137 = vmatpush.msra.mxu0 0.0
      %1138 = vmatpush.msra.mxu0 0.0
      %1139 = vmatpush.msra.mxu0 0.0
      %1140 = vmatpush.msra.mxu0 0.0
      %1141 = vmatpush.msra.mxu0 0.0
      %1142 = vmatpush.msra.mxu0 0.0
      %1143 = vmatpush.msra.mxu0 0.0
      %1144 = vmatpush.msra.mxu0 0.0
      %1145 = vmatpush.msra.mxu0 0.0
      %1146 = vmatpush.msra.mxu0 %v752
      %1147 = vmatmul.f32.gmra.mxu0 %v1129
      %v1148 = vpop.f32.mrf.mxu0
      %v1149 = vadd.f32 0.0, %v1148
      %1150 = vdwg.mxu0
      %v1151 = vadd.f32 %v1010, %v1149
      %1152 = vrot.lane.b32.xlu0 %v594, 104
      %v1153 = vpop.permute.xlu0 %1152
      %1154 = vrot.lane.b32.xlu0 %v654, 104
      %v1155 = vpop.permute.xlu0 %1154
      %1156 = vrot.lane.b32.xlu0 %v657, 104
      %v1157 = vpop.permute.xlu0 %1156
      %1158 = vrot.lane.b32.xlu0 %v660, 104
      %v1159 = vpop.permute.xlu0 %1158
      %1160 = vrot.lane.b32.xlu0 %v663, 104
      %v1161 = vpop.permute.xlu0 %1160
      %1162 = vrot.lane.b32.xlu0 %v666, 104
      %v1163 = vpop.permute.xlu0 %1162
      %1164 = vrot.lane.b32.xlu0 %v669, 104
      %v1165 = vpop.permute.xlu0 %1164
      %1166 = vrot.lane.b32.xlu0 %v672, 104
      %v1167 = vpop.permute.xlu0 %1166
      %1168 = vrot.lane.b32.xlu0 %v675, 104
      %v1169 = vpop.permute.xlu0 %1168
      %v1170 = vsel %vm754, %v1153, 0
      %v1172 = vsel %vm754, %v1155, 0
      %v1174 = vsel %vm754, %v1157, 0
      %v1176 = vsel %vm754, %v1159, 0
      %v1178 = vsel %vm754, %v1161, 0
      %v1180 = vsel %vm754, %v1163, 0
      %v1182 = vsel %vm754, %v1165, 0
      %v1184 = vsel %vm754, %v1167, 0
      %v1186 = vsel %vm754, %v1169, 0
      %1188 = vmatpush.xpose.msra.mxu0 0.0
      %1189 = vmatpush.xpose.msra.mxu0 0.0
      %1190 = vmatpush.xpose.msra.mxu0 0.0
      %1191 = vmatpush.xpose.msra.mxu0 0.0
      %1192 = vmatpush.xpose.msra.mxu0 0.0
      %1193 = vmatpush.xpose.msra.mxu0 0.0
      %1194 = vmatpush.xpose.msra.mxu0 0.0
      %1195 = vmatpush.xpose.msra.mxu0 0.0
      %1196 = vmatpush.xpose.msra.mxu0 %v1186
      %1197 = vmatpush.xpose.msra.mxu0 %v1184
      %1198 = vmatpush.xpose.msra.mxu0 %v1182
      %1199 = vmatpush.xpose.msra.mxu0 %v1180
      %1200 = vmatpush.xpose.msra.mxu0 %v1178
      %1201 = vmatpush.xpose.msra.mxu0 %v1176
      %1202 = vmatpush.xpose.msra.mxu0 %v1174
      %1203 = vmatpush.xpose.msra.mxu0 %v1172
      %1204 = vmatmul.f32.gmra.mxu0 %v1170
      %v1205 = vpop.f32.mrf.mxu0
      %v1206 = vadd.f32 0.0, %v1205
      %1207 = vdwg.mxu0
      %v1208 = vmul.f32 %v1206, 0.35355338
      %v1209 = vadd.f32 %v1208, %v804
      %v1210 = vsel %vm807, %v1209, -inf
      %1211 = vmax.xlane.f32.xlu0 %v1210
      %v1212 = vpop.xlane.xlu0 %1211
      %v1213 = vsub.f32 %v1209, %v1212
      %v1214 = vmul.f32 %v1213, 1.442695
      %v1215 = vpow.pop %v1214
      %v1216 = vsel %vm807, %v1215, 0.0
      %1217 = vadd.xlane.f32.xlu0 %v1216
      %v1218 = vpop.xlane.xlu0 %1217
      %v1219 = vrcp.pop %v1218
      %v1220 = vmul.f32 %v1215, %v1219
      %1221 = vrot.lane.b32.xlu0 %v727, 104
      %v1222 = vpop.permute.xlu0 %1221
      %1223 = vrot.lane.b32.xlu0 %v730, 104
      %v1224 = vpop.permute.xlu0 %1223
      %1225 = vrot.lane.b32.xlu0 %v733, 104
      %v1226 = vpop.permute.xlu0 %1225
      %1227 = vrot.lane.b32.xlu0 %v736, 104
      %v1228 = vpop.permute.xlu0 %1227
      %1229 = vrot.lane.b32.xlu0 %v739, 104
      %v1230 = vpop.permute.xlu0 %1229
      %1231 = vrot.lane.b32.xlu0 %v742, 104
      %v1232 = vpop.permute.xlu0 %1231
      %1233 = vrot.lane.b32.xlu0 %v745, 104
      %v1234 = vpop.permute.xlu0 %1233
      %1235 = vrot.lane.b32.xlu0 %v748, 104
      %v1236 = vpop.permute.xlu0 %1235
      %v1246 = vsel %vm807, %v1220, 0
      %1248 = vmatpush.msra.mxu0 0.0
      %1249 = vmatpush.msra.mxu0 0.0
      %1250 = vmatpush.msra.mxu0 0.0
      %1251 = vmatpush.msra.mxu0 0.0
      %1252 = vmatpush.msra.mxu0 0.0
      %1253 = vmatpush.msra.mxu0 0.0
      %1254 = vmatpush.msra.mxu0 0.0
      %1255 = vmatpush.msra.mxu0 0.0
      %1256 = vmatpush.msra.mxu0 %v1236
      %1257 = vmatpush.msra.mxu0 %v1234
      %1258 = vmatpush.msra.mxu0 %v1232
      %1259 = vmatpush.msra.mxu0 %v1230
      %1260 = vmatpush.msra.mxu0 %v1228
      %1261 = vmatpush.msra.mxu0 %v1226
      %1262 = vmatpush.msra.mxu0 %v1224
      %1263 = vmatpush.msra.mxu0 %v1222
      %1264 = vmatmul.f32.gmra.mxu0 %v1246
      %v1265 = vpop.f32.mrf.mxu0
      %v1266 = vadd.f32 0.0, %v1265
      %1267 = vdwg.mxu0
      %v1269 = vsel %vm754, %v1266, 0
      %1271 = vmatpush.msra.mxu0 0.0
      %1272 = vmatpush.msra.mxu0 0.0
      %1273 = vmatpush.msra.mxu0 0.0
      %1274 = vmatpush.msra.mxu0 0.0
      %1275 = vmatpush.msra.mxu0 0.0
      %1276 = vmatpush.msra.mxu0 0.0
      %1277 = vmatpush.msra.mxu0 0.0
      %1278 = vmatpush.msra.mxu0 0.0
      %1279 = vmatpush.msra.mxu0 0.0
      %1280 = vmatpush.msra.mxu0 0.0
      %1281 = vmatpush.msra.mxu0 0.0
      %1282 = vmatpush.msra.mxu0 0.0
      %1283 = vmatpush.msra.mxu0 0.0
      %1284 = vmatpush.msra.mxu0 0.0
      %1285 = vmatpush.msra.mxu0 0.0
      %1286 = vmatpush.msra.mxu0 %v753
      %1287 = vmatmul.f32.gmra.mxu0 %v1269
      %v1288 = vpop.f32.mrf.mxu0
      %v1289 = vadd.f32 0.0, %v1288
      %1290 = vdwg.mxu0
      %v1291 = vadd.f32 %v1151, %v1289
      %v1292 = vadd.f32 %v544, %v1291
      %v1293 = vld [vmem:[%s12] sm:$0x1]
      %v1295 = vperm.slane %v1293, 0
      %v1297 = vadd.f32 %v1292, %v1295
      %v1298 = vsel %vm572, %v1297, 0.0
      %1299 = vadd.xlane.f32.xlu0 %v1298
      %v1300 = vpop.xlane.xlu0 %1299
      %v1301 = vrcp.pop 32.0
      %v1302 = vmul.f32 32.0, %v1301
      %v1303 = vsub.f32 1.0, %v1302
      %v1304 = vmul.f32 %v1301, %v1303
      %v1305 = vadd.f32 %v1301, %v1304
      %vm1306 = vweird.f32 %v1301
      %v1307 = vsel %vm1306, %v1301, %v1305
      %v1308 = vmul.f32 %v1300, %v1307
      %v1309 = vsub.f32 %v1297, %v1308
      %v1310 = vmul.f32 %v1309, %v1309
      %v1311 = vsel %vm572, %v1310, 0.0
      %1312 = vadd.xlane.f32.xlu0 %v1311
      %v1313 = vpop.xlane.xlu0 %1312
      %v1314 = vmul.f32 %v1313, %v1307
      %v1315 = vadd.f32 %v1314, 1e-05
      %v1316 = vrsqrt.pop %v1315
      %v1317 = vmul.f32 %v1316, %v1315
      %v1318 = vmul.f32 %v1317, %v1316
      %v1319 = vmul.f32 0.5, %v1318
      %v1320 = vsub.f32 1.5, %v1319
      %v1321 = vmul.f32 %v1316, %v1320
      %vm1322 = vweird.f32 %v1315
      %vm1323 = vweird.f32 %v1316
      %vm1324 = vmor %vm1322, %vm1323
      %v1325 = vsel %vm1324, %v1316, %v1321
      %v1326 = vmul.f32 %v1309, %v1325
      %v1327 = vld [vmem:[%s13] sm:$0x1]
      %v1329 = vperm.slane %v1327, 0
      %v1331 = vmul.f32 %v1326, %v1329
      %v1332 = vld [vmem:[%s14] sm:$0x1]
      %v1334 = vperm.slane %v1332, 0
      %v1336 = vadd.f32 %v1331, %v1334
      %1337 = vst.msk [vmem:[%s543] sm:$0xff] %vm572, %v1336
      %p1338 = scmp.lt.s32.totalorder %s26, 1
      %s1339 = scalar_select %p1338, %s26, 1
      %s1340 = smul.addr %s1339, 8
      %s1341 = scalar_lea.vmem %s15, %s1340
      // Predicated region
      $region81: #{detr_forward.11} parent=79 // pred_check
        %p1342 = pneg %p379
      $region82: #{detr_forward.11} parent=79 // pred_check_branch
        %1344 = sbr.rel (%p1342) target = $region84
      $region83: #{detr_forward.11} parent=79 // pred_region
        _
      $region84: #{detr_forward.11} parent=79 // pred_fallthru
        _
    $region80: #{detr_forward.11} parent=5 // pred_fallthru
      _
    %p1345 = scmp.le.s32.totalorder 2, %s21
    // Predicated region
    $region85: #{detr_forward.11} parent=5 // pred_check
      %p1346 = pneg %p1345
    $region86: #{detr_forward.11} parent=5 // pred_check_branch
      %1348 = sbr.rel (%p1346) target = $region88
    $region87: #{detr_forward.11} parent=5 // pred_region
      %s1349 = ssub.s32 %s21, 2
      // Predicated region
      $region89: #{detr_forward.11} parent=87 // pred_check
        %p1350 = pneg %p385
      $region90: #{detr_forward.11} parent=87 // pred_check_branch
        %1352 = sbr.rel (%p1350) target = $region92
      $region91: #{detr_forward.11} parent=87 // pred_region
        %p1353 = scmp.lt.s32.totalorder %s27, 1
        %s1354 = scalar_select %p1353, %s27, 1
        %s1355 = smul.addr %s1354, 8
        %s1356 = scalar_lea.vmem %s15, %s1355
      $region92: #{detr_forward.11} parent=87 // pred_fallthru
        _
    $region88: #{detr_forward.11} parent=5 // pred_fallthru
      _
  $region6: #{detr_forward.11} parent=0 // loop_footer
    %s25 = sadd.s32 1, %s21
  $region7: #{detr_forward.11} parent=0 // loop_footer_branch
    %20 = sbr.rel target = $region3
  $region8: #{detr_forward.11} parent=0 // loop_exit
    _

// kernel: detr_forward.8
$region0: #{detr_forward.8}
  #allocation0 [shape = 'u32[]', space=smem, size = 0x4, offset = 0x4, fixed_abs, tag = 'smem constant byte address 0x4 - core index']
  #allocation1 [shape = 'u32[72,128]{1,0:T(1,128)}', space=vmem, size = 0x9000, scoped, tag = 'internal scratch']
  %s0 = inlined_call_operand.vmem [shape: f32[2,64,32], index: 0, kind: input, shape index: {}, may-alias: {0,2}]
  %s1 = inlined_call_operand.vmem [shape: f32[2,64,32], index: 1, kind: input, shape index: {}, may-alias: {1,3}]
  %s2 = inlined_call_operand.vmem [shape: f32[2,64,32], index: 2, kind: input, shape index: {}, may-alias: {0,2}]
  %s3 = inlined_call_operand.vmem [shape: f32[2,64,32], index: 3, kind: input, shape index: {}, may-alias: {1,3}]
  %s4 = inlined_call_operand.vmem [shape: f32[2,1,64], index: 4, kind: input, shape index: {}]
  %s5 = inlined_call_operand.vmem [shape: f32[32,32], index: 5, kind: input, shape index: {}]
  %s6 = inlined_call_operand.vmem [shape: f32[1,32], index: 6, kind: input, shape index: {}]
  %s7 = inlined_call_operand.vmem [shape: f32[32,32], index: 7, kind: input, shape index: {}]
  %s8 = inlined_call_operand.vmem [shape: f32[1,32], index: 8, kind: input, shape index: {}]
  %s9 = inlined_call_operand.vmem [shape: f32[32,32], index: 9, kind: input, shape index: {}]
  %s10 = inlined_call_operand.vmem [shape: f32[1,32], index: 10, kind: input, shape index: {}]
  %s11 = inlined_call_operand.vmem [shape: f32[32,32], index: 11, kind: input, shape index: {}]
  %s12 = inlined_call_operand.vmem [shape: f32[1,32], index: 12, kind: input, shape index: {}]
  %s13 = inlined_call_operand.vmem [shape: f32[1,32], index: 13, kind: input, shape index: {}]
  %s14 = inlined_call_operand.vmem [shape: f32[1,32], index: 14, kind: input, shape index: {}]
  %s15 = inlined_call_operand.vmem [shape: f32[2,64,32], index: 15, kind: output, shape index: {}]
  %s16 = sld [smem:[#allocation0]]
  $region93: #{detr_forward.8} parent=0
    _
  %s18 = ssub.s32 1, %s16
  %s19 = scalar_select 0, %s18, %s16
  loop: start=0, step=1, limit=4
  $region2: #{detr_forward.8} parent=0 // loop_pre_header
    _
  $region3: #{detr_forward.8} parent=0 // loop_header
    %s21 = sphi 0, %s25
    %p22 = scmp.ge.s32.totalorder %s21, 4
    %s31 = sphi 0, %s33
    %s34 = sphi 0, %s31
    %s35 = sphi 0, %s34
    %s51 = sphi 0, %s35
    %s57 = sphi 0, %s59
    %s60 = sphi 0, %s57
    %s61 = sphi 0, %s60
    %s77 = sphi 0, %s61
    %s83 = sphi 0, %s85
    %s86 = sphi 0, %s83
    %s87 = sphi 0, %s86
    %s103 = sphi 0, %s87
    %s109 = sphi 0, %s111
    %s112 = sphi 0, %s109
    %s113 = sphi 0, %s112
    %s129 = sphi 0, %s113
    %s135 = sphi 0, %s137
    %s138 = sphi 0, %s135
    %s139 = sphi 0, %s138
    %s155 = sphi 0, %s139
    %s159 = sphi 0, %s159
    %s161 = sphi 0, %s159
    %s162 = sphi 0, %s161
    %s176 = sphi 0, %s162
    %s180 = sphi 0, %s180
    %s182 = sphi 0, %s180
    %s183 = sphi 0, %s182
    %s197 = sphi 0, %s183
    %s201 = sphi 0, %s201
    %s203 = sphi 0, %s201
    %s204 = sphi 0, %s203
    %s218 = sphi 0, %s204
    %s222 = sphi 0, %s222
    %s224 = sphi 0, %s222
    %s225 = sphi 0, %s224
    %s239 = sphi 0, %s225
    %s243 = sphi 0, %s243
    %s245 = sphi 0, %s243
    %s246 = sphi 0, %s245
    %s260 = sphi 0, %s246
    %s264 = sphi 0, %s264
    %s266 = sphi 0, %s264
    %s267 = sphi 0, %s266
    %s281 = sphi 0, %s267
    %s285 = sphi 0, %s285
    %s287 = sphi 0, %s285
    %s288 = sphi 0, %s287
    %s302 = sphi 0, %s288
    %s306 = sphi 0, %s306
    %s308 = sphi 0, %s306
    %s309 = sphi 0, %s308
    %s323 = sphi 0, %s309
    %s327 = sphi 0, %s327
    %s329 = sphi 0, %s327
    %s330 = sphi 0, %s329
    %s344 = sphi 0, %s330
    %s348 = sphi 0, %s348
    %s350 = sphi 0, %s348
    %s351 = sphi 0, %s350
    %s365 = sphi 0, %s351
    %s371 = sphi 0, %s373
    %s374 = sphi 0, %s371
    %s375 = sphi 0, %s374
    %s391 = sphi 0, %s375
  $region4: #{detr_forward.8} parent=0 // loop_header_branch
    %24 = sbr.rel (%p22) target = $region8
  $region5: #{detr_forward.8} parent=0 // loop_body
    %s26 = ssub.s32 %s21, 1
    %s27 = ssub.s32 %s21, 2
    %s28 = sadd.s32 %s21, 1
    %s29 = ssub.s32 %s21, %s28
    %p30 = scmp.eq.s32.totalorder %s29, 0
    %s32 = sadd.s32 %s31, 1
    %s33 = scalar_select %p30, %s31, %s32
    %p36 = pneg %p30
    %p37 = scmp.eq.s32.totalorder %s21, 1
    %p38 = por %p36, %p37
    %p39 = scmp.ne.s32.totalorder %s31, %s34
    %p40 = scmp.eq.s32.totalorder %s21, 0
    %p41 = por %p39, %p40
    %p42 = scmp.ne.s32.totalorder %s31, %s34
    %p43 = scmp.eq.s32.totalorder %s26, 1
    %p44 = por %p42, %p43
    %p45 = scmp.ne.s32.totalorder %s34, %s35
    %p46 = scmp.eq.s32.totalorder %s26, 0
    %p47 = por %p45, %p46
    %p48 = scmp.ne.s32.totalorder %s34, %s35
    %p49 = scmp.eq.s32.totalorder %s27, 1
    %p50 = por %p48, %p49
    %p52 = scmp.ne.s32.totalorder %s35, %s51
    %p53 = scmp.eq.s32.totalorder %s27, 0
    %p54 = por %p52, %p53
    %s55 = ssub.s32 %s21, %s28
    %p56 = scmp.eq.s32.totalorder %s55, 0
    %s58 = sadd.s32 %s57, 1
    %s59 = scalar_select %p56, %s57, %s58
    %p62 = pneg %p56
    %p63 = scmp.eq.s32.totalorder %s21, 1
    %p64 = por %p62, %p63
    %p65 = scmp.ne.s32.totalorder %s57, %s60
    %p66 = scmp.eq.s32.totalorder %s21, 0
    %p67 = por %p65, %p66
    %p68 = scmp.ne.s32.totalorder %s57, %s60
    %p69 = scmp.eq.s32.totalorder %s26, 1
    %p70 = por %p68, %p69
    %p71 = scmp.ne.s32.totalorder %s60, %s61
    %p72 = scmp.eq.s32.totalorder %s26, 0
    %p73 = por %p71, %p72
    %p74 = scmp.ne.s32.totalorder %s60, %s61
    %p75 = scmp.eq.s32.totalorder %s27, 1
    %p76 = por %p74, %p75
    %p78 = scmp.ne.s32.totalorder %s61, %s77
    %p79 = scmp.eq.s32.totalorder %s27, 0
    %p80 = por %p78, %p79
    %s81 = ssub.s32 %s21, %s28
    %p82 = scmp.eq.s32.totalorder %s81, 0
    %s84 = sadd.s32 %s83, 1
    %s85 = scalar_select %p82, %s83, %s84
    %p88 = pneg %p82
    %p89 = scmp.eq.s32.totalorder %s21, 1
    %p90 = por %p88, %p89
    %p91 = scmp.ne.s32.totalorder %s83, %s86
    %p92 = scmp.eq.s32.totalorder %s21, 0
    %p93 = por %p91, %p92
    %p94 = scmp.ne.s32.totalorder %s83, %s86
    %p95 = scmp.eq.s32.totalorder %s26, 1
    %p96 = por %p94, %p95
    %p97 = scmp.ne.s32.totalorder %s86, %s87
    %p98 = scmp.eq.s32.totalorder %s26, 0
    %p99 = por %p97, %p98
    %p100 = scmp.ne.s32.totalorder %s86, %s87
    %p101 = scmp.eq.s32.totalorder %s27, 1
    %p102 = por %p100, %p101
    %p104 = scmp.ne.s32.totalorder %s87, %s103
    %p105 = scmp.eq.s32.totalorder %s27, 0
    %p106 = por %p104, %p105
    %s107 = ssub.s32 %s21, %s28
    %p108 = scmp.eq.s32.totalorder %s107, 0
    %s110 = sadd.s32 %s109, 1
    %s111 = scalar_select %p108, %s109, %s110
    %p114 = pneg %p108
    %p115 = scmp.eq.s32.totalorder %s21, 1
    %p116 = por %p114, %p115
    %p117 = scmp.ne.s32.totalorder %s109, %s112
    %p118 = scmp.eq.s32.totalorder %s21, 0
    %p119 = por %p117, %p118
    %p120 = scmp.ne.s32.totalorder %s109, %s112
    %p121 = scmp.eq.s32.totalorder %s26, 1
    %p122 = por %p120, %p121
    %p123 = scmp.ne.s32.totalorder %s112, %s113
    %p124 = scmp.eq.s32.totalorder %s26, 0
    %p125 = por %p123, %p124
    %p126 = scmp.ne.s32.totalorder %s112, %s113
    %p127 = scmp.eq.s32.totalorder %s27, 1
    %p128 = por %p126, %p127
    %p130 = scmp.ne.s32.totalorder %s113, %s129
    %p131 = scmp.eq.s32.totalorder %s27, 0
    %p132 = por %p130, %p131
    %s133 = ssub.s32 %s21, %s28
    %p134 = scmp.eq.s32.totalorder %s133, 0
    %s136 = sadd.s32 %s135, 1
    %s137 = scalar_select %p134, %s135, %s136
    %p140 = pneg %p134
    %p141 = scmp.eq.s32.totalorder %s21, 1
    %p142 = por %p140, %p141
    %p143 = scmp.ne.s32.totalorder %s135, %s138
    %p144 = scmp.eq.s32.totalorder %s21, 0
    %p145 = por %p143, %p144
    %p146 = scmp.ne.s32.totalorder %s135, %s138
    %p147 = scmp.eq.s32.totalorder %s26, 1
    %p148 = por %p146, %p147
    %p149 = scmp.ne.s32.totalorder %s138, %s139
    %p150 = scmp.eq.s32.totalorder %s26, 0
    %p151 = por %p149, %p150
    %p152 = scmp.ne.s32.totalorder %s138, %s139
    %p153 = scmp.eq.s32.totalorder %s27, 1
    %p154 = por %p152, %p153
    %p156 = scmp.ne.s32.totalorder %s139, %s155
    %p157 = scmp.eq.s32.totalorder %s27, 0
    %p158 = por %p156, %p157
    %s160 = sadd.s32 %s159, 1
    %p163 = scmp.eq.s32.totalorder %s21, 1
    %p164 = scmp.ne.s32.totalorder %s159, %s161
    %p165 = scmp.eq.s32.totalorder %s21, 0
    %p166 = por %p164, %p165
    %p167 = scmp.ne.s32.totalorder %s159, %s161
    %p168 = scmp.eq.s32.totalorder %s26, 1
    %p169 = por %p167, %p168
    %p170 = scmp.ne.s32.totalorder %s161, %s162
    %p171 = scmp.eq.s32.totalorder %s26, 0
    %p172 = por %p170, %p171
    %p173 = scmp.ne.s32.totalorder %s161, %s162
    %p174 = scmp.eq.s32.totalorder %s27, 1
    %p175 = por %p173, %p174
    %p177 = scmp.ne.s32.totalorder %s162, %s176
    %p178 = scmp.eq.s32.totalorder %s27, 0
    %p179 = por %p177, %p178
    %s181 = sadd.s32 %s180, 1
    %p184 = scmp.eq.s32.totalorder %s21, 1
    %p185 = scmp.ne.s32.totalorder %s180, %s182
    %p186 = scmp.eq.s32.totalorder %s21, 0
    %p187 = por %p185, %p186
    %p188 = scmp.ne.s32.totalorder %s180, %s182
    %p189 = scmp.eq.s32.totalorder %s26, 1
    %p190 = por %p188, %p189
    %p191 = scmp.ne.s32.totalorder %s182, %s183
    %p192 = scmp.eq.s32.totalorder %s26, 0
    %p193 = por %p191, %p192
    %p194 = scmp.ne.s32.totalorder %s182, %s183
    %p195 = scmp.eq.s32.totalorder %s27, 1
    %p196 = por %p194, %p195
    %p198 = scmp.ne.s32.totalorder %s183, %s197
    %p199 = scmp.eq.s32.totalorder %s27, 0
    %p200 = por %p198, %p199
    %s202 = sadd.s32 %s201, 1
    %p205 = scmp.eq.s32.totalorder %s21, 1
    %p206 = scmp.ne.s32.totalorder %s201, %s203
    %p207 = scmp.eq.s32.totalorder %s21, 0
    %p208 = por %p206, %p207
    %p209 = scmp.ne.s32.totalorder %s201, %s203
    %p210 = scmp.eq.s32.totalorder %s26, 1
    %p211 = por %p209, %p210
    %p212 = scmp.ne.s32.totalorder %s203, %s204
    %p213 = scmp.eq.s32.totalorder %s26, 0
    %p214 = por %p212, %p213
    %p215 = scmp.ne.s32.totalorder %s203, %s204
    %p216 = scmp.eq.s32.totalorder %s27, 1
    %p217 = por %p215, %p216
    %p219 = scmp.ne.s32.totalorder %s204, %s218
    %p220 = scmp.eq.s32.totalorder %s27, 0
    %p221 = por %p219, %p220
    %s223 = sadd.s32 %s222, 1
    %p226 = scmp.eq.s32.totalorder %s21, 1
    %p227 = scmp.ne.s32.totalorder %s222, %s224
    %p228 = scmp.eq.s32.totalorder %s21, 0
    %p229 = por %p227, %p228
    %p230 = scmp.ne.s32.totalorder %s222, %s224
    %p231 = scmp.eq.s32.totalorder %s26, 1
    %p232 = por %p230, %p231
    %p233 = scmp.ne.s32.totalorder %s224, %s225
    %p234 = scmp.eq.s32.totalorder %s26, 0
    %p235 = por %p233, %p234
    %p236 = scmp.ne.s32.totalorder %s224, %s225
    %p237 = scmp.eq.s32.totalorder %s27, 1
    %p238 = por %p236, %p237
    %p240 = scmp.ne.s32.totalorder %s225, %s239
    %p241 = scmp.eq.s32.totalorder %s27, 0
    %p242 = por %p240, %p241
    %s244 = sadd.s32 %s243, 1
    %p247 = scmp.eq.s32.totalorder %s21, 1
    %p248 = scmp.ne.s32.totalorder %s243, %s245
    %p249 = scmp.eq.s32.totalorder %s21, 0
    %p250 = por %p248, %p249
    %p251 = scmp.ne.s32.totalorder %s243, %s245
    %p252 = scmp.eq.s32.totalorder %s26, 1
    %p253 = por %p251, %p252
    %p254 = scmp.ne.s32.totalorder %s245, %s246
    %p255 = scmp.eq.s32.totalorder %s26, 0
    %p256 = por %p254, %p255
    %p257 = scmp.ne.s32.totalorder %s245, %s246
    %p258 = scmp.eq.s32.totalorder %s27, 1
    %p259 = por %p257, %p258
    %p261 = scmp.ne.s32.totalorder %s246, %s260
    %p262 = scmp.eq.s32.totalorder %s27, 0
    %p263 = por %p261, %p262
    %s265 = sadd.s32 %s264, 1
    %p268 = scmp.eq.s32.totalorder %s21, 1
    %p269 = scmp.ne.s32.totalorder %s264, %s266
    %p270 = scmp.eq.s32.totalorder %s21, 0
    %p271 = por %p269, %p270
    %p272 = scmp.ne.s32.totalorder %s264, %s266
    %p273 = scmp.eq.s32.totalorder %s26, 1
    %p274 = por %p272, %p273
    %p275 = scmp.ne.s32.totalorder %s266, %s267
    %p276 = scmp.eq.s32.totalorder %s26, 0
    %p277 = por %p275, %p276
    %p278 = scmp.ne.s32.totalorder %s266, %s267
    %p279 = scmp.eq.s32.totalorder %s27, 1
    %p280 = por %p278, %p279
    %p282 = scmp.ne.s32.totalorder %s267, %s281
    %p283 = scmp.eq.s32.totalorder %s27, 0
    %p284 = por %p282, %p283
    %s286 = sadd.s32 %s285, 1
    %p289 = scmp.eq.s32.totalorder %s21, 1
    %p290 = scmp.ne.s32.totalorder %s285, %s287
    %p291 = scmp.eq.s32.totalorder %s21, 0
    %p292 = por %p290, %p291
    %p293 = scmp.ne.s32.totalorder %s285, %s287
    %p294 = scmp.eq.s32.totalorder %s26, 1
    %p295 = por %p293, %p294
    %p296 = scmp.ne.s32.totalorder %s287, %s288
    %p297 = scmp.eq.s32.totalorder %s26, 0
    %p298 = por %p296, %p297
    %p299 = scmp.ne.s32.totalorder %s287, %s288
    %p300 = scmp.eq.s32.totalorder %s27, 1
    %p301 = por %p299, %p300
    %p303 = scmp.ne.s32.totalorder %s288, %s302
    %p304 = scmp.eq.s32.totalorder %s27, 0
    %p305 = por %p303, %p304
    %s307 = sadd.s32 %s306, 1
    %p310 = scmp.eq.s32.totalorder %s21, 1
    %p311 = scmp.ne.s32.totalorder %s306, %s308
    %p312 = scmp.eq.s32.totalorder %s21, 0
    %p313 = por %p311, %p312
    %p314 = scmp.ne.s32.totalorder %s306, %s308
    %p315 = scmp.eq.s32.totalorder %s26, 1
    %p316 = por %p314, %p315
    %p317 = scmp.ne.s32.totalorder %s308, %s309
    %p318 = scmp.eq.s32.totalorder %s26, 0
    %p319 = por %p317, %p318
    %p320 = scmp.ne.s32.totalorder %s308, %s309
    %p321 = scmp.eq.s32.totalorder %s27, 1
    %p322 = por %p320, %p321
    %p324 = scmp.ne.s32.totalorder %s309, %s323
    %p325 = scmp.eq.s32.totalorder %s27, 0
    %p326 = por %p324, %p325
    %s328 = sadd.s32 %s327, 1
    %p331 = scmp.eq.s32.totalorder %s21, 1
    %p332 = scmp.ne.s32.totalorder %s327, %s329
    %p333 = scmp.eq.s32.totalorder %s21, 0
    %p334 = por %p332, %p333
    %p335 = scmp.ne.s32.totalorder %s327, %s329
    %p336 = scmp.eq.s32.totalorder %s26, 1
    %p337 = por %p335, %p336
    %p338 = scmp.ne.s32.totalorder %s329, %s330
    %p339 = scmp.eq.s32.totalorder %s26, 0
    %p340 = por %p338, %p339
    %p341 = scmp.ne.s32.totalorder %s329, %s330
    %p342 = scmp.eq.s32.totalorder %s27, 1
    %p343 = por %p341, %p342
    %p345 = scmp.ne.s32.totalorder %s330, %s344
    %p346 = scmp.eq.s32.totalorder %s27, 0
    %p347 = por %p345, %p346
    %s349 = sadd.s32 %s348, 1
    %p352 = scmp.eq.s32.totalorder %s21, 1
    %p353 = scmp.ne.s32.totalorder %s348, %s350
    %p354 = scmp.eq.s32.totalorder %s21, 0
    %p355 = por %p353, %p354
    %p356 = scmp.ne.s32.totalorder %s348, %s350
    %p357 = scmp.eq.s32.totalorder %s26, 1
    %p358 = por %p356, %p357
    %p359 = scmp.ne.s32.totalorder %s350, %s351
    %p360 = scmp.eq.s32.totalorder %s26, 0
    %p361 = por %p359, %p360
    %p362 = scmp.ne.s32.totalorder %s350, %s351
    %p363 = scmp.eq.s32.totalorder %s27, 1
    %p364 = por %p362, %p363
    %p366 = scmp.ne.s32.totalorder %s351, %s365
    %p367 = scmp.eq.s32.totalorder %s27, 0
    %p368 = por %p366, %p367
    %s369 = ssub.s32 %s21, %s28
    %p370 = scmp.eq.s32.totalorder %s369, 0
    %s372 = sadd.s32 %s371, 1
    %s373 = scalar_select %p370, %s371, %s372
    %p376 = pneg %p370
    %p377 = scmp.eq.s32.totalorder %s21, 1
    %p378 = por %p376, %p377
    %p379 = scmp.ne.s32.totalorder %s371, %s374
    %p380 = scmp.eq.s32.totalorder %s21, 0
    %p381 = por %p379, %p380
    %p382 = scmp.ne.s32.totalorder %s371, %s374
    %p383 = scmp.eq.s32.totalorder %s26, 1
    %p384 = por %p382, %p383
    %p385 = scmp.ne.s32.totalorder %s374, %s375
    %p386 = scmp.eq.s32.totalorder %s26, 0
    %p387 = por %p385, %p386
    %p388 = scmp.ne.s32.totalorder %s374, %s375
    %p389 = scmp.eq.s32.totalorder %s27, 1
    %p390 = por %p388, %p389
    %p392 = scmp.ne.s32.totalorder %s375, %s391
    %p393 = scmp.eq.s32.totalorder %s27, 0
    %p394 = por %p392, %p393
    %p395 = scmp.le.s32.totalorder 1, %s21
    %p396 = scmp.lt.s32.totalorder %s21, 3
    %p397 = pnand %p395, %p396
    %p398 = pneg %p397
    // Predicated region
    $region9: #{detr_forward.8} parent=5 // pred_check
      _
    $region10: #{detr_forward.8} parent=5 // pred_check_branch
      %400 = sbr.rel (%p397) target = $region12
    $region11: #{detr_forward.8} parent=5 // pred_region
      %s401 = ssub.s32 %s21, 1
      // Predicated region
      $region13: #{detr_forward.8} parent=11 // pred_check
        %p402 = pneg %p172
      $region14: #{detr_forward.8} parent=11 // pred_check_branch
        %404 = sbr.rel (%p402) target = $region16
      $region15: #{detr_forward.8} parent=11 // pred_region
        _
      $region16: #{detr_forward.8} parent=11 // pred_fallthru
        _
      // Predicated region
      $region17: #{detr_forward.8} parent=11 // pred_check
        %p405 = pneg %p193
      $region18: #{detr_forward.8} parent=11 // pred_check_branch
        %407 = sbr.rel (%p405) target = $region20
      $region19: #{detr_forward.8} parent=11 // pred_region
        _
      $region20: #{detr_forward.8} parent=11 // pred_fallthru
        _
      // Predicated region
      $region21: #{detr_forward.8} parent=11 // pred_check
        %p408 = pneg %p214
      $region22: #{detr_forward.8} parent=11 // pred_check_branch
        %410 = sbr.rel (%p408) target = $region24
      $region23: #{detr_forward.8} parent=11 // pred_region
        _
      $region24: #{detr_forward.8} parent=11 // pred_fallthru
        _
      // Predicated region
      $region25: #{detr_forward.8} parent=11 // pred_check
        %p411 = pneg %p235
      $region26: #{detr_forward.8} parent=11 // pred_check_branch
        %413 = sbr.rel (%p411) target = $region28
      $region27: #{detr_forward.8} parent=11 // pred_region
        _
      $region28: #{detr_forward.8} parent=11 // pred_fallthru
        _
      // Predicated region
      $region29: #{detr_forward.8} parent=11 // pred_check
        %p414 = pneg %p256
      $region30: #{detr_forward.8} parent=11 // pred_check_branch
        %416 = sbr.rel (%p414) target = $region32
      $region31: #{detr_forward.8} parent=11 // pred_region
        _
      $region32: #{detr_forward.8} parent=11 // pred_fallthru
        _
      // Predicated region
      $region33: #{detr_forward.8} parent=11 // pred_check
        %p417 = pneg %p277
      $region34: #{detr_forward.8} parent=11 // pred_check_branch
        %419 = sbr.rel (%p417) target = $region36
      $region35: #{detr_forward.8} parent=11 // pred_region
        _
      $region36: #{detr_forward.8} parent=11 // pred_fallthru
        _
      // Predicated region
      $region37: #{detr_forward.8} parent=11 // pred_check
        %p420 = pneg %p298
      $region38: #{detr_forward.8} parent=11 // pred_check_branch
        %422 = sbr.rel (%p420) target = $region40
      $region39: #{detr_forward.8} parent=11 // pred_region
        _
      $region40: #{detr_forward.8} parent=11 // pred_fallthru
        _
      // Predicated region
      $region41: #{detr_forward.8} parent=11 // pred_check
        %p423 = pneg %p319
      $region42: #{detr_forward.8} parent=11 // pred_check_branch
        %425 = sbr.rel (%p423) target = $region44
      $region43: #{detr_forward.8} parent=11 // pred_region
        _
      $region44: #{detr_forward.8} parent=11 // pred_fallthru
        _
      // Predicated region
      $region45: #{detr_forward.8} parent=11 // pred_check
        %p426 = pneg %p340
      $region46: #{detr_forward.8} parent=11 // pred_check_branch
        %428 = sbr.rel (%p426) target = $region48
      $region47: #{detr_forward.8} parent=11 // pred_region
        _
      $region48: #{detr_forward.8} parent=11 // pred_fallthru
        _
      // Predicated region
      $region49: #{detr_forward.8} parent=11 // pred_check
        %p429 = pneg %p361
      $region50: #{detr_forward.8} parent=11 // pred_check_branch
        %431 = sbr.rel (%p429) target = $region52
      $region51: #{detr_forward.8} parent=11 // pred_region
        _
      $region52: #{detr_forward.8} parent=11 // pred_fallthru
        _
    $region12: #{detr_forward.8} parent=5 // pred_fallthru
      _
    %p432 = scmp.lt.s32.totalorder %s21, 2
    // Predicated region
    $region53: #{detr_forward.8} parent=5 // pred_check
      %p433 = pneg %p432
    $region54: #{detr_forward.8} parent=5 // pred_check_branch
      %435 = sbr.rel (%p433) target = $region56
    $region55: #{detr_forward.8} parent=5 // pred_region
      // Predicated region
      $region57: #{detr_forward.8} parent=55 // pred_check
        %p436 = pneg %p41
      $region58: #{detr_forward.8} parent=55 // pred_check_branch
        %438 = sbr.rel (%p436) target = $region60
      $region59: #{detr_forward.8} parent=55 // pred_region
        %p439 = scmp.lt.s32.totalorder %s21, 1
        %s440 = scalar_select %p439, %s21, 1
        %s441 = smul.addr %s440, 8
        %s442 = smul.addr %s441, 8
        %s443 = scalar_lea.vmem %s0, %s442
      $region60: #{detr_forward.8} parent=55 // pred_fallthru
        _
      // Predicated region
      $region61: #{detr_forward.8} parent=55 // pred_check
        %p444 = pneg %p67
      $region62: #{detr_forward.8} parent=55 // pred_check_branch
        %446 = sbr.rel (%p444) target = $region64
      $region63: #{detr_forward.8} parent=55 // pred_region
        %p447 = scmp.lt.s32.totalorder %s21, 1
        %s448 = scalar_select %p447, %s21, 1
        %s449 = smul.addr %s448, 8
        %s450 = smul.addr %s449, 8
        %s451 = scalar_lea.vmem %s1, %s450
      $region64: #{detr_forward.8} parent=55 // pred_fallthru
        _
      // Predicated region
      $region65: #{detr_forward.8} parent=55 // pred_check
        %p452 = pneg %p93
      $region66: #{detr_forward.8} parent=55 // pred_check_branch
        %454 = sbr.rel (%p452) target = $region68
      $region67: #{detr_forward.8} parent=55 // pred_region
        %p455 = scmp.lt.s32.totalorder %s21, 1
        %s456 = scalar_select %p455, %s21, 1
        %s457 = smul.addr %s456, 8
        %s458 = smul.addr %s457, 8
        %s459 = scalar_lea.vmem %s2, %s458
      $region68: #{detr_forward.8} parent=55 // pred_fallthru
        _
      // Predicated region
      $region69: #{detr_forward.8} parent=55 // pred_check
        %p460 = pneg %p119
      $region70: #{detr_forward.8} parent=55 // pred_check_branch
        %462 = sbr.rel (%p460) target = $region72
      $region71: #{detr_forward.8} parent=55 // pred_region
        %p463 = scmp.lt.s32.totalorder %s21, 1
        %s464 = scalar_select %p463, %s21, 1
        %s465 = smul.addr %s464, 8
        %s466 = smul.addr %s465, 8
        %s467 = scalar_lea.vmem %s3, %s466
      $region72: #{detr_forward.8} parent=55 // pred_fallthru
        _
      // Predicated region
      $region73: #{detr_forward.8} parent=55 // pred_check
        %p468 = pneg %p145
      $region74: #{detr_forward.8} parent=55 // pred_check_branch
        %470 = sbr.rel (%p468) target = $region76
      $region75: #{detr_forward.8} parent=55 // pred_region
        %p471 = scmp.lt.s32.totalorder %s21, 1
        %s472 = scalar_select %p471, %s21, 1
        %s473 = scalar_lea.vmem %s4, %s472
      $region76: #{detr_forward.8} parent=55 // pred_fallthru
        _
    $region56: #{detr_forward.8} parent=5 // pred_fallthru
      _
    %p474 = scmp.le.s32.totalorder 1, %s21
    %p475 = scmp.lt.s32.totalorder %s21, 3
    %p476 = pnand %p474, %p475
    %p477 = pneg %p476
    // Predicated region
    $region77: #{detr_forward.8} parent=5 // pred_check
      _
    $region78: #{detr_forward.8} parent=5 // pred_check_branch
      %479 = sbr.rel (%p476) target = $region80
    $region79: #{detr_forward.8} parent=5 // pred_region
      %s480 = ssub.s32 %s21, 1
      %p481 = scmp.lt.s32.totalorder %s26, 1
      %s482 = scalar_select %p481, %s26, 1
      %s483 = smul.addr %s482, 8
      %s484 = smul.addr %s483, 8
      %s485 = scalar_lea.vmem %s0, %s484
      %p486 = pneg %p47
      %p487 = pneg %p44
      %p488 = scmp.lt.s32.totalorder %s26, 1
      %s489 = scalar_select %p488, %s26, 1
      %s490 = smul.addr %s489, 8
      %s491 = smul.addr %s490, 8
      %s492 = scalar_lea.vmem %s1, %s491
      %p493 = pneg %p73
      %p494 = pneg %p70
      %p495 = scmp.lt.s32.totalorder %s26, 1
      %s496 = scalar_select %p495, %s26, 1
      %s497 = smul.addr %s496, 8
      %s498 = smul.addr %s497, 8
      %s499 = scalar_lea.vmem %s2, %s498
      %p500 = pneg %p99
      %p501 = pneg %p96
      %p502 = scmp.lt.s32.totalorder %s26, 1
      %s503 = scalar_select %p502, %s26, 1
      %s504 = smul.addr %s503, 8
      %s505 = smul.addr %s504, 8
      %s506 = scalar_lea.vmem %s3, %s505
      %p507 = pneg %p125
      %p508 = pneg %p122
      %p509 = scmp.lt.s32.totalorder %s26, 1
      %s510 = scalar_select %p509, %s26, 1
      %s511 = scalar_lea.vmem %s4, %s510
      %p512 = pneg %p151
      %p513 = pneg %p148
      %p514 = pneg %p172
      %p515 = pneg %p169
      %p516 = pneg %p193
      %p517 = pneg %p190
      %p518 = pneg %p214
      %p519 = pneg %p211
      %p520 = pneg %p235
      %p521 = pneg %p232
      %p522 = pneg %p256
      %p523 = pneg %p253
      %p524 = pneg %p277
      %p525 = pneg %p274
      %p526 = pneg %p298
      %p527 = pneg %p295
      %p528 = pneg %p319
      %p529 = pneg %p316
      %p530 = pneg %p340
      %p531 = pneg %p337
      %p532 = pneg %p361
      %p533 = pneg %p358
      %p534 = pneg %p387
      %p535 = pneg %p384
      %p536 = scmp.lt.s32.totalorder %s26, 1
      %s537 = scalar_select %p536, %s26, 1
      %s538 = smul.addr %s537, 8
      %s539 = smul.addr %s538, 8
      %s540 = scalar_lea.vmem %s15, %s539
      %p541 = scmp.lt.s32.totalorder %s26, 1
      %s542 = scalar_select %p541, %s26, 1
      %s543 = smul.addr %s542, 8
      %s544 = smul.addr %s543, 8
      %s545 = scalar_lea.vmem %s0, %s544
      %p546 = scmp.lt.s32.totalorder %s26, 1
      %s547 = scalar_select %p546, %s26, 1
      %s548 = smul.addr %s547, 8
      %s549 = smul.addr %s548, 8
      %s550 = scalar_lea.vmem %s1, %s549
      %p551 = scmp.lt.s32.totalorder %s26, 1
      %s552 = scalar_select %p551, %s26, 1
      %s553 = smul.addr %s552, 8
      %s554 = smul.addr %s553, 8
      %s555 = scalar_lea.vmem %s2, %s554
      %p556 = scmp.lt.s32.totalorder %s26, 1
      %s557 = scalar_select %p556, %s26, 1
      %s558 = smul.addr %s557, 8
      %s559 = smul.addr %s558, 8
      %s560 = scalar_lea.vmem %s3, %s559
      %p561 = scmp.lt.s32.totalorder %s26, 1
      %s562 = scalar_select %p561, %s26, 1
      %s563 = scalar_lea.vmem %s4, %s562
      %p564 = scmp.lt.s32.totalorder %s26, 1
      %s565 = scalar_select %p564, %s26, 1
      %s566 = smul.addr %s565, 8
      %s567 = smul.addr %s566, 8
      %s568 = scalar_lea.vmem %s15, %s567
      %v569 = vld [vmem:[%s545] sm:$0xff]
      %v570 = vld [vmem:[%s545 + $0x8] sm:$0xff]
      %v571 = vld [vmem:[%s545 + $0x10] sm:$0xff]
      %v572 = vld [vmem:[%s545 + $0x18] sm:$0xff]
      %v573 = vld [vmem:[%s545 + $0x20] sm:$0xff]
      %v574 = vld [vmem:[%s545 + $0x28] sm:$0xff]
      %v575 = vld [vmem:[%s545 + $0x30] sm:$0xff]
      %v576 = vld [vmem:[%s545 + $0x38] sm:$0xff]
      %v577 = vld [vmem:[%s550] sm:$0xff]
      %v578 = vld [vmem:[%s550 + $0x8] sm:$0xff]
      %v579 = vld [vmem:[%s550 + $0x10] sm:$0xff]
      %v580 = vld [vmem:[%s550 + $0x18] sm:$0xff]
      %v581 = vld [vmem:[%s550 + $0x20] sm:$0xff]
      %v582 = vld [vmem:[%s550 + $0x28] sm:$0xff]
      %v583 = vld [vmem:[%s550 + $0x30] sm:$0xff]
      %v584 = vld [vmem:[%s550 + $0x38] sm:$0xff]
      %v585 = vld [vmem:[%s555] sm:$0xff]
      %v586 = vld [vmem:[%s555 + $0x8] sm:$0xff]
      %v587 = vld [vmem:[%s555 + $0x10] sm:$0xff]
      %v588 = vld [vmem:[%s555 + $0x18] sm:$0xff]
      %v589 = vld [vmem:[%s555 + $0x20] sm:$0xff]
      %v590 = vld [vmem:[%s555 + $0x28] sm:$0xff]
      %v591 = vld [vmem:[%s555 + $0x30] sm:$0xff]
      %v592 = vld [vmem:[%s555 + $0x38] sm:$0xff]
      %v593 = vld [vmem:[%s560] sm:$0xff]
      %v594 = vld [vmem:[%s560 + $0x8] sm:$0xff]
      %v595 = vld [vmem:[%s560 + $0x10] sm:$0xff]
      %v596 = vld [vmem:[%s560 + $0x18] sm:$0xff]
      %v597 = vld [vmem:[%s560 + $0x20] sm:$0xff]
      %v598 = vld [vmem:[%s560 + $0x28] sm:$0xff]
      %v599 = vld [vmem:[%s560 + $0x30] sm:$0xff]
      %v600 = vld [vmem:[%s560 + $0x38] sm:$0xff]
      %v601 = vld [vmem:[%s563] sm:$0x1]
      %v602 = vadd.f32 %v569, %v577
      %v603 = vadd.f32 %v570, %v578
      %v604 = vadd.f32 %v571, %v579
      %v605 = vadd.f32 %v572, %v580
      %v606 = vadd.f32 %v573, %v581
      %v607 = vadd.f32 %v574, %v582
      %v608 = vadd.f32 %v575, %v583
      %v609 = vadd.f32 %v576, %v584
      %v610 = vld [vmem:[%s5] sm:$0xff]
      %v611 = vld [vmem:[%s5 + $0x8] sm:$0xff]
      %v612 = vld [vmem:[%s5 + $0x10] sm:$0xff]
      %v613 = vld [vmem:[%s5 + $0x18] sm:$0xff]
      %v614 = vld [vmem:[%s6] sm:$0x1]
      %v616 = vperm.slane %v614, 0
      %vm618 = vcmask 261120
      %v620 = vsel %vm618, %v602, 0
      %v623 = vsel %vm618, %v603, 0
      %v626 = vsel %vm618, %v604, 0
      %v629 = vsel %vm618, %v605, 0
      %v632 = vsel %vm618, %v606, 0
      %v635 = vsel %vm618, %v607, 0
      %v638 = vsel %vm618, %v608, 0
      %v641 = vsel %vm618, %v609, 0
      %643 = vmatpush.msra.mxu0 0.0
      %644 = vmatpush.msra.mxu0 0.0
      %645 = vmatpush.msra.mxu0 0.0
      %646 = vmatpush.msra.mxu0 0.0
      %647 = vmatpush.msra.mxu0 0.0
      %648 = vmatpush.msra.mxu0 0.0
      %649 = vmatpush.msra.mxu0 0.0
      %650 = vmatpush.msra.mxu0 0.0
      %651 = vmatpush.msra.mxu0 0.0
      %652 = vmatpush.msra.mxu0 0.0
      %653 = vmatpush.msra.mxu0 0.0
      %654 = vmatpush.msra.mxu0 0.0
      %655 = vmatpush.msra.mxu0 %v613
      %656 = vmatpush.msra.mxu0 %v612
      %657 = vmatpush.msra.mxu0 %v611
      %658 = vmatpush.msra.mxu0 %v610
      %659 = vmatmul.f32.gmra.mxu0 %v620
      %v660 = vpop.f32.mrf.mxu0
      %v661 = vadd.f32 %v616, %v660
      %662 = vmatmul.f32.gmra.mxu0 %v623
      %v663 = vpop.f32.mrf.mxu0
      %v664 = vadd.f32 %v616, %v663
      %665 = vmatmul.f32.gmra.mxu0 %v626
      %v666 = vpop.f32.mrf.mxu0
      %v667 = vadd.f32 %v616, %v666
      %668 = vmatmul.f32.gmra.mxu0 %v629
      %v669 = vpop.f32.mrf.mxu0
      %v670 = vadd.f32 %v616, %v669
      %671 = vmatmul.f32.gmra.mxu0 %v632
      %v672 = vpop.f32.mrf.mxu0
      %v673 = vadd.f32 %v616, %v672
      %674 = vmatmul.f32.gmra.mxu0 %v635
      %v675 = vpop.f32.mrf.mxu0
      %v676 = vadd.f32 %v616, %v675
      %677 = vmatmul.f32.gmra.mxu0 %v638
      %v678 = vpop.f32.mrf.mxu0
      %v679 = vadd.f32 %v616, %v678
      %680 = vmatmul.f32.gmra.mxu0 %v641
      %v681 = vpop.f32.mrf.mxu0
      %v682 = vadd.f32 %v616, %v681
      %683 = vdwg.mxu0
      %v684 = vadd.f32 %v585, %v593
      %v685 = vadd.f32 %v586, %v594
      %v686 = vadd.f32 %v587, %v595
      %v687 = vadd.f32 %v588, %v596
      %v688 = vadd.f32 %v589, %v597
      %v689 = vadd.f32 %v590, %v598
      %v690 = vadd.f32 %v591, %v599
      %v691 = vadd.f32 %v592, %v600
      %v692 = vld [vmem:[%s7] sm:$0xff]
      %v693 = vld [vmem:[%s7 + $0x8] sm:$0xff]
      %v694 = vld [vmem:[%s7 + $0x10] sm:$0xff]
      %v695 = vld [vmem:[%s7 + $0x18] sm:$0xff]
      %v696 = vld [vmem:[%s8] sm:$0x1]
      %v698 = vperm.slane %v696, 0
      %v701 = vsel %vm618, %v684, 0
      %v704 = vsel %vm618, %v685, 0
      %v707 = vsel %vm618, %v686, 0
      %v710 = vsel %vm618, %v687, 0
      %v713 = vsel %vm618, %v688, 0
      %v716 = vsel %vm618, %v689, 0
      %v719 = vsel %vm618, %v690, 0
      %v722 = vsel %vm618, %v691, 0
      %724 = vmatpush.msra.mxu0 0.0
      %725 = vmatpush.msra.mxu0 0.0
      %726 = vmatpush.msra.mxu0 0.0
      %727 = vmatpush.msra.mxu0 0.0
      %728 = vmatpush.msra.mxu0 0.0
      %729 = vmatpush.msra.mxu0 0.0
      %730 = vmatpush.msra.mxu0 0.0
      %731 = vmatpush.msra.mxu0 0.0
      %732 = vmatpush.msra.mxu0 0.0
      %733 = vmatpush.msra.mxu0 0.0
      %734 = vmatpush.msra.mxu0 0.0
      %735 = vmatpush.msra.mxu0 0.0
      %736 = vmatpush.msra.mxu0 %v695
      %737 = vmatpush.msra.mxu0 %v694
      %738 = vmatpush.msra.mxu0 %v693
      %739 = vmatpush.msra.mxu0 %v692
      %740 = vmatmul.f32.gmra.mxu0 %v701
      %v741 = vpop.f32.mrf.mxu0
      %v742 = vadd.f32 %v698, %v741
      %743 = vmatmul.f32.gmra.mxu0 %v704
      %v744 = vpop.f32.mrf.mxu0
      %v745 = vadd.f32 %v698, %v744
      %746 = vmatmul.f32.gmra.mxu0 %v707
      %v747 = vpop.f32.mrf.mxu0
      %v748 = vadd.f32 %v698, %v747
      %749 = vmatmul.f32.gmra.mxu0 %v710
      %v750 = vpop.f32.mrf.mxu0
      %v751 = vadd.f32 %v698, %v750
      %752 = vmatmul.f32.gmra.mxu0 %v713
      %v753 = vpop.f32.mrf.mxu0
      %v754 = vadd.f32 %v698, %v753
      %755 = vmatmul.f32.gmra.mxu0 %v716
      %v756 = vpop.f32.mrf.mxu0
      %v757 = vadd.f32 %v698, %v756
      %758 = vmatmul.f32.gmra.mxu0 %v719
      %v759 = vpop.f32.mrf.mxu0
      %v760 = vadd.f32 %v698, %v759
      %761 = vmatmul.f32.gmra.mxu0 %v722
      %v762 = vpop.f32.mrf.mxu0
      %v763 = vadd.f32 %v698, %v762
      %764 = vdwg.mxu0
      %v765 = vld [vmem:[%s9] sm:$0xff]
      %v766 = vld [vmem:[%s9 + $0x8] sm:$0xff]
      %v767 = vld [vmem:[%s9 + $0x10] sm:$0xff]
      %v768 = vld [vmem:[%s9 + $0x18] sm:$0xff]
      %v769 = vld [vmem:[%s10] sm:$0x1]
      %v771 = vperm.slane %v769, 0
      %v774 = vsel %vm618, %v585, 0
      %v777 = vsel %vm618, %v586, 0
      %v780 = vsel %vm618, %v587, 0
      %v783 = vsel %vm618, %v588, 0
      %v786 = vsel %vm618, %v589, 0
      %v789 = vsel %vm618, %v590, 0
      %v792 = vsel %vm618, %v591, 0
      %v795 = vsel %vm618, %v592, 0
      %797 = vmatpush.msra.mxu0 0.0
      %798 = vmatpush.msra.mxu0 0.0
      %799 = vmatpush.msra.mxu0 0.0
      %800 = vmatpush.msra.mxu0 0.0
      %801 = vmatpush.msra.mxu0 0.0
      %802 = vmatpush.msra.mxu0 0.0
      %803 = vmatpush.msra.mxu0 0.0
      %804 = vmatpush.msra.mxu0 0.0
      %805 = vmatpush.msra.mxu0 0.0
      %806 = vmatpush.msra.mxu0 0.0
      %807 = vmatpush.msra.mxu0 0.0
      %808 = vmatpush.msra.mxu0 0.0
      %809 = vmatpush.msra.mxu0 %v768
      %810 = vmatpush.msra.mxu0 %v767
      %811 = vmatpush.msra.mxu0 %v766
      %812 = vmatpush.msra.mxu0 %v765
      %813 = vmatmul.f32.gmra.mxu0 %v774
      %v814 = vpop.f32.mrf.mxu0
      %v815 = vadd.f32 %v771, %v814
      %816 = vmatmul.f32.gmra.mxu0 %v777
      %v817 = vpop.f32.mrf.mxu0
      %v818 = vadd.f32 %v771, %v817
      %819 = vmatmul.f32.gmra.mxu0 %v780
      %v820 = vpop.f32.mrf.mxu0
      %v821 = vadd.f32 %v771, %v820
      %822 = vmatmul.f32.gmra.mxu0 %v783
      %v823 = vpop.f32.mrf.mxu0
      %v824 = vadd.f32 %v771, %v823
      %825 = vmatmul.f32.gmra.mxu0 %v786
      %v826 = vpop.f32.mrf.mxu0
      %v827 = vadd.f32 %v771, %v826
      %828 = vmatmul.f32.gmra.mxu0 %v789
      %v829 = vpop.f32.mrf.mxu0
      %v830 = vadd.f32 %v771, %v829
      %831 = vmatmul.f32.gmra.mxu0 %v792
      %v832 = vpop.f32.mrf.mxu0
      %v833 = vadd.f32 %v771, %v832
      %834 = vmatmul.f32.gmra.mxu0 %v795
      %v835 = vpop.f32.mrf.mxu0
      %v836 = vadd.f32 %v771, %v835
      %837 = vdwg.mxu0
      %v838 = vld [vmem:[%s11] sm:$0xff]
      %v839 = vld [vmem:[%s11 + $0x8] sm:$0xff]
      %v840 = vld [vmem:[%s11 + $0x10] sm:$0xff]
      %v841 = vld [vmem:[%s11 + $0x18] sm:$0xff]
      %vm842 = vcmask 64512
      %v844 = vsel %vm842, %v661, 0
      %v847 = vsel %vm842, %v664, 0
      %v850 = vsel %vm842, %v667, 0
      %v853 = vsel %vm842, %v670, 0
      %v856 = vsel %vm842, %v673, 0
      %v859 = vsel %vm842, %v676, 0
      %v862 = vsel %vm842, %v679, 0
      %v865 = vsel %vm842, %v682, 0
      %v868 = vsel %vm842, %v742, 0
      %v871 = vsel %vm842, %v745, 0
      %v874 = vsel %vm842, %v748, 0
      %v877 = vsel %vm842, %v751, 0
      %v880 = vsel %vm842, %v754, 0
      %v883 = vsel %vm842, %v757, 0
      %v886 = vsel %vm842, %v760, 0
      %v889 = vsel %vm842, %v763, 0
      %891 = vmatpush.xpose.msra.mxu0 0.0
      %892 = vmatpush.xpose.msra.mxu0 0.0
      %893 = vmatpush.xpose.msra.mxu0 0.0
      %894 = vmatpush.xpose.msra.mxu0 0.0
      %895 = vmatpush.xpose.msra.mxu0 0.0
      %896 = vmatpush.xpose.msra.mxu0 0.0
      %897 = vmatpush.xpose.msra.mxu0 0.0
      %898 = vmatpush.xpose.msra.mxu0 0.0
      %899 = vmatpush.xpose.msra.mxu0 %v889
      %900 = vmatpush.xpose.msra.mxu0 %v886
      %901 = vmatpush.xpose.msra.mxu0 %v883
      %902 = vmatpush.xpose.msra.mxu0 %v880
      %903 = vmatpush.xpose.msra.mxu0 %v877
      %904 = vmatpush.xpose.msra.mxu0 %v874
      %905 = vmatpush.xpose.msra.mxu0 %v871
      %906 = vmatpush.xpose.msra.mxu0 %v868
      %907 = vmatmul.f32.gmra.mxu0 %v844
      %v908 = vpop.f32.mrf.mxu0
      %v909 = vadd.f32 0.0, %v908
      %910 = vmatmul.f32.gmra.mxu0 %v847
      %v911 = vpop.f32.mrf.mxu0
      %v912 = vadd.f32 0.0, %v911
      %913 = vmatmul.f32.gmra.mxu0 %v850
      %v914 = vpop.f32.mrf.mxu0
      %v915 = vadd.f32 0.0, %v914
      %916 = vmatmul.f32.gmra.mxu0 %v853
      %v917 = vpop.f32.mrf.mxu0
      %v918 = vadd.f32 0.0, %v917
      %919 = vmatmul.f32.gmra.mxu0 %v856
      %v920 = vpop.f32.mrf.mxu0
      %v921 = vadd.f32 0.0, %v920
      %922 = vmatmul.f32.gmra.mxu0 %v859
      %v923 = vpop.f32.mrf.mxu0
      %v924 = vadd.f32 0.0, %v923
      %925 = vmatmul.f32.gmra.mxu0 %v862
      %v926 = vpop.f32.mrf.mxu0
      %v927 = vadd.f32 0.0, %v926
      %928 = vmatmul.f32.gmra.mxu0 %v865
      %v929 = vpop.f32.mrf.mxu0
      %v930 = vadd.f32 0.0, %v929
      %931 = vdwg.mxu0
      %v932 = vmul.f32 %v909, 0.35355338
      %v933 = vmul.f32 %v912, 0.35355338
      %v934 = vmul.f32 %v915, 0.35355338
      %v935 = vmul.f32 %v918, 0.35355338
      %v936 = vmul.f32 %v921, 0.35355338
      %v937 = vmul.f32 %v924, 0.35355338
      %v938 = vmul.f32 %v927, 0.35355338
      %v939 = vmul.f32 %v930, 0.35355338
      %v941 = vperm.slane %v601, 0
      %v943 = vadd.f32 %v932, %v941
      %v944 = vadd.f32 %v933, %v941
      %v945 = vadd.f32 %v934, %v941
      %v946 = vadd.f32 %v935, %v941
      %v947 = vadd.f32 %v936, %v941
      %v948 = vadd.f32 %v937, %v941
      %v949 = vadd.f32 %v938, %v941
      %v950 = vadd.f32 %v939, %v941
      %vm951 = vcmask 523264
      %v952 = vsel %vm951, %v943, -inf
      %953 = vmax.xlane.f32.xlu0 %v952
      %v954 = vpop.xlane.xlu0 %953
      %v955 = vsel %vm951, %v944, -inf
      %956 = vmax.xlane.f32.xlu0 %v955
      %v957 = vpop.xlane.xlu0 %956
      %v958 = vsel %vm951, %v945, -inf
      %959 = vmax.xlane.f32.xlu0 %v958
      %v960 = vpop.xlane.xlu0 %959
      %v961 = vsel %vm951, %v946, -inf
      %962 = vmax.xlane.f32.xlu0 %v961
      %v963 = vpop.xlane.xlu0 %962
      %v964 = vsel %vm951, %v947, -inf
      %965 = vmax.xlane.f32.xlu0 %v964
      %v966 = vpop.xlane.xlu0 %965
      %v967 = vsel %vm951, %v948, -inf
      %968 = vmax.xlane.f32.xlu0 %v967
      %v969 = vpop.xlane.xlu0 %968
      %v970 = vsel %vm951, %v949, -inf
      %971 = vmax.xlane.f32.xlu0 %v970
      %v972 = vpop.xlane.xlu0 %971
      %v973 = vsel %vm951, %v950, -inf
      %974 = vmax.xlane.f32.xlu0 %v973
      %v975 = vpop.xlane.xlu0 %974
      %v976 = vsub.f32 %v943, %v954
      %v977 = vsub.f32 %v944, %v957
      %v978 = vsub.f32 %v945, %v960
      %v979 = vsub.f32 %v946, %v963
      %v980 = vsub.f32 %v947, %v966
      %v981 = vsub.f32 %v948, %v969
      %v982 = vsub.f32 %v949, %v972
      %v983 = vsub.f32 %v950, %v975
      %v984 = vmul.f32 %v976, 1.442695
      %v985 = vpow.pop %v984
      %v986 = vmul.f32 %v977, 1.442695
      %v987 = vpow.pop %v986
      %v988 = vmul.f32 %v978, 1.442695
      %v989 = vpow.pop %v988
      %v990 = vmul.f32 %v979, 1.442695
      %v991 = vpow.pop %v990
      %v992 = vmul.f32 %v980, 1.442695
      %v993 = vpow.pop %v992
      %v994 = vmul.f32 %v981, 1.442695
      %v995 = vpow.pop %v994
      %v996 = vmul.f32 %v982, 1.442695
      %v997 = vpow.pop %v996
      %v998 = vmul.f32 %v983, 1.442695
      %v999 = vpow.pop %v998
      %v1000 = vsel %vm951, %v985, 0.0
      %1001 = vadd.xlane.f32.xlu0 %v1000
      %v1002 = vpop.xlane.xlu0 %1001
      %v1003 = vsel %vm951, %v987, 0.0
      %1004 = vadd.xlane.f32.xlu0 %v1003
      %v1005 = vpop.xlane.xlu0 %1004
      %v1006 = vsel %vm951, %v989, 0.0
      %1007 = vadd.xlane.f32.xlu0 %v1006
      %v1008 = vpop.xlane.xlu0 %1007
      %v1009 = vsel %vm951, %v991, 0.0
      %1010 = vadd.xlane.f32.xlu0 %v1009
      %v1011 = vpop.xlane.xlu0 %1010
      %v1012 = vsel %vm951, %v993, 0.0
      %1013 = vadd.xlane.f32.xlu0 %v1012
      %v1014 = vpop.xlane.xlu0 %1013
      %v1015 = vsel %vm951, %v995, 0.0
      %1016 = vadd.xlane.f32.xlu0 %v1015
      %v1017 = vpop.xlane.xlu0 %1016
      %v1018 = vsel %vm951, %v997, 0.0
      %1019 = vadd.xlane.f32.xlu0 %v1018
      %v1020 = vpop.xlane.xlu0 %1019
      %v1021 = vsel %vm951, %v999, 0.0
      %1022 = vadd.xlane.f32.xlu0 %v1021
      %v1023 = vpop.xlane.xlu0 %1022
      %v1024 = vrcp.pop %v1002
      %v1025 = vrcp.pop %v1005
      %v1026 = vrcp.pop %v1008
      %v1027 = vrcp.pop %v1011
      %v1028 = vrcp.pop %v1014
      %v1029 = vrcp.pop %v1017
      %v1030 = vrcp.pop %v1020
      %v1031 = vrcp.pop %v1023
      %v1032 = vmul.f32 %v985, %v1024
      %v1033 = vmul.f32 %v987, %v1025
      %v1034 = vmul.f32 %v989, %v1026
      %v1035 = vmul.f32 %v991, %v1027
      %v1036 = vmul.f32 %v993, %v1028
      %v1037 = vmul.f32 %v995, %v1029
      %v1038 = vmul.f32 %v997, %v1030
      %v1039 = vmul.f32 %v999, %v1031
      %v1041 = vsel %vm951, %v1032, 0
      %v1044 = vsel %vm951, %v1033, 0
      %v1047 = vsel %vm951, %v1034, 0
      %v1050 = vsel %vm951, %v1035, 0
      %v1053 = vsel %vm951, %v1036, 0
      %v1056 = vsel %vm951, %v1037, 0
      %v1059 = vsel %vm951, %v1038, 0
      %v1062 = vsel %vm951, %v1039, 0
      %1064 = vmatpush.msra.mxu0 0.0
      %1065 = vmatpush.msra.mxu0 0.0
      %1066 = vmatpush.msra.mxu0 0.0
      %1067 = vmatpush.msra.mxu0 0.0
      %1068 = vmatpush.msra.mxu0 0.0
      %1069 = vmatpush.msra.mxu0 0.0
      %1070 = vmatpush.msra.mxu0 0.0
      %1071 = vmatpush.msra.mxu0 0.0
      %1072 = vmatpush.msra.mxu0 %v836
      %1073 = vmatpush.msra.mxu0 %v833
      %1074 = vmatpush.msra.mxu0 %v830
      %1075 = vmatpush.msra.mxu0 %v827
      %1076 = vmatpush.msra.mxu0 %v824
      %1077 = vmatpush.msra.mxu0 %v821
      %1078 = vmatpush.msra.mxu0 %v818
      %1079 = vmatpush.msra.mxu0 %v815
      %1080 = vmatmul.f32.gmra.mxu0 %v1041
      %v1081 = vpop.f32.mrf.mxu0
      %v1082 = vadd.f32 0.0, %v1081
      %1083 = vmatmul.f32.gmra.mxu0 %v1044
      %v1084 = vpop.f32.mrf.mxu0
      %v1085 = vadd.f32 0.0, %v1084
      %1086 = vmatmul.f32.gmra.mxu0 %v1047
      %v1087 = vpop.f32.mrf.mxu0
      %v1088 = vadd.f32 0.0, %v1087
      %1089 = vmatmul.f32.gmra.mxu0 %v1050
      %v1090 = vpop.f32.mrf.mxu0
      %v1091 = vadd.f32 0.0, %v1090
      %1092 = vmatmul.f32.gmra.mxu0 %v1053
      %v1093 = vpop.f32.mrf.mxu0
      %v1094 = vadd.f32 0.0, %v1093
      %1095 = vmatmul.f32.gmra.mxu0 %v1056
      %v1096 = vpop.f32.mrf.mxu0
      %v1097 = vadd.f32 0.0, %v1096
      %1098 = vmatmul.f32.gmra.mxu0 %v1059
      %v1099 = vpop.f32.mrf.mxu0
      %v1100 = vadd.f32 0.0, %v1099
      %1101 = vmatmul.f32.gmra.mxu0 %v1062
      %v1102 = vpop.f32.mrf.mxu0
      %v1103 = vadd.f32 0.0, %v1102
      %1104 = vdwg.mxu0
      %1105 = vrot.lane.b32.xlu0 %v661, 120
      %v1106 = vpop.permute.xlu0 %1105
      %1107 = vrot.lane.b32.xlu0 %v664, 120
      %v1108 = vpop.permute.xlu0 %1107
      %1109 = vrot.lane.b32.xlu0 %v667, 120
      %v1110 = vpop.permute.xlu0 %1109
      %1111 = vrot.lane.b32.xlu0 %v670, 120
      %v1112 = vpop.permute.xlu0 %1111
      %1113 = vrot.lane.b32.xlu0 %v673, 120
      %v1114 = vpop.permute.xlu0 %1113
      %1115 = vrot.lane.b32.xlu0 %v676, 120
      %v1116 = vpop.permute.xlu0 %1115
      %1117 = vrot.lane.b32.xlu0 %v679, 120
      %v1118 = vpop.permute.xlu0 %1117
      %1119 = vrot.lane.b32.xlu0 %v682, 120
      %v1120 = vpop.permute.xlu0 %1119
      %1121 = vrot.lane.b32.xlu0 %v742, 120
      %v1122 = vpop.permute.xlu0 %1121
      %1123 = vrot.lane.b32.xlu0 %v745, 120
      %v1124 = vpop.permute.xlu0 %1123
      %1125 = vrot.lane.b32.xlu0 %v748, 120
      %v1126 = vpop.permute.xlu0 %1125
      %1127 = vrot.lane.b32.xlu0 %v751, 120
      %v1128 = vpop.permute.xlu0 %1127
      %1129 = vrot.lane.b32.xlu0 %v754, 120
      %v1130 = vpop.permute.xlu0 %1129
      %1131 = vrot.lane.b32.xlu0 %v757, 120
      %v1132 = vpop.permute.xlu0 %1131
      %1133 = vrot.lane.b32.xlu0 %v760, 120
      %v1134 = vpop.permute.xlu0 %1133
      %1135 = vrot.lane.b32.xlu0 %v763, 120
      %v1136 = vpop.permute.xlu0 %1135
      %v1137 = vsel %vm842, %v1106, 0
      %v1139 = vsel %vm842, %v1108, 0
      %v1141 = vsel %vm842, %v1110, 0
      %v1143 = vsel %vm842, %v1112, 0
      %v1145 = vsel %vm842, %v1114, 0
      %v1147 = vsel %vm842, %v1116, 0
      %v1149 = vsel %vm842, %v1118, 0
      %v1151 = vsel %vm842, %v1120, 0
      %v1153 = vsel %vm842, %v1122, 0
      %v1155 = vsel %vm842, %v1124, 0
      %v1157 = vsel %vm842, %v1126, 0
      %v1159 = vsel %vm842, %v1128, 0
      %v1161 = vsel %vm842, %v1130, 0
      %v1163 = vsel %vm842, %v1132, 0
      %v1165 = vsel %vm842, %v1134, 0
      %v1167 = vsel %vm842, %v1136, 0
      %1169 = vmatpush.xpose.msra.mxu0 0.0
      %1170 = vmatpush.xpose.msra.mxu0 0.0
      %1171 = vmatpush.xpose.msra.mxu0 0.0
      %1172 = vmatpush.xpose.msra.mxu0 0.0
      %1173 = vmatpush.xpose.msra.mxu0 0.0
      %1174 = vmatpush.xpose.msra.mxu0 0.0
      %1175 = vmatpush.xpose.msra.mxu0 0.0
      %1176 = vmatpush.xpose.msra.mxu0 0.0
      %1177 = vmatpush.xpose.msra.mxu0 %v1167
      %1178 = vmatpush.xpose.msra.mxu0 %v1165
      %1179 = vmatpush.xpose.msra.mxu0 %v1163
      %1180 = vmatpush.xpose.msra.mxu0 %v1161
      %1181 = vmatpush.xpose.msra.mxu0 %v1159
      %1182 = vmatpush.xpose.msra.mxu0 %v1157
      %1183 = vmatpush.xpose.msra.mxu0 %v1155
      %1184 = vmatpush.xpose.msra.mxu0 %v1153
      %1185 = vmatmul.f32.gmra.mxu0 %v1137
      %v1186 = vpop.f32.mrf.mxu0
      %v1187 = vadd.f32 0.0, %v1186
      %1188 = vmatmul.f32.gmra.mxu0 %v1139
      %v1189 = vpop.f32.mrf.mxu0
      %v1190 = vadd.f32 0.0, %v1189
      %1191 = vmatmul.f32.gmra.mxu0 %v1141
      %v1192 = vpop.f32.mrf.mxu0
      %v1193 = vadd.f32 0.0, %v1192
      %1194 = vmatmul.f32.gmra.mxu0 %v1143
      %v1195 = vpop.f32.mrf.mxu0
      %v1196 = vadd.f32 0.0, %v1195
      %1197 = vmatmul.f32.gmra.mxu0 %v1145
      %v1198 = vpop.f32.mrf.mxu0
      %v1199 = vadd.f32 0.0, %v1198
      %1200 = vmatmul.f32.gmra.mxu0 %v1147
      %v1201 = vpop.f32.mrf.mxu0
      %v1202 = vadd.f32 0.0, %v1201
      %1203 = vmatmul.f32.gmra.mxu0 %v1149
      %v1204 = vpop.f32.mrf.mxu0
      %v1205 = vadd.f32 0.0, %v1204
      %1206 = vmatmul.f32.gmra.mxu0 %v1151
      %v1207 = vpop.f32.mrf.mxu0
      %v1208 = vadd.f32 0.0, %v1207
      %1209 = vdwg.mxu0
      %v1210 = vmul.f32 %v1187, 0.35355338
      %v1211 = vmul.f32 %v1190, 0.35355338
      %v1212 = vmul.f32 %v1193, 0.35355338
      %v1213 = vmul.f32 %v1196, 0.35355338
      %v1214 = vmul.f32 %v1199, 0.35355338
      %v1215 = vmul.f32 %v1202, 0.35355338
      %v1216 = vmul.f32 %v1205, 0.35355338
      %v1217 = vmul.f32 %v1208, 0.35355338
      %v1218 = vadd.f32 %v1210, %v941
      %v1219 = vadd.f32 %v1211, %v941
      %v1220 = vadd.f32 %v1212, %v941
      %v1221 = vadd.f32 %v1213, %v941
      %v1222 = vadd.f32 %v1214, %v941
      %v1223 = vadd.f32 %v1215, %v941
      %v1224 = vadd.f32 %v1216, %v941
      %v1225 = vadd.f32 %v1217, %v941
      %v1226 = vsel %vm951, %v1218, -inf
      %1227 = vmax.xlane.f32.xlu0 %v1226
      %v1228 = vpop.xlane.xlu0 %1227
      %v1229 = vsel %vm951, %v1219, -inf
      %1230 = vmax.xlane.f32.xlu0 %v1229
      %v1231 = vpop.xlane.xlu0 %1230
      %v1232 = vsel %vm951, %v1220, -inf
      %1233 = vmax.xlane.f32.xlu0 %v1232
      %v1234 = vpop.xlane.xlu0 %1233
      %v1235 = vsel %vm951, %v1221, -inf
      %1236 = vmax.xlane.f32.xlu0 %v1235
      %v1237 = vpop.xlane.xlu0 %1236
      %v1238 = vsel %vm951, %v1222, -inf
      %1239 = vmax.xlane.f32.xlu0 %v1238
      %v1240 = vpop.xlane.xlu0 %1239
      %v1241 = vsel %vm951, %v1223, -inf
      %1242 = vmax.xlane.f32.xlu0 %v1241
      %v1243 = vpop.xlane.xlu0 %1242
      %v1244 = vsel %vm951, %v1224, -inf
      %1245 = vmax.xlane.f32.xlu0 %v1244
      %v1246 = vpop.xlane.xlu0 %1245
      %v1247 = vsel %vm951, %v1225, -inf
      %1248 = vmax.xlane.f32.xlu0 %v1247
      %v1249 = vpop.xlane.xlu0 %1248
      %v1250 = vsub.f32 %v1218, %v1228
      %v1251 = vsub.f32 %v1219, %v1231
      %v1252 = vsub.f32 %v1220, %v1234
      %v1253 = vsub.f32 %v1221, %v1237
      %v1254 = vsub.f32 %v1222, %v1240
      %v1255 = vsub.f32 %v1223, %v1243
      %v1256 = vsub.f32 %v1224, %v1246
      %v1257 = vsub.f32 %v1225, %v1249
      %v1258 = vmul.f32 %v1250, 1.442695
      %v1259 = vpow.pop %v1258
      %v1260 = vmul.f32 %v1251, 1.442695
      %v1261 = vpow.pop %v1260
      %v1262 = vmul.f32 %v1252, 1.442695
      %v1263 = vpow.pop %v1262
      %v1264 = vmul.f32 %v1253, 1.442695
      %v1265 = vpow.pop %v1264
      %v1266 = vmul.f32 %v1254, 1.442695
      %v1267 = vpow.pop %v1266
      %v1268 = vmul.f32 %v1255, 1.442695
      %v1269 = vpow.pop %v1268
      %v1270 = vmul.f32 %v1256, 1.442695
      %v1271 = vpow.pop %v1270
      %v1272 = vmul.f32 %v1257, 1.442695
      %v1273 = vpow.pop %v1272
      %v1274 = vsel %vm951, %v1259, 0.0
      %1275 = vadd.xlane.f32.xlu0 %v1274
      %v1276 = vpop.xlane.xlu0 %1275
      %v1277 = vsel %vm951, %v1261, 0.0
      %1278 = vadd.xlane.f32.xlu0 %v1277
      %v1279 = vpop.xlane.xlu0 %1278
      %v1280 = vsel %vm951, %v1263, 0.0
      %1281 = vadd.xlane.f32.xlu0 %v1280
      %v1282 = vpop.xlane.xlu0 %1281
      %v1283 = vsel %vm951, %v1265, 0.0
      %1284 = vadd.xlane.f32.xlu0 %v1283
      %v1285 = vpop.xlane.xlu0 %1284
      %v1286 = vsel %vm951, %v1267, 0.0
      %1287 = vadd.xlane.f32.xlu0 %v1286
      %v1288 = vpop.xlane.xlu0 %1287
      %v1289 = vsel %vm951, %v1269, 0.0
      %1290 = vadd.xlane.f32.xlu0 %v1289
      %v1291 = vpop.xlane.xlu0 %1290
      %v1292 = vsel %vm951, %v1271, 0.0
      %1293 = vadd.xlane.f32.xlu0 %v1292
      %v1294 = vpop.xlane.xlu0 %1293
      %v1295 = vsel %vm951, %v1273, 0.0
      %1296 = vadd.xlane.f32.xlu0 %v1295
      %v1297 = vpop.xlane.xlu0 %1296
      %v1298 = vrcp.pop %v1276
      %v1299 = vrcp.pop %v1279
      %v1300 = vrcp.pop %v1282
      %v1301 = vrcp.pop %v1285
      %v1302 = vrcp.pop %v1288
      %v1303 = vrcp.pop %v1291
      %v1304 = vrcp.pop %v1294
      %v1305 = vrcp.pop %v1297
      %v1306 = vmul.f32 %v1259, %v1298
      %v1307 = vmul.f32 %v1261, %v1299
      %v1308 = vmul.f32 %v1263, %v1300
      %v1309 = vmul.f32 %v1265, %v1301
      %v1310 = vmul.f32 %v1267, %v1302
      %v1311 = vmul.f32 %v1269, %v1303
      %v1312 = vmul.f32 %v1271, %v1304
      %v1313 = vmul.f32 %v1273, %v1305
      %1322 = vrot.lane.b32.xlu0 %v815, 120
      %v1323 = vpop.permute.xlu0 %1322
      %1324 = vrot.lane.b32.xlu0 %v818, 120
      %v1325 = vpop.permute.xlu0 %1324
      %1326 = vrot.lane.b32.xlu0 %v821, 120
      %v1327 = vpop.permute.xlu0 %1326
      %1328 = vrot.lane.b32.xlu0 %v824, 120
      %v1329 = vpop.permute.xlu0 %1328
      %1330 = vrot.lane.b32.xlu0 %v827, 120
      %v1331 = vpop.permute.xlu0 %1330
      %1332 = vrot.lane.b32.xlu0 %v830, 120
      %v1333 = vpop.permute.xlu0 %1332
      %1334 = vrot.lane.b32.xlu0 %v833, 120
      %v1335 = vpop.permute.xlu0 %1334
      %1336 = vrot.lane.b32.xlu0 %v836, 120
      %v1337 = vpop.permute.xlu0 %1336
      %v1347 = vsel %vm951, %v1306, 0
      %v1350 = vsel %vm951, %v1307, 0
      %v1353 = vsel %vm951, %v1308, 0
      %v1356 = vsel %vm951, %v1309, 0
      %v1359 = vsel %vm951, %v1310, 0
      %v1362 = vsel %vm951, %v1311, 0
      %v1365 = vsel %vm951, %v1312, 0
      %v1368 = vsel %vm951, %v1313, 0
      %1370 = vmatpush.msra.mxu0 0.0
      %1371 = vmatpush.msra.mxu0 0.0
      %1372 = vmatpush.msra.mxu0 0.0
      %1373 = vmatpush.msra.mxu0 0.0
      %1374 = vmatpush.msra.mxu0 0.0
      %1375 = vmatpush.msra.mxu0 0.0
      %1376 = vmatpush.msra.mxu0 0.0
      %1377 = vmatpush.msra.mxu0 0.0
      %1378 = vmatpush.msra.mxu0 %v1337
      %1379 = vmatpush.msra.mxu0 %v1335
      %1380 = vmatpush.msra.mxu0 %v1333
      %1381 = vmatpush.msra.mxu0 %v1331
      %1382 = vmatpush.msra.mxu0 %v1329
      %1383 = vmatpush.msra.mxu0 %v1327
      %1384 = vmatpush.msra.mxu0 %v1325
      %1385 = vmatpush.msra.mxu0 %v1323
      %1386 = vmatmul.f32.gmra.mxu0 %v1347
      %v1387 = vpop.f32.mrf.mxu0
      %v1388 = vadd.f32 0.0, %v1387
      %1389 = vmatmul.f32.gmra.mxu0 %v1350
      %v1390 = vpop.f32.mrf.mxu0
      %v1391 = vadd.f32 0.0, %v1390
      %1392 = vmatmul.f32.gmra.mxu0 %v1353
      %v1393 = vpop.f32.mrf.mxu0
      %v1394 = vadd.f32 0.0, %v1393
      %1395 = vmatmul.f32.gmra.mxu0 %v1356
      %v1396 = vpop.f32.mrf.mxu0
      %v1397 = vadd.f32 0.0, %v1396
      %1398 = vmatmul.f32.gmra.mxu0 %v1359
      %v1399 = vpop.f32.mrf.mxu0
      %v1400 = vadd.f32 0.0, %v1399
      %1401 = vmatmul.f32.gmra.mxu0 %v1362
      %v1402 = vpop.f32.mrf.mxu0
      %v1403 = vadd.f32 0.0, %v1402
      %1404 = vmatmul.f32.gmra.mxu0 %v1365
      %v1405 = vpop.f32.mrf.mxu0
      %v1406 = vadd.f32 0.0, %v1405
      %1407 = vmatmul.f32.gmra.mxu0 %v1368
      %v1408 = vpop.f32.mrf.mxu0
      %v1409 = vadd.f32 0.0, %v1408
      %1410 = vdwg.mxu0
      %v1412 = vsel %vm842, %v1388, 0
      %v1415 = vsel %vm842, %v1391, 0
      %v1418 = vsel %vm842, %v1394, 0
      %v1421 = vsel %vm842, %v1397, 0
      %v1424 = vsel %vm842, %v1400, 0
      %v1427 = vsel %vm842, %v1403, 0
      %v1430 = vsel %vm842, %v1406, 0
      %v1433 = vsel %vm842, %v1409, 0
      %1435 = vmatpush.msra.mxu0 0.0
      %1436 = vmatpush.msra.mxu0 0.0
      %1437 = vmatpush.msra.mxu0 0.0
      %1438 = vmatpush.msra.mxu0 0.0
      %1439 = vmatpush.msra.mxu0 0.0
      %1440 = vmatpush.msra.mxu0 0.0
      %1441 = vmatpush.msra.mxu0 0.0
      %1442 = vmatpush.msra.mxu0 0.0
      %1443 = vmatpush.msra.mxu0 0.0
      %1444 = vmatpush.msra.mxu0 0.0
      %1445 = vmatpush.msra.mxu0 0.0
      %1446 = vmatpush.msra.mxu0 0.0
      %1447 = vmatpush.msra.mxu0 0.0
      %1448 = vmatpush.msra.mxu0 0.0
      %1449 = vmatpush.msra.mxu0 0.0
      %1450 = vmatpush.msra.mxu0 %v839
      %1451 = vmatmul.f32.gmra.mxu0 %v1412
      %v1452 = vpop.f32.mrf.mxu0
      %v1453 = vadd.f32 0.0, %v1452
      %1454 = vmatmul.f32.gmra.mxu0 %v1415
      %v1455 = vpop.f32.mrf.mxu0
      %v1456 = vadd.f32 0.0, %v1455
      %1457 = vmatmul.f32.gmra.mxu0 %v1418
      %v1458 = vpop.f32.mrf.mxu0
      %v1459 = vadd.f32 0.0, %v1458
      %1460 = vmatmul.f32.gmra.mxu0 %v1421
      %v1461 = vpop.f32.mrf.mxu0
      %v1462 = vadd.f32 0.0, %v1461
      %1463 = vmatmul.f32.gmra.mxu0 %v1424
      %v1464 = vpop.f32.mrf.mxu0
      %v1465 = vadd.f32 0.0, %v1464
      %1466 = vmatmul.f32.gmra.mxu0 %v1427
      %v1467 = vpop.f32.mrf.mxu0
      %v1468 = vadd.f32 0.0, %v1467
      %1469 = vmatmul.f32.gmra.mxu0 %v1430
      %v1470 = vpop.f32.mrf.mxu0
      %v1471 = vadd.f32 0.0, %v1470
      %1472 = vmatmul.f32.gmra.mxu0 %v1433
      %v1473 = vpop.f32.mrf.mxu0
      %v1474 = vadd.f32 0.0, %v1473
      %1475 = vdwg.mxu0
      %v1477 = vsel %vm842, %v1082, 0
      %v1480 = vsel %vm842, %v1085, 0
      %v1483 = vsel %vm842, %v1088, 0
      %v1486 = vsel %vm842, %v1091, 0
      %v1489 = vsel %vm842, %v1094, 0
      %v1492 = vsel %vm842, %v1097, 0
      %v1495 = vsel %vm842, %v1100, 0
      %v1498 = vsel %vm842, %v1103, 0
      %1500 = vmatpush.msra.mxu0 0.0
      %1501 = vmatpush.msra.mxu0 0.0
      %1502 = vmatpush.msra.mxu0 0.0
      %1503 = vmatpush.msra.mxu0 0.0
      %1504 = vmatpush.msra.mxu0 0.0
      %1505 = vmatpush.msra.mxu0 0.0
      %1506 = vmatpush.msra.mxu0 0.0
      %1507 = vmatpush.msra.mxu0 0.0
      %1508 = vmatpush.msra.mxu0 0.0
      %1509 = vmatpush.msra.mxu0 0.0
      %1510 = vmatpush.msra.mxu0 0.0
      %1511 = vmatpush.msra.mxu0 0.0
      %1512 = vmatpush.msra.mxu0 0.0
      %1513 = vmatpush.msra.mxu0 0.0
      %1514 = vmatpush.msra.mxu0 0.0
      %1515 = vmatpush.msra.mxu0 %v838
      %1516 = vmatmul.f32.gmra.mxu0 %v1477
      %v1517 = vpop.f32.mrf.mxu0
      %v1518 = vadd.f32 %v1453, %v1517
      %1519 = vmatmul.f32.gmra.mxu0 %v1480
      %v1520 = vpop.f32.mrf.mxu0
      %v1521 = vadd.f32 %v1456, %v1520
      %1522 = vmatmul.f32.gmra.mxu0 %v1483
      %v1523 = vpop.f32.mrf.mxu0
      %v1524 = vadd.f32 %v1459, %v1523
      %1525 = vmatmul.f32.gmra.mxu0 %v1486
      %v1526 = vpop.f32.mrf.mxu0
      %v1527 = vadd.f32 %v1462, %v1526
      %1528 = vmatmul.f32.gmra.mxu0 %v1489
      %v1529 = vpop.f32.mrf.mxu0
      %v1530 = vadd.f32 %v1465, %v1529
      %1531 = vmatmul.f32.gmra.mxu0 %v1492
      %v1532 = vpop.f32.mrf.mxu0
      %v1533 = vadd.f32 %v1468, %v1532
      %1534 = vmatmul.f32.gmra.mxu0 %v1495
      %v1535 = vpop.f32.mrf.mxu0
      %v1536 = vadd.f32 %v1471, %v1535
      %1537 = vmatmul.f32.gmra.mxu0 %v1498
      %v1538 = vpop.f32.mrf.mxu0
      %v1539 = vadd.f32 %v1474, %v1538
      %1540 = vdwg.mxu0
      %1541 = vrot.lane.b32.xlu0 %v661, 112
      %v1542 = vpop.permute.xlu0 %1541
      %1543 = vrot.lane.b32.xlu0 %v664, 112
      %v1544 = vpop.permute.xlu0 %1543
      %1545 = vrot.lane.b32.xlu0 %v667, 112
      %v1546 = vpop.permute.xlu0 %1545
      %1547 = vrot.lane.b32.xlu0 %v670, 112
      %v1548 = vpop.permute.xlu0 %1547
      %1549 = vrot.lane.b32.xlu0 %v673, 112
      %v1550 = vpop.permute.xlu0 %1549
      %1551 = vrot.lane.b32.xlu0 %v676, 112
      %v1552 = vpop.permute.xlu0 %1551
      %1553 = vrot.lane.b32.xlu0 %v679, 112
      %v1554 = vpop.permute.xlu0 %1553
      %1555 = vrot.lane.b32.xlu0 %v682, 112
      %v1556 = vpop.permute.xlu0 %1555
      %1557 = vrot.lane.b32.xlu0 %v742, 112
      %v1558 = vpop.permute.xlu0 %1557
      %1559 = vrot.lane.b32.xlu0 %v745, 112
      %v1560 = vpop.permute.xlu0 %1559
      %1561 = vrot.lane.b32.xlu0 %v748, 112
      %v1562 = vpop.permute.xlu0 %1561
      %1563 = vrot.lane.b32.xlu0 %v751, 112
      %v1564 = vpop.permute.xlu0 %1563
      %1565 = vrot.lane.b32.xlu0 %v754, 112
      %v1566 = vpop.permute.xlu0 %1565
      %1567 = vrot.lane.b32.xlu0 %v757, 112
      %v1568 = vpop.permute.xlu0 %1567
      %1569 = vrot.lane.b32.xlu0 %v760, 112
      %v1570 = vpop.permute.xlu0 %1569
      %1571 = vrot.lane.b32.xlu0 %v763, 112
      %v1572 = vpop.permute.xlu0 %1571
      %v1573 = vsel %vm842, %v1542, 0
      %v1575 = vsel %vm842, %v1544, 0
      %v1577 = vsel %vm842, %v1546, 0
      %v1579 = vsel %vm842, %v1548, 0
      %v1581 = vsel %vm842, %v1550, 0
      %v1583 = vsel %vm842, %v1552, 0
      %v1585 = vsel %vm842, %v1554, 0
      %v1587 = vsel %vm842, %v1556, 0
      %v1589 = vsel %vm842, %v1558, 0
      %v1591 = vsel %vm842, %v1560, 0
      %v1593 = vsel %vm842, %v1562, 0
      %v1595 = vsel %vm842, %v1564, 0
      %v1597 = vsel %vm842, %v1566, 0
      %v1599 = vsel %vm842, %v1568, 0
      %v1601 = vsel %vm842, %v1570, 0
      %v1603 = vsel %vm842, %v1572, 0
      %1605 = vmatpush.xpose.msra.mxu0 0.0
      %1606 = vmatpush.xpose.msra.mxu0 0.0
      %1607 = vmatpush.xpose.msra.mxu0 0.0
      %1608 = vmatpush.xpose.msra.mxu0 0.0
      %1609 = vmatpush.xpose.msra.mxu0 0.0
      %1610 = vmatpush.xpose.msra.mxu0 0.0
      %1611 = vmatpush.xpose.msra.mxu0 0.0
      %1612 = vmatpush.xpose.msra.mxu0 0.0
      %1613 = vmatpush.xpose.msra.mxu0 %v1603
      %1614 = vmatpush.xpose.msra.mxu0 %v1601
      %1615 = vmatpush.xpose.msra.mxu0 %v1599
      %1616 = vmatpush.xpose.msra.mxu0 %v1597
      %1617 = vmatpush.xpose.msra.mxu0 %v1595
      %1618 = vmatpush.xpose.msra.mxu0 %v1593
      %1619 = vmatpush.xpose.msra.mxu0 %v1591
      %1620 = vmatpush.xpose.msra.mxu0 %v1589
      %1621 = vmatmul.f32.gmra.mxu0 %v1573
      %v1622 = vpop.f32.mrf.mxu0
      %v1623 = vadd.f32 0.0, %v1622
      %1624 = vmatmul.f32.gmra.mxu0 %v1575
      %v1625 = vpop.f32.mrf.mxu0
      %v1626 = vadd.f32 0.0, %v1625
      %1627 = vmatmul.f32.gmra.mxu0 %v1577
      %v1628 = vpop.f32.mrf.mxu0
      %v1629 = vadd.f32 0.0, %v1628
      %1630 = vmatmul.f32.gmra.mxu0 %v1579
      %v1631 = vpop.f32.mrf.mxu0
      %v1632 = vadd.f32 0.0, %v1631
      %1633 = vmatmul.f32.gmra.mxu0 %v1581
      %v1634 = vpop.f32.mrf.mxu0
      %v1635 = vadd.f32 0.0, %v1634
      %1636 = vmatmul.f32.gmra.mxu0 %v1583
      %v1637 = vpop.f32.mrf.mxu0
      %v1638 = vadd.f32 0.0, %v1637
      %1639 = vmatmul.f32.gmra.mxu0 %v1585
      %v1640 = vpop.f32.mrf.mxu0
      %v1641 = vadd.f32 0.0, %v1640
      %1642 = vmatmul.f32.gmra.mxu0 %v1587
      %v1643 = vpop.f32.mrf.mxu0
      %v1644 = vadd.f32 0.0, %v1643
      %1645 = vdwg.mxu0
      %v1646 = vmul.f32 %v1623, 0.35355338
      %v1647 = vmul.f32 %v1626, 0.35355338
      %v1648 = vmul.f32 %v1629, 0.35355338
      %v1649 = vmul.f32 %v1632, 0.35355338
      %v1650 = vmul.f32 %v1635, 0.35355338
      %v1651 = vmul.f32 %v1638, 0.35355338
      %v1652 = vmul.f32 %v1641, 0.35355338
      %v1653 = vmul.f32 %v1644, 0.35355338
      %v1654 = vadd.f32 %v1646, %v941
      %v1655 = vadd.f32 %v1647, %v941
      %v1656 = vadd.f32 %v1648, %v941
      %v1657 = vadd.f32 %v1649, %v941
      %v1658 = vadd.f32 %v1650, %v941
      %v1659 = vadd.f32 %v1651, %v941
      %v1660 = vadd.f32 %v1652, %v941
      %v1661 = vadd.f32 %v1653, %v941
      %v1662 = vsel %vm951, %v1654, -inf
      %1663 = vmax.xlane.f32.xlu0 %v1662
      %v1664 = vpop.xlane.xlu0 %1663
      %v1665 = vsel %vm951, %v1655, -inf
      %1666 = vmax.xlane.f32.xlu0 %v1665
      %v1667 = vpop.xlane.xlu0 %1666
      %v1668 = vsel %vm951, %v1656, -inf
      %1669 = vmax.xlane.f32.xlu0 %v1668
      %v1670 = vpop.xlane.xlu0 %1669
      %v1671 = vsel %vm951, %v1657, -inf
      %1672 = vmax.xlane.f32.xlu0 %v1671
      %v1673 = vpop.xlane.xlu0 %1672
      %v1674 = vsel %vm951, %v1658, -inf
      %1675 = vmax.xlane.f32.xlu0 %v1674
      %v1676 = vpop.xlane.xlu0 %1675
      %v1677 = vsel %vm951, %v1659, -inf
      %1678 = vmax.xlane.f32.xlu0 %v1677
      %v1679 = vpop.xlane.xlu0 %1678
      %v1680 = vsel %vm951, %v1660, -inf
      %1681 = vmax.xlane.f32.xlu0 %v1680
      %v1682 = vpop.xlane.xlu0 %1681
      %v1683 = vsel %vm951, %v1661, -inf
      %1684 = vmax.xlane.f32.xlu0 %v1683
      %v1685 = vpop.xlane.xlu0 %1684
      %v1686 = vsub.f32 %v1654, %v1664
      %v1687 = vsub.f32 %v1655, %v1667
      %v1688 = vsub.f32 %v1656, %v1670
      %v1689 = vsub.f32 %v1657, %v1673
      %v1690 = vsub.f32 %v1658, %v1676
      %v1691 = vsub.f32 %v1659, %v1679
      %v1692 = vsub.f32 %v1660, %v1682
      %v1693 = vsub.f32 %v1661, %v1685
      %v1694 = vmul.f32 %v1686, 1.442695
      %v1695 = vpow.pop %v1694
      %v1696 = vmul.f32 %v1687, 1.442695
      %v1697 = vpow.pop %v1696
      %v1698 = vmul.f32 %v1688, 1.442695
      %v1699 = vpow.pop %v1698
      %v1700 = vmul.f32 %v1689, 1.442695
      %v1701 = vpow.pop %v1700
      %v1702 = vmul.f32 %v1690, 1.442695
      %v1703 = vpow.pop %v1702
      %v1704 = vmul.f32 %v1691, 1.442695
      %v1705 = vpow.pop %v1704
      %v1706 = vmul.f32 %v1692, 1.442695
      %v1707 = vpow.pop %v1706
      %v1708 = vmul.f32 %v1693, 1.442695
      %v1709 = vpow.pop %v1708
      %v1710 = vsel %vm951, %v1695, 0.0
      %1711 = vadd.xlane.f32.xlu0 %v1710
      %v1712 = vpop.xlane.xlu0 %1711
      %v1713 = vsel %vm951, %v1697, 0.0
      %1714 = vadd.xlane.f32.xlu0 %v1713
      %v1715 = vpop.xlane.xlu0 %1714
      %v1716 = vsel %vm951, %v1699, 0.0
      %1717 = vadd.xlane.f32.xlu0 %v1716
      %v1718 = vpop.xlane.xlu0 %1717
      %v1719 = vsel %vm951, %v1701, 0.0
      %1720 = vadd.xlane.f32.xlu0 %v1719
      %v1721 = vpop.xlane.xlu0 %1720
      %v1722 = vsel %vm951, %v1703, 0.0
      %1723 = vadd.xlane.f32.xlu0 %v1722
      %v1724 = vpop.xlane.xlu0 %1723
      %v1725 = vsel %vm951, %v1705, 0.0
      %1726 = vadd.xlane.f32.xlu0 %v1725
      %v1727 = vpop.xlane.xlu0 %1726
      %v1728 = vsel %vm951, %v1707, 0.0
      %1729 = vadd.xlane.f32.xlu0 %v1728
      %v1730 = vpop.xlane.xlu0 %1729
      %v1731 = vsel %vm951, %v1709, 0.0
      %1732 = vadd.xlane.f32.xlu0 %v1731
      %v1733 = vpop.xlane.xlu0 %1732
      %v1734 = vrcp.pop %v1712
      %v1735 = vrcp.pop %v1715
      %v1736 = vrcp.pop %v1718
      %v1737 = vrcp.pop %v1721
      %v1738 = vrcp.pop %v1724
      %v1739 = vrcp.pop %v1727
      %v1740 = vrcp.pop %v1730
      %v1741 = vrcp.pop %v1733
      %v1742 = vmul.f32 %v1695, %v1734
      %v1743 = vmul.f32 %v1697, %v1735
      %v1744 = vmul.f32 %v1699, %v1736
      %v1745 = vmul.f32 %v1701, %v1737
      %v1746 = vmul.f32 %v1703, %v1738
      %v1747 = vmul.f32 %v1705, %v1739
      %v1748 = vmul.f32 %v1707, %v1740
      %v1749 = vmul.f32 %v1709, %v1741
      %1750 = vrot.lane.b32.xlu0 %v815, 112
      %v1751 = vpop.permute.xlu0 %1750
      %1752 = vrot.lane.b32.xlu0 %v818, 112
      %v1753 = vpop.permute.xlu0 %1752
      %1754 = vrot.lane.b32.xlu0 %v821, 112
      %v1755 = vpop.permute.xlu0 %1754
      %1756 = vrot.lane.b32.xlu0 %v824, 112
      %v1757 = vpop.permute.xlu0 %1756
      %1758 = vrot.lane.b32.xlu0 %v827, 112
      %v1759 = vpop.permute.xlu0 %1758
      %1760 = vrot.lane.b32.xlu0 %v830, 112
      %v1761 = vpop.permute.xlu0 %1760
      %1762 = vrot.lane.b32.xlu0 %v833, 112
      %v1763 = vpop.permute.xlu0 %1762
      %1764 = vrot.lane.b32.xlu0 %v836, 112
      %v1765 = vpop.permute.xlu0 %1764
      %v1775 = vsel %vm951, %v1742, 0
      %v1778 = vsel %vm951, %v1743, 0
      %v1781 = vsel %vm951, %v1744, 0
      %v1784 = vsel %vm951, %v1745, 0
      %v1787 = vsel %vm951, %v1746, 0
      %v1790 = vsel %vm951, %v1747, 0
      %v1793 = vsel %vm951, %v1748, 0
      %v1796 = vsel %vm951, %v1749, 0
      %1798 = vmatpush.msra.mxu0 0.0
      %1799 = vmatpush.msra.mxu0 0.0
      %1800 = vmatpush.msra.mxu0 0.0
      %1801 = vmatpush.msra.mxu0 0.0
      %1802 = vmatpush.msra.mxu0 0.0
      %1803 = vmatpush.msra.mxu0 0.0
      %1804 = vmatpush.msra.mxu0 0.0
      %1805 = vmatpush.msra.mxu0 0.0
      %1806 = vmatpush.msra.mxu0 %v1765
      %1807 = vmatpush.msra.mxu0 %v1763
      %1808 = vmatpush.msra.mxu0 %v1761
      %1809 = vmatpush.msra.mxu0 %v1759
      %1810 = vmatpush.msra.mxu0 %v1757
      %1811 = vmatpush.msra.mxu0 %v1755
      %1812 = vmatpush.msra.mxu0 %v1753
      %1813 = vmatpush.msra.mxu0 %v1751
      %1814 = vmatmul.f32.gmra.mxu0 %v1775
      %v1815 = vpop.f32.mrf.mxu0
      %v1816 = vadd.f32 0.0, %v1815
      %1817 = vmatmul.f32.gmra.mxu0 %v1778
      %v1818 = vpop.f32.mrf.mxu0
      %v1819 = vadd.f32 0.0, %v1818
      %1820 = vmatmul.f32.gmra.mxu0 %v1781
      %v1821 = vpop.f32.mrf.mxu0
      %v1822 = vadd.f32 0.0, %v1821
      %1823 = vmatmul.f32.gmra.mxu0 %v1784
      %v1824 = vpop.f32.mrf.mxu0
      %v1825 = vadd.f32 0.0, %v1824
      %1826 = vmatmul.f32.gmra.mxu0 %v1787
      %v1827 = vpop.f32.mrf.mxu0
      %v1828 = vadd.f32 0.0, %v1827
      %1829 = vmatmul.f32.gmra.mxu0 %v1790
      %v1830 = vpop.f32.mrf.mxu0
      %v1831 = vadd.f32 0.0, %v1830
      %1832 = vmatmul.f32.gmra.mxu0 %v1793
      %v1833 = vpop.f32.mrf.mxu0
      %v1834 = vadd.f32 0.0, %v1833
      %1835 = vmatmul.f32.gmra.mxu0 %v1796
      %v1836 = vpop.f32.mrf.mxu0
      %v1837 = vadd.f32 0.0, %v1836
      %1838 = vdwg.mxu0
      %v1840 = vsel %vm842, %v1816, 0
      %v1843 = vsel %vm842, %v1819, 0
      %v1846 = vsel %vm842, %v1822, 0
      %v1849 = vsel %vm842, %v1825, 0
      %v1852 = vsel %vm842, %v1828, 0
      %v1855 = vsel %vm842, %v1831, 0
      %v1858 = vsel %vm842, %v1834, 0
      %v1861 = vsel %vm842, %v1837, 0
      %1863 = vmatpush.msra.mxu0 0.0
      %1864 = vmatpush.msra.mxu0 0.0
      %1865 = vmatpush.msra.mxu0 0.0
      %1866 = vmatpush.msra.mxu0 0.0
      %1867 = vmatpush.msra.mxu0 0.0
      %1868 = vmatpush.msra.mxu0 0.0
      %1869 = vmatpush.msra.mxu0 0.0
      %1870 = vmatpush.msra.mxu0 0.0
      %1871 = vmatpush.msra.mxu0 0.0
      %1872 = vmatpush.msra.mxu0 0.0
      %1873 = vmatpush.msra.mxu0 0.0
      %1874 = vmatpush.msra.mxu0 0.0
      %1875 = vmatpush.msra.mxu0 0.0
      %1876 = vmatpush.msra.mxu0 0.0
      %1877 = vmatpush.msra.mxu0 0.0
      %1878 = vmatpush.msra.mxu0 %v840
      %1879 = vmatmul.f32.gmra.mxu0 %v1840
      %v1880 = vpop.f32.mrf.mxu0
      %v1881 = vadd.f32 0.0, %v1880
      %1882 = vmatmul.f32.gmra.mxu0 %v1843
      %v1883 = vpop.f32.mrf.mxu0
      %v1884 = vadd.f32 0.0, %v1883
      %1885 = vmatmul.f32.gmra.mxu0 %v1846
      %v1886 = vpop.f32.mrf.mxu0
      %v1887 = vadd.f32 0.0, %v1886
      %1888 = vmatmul.f32.gmra.mxu0 %v1849
      %v1889 = vpop.f32.mrf.mxu0
      %v1890 = vadd.f32 0.0, %v1889
      %1891 = vmatmul.f32.gmra.mxu0 %v1852
      %v1892 = vpop.f32.mrf.mxu0
      %v1893 = vadd.f32 0.0, %v1892
      %1894 = vmatmul.f32.gmra.mxu0 %v1855
      %v1895 = vpop.f32.mrf.mxu0
      %v1896 = vadd.f32 0.0, %v1895
      %1897 = vmatmul.f32.gmra.mxu0 %v1858
      %v1898 = vpop.f32.mrf.mxu0
      %v1899 = vadd.f32 0.0, %v1898
      %1900 = vmatmul.f32.gmra.mxu0 %v1861
      %v1901 = vpop.f32.mrf.mxu0
      %v1902 = vadd.f32 0.0, %v1901
      %1903 = vdwg.mxu0
      %v1904 = vadd.f32 %v1518, %v1881
      %v1905 = vadd.f32 %v1521, %v1884
      %v1906 = vadd.f32 %v1524, %v1887
      %v1907 = vadd.f32 %v1527, %v1890
      %v1908 = vadd.f32 %v1530, %v1893
      %v1909 = vadd.f32 %v1533, %v1896
      %v1910 = vadd.f32 %v1536, %v1899
      %v1911 = vadd.f32 %v1539, %v1902
      %1912 = vrot.lane.b32.xlu0 %v661, 104
      %v1913 = vpop.permute.xlu0 %1912
      %1914 = vrot.lane.b32.xlu0 %v664, 104
      %v1915 = vpop.permute.xlu0 %1914
      %1916 = vrot.lane.b32.xlu0 %v667, 104
      %v1917 = vpop.permute.xlu0 %1916
      %1918 = vrot.lane.b32.xlu0 %v670, 104
      %v1919 = vpop.permute.xlu0 %1918
      %1920 = vrot.lane.b32.xlu0 %v673, 104
      %v1921 = vpop.permute.xlu0 %1920
      %1922 = vrot.lane.b32.xlu0 %v676, 104
      %v1923 = vpop.permute.xlu0 %1922
      %1924 = vrot.lane.b32.xlu0 %v679, 104
      %v1925 = vpop.permute.xlu0 %1924
      %1926 = vrot.lane.b32.xlu0 %v682, 104
      %v1927 = vpop.permute.xlu0 %1926
      %1928 = vrot.lane.b32.xlu0 %v742, 104
      %v1929 = vpop.permute.xlu0 %1928
      %1930 = vrot.lane.b32.xlu0 %v745, 104
      %v1931 = vpop.permute.xlu0 %1930
      %1932 = vrot.lane.b32.xlu0 %v748, 104
      %v1933 = vpop.permute.xlu0 %1932
      %1934 = vrot.lane.b32.xlu0 %v751, 104
      %v1935 = vpop.permute.xlu0 %1934
      %1936 = vrot.lane.b32.xlu0 %v754, 104
      %v1937 = vpop.permute.xlu0 %1936
      %1938 = vrot.lane.b32.xlu0 %v757, 104
      %v1939 = vpop.permute.xlu0 %1938
      %1940 = vrot.lane.b32.xlu0 %v760, 104
      %v1941 = vpop.permute.xlu0 %1940
      %1942 = vrot.lane.b32.xlu0 %v763, 104
      %v1943 = vpop.permute.xlu0 %1942
      %v1944 = vsel %vm842, %v1913, 0
      %v1946 = vsel %vm842, %v1915, 0
      %v1948 = vsel %vm842, %v1917, 0
      %v1950 = vsel %vm842, %v1919, 0
      %v1952 = vsel %vm842, %v1921, 0
      %v1954 = vsel %vm842, %v1923, 0
      %v1956 = vsel %vm842, %v1925, 0
      %v1958 = vsel %vm842, %v1927, 0
      %v1960 = vsel %vm842, %v1929, 0
      %v1962 = vsel %vm842, %v1931, 0
      %v1964 = vsel %vm842, %v1933, 0
      %v1966 = vsel %vm842, %v1935, 0
      %v1968 = vsel %vm842, %v1937, 0
      %v1970 = vsel %vm842, %v1939, 0
      %v1972 = vsel %vm842, %v1941, 0
      %v1974 = vsel %vm842, %v1943, 0
      %1976 = vmatpush.xpose.msra.mxu0 0.0
      %1977 = vmatpush.xpose.msra.mxu0 0.0
      %1978 = vmatpush.xpose.msra.mxu0 0.0
      %1979 = vmatpush.xpose.msra.mxu0 0.0
      %1980 = vmatpush.xpose.msra.mxu0 0.0
      %1981 = vmatpush.xpose.msra.mxu0 0.0
      %1982 = vmatpush.xpose.msra.mxu0 0.0
      %1983 = vmatpush.xpose.msra.mxu0 0.0
      %1984 = vmatpush.xpose.msra.mxu0 %v1974
      %1985 = vmatpush.xpose.msra.mxu0 %v1972
      %1986 = vmatpush.xpose.msra.mxu0 %v1970
      %1987 = vmatpush.xpose.msra.mxu0 %v1968
      %1988 = vmatpush.xpose.msra.mxu0 %v1966
      %1989 = vmatpush.xpose.msra.mxu0 %v1964
      %1990 = vmatpush.xpose.msra.mxu0 %v1962
      %1991 = vmatpush.xpose.msra.mxu0 %v1960
      %1992 = vmatmul.f32.gmra.mxu0 %v1944
      %v1993 = vpop.f32.mrf.mxu0
      %v1994 = vadd.f32 0.0, %v1993
      %1995 = vmatmul.f32.gmra.mxu0 %v1946
      %v1996 = vpop.f32.mrf.mxu0
      %v1997 = vadd.f32 0.0, %v1996
      %1998 = vmatmul.f32.gmra.mxu0 %v1948
      %v1999 = vpop.f32.mrf.mxu0
      %v2000 = vadd.f32 0.0, %v1999
      %2001 = vmatmul.f32.gmra.mxu0 %v1950
      %v2002 = vpop.f32.mrf.mxu0
      %v2003 = vadd.f32 0.0, %v2002
      %2004 = vmatmul.f32.gmra.mxu0 %v1952
      %v2005 = vpop.f32.mrf.mxu0
      %v2006 = vadd.f32 0.0, %v2005
      %2007 = vmatmul.f32.gmra.mxu0 %v1954
      %v2008 = vpop.f32.mrf.mxu0
      %v2009 = vadd.f32 0.0, %v2008
      %2010 = vmatmul.f32.gmra.mxu0 %v1956
      %v2011 = vpop.f32.mrf.mxu0
      %v2012 = vadd.f32 0.0, %v2011
      %2013 = vmatmul.f32.gmra.mxu0 %v1958
      %v2014 = vpop.f32.mrf.mxu0
      %v2015 = vadd.f32 0.0, %v2014
      %2016 = vdwg.mxu0
      %v2017 = vmul.f32 %v1994, 0.35355338
      %v2018 = vmul.f32 %v1997, 0.35355338
      %v2019 = vmul.f32 %v2000, 0.35355338
      %v2020 = vmul.f32 %v2003, 0.35355338
      %v2021 = vmul.f32 %v2006, 0.35355338
      %v2022 = vmul.f32 %v2009, 0.35355338
      %v2023 = vmul.f32 %v2012, 0.35355338
      %v2024 = vmul.f32 %v2015, 0.35355338
      %v2025 = vadd.f32 %v2017, %v941
      %v2026 = vadd.f32 %v2018, %v941
      %v2027 = vadd.f32 %v2019, %v941
      %v2028 = vadd.f32 %v2020, %v941
      %v2029 = vadd.f32 %v2021, %v941
      %v2030 = vadd.f32 %v2022, %v941
      %v2031 = vadd.f32 %v2023, %v941
      %v2032 = vadd.f32 %v2024, %v941
      %v2033 = vsel %vm951, %v2025, -inf
      %2034 = vmax.xlane.f32.xlu0 %v2033
      %v2035 = vpop.xlane.xlu0 %2034
      %v2036 = vsel %vm951, %v2026, -inf
      %2037 = vmax.xlane.f32.xlu0 %v2036
      %v2038 = vpop.xlane.xlu0 %2037
      %v2039 = vsel %vm951, %v2027, -inf
      %2040 = vmax.xlane.f32.xlu0 %v2039
      %v2041 = vpop.xlane.xlu0 %2040
      %v2042 = vsel %vm951, %v2028, -inf
      %2043 = vmax.xlane.f32.xlu0 %v2042
      %v2044 = vpop.xlane.xlu0 %2043
      %v2045 = vsel %vm951, %v2029, -inf
      %2046 = vmax.xlane.f32.xlu0 %v2045
      %v2047 = vpop.xlane.xlu0 %2046
      %v2048 = vsel %vm951, %v2030, -inf
      %2049 = vmax.xlane.f32.xlu0 %v2048
      %v2050 = vpop.xlane.xlu0 %2049
      %v2051 = vsel %vm951, %v2031, -inf
      %2052 = vmax.xlane.f32.xlu0 %v2051
      %v2053 = vpop.xlane.xlu0 %2052
      %v2054 = vsel %vm951, %v2032, -inf
      %2055 = vmax.xlane.f32.xlu0 %v2054
      %v2056 = vpop.xlane.xlu0 %2055
      %v2057 = vsub.f32 %v2025, %v2035
      %v2058 = vsub.f32 %v2026, %v2038
      %v2059 = vsub.f32 %v2027, %v2041
      %v2060 = vsub.f32 %v2028, %v2044
      %v2061 = vsub.f32 %v2029, %v2047
      %v2062 = vsub.f32 %v2030, %v2050
      %v2063 = vsub.f32 %v2031, %v2053
      %v2064 = vsub.f32 %v2032, %v2056
      %v2065 = vmul.f32 %v2057, 1.442695
      %v2066 = vpow.pop %v2065
      %v2067 = vmul.f32 %v2058, 1.442695
      %v2068 = vpow.pop %v2067
      %v2069 = vmul.f32 %v2059, 1.442695
      %v2070 = vpow.pop %v2069
      %v2071 = vmul.f32 %v2060, 1.442695
      %v2072 = vpow.pop %v2071
      %v2073 = vmul.f32 %v2061, 1.442695
      %v2074 = vpow.pop %v2073
      %v2075 = vmul.f32 %v2062, 1.442695
      %v2076 = vpow.pop %v2075
      %v2077 = vmul.f32 %v2063, 1.442695
      %v2078 = vpow.pop %v2077
      %v2079 = vmul.f32 %v2064, 1.442695
      %v2080 = vpow.pop %v2079
      %v2081 = vsel %vm951, %v2066, 0.0
      %2082 = vadd.xlane.f32.xlu0 %v2081
      %v2083 = vpop.xlane.xlu0 %2082
      %v2084 = vsel %vm951, %v2068, 0.0
      %2085 = vadd.xlane.f32.xlu0 %v2084
      %v2086 = vpop.xlane.xlu0 %2085
      %v2087 = vsel %vm951, %v2070, 0.0
      %2088 = vadd.xlane.f32.xlu0 %v2087
      %v2089 = vpop.xlane.xlu0 %2088
      %v2090 = vsel %vm951, %v2072, 0.0
      %2091 = vadd.xlane.f32.xlu0 %v2090
      %v2092 = vpop.xlane.xlu0 %2091
      %v2093 = vsel %vm951, %v2074, 0.0
      %2094 = vadd.xlane.f32.xlu0 %v2093
      %v2095 = vpop.xlane.xlu0 %2094
      %v2096 = vsel %vm951, %v2076, 0.0
      %2097 = vadd.xlane.f32.xlu0 %v2096
      %v2098 = vpop.xlane.xlu0 %2097
      %v2099 = vsel %vm951, %v2078, 0.0
      %2100 = vadd.xlane.f32.xlu0 %v2099
      %v2101 = vpop.xlane.xlu0 %2100
      %v2102 = vsel %vm951, %v2080, 0.0
      %2103 = vadd.xlane.f32.xlu0 %v2102
      %v2104 = vpop.xlane.xlu0 %2103
      %v2105 = vrcp.pop %v2083
      %v2106 = vrcp.pop %v2086
      %v2107 = vrcp.pop %v2089
      %v2108 = vrcp.pop %v2092
      %v2109 = vrcp.pop %v2095
      %v2110 = vrcp.pop %v2098
      %v2111 = vrcp.pop %v2101
      %v2112 = vrcp.pop %v2104
      %v2113 = vmul.f32 %v2066, %v2105
      %v2114 = vmul.f32 %v2068, %v2106
      %v2115 = vmul.f32 %v2070, %v2107
      %v2116 = vmul.f32 %v2072, %v2108
      %v2117 = vmul.f32 %v2074, %v2109
      %v2118 = vmul.f32 %v2076, %v2110
      %v2119 = vmul.f32 %v2078, %v2111
      %v2120 = vmul.f32 %v2080, %v2112
      %2121 = vrot.lane.b32.xlu0 %v815, 104
      %v2122 = vpop.permute.xlu0 %2121
      %2123 = vrot.lane.b32.xlu0 %v818, 104
      %v2124 = vpop.permute.xlu0 %2123
      %2125 = vrot.lane.b32.xlu0 %v821, 104
      %v2126 = vpop.permute.xlu0 %2125
      %2127 = vrot.lane.b32.xlu0 %v824, 104
      %v2128 = vpop.permute.xlu0 %2127
      %2129 = vrot.lane.b32.xlu0 %v827, 104
      %v2130 = vpop.permute.xlu0 %2129
      %2131 = vrot.lane.b32.xlu0 %v830, 104
      %v2132 = vpop.permute.xlu0 %2131
      %2133 = vrot.lane.b32.xlu0 %v833, 104
      %v2134 = vpop.permute.xlu0 %2133
      %2135 = vrot.lane.b32.xlu0 %v836, 104
      %v2136 = vpop.permute.xlu0 %2135
      %v2146 = vsel %vm951, %v2113, 0
      %v2149 = vsel %vm951, %v2114, 0
      %v2152 = vsel %vm951, %v2115, 0
      %v2155 = vsel %vm951, %v2116, 0
      %v2158 = vsel %vm951, %v2117, 0
      %v2161 = vsel %vm951, %v2118, 0
      %v2164 = vsel %vm951, %v2119, 0
      %v2167 = vsel %vm951, %v2120, 0
      %2169 = vmatpush.msra.mxu0 0.0
      %2170 = vmatpush.msra.mxu0 0.0
      %2171 = vmatpush.msra.mxu0 0.0
      %2172 = vmatpush.msra.mxu0 0.0
      %2173 = vmatpush.msra.mxu0 0.0
      %2174 = vmatpush.msra.mxu0 0.0
      %2175 = vmatpush.msra.mxu0 0.0
      %2176 = vmatpush.msra.mxu0 0.0
      %2177 = vmatpush.msra.mxu0 %v2136
      %2178 = vmatpush.msra.mxu0 %v2134
      %2179 = vmatpush.msra.mxu0 %v2132
      %2180 = vmatpush.msra.mxu0 %v2130
      %2181 = vmatpush.msra.mxu0 %v2128
      %2182 = vmatpush.msra.mxu0 %v2126
      %2183 = vmatpush.msra.mxu0 %v2124
      %2184 = vmatpush.msra.mxu0 %v2122
      %2185 = vmatmul.f32.gmra.mxu0 %v2146
      %v2186 = vpop.f32.mrf.mxu0
      %v2187 = vadd.f32 0.0, %v2186
      %2188 = vmatmul.f32.gmra.mxu0 %v2149
      %v2189 = vpop.f32.mrf.mxu0
      %v2190 = vadd.f32 0.0, %v2189
      %2191 = vmatmul.f32.gmra.mxu0 %v2152
      %v2192 = vpop.f32.mrf.mxu0
      %v2193 = vadd.f32 0.0, %v2192
      %2194 = vmatmul.f32.gmra.mxu0 %v2155
      %v2195 = vpop.f32.mrf.mxu0
      %v2196 = vadd.f32 0.0, %v2195
      %2197 = vmatmul.f32.gmra.mxu0 %v2158
      %v2198 = vpop.f32.mrf.mxu0
      %v2199 = vadd.f32 0.0, %v2198
      %2200 = vmatmul.f32.gmra.mxu0 %v2161
      %v2201 = vpop.f32.mrf.mxu0
      %v2202 = vadd.f32 0.0, %v2201
      %2203 = vmatmul.f32.gmra.mxu0 %v2164
      %v2204 = vpop.f32.mrf.mxu0
      %v2205 = vadd.f32 0.0, %v2204
      %2206 = vmatmul.f32.gmra.mxu0 %v2167
      %v2207 = vpop.f32.mrf.mxu0
      %v2208 = vadd.f32 0.0, %v2207
      %2209 = vdwg.mxu0
      %v2211 = vsel %vm842, %v2187, 0
      %v2214 = vsel %vm842, %v2190, 0
      %v2217 = vsel %vm842, %v2193, 0
      %v2220 = vsel %vm842, %v2196, 0
      %v2223 = vsel %vm842, %v2199, 0
      %v2226 = vsel %vm842, %v2202, 0
      %v2229 = vsel %vm842, %v2205, 0
      %v2232 = vsel %vm842, %v2208, 0
      %2234 = vmatpush.msra.mxu0 0.0
      %2235 = vmatpush.msra.mxu0 0.0
      %2236 = vmatpush.msra.mxu0 0.0
      %2237 = vmatpush.msra.mxu0 0.0
      %2238 = vmatpush.msra.mxu0 0.0
      %2239 = vmatpush.msra.mxu0 0.0
      %2240 = vmatpush.msra.mxu0 0.0
      %2241 = vmatpush.msra.mxu0 0.0
      %2242 = vmatpush.msra.mxu0 0.0
      %2243 = vmatpush.msra.mxu0 0.0
      %2244 = vmatpush.msra.mxu0 0.0
      %2245 = vmatpush.msra.mxu0 0.0
      %2246 = vmatpush.msra.mxu0 0.0
      %2247 = vmatpush.msra.mxu0 0.0
      %2248 = vmatpush.msra.mxu0 0.0
      %2249 = vmatpush.msra.mxu0 %v841
      %2250 = vmatmul.f32.gmra.mxu0 %v2211
      %v2251 = vpop.f32.mrf.mxu0
      %v2252 = vadd.f32 0.0, %v2251
      %2253 = vmatmul.f32.gmra.mxu0 %v2214
      %v2254 = vpop.f32.mrf.mxu0
      %v2255 = vadd.f32 0.0, %v2254
      %2256 = vmatmul.f32.gmra.mxu0 %v2217
      %v2257 = vpop.f32.mrf.mxu0
      %v2258 = vadd.f32 0.0, %v2257
      %2259 = vmatmul.f32.gmra.mxu0 %v2220
      %v2260 = vpop.f32.mrf.mxu0
      %v2261 = vadd.f32 0.0, %v2260
      %2262 = vmatmul.f32.gmra.mxu0 %v2223
      %v2263 = vpop.f32.mrf.mxu0
      %v2264 = vadd.f32 0.0, %v2263
      %2265 = vmatmul.f32.gmra.mxu0 %v2226
      %v2266 = vpop.f32.mrf.mxu0
      %v2267 = vadd.f32 0.0, %v2266
      %2268 = vmatmul.f32.gmra.mxu0 %v2229
      %v2269 = vpop.f32.mrf.mxu0
      %v2270 = vadd.f32 0.0, %v2269
      %2271 = vmatmul.f32.gmra.mxu0 %v2232
      %v2272 = vpop.f32.mrf.mxu0
      %v2273 = vadd.f32 0.0, %v2272
      %2274 = vdwg.mxu0
      %v2275 = vadd.f32 %v1904, %v2252
      %v2276 = vadd.f32 %v1905, %v2255
      %v2277 = vadd.f32 %v1906, %v2258
      %v2278 = vadd.f32 %v1907, %v2261
      %v2279 = vadd.f32 %v1908, %v2264
      %v2280 = vadd.f32 %v1909, %v2267
      %v2281 = vadd.f32 %v1910, %v2270
      %v2282 = vadd.f32 %v1911, %v2273
      %v2283 = vadd.f32 %v569, %v2275
      %v2284 = vadd.f32 %v570, %v2276
      %v2285 = vadd.f32 %v571, %v2277
      %v2286 = vadd.f32 %v572, %v2278
      %v2287 = vadd.f32 %v573, %v2279
      %v2288 = vadd.f32 %v574, %v2280
      %v2289 = vadd.f32 %v575, %v2281
      %v2290 = vadd.f32 %v576, %v2282
      %v2291 = vld [vmem:[%s12] sm:$0x1]
      %v2293 = vperm.slane %v2291, 0
      %v2295 = vadd.f32 %v2283, %v2293
      %v2296 = vadd.f32 %v2284, %v2293
      %v2297 = vadd.f32 %v2285, %v2293
      %v2298 = vadd.f32 %v2286, %v2293
      %v2299 = vadd.f32 %v2287, %v2293
      %v2300 = vadd.f32 %v2288, %v2293
      %v2301 = vadd.f32 %v2289, %v2293
      %v2302 = vadd.f32 %v2290, %v2293
      %v2303 = vsel %vm618, %v2295, 0.0
      %2304 = vadd.xlane.f32.xlu0 %v2303
      %v2305 = vpop.xlane.xlu0 %2304
      %v2306 = vsel %vm618, %v2296, 0.0
      %2307 = vadd.xlane.f32.xlu0 %v2306
      %v2308 = vpop.xlane.xlu0 %2307
      %v2309 = vsel %vm618, %v2297, 0.0
      %2310 = vadd.xlane.f32.xlu0 %v2309
      %v2311 = vpop.xlane.xlu0 %2310
      %v2312 = vsel %vm618, %v2298, 0.0
      %2313 = vadd.xlane.f32.xlu0 %v2312
      %v2314 = vpop.xlane.xlu0 %2313
      %v2315 = vsel %vm618, %v2299, 0.0
      %2316 = vadd.xlane.f32.xlu0 %v2315
      %v2317 = vpop.xlane.xlu0 %2316
      %v2318 = vsel %vm618, %v2300, 0.0
      %2319 = vadd.xlane.f32.xlu0 %v2318
      %v2320 = vpop.xlane.xlu0 %2319
      %v2321 = vsel %vm618, %v2301, 0.0
      %2322 = vadd.xlane.f32.xlu0 %v2321
      %v2323 = vpop.xlane.xlu0 %2322
      %v2324 = vsel %vm618, %v2302, 0.0
      %2325 = vadd.xlane.f32.xlu0 %v2324
      %v2326 = vpop.xlane.xlu0 %2325
      %v2327 = vrcp.pop 32.0
      %v2328 = vmul.f32 32.0, %v2327
      %v2329 = vsub.f32 1.0, %v2328
      %v2330 = vmul.f32 %v2327, %v2329
      %v2331 = vadd.f32 %v2327, %v2330
      %vm2332 = vweird.f32 %v2327
      %v2333 = vsel %vm2332, %v2327, %v2331
      %v2334 = vmul.f32 %v2305, %v2333
      %v2335 = vmul.f32 %v2308, %v2333
      %v2336 = vmul.f32 %v2311, %v2333
      %v2337 = vmul.f32 %v2314, %v2333
      %v2338 = vmul.f32 %v2317, %v2333
      %v2339 = vmul.f32 %v2320, %v2333
      %v2340 = vmul.f32 %v2323, %v2333
      %v2341 = vmul.f32 %v2326, %v2333
      %v2342 = vsub.f32 %v2295, %v2334
      %v2343 = vsub.f32 %v2296, %v2335
      %v2344 = vsub.f32 %v2297, %v2336
      %v2345 = vsub.f32 %v2298, %v2337
      %v2346 = vsub.f32 %v2299, %v2338
      %v2347 = vsub.f32 %v2300, %v2339
      %v2348 = vsub.f32 %v2301, %v2340
      %v2349 = vsub.f32 %v2302, %v2341
      %v2350 = vmul.f32 %v2342, %v2342
      %v2351 = vmul.f32 %v2343, %v2343
      %v2352 = vmul.f32 %v2344, %v2344
      %v2353 = vmul.f32 %v2345, %v2345
      %v2354 = vmul.f32 %v2346, %v2346
      %v2355 = vmul.f32 %v2347, %v2347
      %v2356 = vmul.f32 %v2348, %v2348
      %v2357 = vmul.f32 %v2349, %v2349
      %v2358 = vsel %vm618, %v2350, 0.0
      %2359 = vadd.xlane.f32.xlu0 %v2358
      %v2360 = vpop.xlane.xlu0 %2359
      %v2361 = vsel %vm618, %v2351, 0.0
      %2362 = vadd.xlane.f32.xlu0 %v2361
      %v2363 = vpop.xlane.xlu0 %2362
      %v2364 = vsel %vm618, %v2352, 0.0
      %2365 = vadd.xlane.f32.xlu0 %v2364
      %v2366 = vpop.xlane.xlu0 %2365
      %v2367 = vsel %vm618, %v2353, 0.0
      %2368 = vadd.xlane.f32.xlu0 %v2367
      %v2369 = vpop.xlane.xlu0 %2368
      %v2370 = vsel %vm618, %v2354, 0.0
      %2371 = vadd.xlane.f32.xlu0 %v2370
      %v2372 = vpop.xlane.xlu0 %2371
      %v2373 = vsel %vm618, %v2355, 0.0
      %2374 = vadd.xlane.f32.xlu0 %v2373
      %v2375 = vpop.xlane.xlu0 %2374
      %v2376 = vsel %vm618, %v2356, 0.0
      %2377 = vadd.xlane.f32.xlu0 %v2376
      %v2378 = vpop.xlane.xlu0 %2377
      %v2379 = vsel %vm618, %v2357, 0.0
      %2380 = vadd.xlane.f32.xlu0 %v2379
      %v2381 = vpop.xlane.xlu0 %2380
      %v2382 = vmul.f32 %v2360, %v2333
      %v2383 = vmul.f32 %v2363, %v2333
      %v2384 = vmul.f32 %v2366, %v2333
      %v2385 = vmul.f32 %v2369, %v2333
      %v2386 = vmul.f32 %v2372, %v2333
      %v2387 = vmul.f32 %v2375, %v2333
      %v2388 = vmul.f32 %v2378, %v2333
      %v2389 = vmul.f32 %v2381, %v2333
      %v2390 = vadd.f32 %v2382, 1e-05
      %v2391 = vadd.f32 %v2383, 1e-05
      %v2392 = vadd.f32 %v2384, 1e-05
      %v2393 = vadd.f32 %v2385, 1e-05
      %v2394 = vadd.f32 %v2386, 1e-05
      %v2395 = vadd.f32 %v2387, 1e-05
      %v2396 = vadd.f32 %v2388, 1e-05
      %v2397 = vadd.f32 %v2389, 1e-05
      %v2398 = vrsqrt.pop %v2390
      %v2399 = vmul.f32 %v2398, %v2390
      %v2400 = vmul.f32 %v2399, %v2398
      %v2401 = vmul.f32 0.5, %v2400
      %v2402 = vsub.f32 1.5, %v2401
      %v2403 = vmul.f32 %v2398, %v2402
      %vm2404 = vweird.f32 %v2390
      %vm2405 = vweird.f32 %v2398
      %vm2406 = vmor %vm2404, %vm2405
      %v2407 = vsel %vm2406, %v2398, %v2403
      %v2408 = vrsqrt.pop %v2391
      %v2409 = vmul.f32 %v2408, %v2391
      %v2410 = vmul.f32 %v2409, %v2408
      %v2411 = vmul.f32 0.5, %v2410
      %v2412 = vsub.f32 1.5, %v2411
      %v2413 = vmul.f32 %v2408, %v2412
      %vm2414 = vweird.f32 %v2391
      %vm2415 = vweird.f32 %v2408
      %vm2416 = vmor %vm2414, %vm2415
      %v2417 = vsel %vm2416, %v2408, %v2413
      %v2418 = vrsqrt.pop %v2392
      %v2419 = vmul.f32 %v2418, %v2392
      %v2420 = vmul.f32 %v2419, %v2418
      %v2421 = vmul.f32 0.5, %v2420
      %v2422 = vsub.f32 1.5, %v2421
      %v2423 = vmul.f32 %v2418, %v2422
      %vm2424 = vweird.f32 %v2392
      %vm2425 = vweird.f32 %v2418
      %vm2426 = vmor %vm2424, %vm2425
      %v2427 = vsel %vm2426, %v2418, %v2423
      %v2428 = vrsqrt.pop %v2393
      %v2429 = vmul.f32 %v2428, %v2393
      %v2430 = vmul.f32 %v2429, %v2428
      %v2431 = vmul.f32 0.5, %v2430
      %v2432 = vsub.f32 1.5, %v2431
      %v2433 = vmul.f32 %v2428, %v2432
      %vm2434 = vweird.f32 %v2393
      %vm2435 = vweird.f32 %v2428
      %vm2436 = vmor %vm2434, %vm2435
      %v2437 = vsel %vm2436, %v2428, %v2433
      %v2438 = vrsqrt.pop %v2394
      %v2439 = vmul.f32 %v2438, %v2394
      %v2440 = vmul.f32 %v2439, %v2438
      %v2441 = vmul.f32 0.5, %v2440
      %v2442 = vsub.f32 1.5, %v2441
      %v2443 = vmul.f32 %v2438, %v2442
      %vm2444 = vweird.f32 %v2394
      %vm2445 = vweird.f32 %v2438
      %vm2446 = vmor %vm2444, %vm2445
      %v2447 = vsel %vm2446, %v2438, %v2443
      %v2448 = vrsqrt.pop %v2395
      %v2449 = vmul.f32 %v2448, %v2395
      %v2450 = vmul.f32 %v2449, %v2448
      %v2451 = vmul.f32 0.5, %v2450
      %v2452 = vsub.f32 1.5, %v2451
      %v2453 = vmul.f32 %v2448, %v2452
      %vm2454 = vweird.f32 %v2395
      %vm2455 = vweird.f32 %v2448
      %vm2456 = vmor %vm2454, %vm2455
      %v2457 = vsel %vm2456, %v2448, %v2453
      %v2458 = vrsqrt.pop %v2396
      %v2459 = vmul.f32 %v2458, %v2396
      %v2460 = vmul.f32 %v2459, %v2458
      %v2461 = vmul.f32 0.5, %v2460
      %v2462 = vsub.f32 1.5, %v2461
      %v2463 = vmul.f32 %v2458, %v2462
      %vm2464 = vweird.f32 %v2396
      %vm2465 = vweird.f32 %v2458
      %vm2466 = vmor %vm2464, %vm2465
      %v2467 = vsel %vm2466, %v2458, %v2463
      %v2468 = vrsqrt.pop %v2397
      %v2469 = vmul.f32 %v2468, %v2397
      %v2470 = vmul.f32 %v2469, %v2468
      %v2471 = vmul.f32 0.5, %v2470
      %v2472 = vsub.f32 1.5, %v2471
      %v2473 = vmul.f32 %v2468, %v2472
      %vm2474 = vweird.f32 %v2397
      %vm2475 = vweird.f32 %v2468
      %vm2476 = vmor %vm2474, %vm2475
      %v2477 = vsel %vm2476, %v2468, %v2473
      %v2478 = vmul.f32 %v2342, %v2407
      %v2479 = vmul.f32 %v2343, %v2417
      %v2480 = vmul.f32 %v2344, %v2427
      %v2481 = vmul.f32 %v2345, %v2437
      %v2482 = vmul.f32 %v2346, %v2447
      %v2483 = vmul.f32 %v2347, %v2457
      %v2484 = vmul.f32 %v2348, %v2467
      %v2485 = vmul.f32 %v2349, %v2477
      %v2486 = vld [vmem:[%s13] sm:$0x1]
      %v2488 = vperm.slane %v2486, 0
      %v2490 = vmul.f32 %v2478, %v2488
      %v2491 = vmul.f32 %v2479, %v2488
      %v2492 = vmul.f32 %v2480, %v2488
      %v2493 = vmul.f32 %v2481, %v2488
      %v2494 = vmul.f32 %v2482, %v2488
      %v2495 = vmul.f32 %v2483, %v2488
      %v2496 = vmul.f32 %v2484, %v2488
      %v2497 = vmul.f32 %v2485, %v2488
      %v2498 = vld [vmem:[%s14] sm:$0x1]
      %v2500 = vperm.slane %v2498, 0
      %v2502 = vadd.f32 %v2490, %v2500
      %v2503 = vadd.f32 %v2491, %v2500
      %v2504 = vadd.f32 %v2492, %v2500
      %v2505 = vadd.f32 %v2493, %v2500
      %v2506 = vadd.f32 %v2494, %v2500
      %v2507 = vadd.f32 %v2495, %v2500
      %v2508 = vadd.f32 %v2496, %v2500
      %v2509 = vadd.f32 %v2497, %v2500
      %2510 = vst.msk [vmem:[%s568] sm:$0xff] %vm618, %v2502
      %2511 = vst.msk [vmem:[%s568 + $0x8] sm:$0xff] %vm618, %v2503
      %2512 = vst.msk [vmem:[%s568 + $0x10] sm:$0xff] %vm618, %v2504
      %2513 = vst.msk [vmem:[%s568 + $0x18] sm:$0xff] %vm618, %v2505
      %2514 = vst.msk [vmem:[%s568 + $0x20] sm:$0xff] %vm618, %v2506
      %2515 = vst.msk [vmem:[%s568 + $0x28] sm:$0xff] %vm618, %v2507
      %2516 = vst.msk [vmem:[%s568 + $0x30] sm:$0xff] %vm618, %v2508
      %2517 = vst.msk [vmem:[%s568 + $0x38] sm:$0xff] %vm618, %v2509
      %p2518 = scmp.lt.s32.totalorder %s26, 1
      %s2519 = scalar_select %p2518, %s26, 1
      %s2520 = smul.addr %s2519, 8
      %s2521 = smul.addr %s2520, 8
      %s2522 = scalar_lea.vmem %s15, %s2521
      // Predicated region
      $region81: #{detr_forward.8} parent=79 // pred_check
        %p2523 = pneg %p384
      $region82: #{detr_forward.8} parent=79 // pred_check_branch
        %2525 = sbr.rel (%p2523) target = $region84
      $region83: #{detr_forward.8} parent=79 // pred_region
        _
      $region84: #{detr_forward.8} parent=79 // pred_fallthru
        _
    $region80: #{detr_forward.8} parent=5 // pred_fallthru
      _
    %p2526 = scmp.le.s32.totalorder 2, %s21
    // Predicated region
    $region85: #{detr_forward.8} parent=5 // pred_check
      %p2527 = pneg %p2526
    $region86: #{detr_forward.8} parent=5 // pred_check_branch
      %2529 = sbr.rel (%p2527) target = $region88
    $region87: #{detr_forward.8} parent=5 // pred_region
      %s2530 = ssub.s32 %s21, 2
      // Predicated region
      $region89: #{detr_forward.8} parent=87 // pred_check
        %p2531 = pneg %p390
      $region90: #{detr_forward.8} parent=87 // pred_check_branch
        %2533 = sbr.rel (%p2531) target = $region92
      $region91: #{detr_forward.8} parent=87 // pred_region
        %p2534 = scmp.lt.s32.totalorder %s27, 1
        %s2535 = scalar_select %p2534, %s27, 1
        %s2536 = smul.addr %s2535, 8
        %s2537 = smul.addr %s2536, 8
        %s2538 = scalar_lea.vmem %s15, %s2537
      $region92: #{detr_forward.8} parent=87 // pred_fallthru
        _
    $region88: #{detr_forward.8} parent=5 // pred_fallthru
      _
  $region6: #{detr_forward.8} parent=0 // loop_footer
    %s25 = sadd.s32 1, %s21
  $region7: #{detr_forward.8} parent=0 // loop_footer_branch
    %20 = sbr.rel target = $region3
  $region8: #{detr_forward.8} parent=0 // loop_exit
    _

// kernel: detr_forward.12
$region0: #{detr_forward.12}
  #allocation0 [shape = 'u32[]', space=smem, size = 0x4, offset = 0x4, fixed_abs, tag = 'smem constant byte address 0x4 - core index']
  #allocation1 [shape = 'u32[72,128]{1,0:T(1,128)}', space=vmem, size = 0x9000, scoped, tag = 'internal scratch']
  %s0 = inlined_call_operand.vmem [shape: f32[16,32], index: 0, kind: input, shape index: {}]
  %s1 = inlined_call_operand.vmem [shape: f32[32,64], index: 1, kind: input, shape index: {}]
  %s2 = inlined_call_operand.vmem [shape: f32[1,64], index: 2, kind: input, shape index: {}]
  %s3 = inlined_call_operand.vmem [shape: f32[64,32], index: 3, kind: input, shape index: {}]
  %s4 = inlined_call_operand.vmem [shape: f32[1,32], index: 4, kind: input, shape index: {}]
  %s5 = inlined_call_operand.vmem [shape: f32[1,32], index: 5, kind: input, shape index: {}]
  %s6 = inlined_call_operand.vmem [shape: f32[1,32], index: 6, kind: input, shape index: {}]
  %s7 = inlined_call_operand.vmem [shape: f32[16,32], index: 7, kind: output, shape index: {}]
  %s8 = sld [smem:[#allocation0]]
  $region38: #{detr_forward.12} parent=0
    _
  %s10 = ssub.s32 1, %s8
  %s11 = scalar_select 0, %s10, %s8
  // Predicated region
  $region2: #{detr_forward.12} parent=0 // pred_check
    _
  $region3: #{detr_forward.12} parent=0 // pred_check_branch
    %13 = sbr.rel (0) target = $region5
  $region4: #{detr_forward.12} parent=0 // pred_region
    _
  $region5: #{detr_forward.12} parent=0 // pred_fallthru
    _
  // Predicated region
  $region6: #{detr_forward.12} parent=0 // pred_check
    _
  $region7: #{detr_forward.12} parent=0 // pred_check_branch
    %15 = sbr.rel (0) target = $region9
  $region8: #{detr_forward.12} parent=0 // pred_region
    _
  $region9: #{detr_forward.12} parent=0 // pred_fallthru
    _
  // Predicated region
  $region10: #{detr_forward.12} parent=0 // pred_check
    _
  $region11: #{detr_forward.12} parent=0 // pred_check_branch
    %17 = sbr.rel (0) target = $region13
  $region12: #{detr_forward.12} parent=0 // pred_region
    _
  $region13: #{detr_forward.12} parent=0 // pred_fallthru
    _
  // Predicated region
  $region14: #{detr_forward.12} parent=0 // pred_check
    _
  $region15: #{detr_forward.12} parent=0 // pred_check_branch
    %19 = sbr.rel (0) target = $region17
  $region16: #{detr_forward.12} parent=0 // pred_region
    _
  $region17: #{detr_forward.12} parent=0 // pred_fallthru
    _
  // Predicated region
  $region18: #{detr_forward.12} parent=0 // pred_check
    _
  $region19: #{detr_forward.12} parent=0 // pred_check_branch
    %21 = sbr.rel (0) target = $region21
  $region20: #{detr_forward.12} parent=0 // pred_region
    _
  $region21: #{detr_forward.12} parent=0 // pred_fallthru
    _
  // Predicated region
  $region22: #{detr_forward.12} parent=0 // pred_check
    _
  $region23: #{detr_forward.12} parent=0 // pred_check_branch
    %23 = sbr.rel (0) target = $region25
  $region24: #{detr_forward.12} parent=0 // pred_region
    _
  $region25: #{detr_forward.12} parent=0 // pred_fallthru
    _
  // Predicated region
  $region26: #{detr_forward.12} parent=0 // pred_check
    _
  $region27: #{detr_forward.12} parent=0 // pred_check_branch
    %25 = sbr.rel (0) target = $region29
  $region28: #{detr_forward.12} parent=0 // pred_region
    _
  $region29: #{detr_forward.12} parent=0 // pred_fallthru
    _
  %v26 = vld [vmem:[%s0] sm:$0xff]
  %v27 = vld [vmem:[%s0 + $0x8] sm:$0xff]
  %v28 = vld [vmem:[%s1] sm:$0xff]
  %v29 = vld [vmem:[%s1 + $0x8] sm:$0xff]
  %v30 = vld [vmem:[%s1 + $0x10] sm:$0xff]
  %v31 = vld [vmem:[%s1 + $0x18] sm:$0xff]
  %v32 = vld [vmem:[%s2] sm:$0x1]
  %v34 = vperm.slane %v32, 0
  %vm36 = vcmask 261120
  %v38 = vsel %vm36, %v26, 0
  %v41 = vsel %vm36, %v27, 0
  %43 = vmatpush.msra.mxu0 0.0
  %44 = vmatpush.msra.mxu0 0.0
  %45 = vmatpush.msra.mxu0 0.0
  %46 = vmatpush.msra.mxu0 0.0
  %47 = vmatpush.msra.mxu0 0.0
  %48 = vmatpush.msra.mxu0 0.0
  %49 = vmatpush.msra.mxu0 0.0
  %50 = vmatpush.msra.mxu0 0.0
  %51 = vmatpush.msra.mxu0 0.0
  %52 = vmatpush.msra.mxu0 0.0
  %53 = vmatpush.msra.mxu0 0.0
  %54 = vmatpush.msra.mxu0 0.0
  %55 = vmatpush.msra.mxu0 %v31
  %56 = vmatpush.msra.mxu0 %v30
  %57 = vmatpush.msra.mxu0 %v29
  %58 = vmatpush.msra.mxu0 %v28
  %59 = vmatmul.f32.gmra.mxu0 %v38
  %v60 = vpop.f32.mrf.mxu0
  %v61 = vadd.f32 %v34, %v60
  %62 = vmatmul.f32.gmra.mxu0 %v41
  %v63 = vpop.f32.mrf.mxu0
  %v64 = vadd.f32 %v34, %v63
  %65 = vdwg.mxu0
  %v66 = vmax.f32 %v61, 0.0
  %v67 = vmax.f32 %v64, 0.0
  %v68 = vld [vmem:[%s3] sm:$0xff]
  %v69 = vld [vmem:[%s3 + $0x8] sm:$0xff]
  %v70 = vld [vmem:[%s3 + $0x10] sm:$0xff]
  %v71 = vld [vmem:[%s3 + $0x18] sm:$0xff]
  %v72 = vld [vmem:[%s3 + $0x20] sm:$0xff]
  %v73 = vld [vmem:[%s3 + $0x28] sm:$0xff]
  %v74 = vld [vmem:[%s3 + $0x30] sm:$0xff]
  %v75 = vld [vmem:[%s3 + $0x38] sm:$0xff]
  %vm76 = vcmask 523264
  %v78 = vsel %vm76, %v66, 0
  %v81 = vsel %vm76, %v67, 0
  %83 = vmatpush.msra.mxu0 0.0
  %84 = vmatpush.msra.mxu0 0.0
  %85 = vmatpush.msra.mxu0 0.0
  %86 = vmatpush.msra.mxu0 0.0
  %87 = vmatpush.msra.mxu0 0.0
  %88 = vmatpush.msra.mxu0 0.0
  %89 = vmatpush.msra.mxu0 0.0
  %90 = vmatpush.msra.mxu0 0.0
  %91 = vmatpush.msra.mxu0 %v75
  %92 = vmatpush.msra.mxu0 %v74
  %93 = vmatpush.msra.mxu0 %v73
  %94 = vmatpush.msra.mxu0 %v72
  %95 = vmatpush.msra.mxu0 %v71
  %96 = vmatpush.msra.mxu0 %v70
  %97 = vmatpush.msra.mxu0 %v69
  %98 = vmatpush.msra.mxu0 %v68
  %99 = vmatmul.f32.gmra.mxu0 %v78
  %v100 = vpop.f32.mrf.mxu0
  %v101 = vadd.f32 0.0, %v100
  %102 = vmatmul.f32.gmra.mxu0 %v81
  %v103 = vpop.f32.mrf.mxu0
  %v104 = vadd.f32 0.0, %v103
  %105 = vdwg.mxu0
  %v106 = vadd.f32 %v26, %v101
  %v107 = vadd.f32 %v27, %v104
  %v108 = vld [vmem:[%s4] sm:$0x1]
  %v110 = vperm.slane %v108, 0
  %v112 = vadd.f32 %v106, %v110
  %v113 = vadd.f32 %v107, %v110
  %v114 = vsel %vm36, %v112, 0.0
  %115 = vadd.xlane.f32.xlu0 %v114
  %v116 = vpop.xlane.xlu0 %115
  %v117 = vsel %vm36, %v113, 0.0
  %118 = vadd.xlane.f32.xlu0 %v117
  %v119 = vpop.xlane.xlu0 %118
  %v120 = vrcp.pop 32.0
  %v121 = vmul.f32 32.0, %v120
  %v122 = vsub.f32 1.0, %v121
  %v123 = vmul.f32 %v120, %v122
  %v124 = vadd.f32 %v120, %v123
  %vm125 = vweird.f32 %v120
  %v126 = vsel %vm125, %v120, %v124
  %v127 = vmul.f32 %v116, %v126
  %v128 = vmul.f32 %v119, %v126
  %v129 = vsub.f32 %v112, %v127
  %v130 = vsub.f32 %v113, %v128
  %v131 = vmul.f32 %v129, %v129
  %v132 = vmul.f32 %v130, %v130
  %v133 = vsel %vm36, %v131, 0.0
  %134 = vadd.xlane.f32.xlu0 %v133
  %v135 = vpop.xlane.xlu0 %134
  %v136 = vsel %vm36, %v132, 0.0
  %137 = vadd.xlane.f32.xlu0 %v136
  %v138 = vpop.xlane.xlu0 %137
  %v139 = vmul.f32 %v135, %v126
  %v140 = vmul.f32 %v138, %v126
  %v141 = vadd.f32 %v139, 1e-05
  %v142 = vadd.f32 %v140, 1e-05
  %v143 = vrsqrt.pop %v141
  %v144 = vmul.f32 %v143, %v141
  %v145 = vmul.f32 %v144, %v143
  %v146 = vmul.f32 0.5, %v145
  %v147 = vsub.f32 1.5, %v146
  %v148 = vmul.f32 %v143, %v147
  %vm149 = vweird.f32 %v141
  %vm150 = vweird.f32 %v143
  %vm151 = vmor %vm149, %vm150
  %v152 = vsel %vm151, %v143, %v148
  %v153 = vrsqrt.pop %v142
  %v154 = vmul.f32 %v153, %v142
  %v155 = vmul.f32 %v154, %v153
  %v156 = vmul.f32 0.5, %v155
  %v157 = vsub.f32 1.5, %v156
  %v158 = vmul.f32 %v153, %v157
  %vm159 = vweird.f32 %v142
  %vm160 = vweird.f32 %v153
  %vm161 = vmor %vm159, %vm160
  %v162 = vsel %vm161, %v153, %v158
  %v163 = vmul.f32 %v129, %v152
  %v164 = vmul.f32 %v130, %v162
  %v165 = vld [vmem:[%s5] sm:$0x1]
  %v167 = vperm.slane %v165, 0
  %v169 = vmul.f32 %v163, %v167
  %v170 = vmul.f32 %v164, %v167
  %v171 = vld [vmem:[%s6] sm:$0x1]
  %v173 = vperm.slane %v171, 0
  %v175 = vadd.f32 %v169, %v173
  %v176 = vadd.f32 %v170, %v173
  %177 = vst.msk [vmem:[%s7] sm:$0xff] %vm36, %v175
  %178 = vst.msk [vmem:[%s7 + $0x8] sm:$0xff] %vm36, %v176
  // Predicated region
  $region30: #{detr_forward.12} parent=0 // pred_check
    _
  $region31: #{detr_forward.12} parent=0 // pred_check_branch
    %180 = sbr.rel (0) target = $region33
  $region32: #{detr_forward.12} parent=0 // pred_region
    _
  $region33: #{detr_forward.12} parent=0 // pred_fallthru
    _
  // Predicated region
  $region34: #{detr_forward.12} parent=0 // pred_check
    _
  $region35: #{detr_forward.12} parent=0 // pred_check_branch
    %182 = sbr.rel (0) target = $region37
  $region36: #{detr_forward.12} parent=0 // pred_region
    _
  $region37: #{detr_forward.12} parent=0 // pred_fallthru
    _

// kernel: detr_forward.13
$region0: #{detr_forward.13}
  #allocation0 [shape = 'u32[]', space=smem, size = 0x4, offset = 0x4, fixed_abs, tag = 'smem constant byte address 0x4 - core index']
  #allocation1 [shape = 'u32[72,128]{1,0:T(1,128)}', space=vmem, size = 0x9000, scoped, tag = 'internal scratch']
  %s0 = inlined_call_operand.vmem [shape: f32[16,32], index: 0, kind: input, shape index: {}]
  %s1 = inlined_call_operand.vmem [shape: f32[32,128], index: 1, kind: input, shape index: {}]
  %s2 = inlined_call_operand.vmem [shape: f32[1,128], index: 2, kind: input, shape index: {}]
  %s3 = inlined_call_operand.vmem [shape: f32[32,32], index: 3, kind: input, shape index: {}]
  %s4 = inlined_call_operand.vmem [shape: f32[1,32], index: 4, kind: input, shape index: {}]
  %s5 = inlined_call_operand.vmem [shape: f32[32,32], index: 5, kind: input, shape index: {}]
  %s6 = inlined_call_operand.vmem [shape: f32[1,32], index: 6, kind: input, shape index: {}]
  %s7 = inlined_call_operand.vmem [shape: f32[32,128], index: 7, kind: input, shape index: {}]
  %s8 = inlined_call_operand.vmem [shape: f32[1,128], index: 8, kind: input, shape index: {}]
  %s9 = inlined_call_operand.vmem [shape: f32[16,128], index: 9, kind: output, shape index: {0}]
  %s10 = inlined_call_operand.vmem [shape: f32[16,128], index: 10, kind: output, shape index: {1}]
  %11 = xla_tuple %s9, %s10
  %s12 = sld [smem:[#allocation0]]
  $region54: #{detr_forward.13} parent=0
    _
  %s14 = ssub.s32 1, %s12
  %s15 = scalar_select 0, %s14, %s12
  // Predicated region
  $region2: #{detr_forward.13} parent=0 // pred_check
    _
  $region3: #{detr_forward.13} parent=0 // pred_check_branch
    %17 = sbr.rel (0) target = $region5
  $region4: #{detr_forward.13} parent=0 // pred_region
    _
  $region5: #{detr_forward.13} parent=0 // pred_fallthru
    _
  // Predicated region
  $region6: #{detr_forward.13} parent=0 // pred_check
    _
  $region7: #{detr_forward.13} parent=0 // pred_check_branch
    %19 = sbr.rel (0) target = $region9
  $region8: #{detr_forward.13} parent=0 // pred_region
    _
  $region9: #{detr_forward.13} parent=0 // pred_fallthru
    _
  // Predicated region
  $region10: #{detr_forward.13} parent=0 // pred_check
    _
  $region11: #{detr_forward.13} parent=0 // pred_check_branch
    %21 = sbr.rel (0) target = $region13
  $region12: #{detr_forward.13} parent=0 // pred_region
    _
  $region13: #{detr_forward.13} parent=0 // pred_fallthru
    _
  // Predicated region
  $region14: #{detr_forward.13} parent=0 // pred_check
    _
  $region15: #{detr_forward.13} parent=0 // pred_check_branch
    %23 = sbr.rel (0) target = $region17
  $region16: #{detr_forward.13} parent=0 // pred_region
    _
  $region17: #{detr_forward.13} parent=0 // pred_fallthru
    _
  // Predicated region
  $region18: #{detr_forward.13} parent=0 // pred_check
    _
  $region19: #{detr_forward.13} parent=0 // pred_check_branch
    %25 = sbr.rel (0) target = $region21
  $region20: #{detr_forward.13} parent=0 // pred_region
    _
  $region21: #{detr_forward.13} parent=0 // pred_fallthru
    _
  // Predicated region
  $region22: #{detr_forward.13} parent=0 // pred_check
    _
  $region23: #{detr_forward.13} parent=0 // pred_check_branch
    %27 = sbr.rel (0) target = $region25
  $region24: #{detr_forward.13} parent=0 // pred_region
    _
  $region25: #{detr_forward.13} parent=0 // pred_fallthru
    _
  // Predicated region
  $region26: #{detr_forward.13} parent=0 // pred_check
    _
  $region27: #{detr_forward.13} parent=0 // pred_check_branch
    %29 = sbr.rel (0) target = $region29
  $region28: #{detr_forward.13} parent=0 // pred_region
    _
  $region29: #{detr_forward.13} parent=0 // pred_fallthru
    _
  // Predicated region
  $region30: #{detr_forward.13} parent=0 // pred_check
    _
  $region31: #{detr_forward.13} parent=0 // pred_check_branch
    %31 = sbr.rel (0) target = $region33
  $region32: #{detr_forward.13} parent=0 // pred_region
    _
  $region33: #{detr_forward.13} parent=0 // pred_fallthru
    _
  // Predicated region
  $region34: #{detr_forward.13} parent=0 // pred_check
    _
  $region35: #{detr_forward.13} parent=0 // pred_check_branch
    %33 = sbr.rel (0) target = $region37
  $region36: #{detr_forward.13} parent=0 // pred_region
    _
  $region37: #{detr_forward.13} parent=0 // pred_fallthru
    _
  %v34 = vld [vmem:[%s0] sm:$0xff]
  %v35 = vld [vmem:[%s0 + $0x8] sm:$0xff]
  %v36 = vld [vmem:[%s1] sm:$0xff]
  %v37 = vld [vmem:[%s1 + $0x8] sm:$0xff]
  %v38 = vld [vmem:[%s1 + $0x10] sm:$0xff]
  %v39 = vld [vmem:[%s1 + $0x18] sm:$0xff]
  %v40 = vld [vmem:[%s2] sm:$0x1]
  %v42 = vperm.slane %v40, 0
  %vm44 = vcmask 261120
  %v46 = vsel %vm44, %v34, 0
  %v49 = vsel %vm44, %v35, 0
  %51 = vmatpush.msra.mxu0 0.0
  %52 = vmatpush.msra.mxu0 0.0
  %53 = vmatpush.msra.mxu0 0.0
  %54 = vmatpush.msra.mxu0 0.0
  %55 = vmatpush.msra.mxu0 0.0
  %56 = vmatpush.msra.mxu0 0.0
  %57 = vmatpush.msra.mxu0 0.0
  %58 = vmatpush.msra.mxu0 0.0
  %59 = vmatpush.msra.mxu0 0.0
  %60 = vmatpush.msra.mxu0 0.0
  %61 = vmatpush.msra.mxu0 0.0
  %62 = vmatpush.msra.mxu0 0.0
  %63 = vmatpush.msra.mxu0 %v39
  %64 = vmatpush.msra.mxu0 %v38
  %65 = vmatpush.msra.mxu0 %v37
  %66 = vmatpush.msra.mxu0 %v36
  %67 = vmatmul.f32.gmra.mxu0 %v46
  %v68 = vpop.f32.mrf.mxu0
  %v69 = vadd.f32 %v42, %v68
  %70 = vmatmul.f32.gmra.mxu0 %v49
  %v71 = vpop.f32.mrf.mxu0
  %v72 = vadd.f32 %v42, %v71
  %73 = vdwg.mxu0
  %74 = vst [vmem:[%s9] sm:$0xff] %v69
  %75 = vst [vmem:[%s9 + $0x8] sm:$0xff] %v72
  %v76 = vld [vmem:[%s3] sm:$0xff]
  %v77 = vld [vmem:[%s3 + $0x8] sm:$0xff]
  %v78 = vld [vmem:[%s3 + $0x10] sm:$0xff]
  %v79 = vld [vmem:[%s3 + $0x18] sm:$0xff]
  %v80 = vld [vmem:[%s4] sm:$0x1]
  %v82 = vperm.slane %v80, 0
  %84 = vmatpush.msra.mxu0 0.0
  %85 = vmatpush.msra.mxu0 0.0
  %86 = vmatpush.msra.mxu0 0.0
  %87 = vmatpush.msra.mxu0 0.0
  %88 = vmatpush.msra.mxu0 0.0
  %89 = vmatpush.msra.mxu0 0.0
  %90 = vmatpush.msra.mxu0 0.0
  %91 = vmatpush.msra.mxu0 0.0
  %92 = vmatpush.msra.mxu0 0.0
  %93 = vmatpush.msra.mxu0 0.0
  %94 = vmatpush.msra.mxu0 0.0
  %95 = vmatpush.msra.mxu0 0.0
  %96 = vmatpush.msra.mxu0 %v79
  %97 = vmatpush.msra.mxu0 %v78
  %98 = vmatpush.msra.mxu0 %v77
  %99 = vmatpush.msra.mxu0 %v76
  %100 = vmatmul.f32.gmra.mxu0 %v46
  %v101 = vpop.f32.mrf.mxu0
  %v102 = vadd.f32 %v82, %v101
  %103 = vmatmul.f32.gmra.mxu0 %v49
  %v104 = vpop.f32.mrf.mxu0
  %v105 = vadd.f32 %v82, %v104
  %106 = vdwg.mxu0
  %v107 = vmax.f32 %v102, 0.0
  %v108 = vmax.f32 %v105, 0.0
  %v109 = vld [vmem:[%s5] sm:$0xff]
  %v110 = vld [vmem:[%s5 + $0x8] sm:$0xff]
  %v111 = vld [vmem:[%s5 + $0x10] sm:$0xff]
  %v112 = vld [vmem:[%s5 + $0x18] sm:$0xff]
  %v113 = vld [vmem:[%s6] sm:$0x1]
  %v115 = vperm.slane %v113, 0
  %v118 = vsel %vm44, %v107, 0
  %v121 = vsel %vm44, %v108, 0
  %123 = vmatpush.msra.mxu0 0.0
  %124 = vmatpush.msra.mxu0 0.0
  %125 = vmatpush.msra.mxu0 0.0
  %126 = vmatpush.msra.mxu0 0.0
  %127 = vmatpush.msra.mxu0 0.0
  %128 = vmatpush.msra.mxu0 0.0
  %129 = vmatpush.msra.mxu0 0.0
  %130 = vmatpush.msra.mxu0 0.0
  %131 = vmatpush.msra.mxu0 0.0
  %132 = vmatpush.msra.mxu0 0.0
  %133 = vmatpush.msra.mxu0 0.0
  %134 = vmatpush.msra.mxu0 0.0
  %135 = vmatpush.msra.mxu0 %v112
  %136 = vmatpush.msra.mxu0 %v111
  %137 = vmatpush.msra.mxu0 %v110
  %138 = vmatpush.msra.mxu0 %v109
  %139 = vmatmul.f32.gmra.mxu0 %v118
  %v140 = vpop.f32.mrf.mxu0
  %v141 = vadd.f32 %v115, %v140
  %142 = vmatmul.f32.gmra.mxu0 %v121
  %v143 = vpop.f32.mrf.mxu0
  %v144 = vadd.f32 %v115, %v143
  %145 = vdwg.mxu0
  %v146 = vmax.f32 %v141, 0.0
  %v147 = vmax.f32 %v144, 0.0
  %v148 = vld [vmem:[%s7] sm:$0xff]
  %v149 = vld [vmem:[%s7 + $0x8] sm:$0xff]
  %v150 = vld [vmem:[%s7 + $0x10] sm:$0xff]
  %v151 = vld [vmem:[%s7 + $0x18] sm:$0xff]
  %v152 = vld [vmem:[%s8] sm:$0x1]
  %v154 = vperm.slane %v152, 0
  %v157 = vsel %vm44, %v146, 0
  %v160 = vsel %vm44, %v147, 0
  %162 = vmatpush.msra.mxu0 0.0
  %163 = vmatpush.msra.mxu0 0.0
  %164 = vmatpush.msra.mxu0 0.0
  %165 = vmatpush.msra.mxu0 0.0
  %166 = vmatpush.msra.mxu0 0.0
  %167 = vmatpush.msra.mxu0 0.0
  %168 = vmatpush.msra.mxu0 0.0
  %169 = vmatpush.msra.mxu0 0.0
  %170 = vmatpush.msra.mxu0 0.0
  %171 = vmatpush.msra.mxu0 0.0
  %172 = vmatpush.msra.mxu0 0.0
  %173 = vmatpush.msra.mxu0 0.0
  %174 = vmatpush.msra.mxu0 %v151
  %175 = vmatpush.msra.mxu0 %v150
  %176 = vmatpush.msra.mxu0 %v149
  %177 = vmatpush.msra.mxu0 %v148
  %178 = vmatmul.f32.gmra.mxu0 %v157
  %v179 = vpop.f32.mrf.mxu0
  %v180 = vadd.f32 %v154, %v179
  %181 = vmatmul.f32.gmra.mxu0 %v160
  %v182 = vpop.f32.mrf.mxu0
  %v183 = vadd.f32 %v154, %v182
  %184 = vdwg.mxu0
  %v185 = vxor.u32 %v180, 2147483648
  %v186 = vxor.u32 %v183, 2147483648
  %v187 = vmul.f32 %v185, 1.442695
  %v188 = vpow.pop %v187
  %v189 = vmul.f32 %v186, 1.442695
  %v190 = vpow.pop %v189
  %v191 = vadd.f32 %v188, 1.0
  %v192 = vadd.f32 %v190, 1.0
  %v193 = vrcp.pop %v191
  %v194 = vmul.f32 %v191, %v193
  %v195 = vsub.f32 1.0, %v194
  %v196 = vmul.f32 %v193, %v195
  %v197 = vadd.f32 %v193, %v196
  %vm198 = vweird.f32 %v191
  %vm199 = vweird.f32 %v193
  %vm200 = vmor %vm198, %vm199
  %v201 = vsel %vm200, %v193, %v197
  %v202 = vand.u32 2147483647, %v191
  %vm203 = vcmp.eq.f32.partialorder %v202, 8.507059e+37
  %v204 = vand.u32 %v191, 2147483648
  %v205 = vor.u32 1.1754944e-38, %v204
  %v206 = vsel %vm203, %v205, %v201
  %v207 = vmul.f32 1.0, %v206
  %v208 = vrcp.pop %v192
  %v209 = vmul.f32 %v192, %v208
  %v210 = vsub.f32 1.0, %v209
  %v211 = vmul.f32 %v208, %v210
  %v212 = vadd.f32 %v208, %v211
  %vm213 = vweird.f32 %v192
  %vm214 = vweird.f32 %v208
  %vm215 = vmor %vm213, %vm214
  %v216 = vsel %vm215, %v208, %v212
  %v217 = vand.u32 2147483647, %v192
  %vm218 = vcmp.eq.f32.partialorder %v217, 8.507059e+37
  %v219 = vand.u32 %v192, 2147483648
  %v220 = vor.u32 1.1754944e-38, %v219
  %v221 = vsel %vm218, %v220, %v216
  %v222 = vmul.f32 1.0, %v221
  %223 = vst [vmem:[%s10] sm:$0xff] %v207
  %224 = vst [vmem:[%s10 + $0x8] sm:$0xff] %v222
  // Predicated region
  $region38: #{detr_forward.13} parent=0 // pred_check
    _
  $region39: #{detr_forward.13} parent=0 // pred_check_branch
    %226 = sbr.rel (0) target = $region41
  $region40: #{detr_forward.13} parent=0 // pred_region
    _
  $region41: #{detr_forward.13} parent=0 // pred_fallthru
    _
  // Predicated region
  $region42: #{detr_forward.13} parent=0 // pred_check
    _
  $region43: #{detr_forward.13} parent=0 // pred_check_branch
    %228 = sbr.rel (0) target = $region45
  $region44: #{detr_forward.13} parent=0 // pred_region
    _
  $region45: #{detr_forward.13} parent=0 // pred_fallthru
    _
  // Predicated region
  $region46: #{detr_forward.13} parent=0 // pred_check
    _
  $region47: #{detr_forward.13} parent=0 // pred_check_branch
    %230 = sbr.rel (0) target = $region49
  $region48: #{detr_forward.13} parent=0 // pred_region
    _
  $region49: #{detr_forward.13} parent=0 // pred_fallthru
    _
  // Predicated region
  $region50: #{detr_forward.13} parent=0 // pred_check
    _
  $region51: #{detr_forward.13} parent=0 // pred_check_branch
    %232 = sbr.rel (0) target = $region53
  $region52: #{detr_forward.13} parent=0 // pred_region
    _
  $region53: #{detr_forward.13} parent=0 // pred_fallthru
    _

</llo_original>
